<compile_context>
chip_gen: v6e
topology: v6e:2x2x1
jax: 0.10.0
libtpu: 0.0.40
codegen_flags: <defaults>
</compile_context>

<pallas_src>
import jax
import jax.numpy as jnp
from jax.experimental import pallas as pl
from jax.experimental.pallas import tpu as pltpu


def _round_up(x, m):
    return (x + m - 1) // m * m


def _make_vq_min_kernel(m_valid, tm, steps, d, need_mask):
    """Accumulate per-code-vector min_k ||z - e_k||^2 into a lane-dense (8, tm) block.

    Per grid step:
      z_ref : (d, tm)  f32   -- tm code vectors; D on sublanes, M on lanes
      a_ref : (K, dp)  bf16  -- [-2*E | ||e||^2 | 0-pad], dp = round_up(d+1, 8)
      out   : (8, tm)  f32   -- row 0 holds the running per-column sum
      zb    : (dp, tm) f32   -- scratch matmul operand: rows 0:d = z, row d = 1
    """

    def kernel(z_ref, a_ref, out_ref, zb_ref):
        p = pl.program_id(0)   # parallel partition (megacore / v7x)
        i = pl.program_id(1)   # reduction steps within the partition

        @pl.when(i == 0)
        def _init():
            out_ref[...] = jnp.zeros_like(out_ref)
            # Constant rows of the matmul operand: row d = 1 (multiplies the
            # ||e_k||^2 column of a_ref), remaining pad rows = 0.  Rows 0:d are
            # refreshed from z every step, so writing them here is harmless.
            row = jax.lax.broadcasted_iota(jnp.int32, zb_ref.shape, 0)
            zb_ref[...] = jnp.where(row == d, 1.0, 0.0).astype(jnp.float32)

        zf = z_ref[...]                                      # (d, tm) f32
        zb_ref[0:d, :] = zf                                  # refresh data rows

        # s[k, m] = ||e_k||^2 - 2 z_m . e_k  in ONE MXU matmul (bf16 in, f32 acc)
        s = jnp.dot(a_ref[...], zb_ref[...].astype(jnp.bfloat16),
                    preferred_element_type=jnp.float32)      # (K, tm)

        mind = jnp.min(s, axis=0, keepdims=True)             # (1, tm)
        z_sq = jnp.sum(zf * zf, axis=0, keepdims=True)       # (1, tm), f32
        res = jnp.maximum(z_sq + mind, 0.0)                  # clamp cancellation

        if need_mask:
            row0 = (p * steps + i) * tm
            is_tail = row0 + tm > m_valid

            @pl.when(is_tail)
            def _tail():
                cols = row0 + jax.lax.broadcasted_iota(jnp.int32, (1, tm), 1)
                out_ref[0:1, :] += jnp.where(cols < m_valid, res, 0.0)

            @pl.when(jnp.logical_not(is_tail))
            def _full():
                out_ref[0:1, :] += res
        else:
            out_ref[0:1, :] += res

    return kernel


def vq_sq_error_sum(z_cols, embedding, *, tm=2048, cores=1):
    """Sum over all code vectors of min_k ||z - e_k||^2.

    z_cols: (D, M) code vectors as columns (M on the lane axis). embedding: (K, D).
    """
    D, M = z_cols.shape
    K, D2 = embedding.shape
    assert D == D2

    dp = _round_up(D + 1, 8)

    # Tile sizing: the real VMEM consumer is the (K, tm) f32 distance tile.
    # Keep it <= 8 MiB so the kernel also fits v7x's 64 MiB-per-TC VMEM.
    per_core = pl.cdiv(M, cores)
    dist_budget = 8 * 1024 * 1024
    tm_cap = max(128, (dist_budget // (4 * K)) // 128 * 128)
    tm = min(tm, tm_cap, _round_up(per_core, 128))
    tm = max(tm, 128)
    steps = pl.cdiv(per_core, tm)
    m_padded = cores * steps * tm
    need_mask = m_padded != M

    emb32 = embedding.astype(jnp.float32)
    esq = jnp.sum(emb32 * emb32, axis=1, keepdims=True)              # (K, 1) f32
    a_op = jnp.concatenate(
        [-2.0 * emb32, esq, jnp.zeros((K, dp - D - 1), jnp.float32)],
        axis=1).astype(jnp.bfloat16)                                 # (K, dp)

    last_blk = max(pl.cdiv(M, tm) - 1, 0)
    if need_mask:
        # Clamp fully out-of-bounds blocks back to the last valid block; their
        # contribution is zeroed by the in-kernel tail mask.
        z_idx = lambda p, i: (0, jnp.minimum(p * steps + i, last_blk))
    else:
        z_idx = lambda p, i: (0, p * steps + i)

    kernel = _make_vq_min_kernel(M, tm, steps, D, need_mask)

    out = pl.pallas_call(
        kernel,
        out_shape=jax.ShapeDtypeStruct((cores * 8, tm), jnp.float32),
        grid_spec=pltpu.PrefetchScalarGridSpec(
            num_scalar_prefetch=0,
            grid=(cores, steps),
            in_specs=[
                pl.BlockSpec((D, tm), z_idx),                  # z columns, f32
                pl.BlockSpec((K, dp), lambda p, i: (0, 0)),    # codebook operand
            ],
            out_specs=pl.BlockSpec((8, tm), lambda p, i: (p, 0)),
            scratch_shapes=[pltpu.VMEM((dp, tm), jnp.float32)],
        ),
        compiler_params=pltpu.CompilerParams(
            dimension_semantics=("parallel", "arbitrary"),
            vmem_limit_bytes=32 * 1024 * 1024,
        ),
    )(z_cols.astype(jnp.float32), a_op)

    return jnp.sum(out)


def kepler_quantizer_reg_loss(z, embedding, *, partitions=4, beta=0.25,
                              use_kepler_loss=False, kl_weight=1e-8,
                              tm=2048, cores=1):
    """Forward of KeplerQuantizerRegLoss. z: (N, C, H, W), embedding: (K, C//partitions)."""
    N, C, H, W = z.shape
    assert C % partitions == 0
    D = C // partitions

    # NCHW -> (D, N*H*W*partitions): code-vector components on sublanes,
    # code vectors (M) on the lane axis.  One layout pass, no padding pass.
    z_cols = jnp.transpose(
        z.astype(jnp.float32).reshape(N, partitions, D, H, W),
        (2, 0, 3, 4, 1)).reshape(D, -1)
    M = z_cols.shape[1]

    sq_sum = vq_sq_error_sum(z_cols, embedding, tm=tm, cores=cores)
    mse = sq_sum / (M * D)   # mean over all elements of (z_q - z)^2

    # legacy=True forward value: mean((zq.detach()-z)^2) + beta*mean((zq-z.detach())^2)
    loss = (1.0 + beta) * mse
    # TODO(synk): KeplerLoss KL regularizer over codebook usage is not implemented;
    # the reference module uses use_kepler_loss=False so it contributes zero here.
    del use_kepler_loss, kl_weight
    return loss  # scalar; the reference's final .mean() is identity


if __name__ == "__main__":
    key = jax.random.PRNGKey(0)
    k_z, k_e = jax.random.split(key)

    batch, embed_dim, spatial = 2, 16, 16
    partitions = 4
    num_embed = 1024
    beta = 0.25
    code_dim = embed_dim // partitions

    # deterministic codebook init, matching nn.Embedding(...).weight.uniform_(-1/n_e, 1/n_e)
    embedding = jax.random.uniform(
        k_e, (num_embed, code_dim), jnp.float32,
        minval=-1.0 / num_embed, maxval=1.0 / num_embed)

    z = jax.random.normal(k_z, (batch, embed_dim, spatial, spatial), jnp.float32)

    loss_fn = jax.jit(lambda zz, ee: kepler_quantizer_reg_loss(
        zz, ee, partitions=partitions, beta=beta))
    loss = loss_fn(z, embedding)
    jax.block_until_ready(loss)
    print("KERNEL_OK")
</pallas_src>

<mosaic_0001>
module attributes {stable_mosaic.version = 11 : i64} {
  func.func @kernel(%arg0: i32, %arg1: i32, %arg2: memref<4x2048xf32, #tpu.memory_space<vmem>>, %arg3: memref<1024x8xbf16, #tpu.memory_space<vmem>>, %arg4: memref<8x2048xf32, #tpu.memory_space<vmem>>, %arg5: memref<8x2048xf32, #tpu.memory_space<vmem>>) attributes {dimension_semantics = [#tpu.dimension_semantics<parallel>, #tpu.dimension_semantics<arbitrary>], iteration_bounds = array<i64: 1, 1>, scalar_prefetch = 0 : i64, scratch_operands = 1 : i64, tpu.core_type = #tpu.core_type<tc>, window_params = [{transform_indices = @transform_0, window_bounds = array<i64: 4, 2048>}, {pipeline_mode = #tpu.pipeline_mode<synchronous>, transform_indices = @transform_1, window_bounds = array<i64: 1024, 8>}, {transform_indices = @transform_2, window_bounds = array<i64: 8, 2048>}]} {
    %c0_i32 = arith.constant 0 : i32
    %0 = arith.cmpi eq, %arg1, %c0_i32 : i32
    %1 = arith.extui %0 : i1 to i32
    %c0_i32_0 = arith.constant 0 : i32
    %2 = arith.cmpi ne, %1, %c0_i32_0 : i32
    scf.if %2 {
      %cst_15 = arith.constant 0.000000e+00 : f32
      %20 = vector.broadcast %cst_15 : f32 to vector<8x2048xf32>
      %c0_16 = arith.constant 0 : index
      %c0_17 = arith.constant 0 : index
      %21 = vector.load %arg4[%c0_16, %c0_17] : memref<8x2048xf32, #tpu.memory_space<vmem>>, vector<8x2048xf32>
      tpu.vector_store %arg4[%c0_16, %c0_17], %20 {strides = array<i32>} : memref<8x2048xf32, #tpu.memory_space<vmem>>, vector<8x2048xf32>,
      %22 = tpu.iota {dimensions = array<i32: 0>} : vector<8x2048xi32>
      %c4_i32 = arith.constant 4 : i32
      %23 = vector.broadcast %c4_i32 : i32 to vector<8x2048xi32>
      %24 = arith.cmpi eq, %22, %23 : vector<8x2048xi32>
      %cst_18 = arith.constant 1.000000e+00 : f32
      %cst_19 = arith.constant 0.000000e+00 : f32
      %25 = vector.broadcast %cst_18 : f32 to vector<8x2048xf32>
      %26 = vector.broadcast %cst_19 : f32 to vector<8x2048xf32>
      %27 = arith.select %24, %25, %26 : vector<8x2048xi1>, vector<8x2048xf32>
      %c0_20 = arith.constant 0 : index
      %c0_21 = arith.constant 0 : index
      %28 = vector.load %arg5[%c0_20, %c0_21] : memref<8x2048xf32, #tpu.memory_space<vmem>>, vector<8x2048xf32>
      tpu.vector_store %arg5[%c0_20, %c0_21], %27 {strides = array<i32>} : memref<8x2048xf32, #tpu.memory_space<vmem>>, vector<8x2048xf32>,
    } else {
    }
    %c0 = arith.constant 0 : index
    %c0_1 = arith.constant 0 : index
    %3 = vector.load %arg2[%c0, %c0_1] : memref<4x2048xf32, #tpu.memory_space<vmem>>, vector<4x2048xf32>
    %c0_2 = arith.constant 0 : index
    %c0_3 = arith.constant 0 : index
    %4 = vector.load %arg5[%c0_2, %c0_3] : memref<8x2048xf32, #tpu.memory_space<vmem>>, vector<4x2048xf32>
    tpu.vector_store %arg5[%c0_2, %c0_3], %3 {strides = array<i32>} : memref<8x2048xf32, #tpu.memory_space<vmem>>, vector<4x2048xf32>,
    %c0_4 = arith.constant 0 : index
    %c0_5 = arith.constant 0 : index
    %5 = vector.load %arg3[%c0_4, %c0_5] : memref<1024x8xbf16, #tpu.memory_space<vmem>>, vector<1024x8xbf16>
    %c0_6 = arith.constant 0 : index
    %c0_7 = arith.constant 0 : index
    %6 = vector.load %arg5[%c0_6, %c0_7] : memref<8x2048xf32, #tpu.memory_space<vmem>>, vector<8x2048xf32>
    %7 = arith.truncf %6 : vector<8x2048xf32> to vector<8x2048xbf16>
    %cst = arith.constant dense<0.000000e+00> : vector<1024x2048xf32>
    %8 = tpu.matmul %5, %7, %cst {dimension_numbers = #tpu.dot_dimension_numbers<[1], [0], [0], [1], [0, 0, 1, 1], [], []>} : vector<1024x8xbf16>, vector<8x2048xbf16>, vector<1024x2048xf32> -> vector<1024x2048xf32>
    %cst_8 = arith.constant dense<0x7F800000> : vector<2048xf32>
    %9 = vector.multi_reduction <minimumf>, %8, %cst_8 [0] : vector<1024x2048xf32> to vector<2048xf32>
    %10 = vector.shape_cast %9 : vector<2048xf32> to vector<1x2048xf32>
    %11 = arith.mulf %3, %3 : vector<4x2048xf32>
    %cst_9 = arith.constant dense<0.000000e+00> : vector<2048xf32>
    %12 = vector.multi_reduction <add>, %11, %cst_9 [0] : vector<4x2048xf32> to vector<2048xf32>
    %13 = vector.shape_cast %12 : vector<2048xf32> to vector<1x2048xf32>
    %14 = arith.addf %13, %10 : vector<1x2048xf32>
    %cst_10 = arith.constant 0.000000e+00 : f32
    %15 = vector.broadcast %cst_10 : f32 to vector<1x2048xf32>
    %16 = arith.maximumf %14, %15 : vector<1x2048xf32>
    %c0_11 = arith.constant 0 : index
    %c0_12 = arith.constant 0 : index
    %17 = vector.load %arg4[%c0_11, %c0_12] : memref<8x2048xf32, #tpu.memory_space<vmem>>, vector<1x2048xf32>
    %18 = arith.addf %17, %16 : vector<1x2048xf32>
    %c0_13 = arith.constant 0 : index
    %c0_14 = arith.constant 0 : index
    %19 = vector.load %arg4[%c0_13, %c0_14] : memref<8x2048xf32, #tpu.memory_space<vmem>>, vector<1x2048xf32>
    tpu.vector_store %arg4[%c0_13, %c0_14], %18 {strides = array<i32>} : memref<8x2048xf32, #tpu.memory_space<vmem>>, vector<1x2048xf32>,
    return
  }
  func.func @transform_0(%arg0: i32, %arg1: i32) -> (i32, i32) {
    %c1_i32 = arith.constant 1 : i32
    %0 = arith.muli %arg0, %c1_i32 : i32
    %1 = arith.addi %0, %arg1 : i32
    %c0_i32 = arith.constant 0 : i32
    %c0_i32_0 = arith.constant 0 : i32
    return %c0_i32, %1 : i32, i32
  }
  func.func @transform_1(%arg0: i32, %arg1: i32) -> (i32, i32) {
    %c0_i32 = arith.constant 0 : i32
    %c0_i32_0 = arith.constant 0 : i32
    %c0_i32_1 = arith.constant 0 : i32
    return %c0_i32, %c0_i32_0 : i32, i32
  }
  func.func @transform_2(%arg0: i32, %arg1: i32) -> (i32, i32) {
    %c0_i32 = arith.constant 0 : i32
    %c0_i32_0 = arith.constant 0 : i32
    return %arg0, %c0_i32 : i32, i32
  }
}

</mosaic_0001>

<llo_original>
// kernel: _lambda_.1
$region0: #{_lambda_.1}
  #allocation0 [shape = 'u32[]', space=smem, size = 0x4, offset = 0x4, fixed_abs, tag = 'smem constant byte address 0x4 - core index']
  #allocation1 [shape = 'u32[144,128]{1,0:T(1,128)}', space=vmem, size = 0x12000, scoped, tag = 'internal scratch']
  #allocation2 [shape = 'f32[8,2048]{1,0:T(8,128)}', space=vmem, size = 0x10000, scoped, tag = 'scratch operand']
  %s0 = inlined_call_operand.vmem [shape: f32[4,2048], index: 0, kind: input, shape index: {}]
  %s1 = inlined_call_operand.vmem [shape: bf16[1024,8], index: 1, kind: input, shape index: {}]
  %s2 = inlined_call_operand.vmem [shape: f32[8,2048], index: 2, kind: output, shape index: {}]
  %s3 = sld [smem:[#allocation0]]
  $region22: #{_lambda_.1} parent=0
    _
  %s5 = ssub.s32 1, %s3
  %s6 = scalar_select 0, %s5, %s3
  // Predicated region
  $region2: #{_lambda_.1} parent=0 // pred_check
    _
  $region3: #{_lambda_.1} parent=0 // pred_check_branch
    %8 = sbr.rel (0) target = $region5
  $region4: #{_lambda_.1} parent=0 // pred_region
    %s9 = sadd.s32 0, 0
    %s10 = smul.u32 16, %s9
    %p11 = scmp.lt.s32.totalorder %s10, 15
    %s12 = scalar_select %p11, %s10, 15
    %s13 = smul.addr %s12, 4
    %s14 = scalar_lea.vmem %s0, %s13
    %s15 = sadd.s32 0, 0
    %s16 = smul.u32 16, %s15
  $region5: #{_lambda_.1} parent=0 // pred_fallthru
    _
  // Predicated region
  $region6: #{_lambda_.1} parent=0 // pred_check
    _
  $region7: #{_lambda_.1} parent=0 // pred_check_branch
    %18 = sbr.rel (0) target = $region9
  $region8: #{_lambda_.1} parent=0 // pred_region
    _
  $region9: #{_lambda_.1} parent=0 // pred_fallthru
    _
  %s19 = sadd.s32 0, 0
  %s20 = smul.u32 16, %s19
  %p21 = scmp.lt.s32.totalorder %s20, 15
  %s22 = scalar_select %p21, %s20, 15
  %s23 = smul.addr %s22, 4
  %s24 = scalar_lea.vmem %s0, %s23
  %s25 = sadd.s32 0, 0
  %s26 = smul.u32 16, %s25
  %p27 = scmp.lt.s32.totalorder %s26, 15
  %s28 = scalar_select %p27, %s26, 15
  %s29 = smul.addr %s28, 4
  %s30 = scalar_lea.vmem %s0, %s29
  %s31 = sadd.s32 0, 0
  %s32 = smul.u32 16, %s31
  %p34 = scmp.eq.s32.totalorder 0, 0
  // Predicated region
  $region10: #{_lambda_.1} parent=0 // pred_check
    %p35 = pneg %p34
  $region11: #{_lambda_.1} parent=0 // pred_check_branch
    %37 = sbr.rel (%p35) target = $region13
  $region12: #{_lambda_.1} parent=0 // pred_region
    %38 = vst [vmem:[%s2] sm:$0xff] 0.0
    %39 = vst [vmem:[%s2 + $0x8] sm:$0xff] 0.0
    %40 = vst [vmem:[%s2 + $0x10] sm:$0xff] 0.0
    %41 = vst [vmem:[%s2 + $0x18] sm:$0xff] 0.0
    %42 = vst [vmem:[%s2 + $0x20] sm:$0xff] 0.0
    %43 = vst [vmem:[%s2 + $0x28] sm:$0xff] 0.0
    %44 = vst [vmem:[%s2 + $0x30] sm:$0xff] 0.0
    %45 = vst [vmem:[%s2 + $0x38] sm:$0xff] 0.0
    %46 = vst [vmem:[%s2 + $0x40] sm:$0xff] 0.0
    %47 = vst [vmem:[%s2 + $0x48] sm:$0xff] 0.0
    %48 = vst [vmem:[%s2 + $0x50] sm:$0xff] 0.0
    %49 = vst [vmem:[%s2 + $0x58] sm:$0xff] 0.0
    %50 = vst [vmem:[%s2 + $0x60] sm:$0xff] 0.0
    %51 = vst [vmem:[%s2 + $0x68] sm:$0xff] 0.0
    %52 = vst [vmem:[%s2 + $0x70] sm:$0xff] 0.0
    %53 = vst [vmem:[%s2 + $0x78] sm:$0xff] 0.0
    %v54 = vlaneseq
    %v55 = vshrl.u32 %v54, 7
    %vm56 = vcmp.eq.s32.totalorder %v55, 4
    %v57 = vsel %vm56, 1.0, 0.0
    %58 = vst [vmem:[#allocation2] sm:$0xff] %v57
    %59 = vst [vmem:[#allocation2 + $0x8] sm:$0xff] %v57
    %60 = vst [vmem:[#allocation2 + $0x10] sm:$0xff] %v57
    %61 = vst [vmem:[#allocation2 + $0x18] sm:$0xff] %v57
    %62 = vst [vmem:[#allocation2 + $0x20] sm:$0xff] %v57
    %63 = vst [vmem:[#allocation2 + $0x28] sm:$0xff] %v57
    %64 = vst [vmem:[#allocation2 + $0x30] sm:$0xff] %v57
    %65 = vst [vmem:[#allocation2 + $0x38] sm:$0xff] %v57
    %66 = vst [vmem:[#allocation2 + $0x40] sm:$0xff] %v57
    %67 = vst [vmem:[#allocation2 + $0x48] sm:$0xff] %v57
    %68 = vst [vmem:[#allocation2 + $0x50] sm:$0xff] %v57
    %69 = vst [vmem:[#allocation2 + $0x58] sm:$0xff] %v57
    %70 = vst [vmem:[#allocation2 + $0x60] sm:$0xff] %v57
    %71 = vst [vmem:[#allocation2 + $0x68] sm:$0xff] %v57
    %72 = vst [vmem:[#allocation2 + $0x70] sm:$0xff] %v57
    %73 = vst [vmem:[#allocation2 + $0x78] sm:$0xff] %v57
  $region13: #{_lambda_.1} parent=0 // pred_fallthru
    _
  %v74 = vld [vmem:[%s30] sm:$0xff]
  %v75 = vld [vmem:[%s30 + $0x8] sm:$0xff]
  %v76 = vld [vmem:[%s30 + $0x10] sm:$0xff]
  %v77 = vld [vmem:[%s30 + $0x18] sm:$0xff]
  %v78 = vld [vmem:[%s30 + $0x20] sm:$0xff]
  %v79 = vld [vmem:[%s30 + $0x28] sm:$0xff]
  %v80 = vld [vmem:[%s30 + $0x30] sm:$0xff]
  %v81 = vld [vmem:[%s30 + $0x38] sm:$0xff]
  %v90 = vcombine.high %v74, %v74
  %v91 = vcombine.high %v75, %v75
  %v92 = vcombine.high %v76, %v76
  %v93 = vcombine.high %v77, %v77
  %v94 = vcombine.high %v78, %v78
  %v95 = vcombine.high %v79, %v79
  %v96 = vcombine.high %v80, %v80
  %v97 = vcombine.high %v81, %v81
  %106 = vst [vmem:[#allocation2] sm:$0xf] %v74
  %107 = vst [vmem:[#allocation2 + $0x8] sm:$0xf] %v90
  %108 = vst [vmem:[#allocation2 + $0x10] sm:$0xf] %v75
  %109 = vst [vmem:[#allocation2 + $0x18] sm:$0xf] %v91
  %110 = vst [vmem:[#allocation2 + $0x20] sm:$0xf] %v76
  %111 = vst [vmem:[#allocation2 + $0x28] sm:$0xf] %v92
  %112 = vst [vmem:[#allocation2 + $0x30] sm:$0xf] %v77
  %113 = vst [vmem:[#allocation2 + $0x38] sm:$0xf] %v93
  %114 = vst [vmem:[#allocation2 + $0x40] sm:$0xf] %v78
  %115 = vst [vmem:[#allocation2 + $0x48] sm:$0xf] %v94
  %116 = vst [vmem:[#allocation2 + $0x50] sm:$0xf] %v79
  %117 = vst [vmem:[#allocation2 + $0x58] sm:$0xf] %v95
  %118 = vst [vmem:[#allocation2 + $0x60] sm:$0xf] %v80
  %119 = vst [vmem:[#allocation2 + $0x68] sm:$0xf] %v96
  %120 = vst [vmem:[#allocation2 + $0x70] sm:$0xf] %v81
  %121 = vst [vmem:[#allocation2 + $0x78] sm:$0xf] %v97
  %v122 = vld [vmem:[%s1] sm:$0xf]
  %v123 = vld [vmem:[%s1 + $0x4] sm:$0xf]
  %v124 = vld [vmem:[%s1 + $0x8] sm:$0xf]
  %v125 = vld [vmem:[%s1 + $0xc] sm:$0xf]
  %v126 = vld [vmem:[%s1 + $0x10] sm:$0xf]
  %v127 = vld [vmem:[%s1 + $0x14] sm:$0xf]
  %v128 = vld [vmem:[%s1 + $0x18] sm:$0xf]
  %v129 = vld [vmem:[%s1 + $0x1c] sm:$0xf]
  %v130 = vld [vmem:[%s1 + $0x20] sm:$0xf]
  %v131 = vld [vmem:[%s1 + $0x24] sm:$0xf]
  %v132 = vld [vmem:[%s1 + $0x28] sm:$0xf]
  %v133 = vld [vmem:[%s1 + $0x2c] sm:$0xf]
  %v134 = vld [vmem:[%s1 + $0x30] sm:$0xf]
  %v135 = vld [vmem:[%s1 + $0x34] sm:$0xf]
  %v136 = vld [vmem:[%s1 + $0x38] sm:$0xf]
  %v137 = vld [vmem:[%s1 + $0x3c] sm:$0xf]
  %v138 = vld [vmem:[%s1 + $0x40] sm:$0xf]
  %v139 = vld [vmem:[%s1 + $0x44] sm:$0xf]
  %v140 = vld [vmem:[%s1 + $0x48] sm:$0xf]
  %v141 = vld [vmem:[%s1 + $0x4c] sm:$0xf]
  %v142 = vld [vmem:[%s1 + $0x50] sm:$0xf]
  %v143 = vld [vmem:[%s1 + $0x54] sm:$0xf]
  %v144 = vld [vmem:[%s1 + $0x58] sm:$0xf]
  %v145 = vld [vmem:[%s1 + $0x5c] sm:$0xf]
  %v146 = vld [vmem:[%s1 + $0x60] sm:$0xf]
  %v147 = vld [vmem:[%s1 + $0x64] sm:$0xf]
  %v148 = vld [vmem:[%s1 + $0x68] sm:$0xf]
  %v149 = vld [vmem:[%s1 + $0x6c] sm:$0xf]
  %v150 = vld [vmem:[%s1 + $0x70] sm:$0xf]
  %v151 = vld [vmem:[%s1 + $0x74] sm:$0xf]
  %v152 = vld [vmem:[%s1 + $0x78] sm:$0xf]
  %v153 = vld [vmem:[%s1 + $0x7c] sm:$0xf]
  %v154 = vld [vmem:[%s1 + $0x80] sm:$0xf]
  %v155 = vld [vmem:[%s1 + $0x84] sm:$0xf]
  %v156 = vld [vmem:[%s1 + $0x88] sm:$0xf]
  %v157 = vld [vmem:[%s1 + $0x8c] sm:$0xf]
  %v158 = vld [vmem:[%s1 + $0x90] sm:$0xf]
  %v159 = vld [vmem:[%s1 + $0x94] sm:$0xf]
  %v160 = vld [vmem:[%s1 + $0x98] sm:$0xf]
  %v161 = vld [vmem:[%s1 + $0x9c] sm:$0xf]
  %v162 = vld [vmem:[%s1 + $0xa0] sm:$0xf]
  %v163 = vld [vmem:[%s1 + $0xa4] sm:$0xf]
  %v164 = vld [vmem:[%s1 + $0xa8] sm:$0xf]
  %v165 = vld [vmem:[%s1 + $0xac] sm:$0xf]
  %v166 = vld [vmem:[%s1 + $0xb0] sm:$0xf]
  %v167 = vld [vmem:[%s1 + $0xb4] sm:$0xf]
  %v168 = vld [vmem:[%s1 + $0xb8] sm:$0xf]
  %v169 = vld [vmem:[%s1 + $0xbc] sm:$0xf]
  %v170 = vld [vmem:[%s1 + $0xc0] sm:$0xf]
  %v171 = vld [vmem:[%s1 + $0xc4] sm:$0xf]
  %v172 = vld [vmem:[%s1 + $0xc8] sm:$0xf]
  %v173 = vld [vmem:[%s1 + $0xcc] sm:$0xf]
  %v174 = vld [vmem:[%s1 + $0xd0] sm:$0xf]
  %v175 = vld [vmem:[%s1 + $0xd4] sm:$0xf]
  %v176 = vld [vmem:[%s1 + $0xd8] sm:$0xf]
  %v177 = vld [vmem:[%s1 + $0xdc] sm:$0xf]
  %v178 = vld [vmem:[%s1 + $0xe0] sm:$0xf]
  %v179 = vld [vmem:[%s1 + $0xe4] sm:$0xf]
  %v180 = vld [vmem:[%s1 + $0xe8] sm:$0xf]
  %v181 = vld [vmem:[%s1 + $0xec] sm:$0xf]
  %v182 = vld [vmem:[%s1 + $0xf0] sm:$0xf]
  %v183 = vld [vmem:[%s1 + $0xf4] sm:$0xf]
  %v184 = vld [vmem:[%s1 + $0xf8] sm:$0xf]
  %v185 = vld [vmem:[%s1 + $0xfc] sm:$0xf]
  %v186 = vld [vmem:[%s1 + $0x100] sm:$0xf]
  %v187 = vld [vmem:[%s1 + $0x104] sm:$0xf]
  %v188 = vld [vmem:[%s1 + $0x108] sm:$0xf]
  %v189 = vld [vmem:[%s1 + $0x10c] sm:$0xf]
  %v190 = vld [vmem:[%s1 + $0x110] sm:$0xf]
  %v191 = vld [vmem:[%s1 + $0x114] sm:$0xf]
  %v192 = vld [vmem:[%s1 + $0x118] sm:$0xf]
  %v193 = vld [vmem:[%s1 + $0x11c] sm:$0xf]
  %v194 = vld [vmem:[%s1 + $0x120] sm:$0xf]
  %v195 = vld [vmem:[%s1 + $0x124] sm:$0xf]
  %v196 = vld [vmem:[%s1 + $0x128] sm:$0xf]
  %v197 = vld [vmem:[%s1 + $0x12c] sm:$0xf]
  %v198 = vld [vmem:[%s1 + $0x130] sm:$0xf]
  %v199 = vld [vmem:[%s1 + $0x134] sm:$0xf]
  %v200 = vld [vmem:[%s1 + $0x138] sm:$0xf]
  %v201 = vld [vmem:[%s1 + $0x13c] sm:$0xf]
  %v202 = vld [vmem:[%s1 + $0x140] sm:$0xf]
  %v203 = vld [vmem:[%s1 + $0x144] sm:$0xf]
  %v204 = vld [vmem:[%s1 + $0x148] sm:$0xf]
  %v205 = vld [vmem:[%s1 + $0x14c] sm:$0xf]
  %v206 = vld [vmem:[%s1 + $0x150] sm:$0xf]
  %v207 = vld [vmem:[%s1 + $0x154] sm:$0xf]
  %v208 = vld [vmem:[%s1 + $0x158] sm:$0xf]
  %v209 = vld [vmem:[%s1 + $0x15c] sm:$0xf]
  %v210 = vld [vmem:[%s1 + $0x160] sm:$0xf]
  %v211 = vld [vmem:[%s1 + $0x164] sm:$0xf]
  %v212 = vld [vmem:[%s1 + $0x168] sm:$0xf]
  %v213 = vld [vmem:[%s1 + $0x16c] sm:$0xf]
  %v214 = vld [vmem:[%s1 + $0x170] sm:$0xf]
  %v215 = vld [vmem:[%s1 + $0x174] sm:$0xf]
  %v216 = vld [vmem:[%s1 + $0x178] sm:$0xf]
  %v217 = vld [vmem:[%s1 + $0x17c] sm:$0xf]
  %v218 = vld [vmem:[%s1 + $0x180] sm:$0xf]
  %v219 = vld [vmem:[%s1 + $0x184] sm:$0xf]
  %v220 = vld [vmem:[%s1 + $0x188] sm:$0xf]
  %v221 = vld [vmem:[%s1 + $0x18c] sm:$0xf]
  %v222 = vld [vmem:[%s1 + $0x190] sm:$0xf]
  %v223 = vld [vmem:[%s1 + $0x194] sm:$0xf]
  %v224 = vld [vmem:[%s1 + $0x198] sm:$0xf]
  %v225 = vld [vmem:[%s1 + $0x19c] sm:$0xf]
  %v226 = vld [vmem:[%s1 + $0x1a0] sm:$0xf]
  %v227 = vld [vmem:[%s1 + $0x1a4] sm:$0xf]
  %v228 = vld [vmem:[%s1 + $0x1a8] sm:$0xf]
  %v229 = vld [vmem:[%s1 + $0x1ac] sm:$0xf]
  %v230 = vld [vmem:[%s1 + $0x1b0] sm:$0xf]
  %v231 = vld [vmem:[%s1 + $0x1b4] sm:$0xf]
  %v232 = vld [vmem:[%s1 + $0x1b8] sm:$0xf]
  %v233 = vld [vmem:[%s1 + $0x1bc] sm:$0xf]
  %v234 = vld [vmem:[%s1 + $0x1c0] sm:$0xf]
  %v235 = vld [vmem:[%s1 + $0x1c4] sm:$0xf]
  %v236 = vld [vmem:[%s1 + $0x1c8] sm:$0xf]
  %v237 = vld [vmem:[%s1 + $0x1cc] sm:$0xf]
  %v238 = vld [vmem:[%s1 + $0x1d0] sm:$0xf]
  %v239 = vld [vmem:[%s1 + $0x1d4] sm:$0xf]
  %v240 = vld [vmem:[%s1 + $0x1d8] sm:$0xf]
  %v241 = vld [vmem:[%s1 + $0x1dc] sm:$0xf]
  %v242 = vld [vmem:[%s1 + $0x1e0] sm:$0xf]
  %v243 = vld [vmem:[%s1 + $0x1e4] sm:$0xf]
  %v244 = vld [vmem:[%s1 + $0x1e8] sm:$0xf]
  %v245 = vld [vmem:[%s1 + $0x1ec] sm:$0xf]
  %v246 = vld [vmem:[%s1 + $0x1f0] sm:$0xf]
  %v247 = vld [vmem:[%s1 + $0x1f4] sm:$0xf]
  %v248 = vld [vmem:[%s1 + $0x1f8] sm:$0xf]
  %v249 = vld [vmem:[%s1 + $0x1fc] sm:$0xf]
  %v250 = vld [vmem:[#allocation2] sm:$0xff]
  %v251 = vld [vmem:[#allocation2 + $0x8] sm:$0xff]
  %v252 = vld [vmem:[#allocation2 + $0x10] sm:$0xff]
  %v253 = vld [vmem:[#allocation2 + $0x18] sm:$0xff]
  %v254 = vld [vmem:[#allocation2 + $0x20] sm:$0xff]
  %v255 = vld [vmem:[#allocation2 + $0x28] sm:$0xff]
  %v256 = vld [vmem:[#allocation2 + $0x30] sm:$0xff]
  %v257 = vld [vmem:[#allocation2 + $0x38] sm:$0xff]
  %v258 = vld [vmem:[#allocation2 + $0x40] sm:$0xff]
  %v259 = vld [vmem:[#allocation2 + $0x48] sm:$0xff]
  %v260 = vld [vmem:[#allocation2 + $0x50] sm:$0xff]
  %v261 = vld [vmem:[#allocation2 + $0x58] sm:$0xff]
  %v262 = vld [vmem:[#allocation2 + $0x60] sm:$0xff]
  %v263 = vld [vmem:[#allocation2 + $0x68] sm:$0xff]
  %v264 = vld [vmem:[#allocation2 + $0x70] sm:$0xff]
  %v265 = vld [vmem:[#allocation2 + $0x78] sm:$0xff]
  %v266 = vpack.c.bf16 %v250, %v250
  %v267 = vpack.c.bf16 %v251, %v251
  %v268 = vpack.c.bf16 %v252, %v252
  %v269 = vpack.c.bf16 %v253, %v253
  %v270 = vpack.c.bf16 %v254, %v254
  %v271 = vpack.c.bf16 %v255, %v255
  %v272 = vpack.c.bf16 %v256, %v256
  %v273 = vpack.c.bf16 %v257, %v257
  %v274 = vpack.c.bf16 %v258, %v258
  %v275 = vpack.c.bf16 %v259, %v259
  %v276 = vpack.c.bf16 %v260, %v260
  %v277 = vpack.c.bf16 %v261, %v261
  %v278 = vpack.c.bf16 %v262, %v262
  %v279 = vpack.c.bf16 %v263, %v263
  %v280 = vpack.c.bf16 %v264, %v264
  %v281 = vpack.c.bf16 %v265, %v265
  %v410 = vunpack.c.l.b16 %v122
  %v411 = vunpack.c.l.b16 %v123
  %v412 = vunpack.c.l.b16 %v124
  %v413 = vunpack.c.l.b16 %v125
  %v414 = vunpack.c.l.b16 %v126
  %v415 = vunpack.c.l.b16 %v127
  %v416 = vunpack.c.l.b16 %v128
  %v417 = vunpack.c.l.b16 %v129
  %v418 = vunpack.c.l.b16 %v130
  %v419 = vunpack.c.l.b16 %v131
  %v420 = vunpack.c.l.b16 %v132
  %v421 = vunpack.c.l.b16 %v133
  %v422 = vunpack.c.l.b16 %v134
  %v423 = vunpack.c.l.b16 %v135
  %v424 = vunpack.c.l.b16 %v136
  %v425 = vunpack.c.l.b16 %v137
  %v426 = vunpack.c.l.b16 %v138
  %v427 = vunpack.c.l.b16 %v139
  %v428 = vunpack.c.l.b16 %v140
  %v429 = vunpack.c.l.b16 %v141
  %v430 = vunpack.c.l.b16 %v142
  %v431 = vunpack.c.l.b16 %v143
  %v432 = vunpack.c.l.b16 %v144
  %v433 = vunpack.c.l.b16 %v145
  %v434 = vunpack.c.l.b16 %v146
  %v435 = vunpack.c.l.b16 %v147
  %v436 = vunpack.c.l.b16 %v148
  %v437 = vunpack.c.l.b16 %v149
  %v438 = vunpack.c.l.b16 %v150
  %v439 = vunpack.c.l.b16 %v151
  %v440 = vunpack.c.l.b16 %v152
  %v441 = vunpack.c.l.b16 %v153
  %v442 = vunpack.c.l.b16 %v154
  %v443 = vunpack.c.l.b16 %v155
  %v444 = vunpack.c.l.b16 %v156
  %v445 = vunpack.c.l.b16 %v157
  %v446 = vunpack.c.l.b16 %v158
  %v447 = vunpack.c.l.b16 %v159
  %v448 = vunpack.c.l.b16 %v160
  %v449 = vunpack.c.l.b16 %v161
  %v450 = vunpack.c.l.b16 %v162
  %v451 = vunpack.c.l.b16 %v163
  %v452 = vunpack.c.l.b16 %v164
  %v453 = vunpack.c.l.b16 %v165
  %v454 = vunpack.c.l.b16 %v166
  %v455 = vunpack.c.l.b16 %v167
  %v456 = vunpack.c.l.b16 %v168
  %v457 = vunpack.c.l.b16 %v169
  %v458 = vunpack.c.l.b16 %v170
  %v459 = vunpack.c.l.b16 %v171
  %v460 = vunpack.c.l.b16 %v172
  %v461 = vunpack.c.l.b16 %v173
  %v462 = vunpack.c.l.b16 %v174
  %v463 = vunpack.c.l.b16 %v175
  %v464 = vunpack.c.l.b16 %v176
  %v465 = vunpack.c.l.b16 %v177
  %v466 = vunpack.c.l.b16 %v178
  %v467 = vunpack.c.l.b16 %v179
  %v468 = vunpack.c.l.b16 %v180
  %v469 = vunpack.c.l.b16 %v181
  %v470 = vunpack.c.l.b16 %v182
  %v471 = vunpack.c.l.b16 %v183
  %v472 = vunpack.c.l.b16 %v184
  %v473 = vunpack.c.l.b16 %v185
  %v474 = vunpack.c.l.b16 %v186
  %v475 = vunpack.c.l.b16 %v187
  %v476 = vunpack.c.l.b16 %v188
  %v477 = vunpack.c.l.b16 %v189
  %v478 = vunpack.c.l.b16 %v190
  %v479 = vunpack.c.l.b16 %v191
  %v480 = vunpack.c.l.b16 %v192
  %v481 = vunpack.c.l.b16 %v193
  %v482 = vunpack.c.l.b16 %v194
  %v483 = vunpack.c.l.b16 %v195
  %v484 = vunpack.c.l.b16 %v196
  %v485 = vunpack.c.l.b16 %v197
  %v486 = vunpack.c.l.b16 %v198
  %v487 = vunpack.c.l.b16 %v199
  %v488 = vunpack.c.l.b16 %v200
  %v489 = vunpack.c.l.b16 %v201
  %v490 = vunpack.c.l.b16 %v202
  %v491 = vunpack.c.l.b16 %v203
  %v492 = vunpack.c.l.b16 %v204
  %v493 = vunpack.c.l.b16 %v205
  %v494 = vunpack.c.l.b16 %v206
  %v495 = vunpack.c.l.b16 %v207
  %v496 = vunpack.c.l.b16 %v208
  %v497 = vunpack.c.l.b16 %v209
  %v498 = vunpack.c.l.b16 %v210
  %v499 = vunpack.c.l.b16 %v211
  %v500 = vunpack.c.l.b16 %v212
  %v501 = vunpack.c.l.b16 %v213
  %v502 = vunpack.c.l.b16 %v214
  %v503 = vunpack.c.l.b16 %v215
  %v504 = vunpack.c.l.b16 %v216
  %v505 = vunpack.c.l.b16 %v217
  %v506 = vunpack.c.l.b16 %v218
  %v507 = vunpack.c.l.b16 %v219
  %v508 = vunpack.c.l.b16 %v220
  %v509 = vunpack.c.l.b16 %v221
  %v510 = vunpack.c.l.b16 %v222
  %v511 = vunpack.c.l.b16 %v223
  %v512 = vunpack.c.l.b16 %v224
  %v513 = vunpack.c.l.b16 %v225
  %v514 = vunpack.c.l.b16 %v226
  %v515 = vunpack.c.l.b16 %v227
  %v516 = vunpack.c.l.b16 %v228
  %v517 = vunpack.c.l.b16 %v229
  %v518 = vunpack.c.l.b16 %v230
  %v519 = vunpack.c.l.b16 %v231
  %v520 = vunpack.c.l.b16 %v232
  %v521 = vunpack.c.l.b16 %v233
  %v522 = vunpack.c.l.b16 %v234
  %v523 = vunpack.c.l.b16 %v235
  %v524 = vunpack.c.l.b16 %v236
  %v525 = vunpack.c.l.b16 %v237
  %v526 = vunpack.c.l.b16 %v238
  %v527 = vunpack.c.l.b16 %v239
  %v528 = vunpack.c.l.b16 %v240
  %v529 = vunpack.c.l.b16 %v241
  %v530 = vunpack.c.l.b16 %v242
  %v531 = vunpack.c.l.b16 %v243
  %v532 = vunpack.c.l.b16 %v244
  %v533 = vunpack.c.l.b16 %v245
  %v534 = vunpack.c.l.b16 %v246
  %v535 = vunpack.c.l.b16 %v247
  %v536 = vunpack.c.l.b16 %v248
  %v537 = vunpack.c.l.b16 %v249
  %v538 = vpack.c.b16 %v411, %v410
  %v539 = vpack.c.b16 %v413, %v412
  %v540 = vpack.c.b16 %v415, %v414
  %v541 = vpack.c.b16 %v417, %v416
  %v542 = vpack.c.b16 %v419, %v418
  %v543 = vpack.c.b16 %v421, %v420
  %v544 = vpack.c.b16 %v423, %v422
  %v545 = vpack.c.b16 %v425, %v424
  %v546 = vpack.c.b16 %v427, %v426
  %v547 = vpack.c.b16 %v429, %v428
  %v548 = vpack.c.b16 %v431, %v430
  %v549 = vpack.c.b16 %v433, %v432
  %v550 = vpack.c.b16 %v435, %v434
  %v551 = vpack.c.b16 %v437, %v436
  %v552 = vpack.c.b16 %v439, %v438
  %v553 = vpack.c.b16 %v441, %v440
  %v554 = vpack.c.b16 %v443, %v442
  %v555 = vpack.c.b16 %v445, %v444
  %v556 = vpack.c.b16 %v447, %v446
  %v557 = vpack.c.b16 %v449, %v448
  %v558 = vpack.c.b16 %v451, %v450
  %v559 = vpack.c.b16 %v453, %v452
  %v560 = vpack.c.b16 %v455, %v454
  %v561 = vpack.c.b16 %v457, %v456
  %v562 = vpack.c.b16 %v459, %v458
  %v563 = vpack.c.b16 %v461, %v460
  %v564 = vpack.c.b16 %v463, %v462
  %v565 = vpack.c.b16 %v465, %v464
  %v566 = vpack.c.b16 %v467, %v466
  %v567 = vpack.c.b16 %v469, %v468
  %v568 = vpack.c.b16 %v471, %v470
  %v569 = vpack.c.b16 %v473, %v472
  %v570 = vpack.c.b16 %v475, %v474
  %v571 = vpack.c.b16 %v477, %v476
  %v572 = vpack.c.b16 %v479, %v478
  %v573 = vpack.c.b16 %v481, %v480
  %v574 = vpack.c.b16 %v483, %v482
  %v575 = vpack.c.b16 %v485, %v484
  %v576 = vpack.c.b16 %v487, %v486
  %v577 = vpack.c.b16 %v489, %v488
  %v578 = vpack.c.b16 %v491, %v490
  %v579 = vpack.c.b16 %v493, %v492
  %v580 = vpack.c.b16 %v495, %v494
  %v581 = vpack.c.b16 %v497, %v496
  %v582 = vpack.c.b16 %v499, %v498
  %v583 = vpack.c.b16 %v501, %v500
  %v584 = vpack.c.b16 %v503, %v502
  %v585 = vpack.c.b16 %v505, %v504
  %v586 = vpack.c.b16 %v507, %v506
  %v587 = vpack.c.b16 %v509, %v508
  %v588 = vpack.c.b16 %v511, %v510
  %v589 = vpack.c.b16 %v513, %v512
  %v590 = vpack.c.b16 %v515, %v514
  %v591 = vpack.c.b16 %v517, %v516
  %v592 = vpack.c.b16 %v519, %v518
  %v593 = vpack.c.b16 %v521, %v520
  %v594 = vpack.c.b16 %v523, %v522
  %v595 = vpack.c.b16 %v525, %v524
  %v596 = vpack.c.b16 %v527, %v526
  %v597 = vpack.c.b16 %v529, %v528
  %v598 = vpack.c.b16 %v531, %v530
  %v599 = vpack.c.b16 %v533, %v532
  %v600 = vpack.c.b16 %v535, %v534
  %v601 = vpack.c.b16 %v537, %v536
  %vm602 = vcmask 64512
  %v604 = vsel %vm602, %v538, 0
  %v607 = vsel %vm602, %v539, 0
  %v610 = vsel %vm602, %v540, 0
  %v613 = vsel %vm602, %v541, 0
  %v616 = vsel %vm602, %v542, 0
  %v619 = vsel %vm602, %v543, 0
  %v622 = vsel %vm602, %v544, 0
  %v625 = vsel %vm602, %v545, 0
  %v628 = vsel %vm602, %v546, 0
  %v631 = vsel %vm602, %v547, 0
  %v634 = vsel %vm602, %v548, 0
  %v637 = vsel %vm602, %v549, 0
  %v640 = vsel %vm602, %v550, 0
  %v643 = vsel %vm602, %v551, 0
  %v646 = vsel %vm602, %v552, 0
  %v649 = vsel %vm602, %v553, 0
  %v652 = vsel %vm602, %v554, 0
  %v655 = vsel %vm602, %v555, 0
  %v658 = vsel %vm602, %v556, 0
  %v661 = vsel %vm602, %v557, 0
  %v664 = vsel %vm602, %v558, 0
  %v667 = vsel %vm602, %v559, 0
  %v670 = vsel %vm602, %v560, 0
  %v673 = vsel %vm602, %v561, 0
  %v676 = vsel %vm602, %v562, 0
  %v679 = vsel %vm602, %v563, 0
  %v682 = vsel %vm602, %v564, 0
  %v685 = vsel %vm602, %v565, 0
  %v688 = vsel %vm602, %v566, 0
  %v691 = vsel %vm602, %v567, 0
  %v694 = vsel %vm602, %v568, 0
  %v697 = vsel %vm602, %v569, 0
  %v700 = vsel %vm602, %v570, 0
  %v703 = vsel %vm602, %v571, 0
  %v706 = vsel %vm602, %v572, 0
  %v709 = vsel %vm602, %v573, 0
  %v712 = vsel %vm602, %v574, 0
  %v715 = vsel %vm602, %v575, 0
  %v718 = vsel %vm602, %v576, 0
  %v721 = vsel %vm602, %v577, 0
  %v724 = vsel %vm602, %v578, 0
  %v727 = vsel %vm602, %v579, 0
  %v730 = vsel %vm602, %v580, 0
  %v733 = vsel %vm602, %v581, 0
  %v736 = vsel %vm602, %v582, 0
  %v739 = vsel %vm602, %v583, 0
  %v742 = vsel %vm602, %v584, 0
  %v745 = vsel %vm602, %v585, 0
  %v748 = vsel %vm602, %v586, 0
  %v751 = vsel %vm602, %v587, 0
  %v754 = vsel %vm602, %v588, 0
  %v757 = vsel %vm602, %v589, 0
  %v760 = vsel %vm602, %v590, 0
  %v763 = vsel %vm602, %v591, 0
  %v766 = vsel %vm602, %v592, 0
  %v769 = vsel %vm602, %v593, 0
  %v772 = vsel %vm602, %v594, 0
  %v775 = vsel %vm602, %v595, 0
  %v778 = vsel %vm602, %v596, 0
  %v781 = vsel %vm602, %v597, 0
  %v784 = vsel %vm602, %v598, 0
  %v787 = vsel %vm602, %v599, 0
  %v790 = vsel %vm602, %v600, 0
  %v793 = vsel %vm602, %v601, 0
  %vm795 = vcmask 1043456
  %v797 = vsel %vm795, %v266, 0
  %v800 = vsel %vm795, %v267, 0
  %v803 = vsel %vm795, %v268, 0
  %v806 = vsel %vm795, %v269, 0
  %v809 = vsel %vm795, %v270, 0
  %v812 = vsel %vm795, %v271, 0
  %v815 = vsel %vm795, %v272, 0
  %v818 = vsel %vm795, %v273, 0
  %v821 = vsel %vm795, %v274, 0
  %v824 = vsel %vm795, %v275, 0
  %v827 = vsel %vm795, %v276, 0
  %v830 = vsel %vm795, %v277, 0
  %v833 = vsel %vm795, %v278, 0
  %v836 = vsel %vm795, %v279, 0
  %v839 = vsel %vm795, %v280, 0
  %v842 = vsel %vm795, %v281, 0
  %844 = vmatprep.subr.bf16.mxu0 0
  %845 = vmatpush1.bf16.msra.mxu0 0
  %846 = vmatprep.subr.bf16.mxu0 0
  %847 = vmatpush1.bf16.msra.mxu0 0
  %848 = vmatprep.subr.bf16.mxu0 0
  %849 = vmatpush1.bf16.msra.mxu0 0
  %850 = vmatprep.subr.bf16.mxu0 0
  %851 = vmatpush1.bf16.msra.mxu0 0
  %852 = vmatprep.subr.bf16.mxu0 0
  %853 = vmatpush1.bf16.msra.mxu0 0
  %854 = vmatprep.subr.bf16.mxu0 0
  %855 = vmatpush1.bf16.msra.mxu0 0
  %856 = vmatprep.subr.bf16.mxu0 0
  %857 = vmatpush1.bf16.msra.mxu0 0
  %858 = vmatprep.subr.bf16.mxu0 %v800
  %859 = vmatpush1.bf16.msra.mxu0 %v797
  %860 = vmatprep.subr.bf16.mxu0 0
  %861 = vmatpush2.bf16.msra.mxu0 0
  %862 = vmatprep.subr.bf16.mxu0 0
  %863 = vmatpush2.bf16.msra.mxu0 0
  %864 = vmatprep.subr.bf16.mxu0 0
  %865 = vmatpush2.bf16.msra.mxu0 0
  %866 = vmatprep.subr.bf16.mxu0 0
  %867 = vmatpush2.bf16.msra.mxu0 0
  %868 = vmatprep.subr.bf16.mxu0 0
  %869 = vmatpush2.bf16.msra.mxu0 0
  %870 = vmatprep.subr.bf16.mxu0 0
  %871 = vmatpush2.bf16.msra.mxu0 0
  %872 = vmatprep.subr.bf16.mxu0 0
  %873 = vmatpush2.bf16.msra.mxu0 0
  %874 = vmatprep.subr.bf16.mxu0 0
  %875 = vmatpush2.bf16.msra.mxu0 0
  %876 = vmatprep.mubr.bf16.mxu0 0
  %877 = vmatmul.mubr.bf16.gmra.mxu0 %v604
  %v878 = vpop.f32.mrf.mxu0
  %v879 = vadd.f32 0.0, %v878
  %v880 = vpop.f32.mrf.mxu0
  %v881 = vadd.f32 0.0, %v880
  %v882 = vpop.f32.mrf.mxu0
  %v883 = vadd.f32 0.0, %v882
  %v884 = vpop.f32.mrf.mxu0
  %v885 = vadd.f32 0.0, %v884
  %886 = vmatprep.mubr.bf16.mxu0 0
  %887 = vmatmul.mubr.bf16.gmra.mxu0 %v607
  %v888 = vpop.f32.mrf.mxu0
  %v889 = vadd.f32 0.0, %v888
  %v890 = vpop.f32.mrf.mxu0
  %v891 = vadd.f32 0.0, %v890
  %v892 = vpop.f32.mrf.mxu0
  %v893 = vadd.f32 0.0, %v892
  %v894 = vpop.f32.mrf.mxu0
  %v895 = vadd.f32 0.0, %v894
  %896 = vmatprep.mubr.bf16.mxu0 0
  %897 = vmatmul.mubr.bf16.gmra.mxu0 %v610
  %v898 = vpop.f32.mrf.mxu0
  %v899 = vadd.f32 0.0, %v898
  %v900 = vpop.f32.mrf.mxu0
  %v901 = vadd.f32 0.0, %v900
  %v902 = vpop.f32.mrf.mxu0
  %v903 = vadd.f32 0.0, %v902
  %v904 = vpop.f32.mrf.mxu0
  %v905 = vadd.f32 0.0, %v904
  %906 = vmatprep.mubr.bf16.mxu0 0
  %907 = vmatmul.mubr.bf16.gmra.mxu0 %v613
  %v908 = vpop.f32.mrf.mxu0
  %v909 = vadd.f32 0.0, %v908
  %v910 = vpop.f32.mrf.mxu0
  %v911 = vadd.f32 0.0, %v910
  %v912 = vpop.f32.mrf.mxu0
  %v913 = vadd.f32 0.0, %v912
  %v914 = vpop.f32.mrf.mxu0
  %v915 = vadd.f32 0.0, %v914
  %916 = vmatprep.mubr.bf16.mxu0 0
  %917 = vmatmul.mubr.bf16.gmra.mxu0 %v616
  %v918 = vpop.f32.mrf.mxu0
  %v919 = vadd.f32 0.0, %v918
  %v920 = vpop.f32.mrf.mxu0
  %v921 = vadd.f32 0.0, %v920
  %v922 = vpop.f32.mrf.mxu0
  %v923 = vadd.f32 0.0, %v922
  %v924 = vpop.f32.mrf.mxu0
  %v925 = vadd.f32 0.0, %v924
  %926 = vmatprep.mubr.bf16.mxu0 0
  %927 = vmatmul.mubr.bf16.gmra.mxu0 %v619
  %v928 = vpop.f32.mrf.mxu0
  %v929 = vadd.f32 0.0, %v928
  %v930 = vpop.f32.mrf.mxu0
  %v931 = vadd.f32 0.0, %v930
  %v932 = vpop.f32.mrf.mxu0
  %v933 = vadd.f32 0.0, %v932
  %v934 = vpop.f32.mrf.mxu0
  %v935 = vadd.f32 0.0, %v934
  %936 = vmatprep.mubr.bf16.mxu0 0
  %937 = vmatmul.mubr.bf16.gmra.mxu0 %v622
  %v938 = vpop.f32.mrf.mxu0
  %v939 = vadd.f32 0.0, %v938
  %v940 = vpop.f32.mrf.mxu0
  %v941 = vadd.f32 0.0, %v940
  %v942 = vpop.f32.mrf.mxu0
  %v943 = vadd.f32 0.0, %v942
  %v944 = vpop.f32.mrf.mxu0
  %v945 = vadd.f32 0.0, %v944
  %946 = vmatprep.mubr.bf16.mxu0 0
  %947 = vmatmul.mubr.bf16.gmra.mxu0 %v625
  %v948 = vpop.f32.mrf.mxu0
  %v949 = vadd.f32 0.0, %v948
  %v950 = vpop.f32.mrf.mxu0
  %v951 = vadd.f32 0.0, %v950
  %v952 = vpop.f32.mrf.mxu0
  %v953 = vadd.f32 0.0, %v952
  %v954 = vpop.f32.mrf.mxu0
  %v955 = vadd.f32 0.0, %v954
  %956 = vmatprep.mubr.bf16.mxu0 0
  %957 = vmatmul.mubr.bf16.gmra.mxu0 %v628
  %v958 = vpop.f32.mrf.mxu0
  %v959 = vadd.f32 0.0, %v958
  %v960 = vpop.f32.mrf.mxu0
  %v961 = vadd.f32 0.0, %v960
  %v962 = vpop.f32.mrf.mxu0
  %v963 = vadd.f32 0.0, %v962
  %v964 = vpop.f32.mrf.mxu0
  %v965 = vadd.f32 0.0, %v964
  %966 = vmatprep.mubr.bf16.mxu0 0
  %967 = vmatmul.mubr.bf16.gmra.mxu0 %v631
  %v968 = vpop.f32.mrf.mxu0
  %v969 = vadd.f32 0.0, %v968
  %v970 = vpop.f32.mrf.mxu0
  %v971 = vadd.f32 0.0, %v970
  %v972 = vpop.f32.mrf.mxu0
  %v973 = vadd.f32 0.0, %v972
  %v974 = vpop.f32.mrf.mxu0
  %v975 = vadd.f32 0.0, %v974
  %976 = vmatprep.mubr.bf16.mxu0 0
  %977 = vmatmul.mubr.bf16.gmra.mxu0 %v634
  %v978 = vpop.f32.mrf.mxu0
  %v979 = vadd.f32 0.0, %v978
  %v980 = vpop.f32.mrf.mxu0
  %v981 = vadd.f32 0.0, %v980
  %v982 = vpop.f32.mrf.mxu0
  %v983 = vadd.f32 0.0, %v982
  %v984 = vpop.f32.mrf.mxu0
  %v985 = vadd.f32 0.0, %v984
  %986 = vmatprep.mubr.bf16.mxu0 0
  %987 = vmatmul.mubr.bf16.gmra.mxu0 %v637
  %v988 = vpop.f32.mrf.mxu0
  %v989 = vadd.f32 0.0, %v988
  %v990 = vpop.f32.mrf.mxu0
  %v991 = vadd.f32 0.0, %v990
  %v992 = vpop.f32.mrf.mxu0
  %v993 = vadd.f32 0.0, %v992
  %v994 = vpop.f32.mrf.mxu0
  %v995 = vadd.f32 0.0, %v994
  %996 = vmatprep.mubr.bf16.mxu0 0
  %997 = vmatmul.mubr.bf16.gmra.mxu0 %v640
  %v998 = vpop.f32.mrf.mxu0
  %v999 = vadd.f32 0.0, %v998
  %v1000 = vpop.f32.mrf.mxu0
  %v1001 = vadd.f32 0.0, %v1000
  %v1002 = vpop.f32.mrf.mxu0
  %v1003 = vadd.f32 0.0, %v1002
  %v1004 = vpop.f32.mrf.mxu0
  %v1005 = vadd.f32 0.0, %v1004
  %1006 = vmatprep.mubr.bf16.mxu0 0
  %1007 = vmatmul.mubr.bf16.gmra.mxu0 %v643
  %v1008 = vpop.f32.mrf.mxu0
  %v1009 = vadd.f32 0.0, %v1008
  %v1010 = vpop.f32.mrf.mxu0
  %v1011 = vadd.f32 0.0, %v1010
  %v1012 = vpop.f32.mrf.mxu0
  %v1013 = vadd.f32 0.0, %v1012
  %v1014 = vpop.f32.mrf.mxu0
  %v1015 = vadd.f32 0.0, %v1014
  %1016 = vmatprep.mubr.bf16.mxu0 0
  %1017 = vmatmul.mubr.bf16.gmra.mxu0 %v646
  %v1018 = vpop.f32.mrf.mxu0
  %v1019 = vadd.f32 0.0, %v1018
  %v1020 = vpop.f32.mrf.mxu0
  %v1021 = vadd.f32 0.0, %v1020
  %v1022 = vpop.f32.mrf.mxu0
  %v1023 = vadd.f32 0.0, %v1022
  %v1024 = vpop.f32.mrf.mxu0
  %v1025 = vadd.f32 0.0, %v1024
  %1026 = vmatprep.mubr.bf16.mxu0 0
  %1027 = vmatmul.mubr.bf16.gmra.mxu0 %v649
  %v1028 = vpop.f32.mrf.mxu0
  %v1029 = vadd.f32 0.0, %v1028
  %v1030 = vpop.f32.mrf.mxu0
  %v1031 = vadd.f32 0.0, %v1030
  %v1032 = vpop.f32.mrf.mxu0
  %v1033 = vadd.f32 0.0, %v1032
  %v1034 = vpop.f32.mrf.mxu0
  %v1035 = vadd.f32 0.0, %v1034
  %1036 = vmatprep.mubr.bf16.mxu0 0
  %1037 = vmatmul.mubr.bf16.gmra.mxu0 %v652
  %v1038 = vpop.f32.mrf.mxu0
  %v1039 = vadd.f32 0.0, %v1038
  %v1040 = vpop.f32.mrf.mxu0
  %v1041 = vadd.f32 0.0, %v1040
  %v1042 = vpop.f32.mrf.mxu0
  %v1043 = vadd.f32 0.0, %v1042
  %v1044 = vpop.f32.mrf.mxu0
  %v1045 = vadd.f32 0.0, %v1044
  %1046 = vmatprep.mubr.bf16.mxu0 0
  %1047 = vmatmul.mubr.bf16.gmra.mxu0 %v655
  %v1048 = vpop.f32.mrf.mxu0
  %v1049 = vadd.f32 0.0, %v1048
  %v1050 = vpop.f32.mrf.mxu0
  %v1051 = vadd.f32 0.0, %v1050
  %v1052 = vpop.f32.mrf.mxu0
  %v1053 = vadd.f32 0.0, %v1052
  %v1054 = vpop.f32.mrf.mxu0
  %v1055 = vadd.f32 0.0, %v1054
  %1056 = vmatprep.mubr.bf16.mxu0 0
  %1057 = vmatmul.mubr.bf16.gmra.mxu0 %v658
  %v1058 = vpop.f32.mrf.mxu0
  %v1059 = vadd.f32 0.0, %v1058
  %v1060 = vpop.f32.mrf.mxu0
  %v1061 = vadd.f32 0.0, %v1060
  %v1062 = vpop.f32.mrf.mxu0
  %v1063 = vadd.f32 0.0, %v1062
  %v1064 = vpop.f32.mrf.mxu0
  %v1065 = vadd.f32 0.0, %v1064
  %1066 = vmatprep.mubr.bf16.mxu0 0
  %1067 = vmatmul.mubr.bf16.gmra.mxu0 %v661
  %v1068 = vpop.f32.mrf.mxu0
  %v1069 = vadd.f32 0.0, %v1068
  %v1070 = vpop.f32.mrf.mxu0
  %v1071 = vadd.f32 0.0, %v1070
  %v1072 = vpop.f32.mrf.mxu0
  %v1073 = vadd.f32 0.0, %v1072
  %v1074 = vpop.f32.mrf.mxu0
  %v1075 = vadd.f32 0.0, %v1074
  %1076 = vmatprep.mubr.bf16.mxu0 0
  %1077 = vmatmul.mubr.bf16.gmra.mxu0 %v664
  %v1078 = vpop.f32.mrf.mxu0
  %v1079 = vadd.f32 0.0, %v1078
  %v1080 = vpop.f32.mrf.mxu0
  %v1081 = vadd.f32 0.0, %v1080
  %v1082 = vpop.f32.mrf.mxu0
  %v1083 = vadd.f32 0.0, %v1082
  %v1084 = vpop.f32.mrf.mxu0
  %v1085 = vadd.f32 0.0, %v1084
  %1086 = vmatprep.mubr.bf16.mxu0 0
  %1087 = vmatmul.mubr.bf16.gmra.mxu0 %v667
  %v1088 = vpop.f32.mrf.mxu0
  %v1089 = vadd.f32 0.0, %v1088
  %v1090 = vpop.f32.mrf.mxu0
  %v1091 = vadd.f32 0.0, %v1090
  %v1092 = vpop.f32.mrf.mxu0
  %v1093 = vadd.f32 0.0, %v1092
  %v1094 = vpop.f32.mrf.mxu0
  %v1095 = vadd.f32 0.0, %v1094
  %1096 = vmatprep.mubr.bf16.mxu0 0
  %1097 = vmatmul.mubr.bf16.gmra.mxu0 %v670
  %v1098 = vpop.f32.mrf.mxu0
  %v1099 = vadd.f32 0.0, %v1098
  %v1100 = vpop.f32.mrf.mxu0
  %v1101 = vadd.f32 0.0, %v1100
  %v1102 = vpop.f32.mrf.mxu0
  %v1103 = vadd.f32 0.0, %v1102
  %v1104 = vpop.f32.mrf.mxu0
  %v1105 = vadd.f32 0.0, %v1104
  %1106 = vmatprep.mubr.bf16.mxu0 0
  %1107 = vmatmul.mubr.bf16.gmra.mxu0 %v673
  %v1108 = vpop.f32.mrf.mxu0
  %v1109 = vadd.f32 0.0, %v1108
  %v1110 = vpop.f32.mrf.mxu0
  %v1111 = vadd.f32 0.0, %v1110
  %v1112 = vpop.f32.mrf.mxu0
  %v1113 = vadd.f32 0.0, %v1112
  %v1114 = vpop.f32.mrf.mxu0
  %v1115 = vadd.f32 0.0, %v1114
  %1116 = vmatprep.mubr.bf16.mxu0 0
  %1117 = vmatmul.mubr.bf16.gmra.mxu0 %v676
  %v1118 = vpop.f32.mrf.mxu0
  %v1119 = vadd.f32 0.0, %v1118
  %v1120 = vpop.f32.mrf.mxu0
  %v1121 = vadd.f32 0.0, %v1120
  %v1122 = vpop.f32.mrf.mxu0
  %v1123 = vadd.f32 0.0, %v1122
  %v1124 = vpop.f32.mrf.mxu0
  %v1125 = vadd.f32 0.0, %v1124
  %1126 = vmatprep.mubr.bf16.mxu0 0
  %1127 = vmatmul.mubr.bf16.gmra.mxu0 %v679
  %v1128 = vpop.f32.mrf.mxu0
  %v1129 = vadd.f32 0.0, %v1128
  %v1130 = vpop.f32.mrf.mxu0
  %v1131 = vadd.f32 0.0, %v1130
  %v1132 = vpop.f32.mrf.mxu0
  %v1133 = vadd.f32 0.0, %v1132
  %v1134 = vpop.f32.mrf.mxu0
  %v1135 = vadd.f32 0.0, %v1134
  %1136 = vmatprep.mubr.bf16.mxu0 0
  %1137 = vmatmul.mubr.bf16.gmra.mxu0 %v682
  %v1138 = vpop.f32.mrf.mxu0
  %v1139 = vadd.f32 0.0, %v1138
  %v1140 = vpop.f32.mrf.mxu0
  %v1141 = vadd.f32 0.0, %v1140
  %v1142 = vpop.f32.mrf.mxu0
  %v1143 = vadd.f32 0.0, %v1142
  %v1144 = vpop.f32.mrf.mxu0
  %v1145 = vadd.f32 0.0, %v1144
  %1146 = vmatprep.mubr.bf16.mxu0 0
  %1147 = vmatmul.mubr.bf16.gmra.mxu0 %v685
  %v1148 = vpop.f32.mrf.mxu0
  %v1149 = vadd.f32 0.0, %v1148
  %v1150 = vpop.f32.mrf.mxu0
  %v1151 = vadd.f32 0.0, %v1150
  %v1152 = vpop.f32.mrf.mxu0
  %v1153 = vadd.f32 0.0, %v1152
  %v1154 = vpop.f32.mrf.mxu0
  %v1155 = vadd.f32 0.0, %v1154
  %1156 = vmatprep.mubr.bf16.mxu0 0
  %1157 = vmatmul.mubr.bf16.gmra.mxu0 %v688
  %v1158 = vpop.f32.mrf.mxu0
  %v1159 = vadd.f32 0.0, %v1158
  %v1160 = vpop.f32.mrf.mxu0
  %v1161 = vadd.f32 0.0, %v1160
  %v1162 = vpop.f32.mrf.mxu0
  %v1163 = vadd.f32 0.0, %v1162
  %v1164 = vpop.f32.mrf.mxu0
  %v1165 = vadd.f32 0.0, %v1164
  %1166 = vmatprep.mubr.bf16.mxu0 0
  %1167 = vmatmul.mubr.bf16.gmra.mxu0 %v691
  %v1168 = vpop.f32.mrf.mxu0
  %v1169 = vadd.f32 0.0, %v1168
  %v1170 = vpop.f32.mrf.mxu0
  %v1171 = vadd.f32 0.0, %v1170
  %v1172 = vpop.f32.mrf.mxu0
  %v1173 = vadd.f32 0.0, %v1172
  %v1174 = vpop.f32.mrf.mxu0
  %v1175 = vadd.f32 0.0, %v1174
  %1176 = vmatprep.mubr.bf16.mxu0 0
  %1177 = vmatmul.mubr.bf16.gmra.mxu0 %v694
  %v1178 = vpop.f32.mrf.mxu0
  %v1179 = vadd.f32 0.0, %v1178
  %v1180 = vpop.f32.mrf.mxu0
  %v1181 = vadd.f32 0.0, %v1180
  %v1182 = vpop.f32.mrf.mxu0
  %v1183 = vadd.f32 0.0, %v1182
  %v1184 = vpop.f32.mrf.mxu0
  %v1185 = vadd.f32 0.0, %v1184
  %1186 = vmatprep.mubr.bf16.mxu0 0
  %1187 = vmatmul.mubr.bf16.gmra.mxu0 %v697
  %v1188 = vpop.f32.mrf.mxu0
  %v1189 = vadd.f32 0.0, %v1188
  %v1190 = vpop.f32.mrf.mxu0
  %v1191 = vadd.f32 0.0, %v1190
  %v1192 = vpop.f32.mrf.mxu0
  %v1193 = vadd.f32 0.0, %v1192
  %v1194 = vpop.f32.mrf.mxu0
  %v1195 = vadd.f32 0.0, %v1194
  %1196 = vmatprep.mubr.bf16.mxu0 0
  %1197 = vmatmul.mubr.bf16.gmra.mxu0 %v700
  %v1198 = vpop.f32.mrf.mxu0
  %v1199 = vadd.f32 0.0, %v1198
  %v1200 = vpop.f32.mrf.mxu0
  %v1201 = vadd.f32 0.0, %v1200
  %v1202 = vpop.f32.mrf.mxu0
  %v1203 = vadd.f32 0.0, %v1202
  %v1204 = vpop.f32.mrf.mxu0
  %v1205 = vadd.f32 0.0, %v1204
  %1206 = vmatprep.mubr.bf16.mxu0 0
  %1207 = vmatmul.mubr.bf16.gmra.mxu0 %v703
  %v1208 = vpop.f32.mrf.mxu0
  %v1209 = vadd.f32 0.0, %v1208
  %v1210 = vpop.f32.mrf.mxu0
  %v1211 = vadd.f32 0.0, %v1210
  %v1212 = vpop.f32.mrf.mxu0
  %v1213 = vadd.f32 0.0, %v1212
  %v1214 = vpop.f32.mrf.mxu0
  %v1215 = vadd.f32 0.0, %v1214
  %1216 = vmatprep.mubr.bf16.mxu0 0
  %1217 = vmatmul.mubr.bf16.gmra.mxu0 %v706
  %v1218 = vpop.f32.mrf.mxu0
  %v1219 = vadd.f32 0.0, %v1218
  %v1220 = vpop.f32.mrf.mxu0
  %v1221 = vadd.f32 0.0, %v1220
  %v1222 = vpop.f32.mrf.mxu0
  %v1223 = vadd.f32 0.0, %v1222
  %v1224 = vpop.f32.mrf.mxu0
  %v1225 = vadd.f32 0.0, %v1224
  %1226 = vmatprep.mubr.bf16.mxu0 0
  %1227 = vmatmul.mubr.bf16.gmra.mxu0 %v709
  %v1228 = vpop.f32.mrf.mxu0
  %v1229 = vadd.f32 0.0, %v1228
  %v1230 = vpop.f32.mrf.mxu0
  %v1231 = vadd.f32 0.0, %v1230
  %v1232 = vpop.f32.mrf.mxu0
  %v1233 = vadd.f32 0.0, %v1232
  %v1234 = vpop.f32.mrf.mxu0
  %v1235 = vadd.f32 0.0, %v1234
  %1236 = vmatprep.mubr.bf16.mxu0 0
  %1237 = vmatmul.mubr.bf16.gmra.mxu0 %v712
  %v1238 = vpop.f32.mrf.mxu0
  %v1239 = vadd.f32 0.0, %v1238
  %v1240 = vpop.f32.mrf.mxu0
  %v1241 = vadd.f32 0.0, %v1240
  %v1242 = vpop.f32.mrf.mxu0
  %v1243 = vadd.f32 0.0, %v1242
  %v1244 = vpop.f32.mrf.mxu0
  %v1245 = vadd.f32 0.0, %v1244
  %1246 = vmatprep.mubr.bf16.mxu0 0
  %1247 = vmatmul.mubr.bf16.gmra.mxu0 %v715
  %v1248 = vpop.f32.mrf.mxu0
  %v1249 = vadd.f32 0.0, %v1248
  %v1250 = vpop.f32.mrf.mxu0
  %v1251 = vadd.f32 0.0, %v1250
  %v1252 = vpop.f32.mrf.mxu0
  %v1253 = vadd.f32 0.0, %v1252
  %v1254 = vpop.f32.mrf.mxu0
  %v1255 = vadd.f32 0.0, %v1254
  %1256 = vmatprep.mubr.bf16.mxu0 0
  %1257 = vmatmul.mubr.bf16.gmra.mxu0 %v718
  %v1258 = vpop.f32.mrf.mxu0
  %v1259 = vadd.f32 0.0, %v1258
  %v1260 = vpop.f32.mrf.mxu0
  %v1261 = vadd.f32 0.0, %v1260
  %v1262 = vpop.f32.mrf.mxu0
  %v1263 = vadd.f32 0.0, %v1262
  %v1264 = vpop.f32.mrf.mxu0
  %v1265 = vadd.f32 0.0, %v1264
  %1266 = vmatprep.mubr.bf16.mxu0 0
  %1267 = vmatmul.mubr.bf16.gmra.mxu0 %v721
  %v1268 = vpop.f32.mrf.mxu0
  %v1269 = vadd.f32 0.0, %v1268
  %v1270 = vpop.f32.mrf.mxu0
  %v1271 = vadd.f32 0.0, %v1270
  %v1272 = vpop.f32.mrf.mxu0
  %v1273 = vadd.f32 0.0, %v1272
  %v1274 = vpop.f32.mrf.mxu0
  %v1275 = vadd.f32 0.0, %v1274
  %1276 = vmatprep.mubr.bf16.mxu0 0
  %1277 = vmatmul.mubr.bf16.gmra.mxu0 %v724
  %v1278 = vpop.f32.mrf.mxu0
  %v1279 = vadd.f32 0.0, %v1278
  %v1280 = vpop.f32.mrf.mxu0
  %v1281 = vadd.f32 0.0, %v1280
  %v1282 = vpop.f32.mrf.mxu0
  %v1283 = vadd.f32 0.0, %v1282
  %v1284 = vpop.f32.mrf.mxu0
  %v1285 = vadd.f32 0.0, %v1284
  %1286 = vmatprep.mubr.bf16.mxu0 0
  %1287 = vmatmul.mubr.bf16.gmra.mxu0 %v727
  %v1288 = vpop.f32.mrf.mxu0
  %v1289 = vadd.f32 0.0, %v1288
  %v1290 = vpop.f32.mrf.mxu0
  %v1291 = vadd.f32 0.0, %v1290
  %v1292 = vpop.f32.mrf.mxu0
  %v1293 = vadd.f32 0.0, %v1292
  %v1294 = vpop.f32.mrf.mxu0
  %v1295 = vadd.f32 0.0, %v1294
  %1296 = vmatprep.mubr.bf16.mxu0 0
  %1297 = vmatmul.mubr.bf16.gmra.mxu0 %v730
  %v1298 = vpop.f32.mrf.mxu0
  %v1299 = vadd.f32 0.0, %v1298
  %v1300 = vpop.f32.mrf.mxu0
  %v1301 = vadd.f32 0.0, %v1300
  %v1302 = vpop.f32.mrf.mxu0
  %v1303 = vadd.f32 0.0, %v1302
  %v1304 = vpop.f32.mrf.mxu0
  %v1305 = vadd.f32 0.0, %v1304
  %1306 = vmatprep.mubr.bf16.mxu0 0
  %1307 = vmatmul.mubr.bf16.gmra.mxu0 %v733
  %v1308 = vpop.f32.mrf.mxu0
  %v1309 = vadd.f32 0.0, %v1308
  %v1310 = vpop.f32.mrf.mxu0
  %v1311 = vadd.f32 0.0, %v1310
  %v1312 = vpop.f32.mrf.mxu0
  %v1313 = vadd.f32 0.0, %v1312
  %v1314 = vpop.f32.mrf.mxu0
  %v1315 = vadd.f32 0.0, %v1314
  %1316 = vmatprep.mubr.bf16.mxu0 0
  %1317 = vmatmul.mubr.bf16.gmra.mxu0 %v736
  %v1318 = vpop.f32.mrf.mxu0
  %v1319 = vadd.f32 0.0, %v1318
  %v1320 = vpop.f32.mrf.mxu0
  %v1321 = vadd.f32 0.0, %v1320
  %v1322 = vpop.f32.mrf.mxu0
  %v1323 = vadd.f32 0.0, %v1322
  %v1324 = vpop.f32.mrf.mxu0
  %v1325 = vadd.f32 0.0, %v1324
  %1326 = vmatprep.mubr.bf16.mxu0 0
  %1327 = vmatmul.mubr.bf16.gmra.mxu0 %v739
  %v1328 = vpop.f32.mrf.mxu0
  %v1329 = vadd.f32 0.0, %v1328
  %v1330 = vpop.f32.mrf.mxu0
  %v1331 = vadd.f32 0.0, %v1330
  %v1332 = vpop.f32.mrf.mxu0
  %v1333 = vadd.f32 0.0, %v1332
  %v1334 = vpop.f32.mrf.mxu0
  %v1335 = vadd.f32 0.0, %v1334
  %1336 = vmatprep.mubr.bf16.mxu0 0
  %1337 = vmatmul.mubr.bf16.gmra.mxu0 %v742
  %v1338 = vpop.f32.mrf.mxu0
  %v1339 = vadd.f32 0.0, %v1338
  %v1340 = vpop.f32.mrf.mxu0
  %v1341 = vadd.f32 0.0, %v1340
  %v1342 = vpop.f32.mrf.mxu0
  %v1343 = vadd.f32 0.0, %v1342
  %v1344 = vpop.f32.mrf.mxu0
  %v1345 = vadd.f32 0.0, %v1344
  %1346 = vmatprep.mubr.bf16.mxu0 0
  %1347 = vmatmul.mubr.bf16.gmra.mxu0 %v745
  %v1348 = vpop.f32.mrf.mxu0
  %v1349 = vadd.f32 0.0, %v1348
  %v1350 = vpop.f32.mrf.mxu0
  %v1351 = vadd.f32 0.0, %v1350
  %v1352 = vpop.f32.mrf.mxu0
  %v1353 = vadd.f32 0.0, %v1352
  %v1354 = vpop.f32.mrf.mxu0
  %v1355 = vadd.f32 0.0, %v1354
  %1356 = vmatprep.mubr.bf16.mxu0 0
  %1357 = vmatmul.mubr.bf16.gmra.mxu0 %v748
  %v1358 = vpop.f32.mrf.mxu0
  %v1359 = vadd.f32 0.0, %v1358
  %v1360 = vpop.f32.mrf.mxu0
  %v1361 = vadd.f32 0.0, %v1360
  %v1362 = vpop.f32.mrf.mxu0
  %v1363 = vadd.f32 0.0, %v1362
  %v1364 = vpop.f32.mrf.mxu0
  %v1365 = vadd.f32 0.0, %v1364
  %1366 = vmatprep.mubr.bf16.mxu0 0
  %1367 = vmatmul.mubr.bf16.gmra.mxu0 %v751
  %v1368 = vpop.f32.mrf.mxu0
  %v1369 = vadd.f32 0.0, %v1368
  %v1370 = vpop.f32.mrf.mxu0
  %v1371 = vadd.f32 0.0, %v1370
  %v1372 = vpop.f32.mrf.mxu0
  %v1373 = vadd.f32 0.0, %v1372
  %v1374 = vpop.f32.mrf.mxu0
  %v1375 = vadd.f32 0.0, %v1374
  %1376 = vmatprep.mubr.bf16.mxu0 0
  %1377 = vmatmul.mubr.bf16.gmra.mxu0 %v754
  %v1378 = vpop.f32.mrf.mxu0
  %v1379 = vadd.f32 0.0, %v1378
  %v1380 = vpop.f32.mrf.mxu0
  %v1381 = vadd.f32 0.0, %v1380
  %v1382 = vpop.f32.mrf.mxu0
  %v1383 = vadd.f32 0.0, %v1382
  %v1384 = vpop.f32.mrf.mxu0
  %v1385 = vadd.f32 0.0, %v1384
  %1386 = vmatprep.mubr.bf16.mxu0 0
  %1387 = vmatmul.mubr.bf16.gmra.mxu0 %v757
  %v1388 = vpop.f32.mrf.mxu0
  %v1389 = vadd.f32 0.0, %v1388
  %v1390 = vpop.f32.mrf.mxu0
  %v1391 = vadd.f32 0.0, %v1390
  %v1392 = vpop.f32.mrf.mxu0
  %v1393 = vadd.f32 0.0, %v1392
  %v1394 = vpop.f32.mrf.mxu0
  %v1395 = vadd.f32 0.0, %v1394
  %1396 = vmatprep.mubr.bf16.mxu0 0
  %1397 = vmatmul.mubr.bf16.gmra.mxu0 %v760
  %v1398 = vpop.f32.mrf.mxu0
  %v1399 = vadd.f32 0.0, %v1398
  %v1400 = vpop.f32.mrf.mxu0
  %v1401 = vadd.f32 0.0, %v1400
  %v1402 = vpop.f32.mrf.mxu0
  %v1403 = vadd.f32 0.0, %v1402
  %v1404 = vpop.f32.mrf.mxu0
  %v1405 = vadd.f32 0.0, %v1404
  %1406 = vmatprep.mubr.bf16.mxu0 0
  %1407 = vmatmul.mubr.bf16.gmra.mxu0 %v763
  %v1408 = vpop.f32.mrf.mxu0
  %v1409 = vadd.f32 0.0, %v1408
  %v1410 = vpop.f32.mrf.mxu0
  %v1411 = vadd.f32 0.0, %v1410
  %v1412 = vpop.f32.mrf.mxu0
  %v1413 = vadd.f32 0.0, %v1412
  %v1414 = vpop.f32.mrf.mxu0
  %v1415 = vadd.f32 0.0, %v1414
  %1416 = vmatprep.mubr.bf16.mxu0 0
  %1417 = vmatmul.mubr.bf16.gmra.mxu0 %v766
  %v1418 = vpop.f32.mrf.mxu0
  %v1419 = vadd.f32 0.0, %v1418
  %v1420 = vpop.f32.mrf.mxu0
  %v1421 = vadd.f32 0.0, %v1420
  %v1422 = vpop.f32.mrf.mxu0
  %v1423 = vadd.f32 0.0, %v1422
  %v1424 = vpop.f32.mrf.mxu0
  %v1425 = vadd.f32 0.0, %v1424
  %1426 = vmatprep.mubr.bf16.mxu0 0
  %1427 = vmatmul.mubr.bf16.gmra.mxu0 %v769
  %v1428 = vpop.f32.mrf.mxu0
  %v1429 = vadd.f32 0.0, %v1428
  %v1430 = vpop.f32.mrf.mxu0
  %v1431 = vadd.f32 0.0, %v1430
  %v1432 = vpop.f32.mrf.mxu0
  %v1433 = vadd.f32 0.0, %v1432
  %v1434 = vpop.f32.mrf.mxu0
  %v1435 = vadd.f32 0.0, %v1434
  %1436 = vmatprep.mubr.bf16.mxu0 0
  %1437 = vmatmul.mubr.bf16.gmra.mxu0 %v772
  %v1438 = vpop.f32.mrf.mxu0
  %v1439 = vadd.f32 0.0, %v1438
  %v1440 = vpop.f32.mrf.mxu0
  %v1441 = vadd.f32 0.0, %v1440
  %v1442 = vpop.f32.mrf.mxu0
  %v1443 = vadd.f32 0.0, %v1442
  %v1444 = vpop.f32.mrf.mxu0
  %v1445 = vadd.f32 0.0, %v1444
  %1446 = vmatprep.mubr.bf16.mxu0 0
  %1447 = vmatmul.mubr.bf16.gmra.mxu0 %v775
  %v1448 = vpop.f32.mrf.mxu0
  %v1449 = vadd.f32 0.0, %v1448
  %v1450 = vpop.f32.mrf.mxu0
  %v1451 = vadd.f32 0.0, %v1450
  %v1452 = vpop.f32.mrf.mxu0
  %v1453 = vadd.f32 0.0, %v1452
  %v1454 = vpop.f32.mrf.mxu0
  %v1455 = vadd.f32 0.0, %v1454
  %1456 = vmatprep.mubr.bf16.mxu0 0
  %1457 = vmatmul.mubr.bf16.gmra.mxu0 %v778
  %v1458 = vpop.f32.mrf.mxu0
  %v1459 = vadd.f32 0.0, %v1458
  %v1460 = vpop.f32.mrf.mxu0
  %v1461 = vadd.f32 0.0, %v1460
  %v1462 = vpop.f32.mrf.mxu0
  %v1463 = vadd.f32 0.0, %v1462
  %v1464 = vpop.f32.mrf.mxu0
  %v1465 = vadd.f32 0.0, %v1464
  %1466 = vmatprep.mubr.bf16.mxu0 0
  %1467 = vmatmul.mubr.bf16.gmra.mxu0 %v781
  %v1468 = vpop.f32.mrf.mxu0
  %v1469 = vadd.f32 0.0, %v1468
  %v1470 = vpop.f32.mrf.mxu0
  %v1471 = vadd.f32 0.0, %v1470
  %v1472 = vpop.f32.mrf.mxu0
  %v1473 = vadd.f32 0.0, %v1472
  %v1474 = vpop.f32.mrf.mxu0
  %v1475 = vadd.f32 0.0, %v1474
  %1476 = vmatprep.mubr.bf16.mxu0 0
  %1477 = vmatmul.mubr.bf16.gmra.mxu0 %v784
  %v1478 = vpop.f32.mrf.mxu0
  %v1479 = vadd.f32 0.0, %v1478
  %v1480 = vpop.f32.mrf.mxu0
  %v1481 = vadd.f32 0.0, %v1480
  %v1482 = vpop.f32.mrf.mxu0
  %v1483 = vadd.f32 0.0, %v1482
  %v1484 = vpop.f32.mrf.mxu0
  %v1485 = vadd.f32 0.0, %v1484
  %1486 = vmatprep.mubr.bf16.mxu0 0
  %1487 = vmatmul.mubr.bf16.gmra.mxu0 %v787
  %v1488 = vpop.f32.mrf.mxu0
  %v1489 = vadd.f32 0.0, %v1488
  %v1490 = vpop.f32.mrf.mxu0
  %v1491 = vadd.f32 0.0, %v1490
  %v1492 = vpop.f32.mrf.mxu0
  %v1493 = vadd.f32 0.0, %v1492
  %v1494 = vpop.f32.mrf.mxu0
  %v1495 = vadd.f32 0.0, %v1494
  %1496 = vmatprep.mubr.bf16.mxu0 0
  %1497 = vmatmul.mubr.bf16.gmra.mxu0 %v790
  %v1498 = vpop.f32.mrf.mxu0
  %v1499 = vadd.f32 0.0, %v1498
  %v1500 = vpop.f32.mrf.mxu0
  %v1501 = vadd.f32 0.0, %v1500
  %v1502 = vpop.f32.mrf.mxu0
  %v1503 = vadd.f32 0.0, %v1502
  %v1504 = vpop.f32.mrf.mxu0
  %v1505 = vadd.f32 0.0, %v1504
  %1506 = vmatprep.mubr.bf16.mxu0 0
  %1507 = vmatmul.mubr.bf16.gmra.mxu0 %v793
  %v1508 = vpop.f32.mrf.mxu0
  %v1509 = vadd.f32 0.0, %v1508
  %v1510 = vpop.f32.mrf.mxu0
  %v1511 = vadd.f32 0.0, %v1510
  %v1512 = vpop.f32.mrf.mxu0
  %v1513 = vadd.f32 0.0, %v1512
  %v1514 = vpop.f32.mrf.mxu0
  %v1515 = vadd.f32 0.0, %v1514
  %1516 = vdwg.mxu0
  %1517 = vmatprep.subr.bf16.mxu0 0
  %1518 = vmatpush1.bf16.msra.mxu0 0
  %1519 = vmatprep.subr.bf16.mxu0 0
  %1520 = vmatpush1.bf16.msra.mxu0 0
  %1521 = vmatprep.subr.bf16.mxu0 0
  %1522 = vmatpush1.bf16.msra.mxu0 0
  %1523 = vmatprep.subr.bf16.mxu0 0
  %1524 = vmatpush1.bf16.msra.mxu0 0
  %1525 = vmatprep.subr.bf16.mxu0 0
  %1526 = vmatpush1.bf16.msra.mxu0 0
  %1527 = vmatprep.subr.bf16.mxu0 0
  %1528 = vmatpush1.bf16.msra.mxu0 0
  %1529 = vmatprep.subr.bf16.mxu0 0
  %1530 = vmatpush1.bf16.msra.mxu0 0
  %1531 = vmatprep.subr.bf16.mxu0 %v806
  %1532 = vmatpush1.bf16.msra.mxu0 %v803
  %1533 = vmatprep.subr.bf16.mxu0 0
  %1534 = vmatpush2.bf16.msra.mxu0 0
  %1535 = vmatprep.subr.bf16.mxu0 0
  %1536 = vmatpush2.bf16.msra.mxu0 0
  %1537 = vmatprep.subr.bf16.mxu0 0
  %1538 = vmatpush2.bf16.msra.mxu0 0
  %1539 = vmatprep.subr.bf16.mxu0 0
  %1540 = vmatpush2.bf16.msra.mxu0 0
  %1541 = vmatprep.subr.bf16.mxu0 0
  %1542 = vmatpush2.bf16.msra.mxu0 0
  %1543 = vmatprep.subr.bf16.mxu0 0
  %1544 = vmatpush2.bf16.msra.mxu0 0
  %1545 = vmatprep.subr.bf16.mxu0 0
  %1546 = vmatpush2.bf16.msra.mxu0 0
  %1547 = vmatprep.subr.bf16.mxu0 0
  %1548 = vmatpush2.bf16.msra.mxu0 0
  %1549 = vmatprep.mubr.bf16.mxu0 0
  %1550 = vmatmul.mubr.bf16.gmra.mxu0 %v604
  %v1551 = vpop.f32.mrf.mxu0
  %v1552 = vadd.f32 0.0, %v1551
  %v1553 = vpop.f32.mrf.mxu0
  %v1554 = vadd.f32 0.0, %v1553
  %v1555 = vpop.f32.mrf.mxu0
  %v1556 = vadd.f32 0.0, %v1555
  %v1557 = vpop.f32.mrf.mxu0
  %v1558 = vadd.f32 0.0, %v1557
  %1559 = vmatprep.mubr.bf16.mxu0 0
  %1560 = vmatmul.mubr.bf16.gmra.mxu0 %v607
  %v1561 = vpop.f32.mrf.mxu0
  %v1562 = vadd.f32 0.0, %v1561
  %v1563 = vpop.f32.mrf.mxu0
  %v1564 = vadd.f32 0.0, %v1563
  %v1565 = vpop.f32.mrf.mxu0
  %v1566 = vadd.f32 0.0, %v1565
  %v1567 = vpop.f32.mrf.mxu0
  %v1568 = vadd.f32 0.0, %v1567
  %1569 = vmatprep.mubr.bf16.mxu0 0
  %1570 = vmatmul.mubr.bf16.gmra.mxu0 %v610
  %v1571 = vpop.f32.mrf.mxu0
  %v1572 = vadd.f32 0.0, %v1571
  %v1573 = vpop.f32.mrf.mxu0
  %v1574 = vadd.f32 0.0, %v1573
  %v1575 = vpop.f32.mrf.mxu0
  %v1576 = vadd.f32 0.0, %v1575
  %v1577 = vpop.f32.mrf.mxu0
  %v1578 = vadd.f32 0.0, %v1577
  %1579 = vmatprep.mubr.bf16.mxu0 0
  %1580 = vmatmul.mubr.bf16.gmra.mxu0 %v613
  %v1581 = vpop.f32.mrf.mxu0
  %v1582 = vadd.f32 0.0, %v1581
  %v1583 = vpop.f32.mrf.mxu0
  %v1584 = vadd.f32 0.0, %v1583
  %v1585 = vpop.f32.mrf.mxu0
  %v1586 = vadd.f32 0.0, %v1585
  %v1587 = vpop.f32.mrf.mxu0
  %v1588 = vadd.f32 0.0, %v1587
  %1589 = vmatprep.mubr.bf16.mxu0 0
  %1590 = vmatmul.mubr.bf16.gmra.mxu0 %v616
  %v1591 = vpop.f32.mrf.mxu0
  %v1592 = vadd.f32 0.0, %v1591
  %v1593 = vpop.f32.mrf.mxu0
  %v1594 = vadd.f32 0.0, %v1593
  %v1595 = vpop.f32.mrf.mxu0
  %v1596 = vadd.f32 0.0, %v1595
  %v1597 = vpop.f32.mrf.mxu0
  %v1598 = vadd.f32 0.0, %v1597
  %1599 = vmatprep.mubr.bf16.mxu0 0
  %1600 = vmatmul.mubr.bf16.gmra.mxu0 %v619
  %v1601 = vpop.f32.mrf.mxu0
  %v1602 = vadd.f32 0.0, %v1601
  %v1603 = vpop.f32.mrf.mxu0
  %v1604 = vadd.f32 0.0, %v1603
  %v1605 = vpop.f32.mrf.mxu0
  %v1606 = vadd.f32 0.0, %v1605
  %v1607 = vpop.f32.mrf.mxu0
  %v1608 = vadd.f32 0.0, %v1607
  %1609 = vmatprep.mubr.bf16.mxu0 0
  %1610 = vmatmul.mubr.bf16.gmra.mxu0 %v622
  %v1611 = vpop.f32.mrf.mxu0
  %v1612 = vadd.f32 0.0, %v1611
  %v1613 = vpop.f32.mrf.mxu0
  %v1614 = vadd.f32 0.0, %v1613
  %v1615 = vpop.f32.mrf.mxu0
  %v1616 = vadd.f32 0.0, %v1615
  %v1617 = vpop.f32.mrf.mxu0
  %v1618 = vadd.f32 0.0, %v1617
  %1619 = vmatprep.mubr.bf16.mxu0 0
  %1620 = vmatmul.mubr.bf16.gmra.mxu0 %v625
  %v1621 = vpop.f32.mrf.mxu0
  %v1622 = vadd.f32 0.0, %v1621
  %v1623 = vpop.f32.mrf.mxu0
  %v1624 = vadd.f32 0.0, %v1623
  %v1625 = vpop.f32.mrf.mxu0
  %v1626 = vadd.f32 0.0, %v1625
  %v1627 = vpop.f32.mrf.mxu0
  %v1628 = vadd.f32 0.0, %v1627
  %1629 = vmatprep.mubr.bf16.mxu0 0
  %1630 = vmatmul.mubr.bf16.gmra.mxu0 %v628
  %v1631 = vpop.f32.mrf.mxu0
  %v1632 = vadd.f32 0.0, %v1631
  %v1633 = vpop.f32.mrf.mxu0
  %v1634 = vadd.f32 0.0, %v1633
  %v1635 = vpop.f32.mrf.mxu0
  %v1636 = vadd.f32 0.0, %v1635
  %v1637 = vpop.f32.mrf.mxu0
  %v1638 = vadd.f32 0.0, %v1637
  %1639 = vmatprep.mubr.bf16.mxu0 0
  %1640 = vmatmul.mubr.bf16.gmra.mxu0 %v631
  %v1641 = vpop.f32.mrf.mxu0
  %v1642 = vadd.f32 0.0, %v1641
  %v1643 = vpop.f32.mrf.mxu0
  %v1644 = vadd.f32 0.0, %v1643
  %v1645 = vpop.f32.mrf.mxu0
  %v1646 = vadd.f32 0.0, %v1645
  %v1647 = vpop.f32.mrf.mxu0
  %v1648 = vadd.f32 0.0, %v1647
  %1649 = vmatprep.mubr.bf16.mxu0 0
  %1650 = vmatmul.mubr.bf16.gmra.mxu0 %v634
  %v1651 = vpop.f32.mrf.mxu0
  %v1652 = vadd.f32 0.0, %v1651
  %v1653 = vpop.f32.mrf.mxu0
  %v1654 = vadd.f32 0.0, %v1653
  %v1655 = vpop.f32.mrf.mxu0
  %v1656 = vadd.f32 0.0, %v1655
  %v1657 = vpop.f32.mrf.mxu0
  %v1658 = vadd.f32 0.0, %v1657
  %1659 = vmatprep.mubr.bf16.mxu0 0
  %1660 = vmatmul.mubr.bf16.gmra.mxu0 %v637
  %v1661 = vpop.f32.mrf.mxu0
  %v1662 = vadd.f32 0.0, %v1661
  %v1663 = vpop.f32.mrf.mxu0
  %v1664 = vadd.f32 0.0, %v1663
  %v1665 = vpop.f32.mrf.mxu0
  %v1666 = vadd.f32 0.0, %v1665
  %v1667 = vpop.f32.mrf.mxu0
  %v1668 = vadd.f32 0.0, %v1667
  %1669 = vmatprep.mubr.bf16.mxu0 0
  %1670 = vmatmul.mubr.bf16.gmra.mxu0 %v640
  %v1671 = vpop.f32.mrf.mxu0
  %v1672 = vadd.f32 0.0, %v1671
  %v1673 = vpop.f32.mrf.mxu0
  %v1674 = vadd.f32 0.0, %v1673
  %v1675 = vpop.f32.mrf.mxu0
  %v1676 = vadd.f32 0.0, %v1675
  %v1677 = vpop.f32.mrf.mxu0
  %v1678 = vadd.f32 0.0, %v1677
  %1679 = vmatprep.mubr.bf16.mxu0 0
  %1680 = vmatmul.mubr.bf16.gmra.mxu0 %v643
  %v1681 = vpop.f32.mrf.mxu0
  %v1682 = vadd.f32 0.0, %v1681
  %v1683 = vpop.f32.mrf.mxu0
  %v1684 = vadd.f32 0.0, %v1683
  %v1685 = vpop.f32.mrf.mxu0
  %v1686 = vadd.f32 0.0, %v1685
  %v1687 = vpop.f32.mrf.mxu0
  %v1688 = vadd.f32 0.0, %v1687
  %1689 = vmatprep.mubr.bf16.mxu0 0
  %1690 = vmatmul.mubr.bf16.gmra.mxu0 %v646
  %v1691 = vpop.f32.mrf.mxu0
  %v1692 = vadd.f32 0.0, %v1691
  %v1693 = vpop.f32.mrf.mxu0
  %v1694 = vadd.f32 0.0, %v1693
  %v1695 = vpop.f32.mrf.mxu0
  %v1696 = vadd.f32 0.0, %v1695
  %v1697 = vpop.f32.mrf.mxu0
  %v1698 = vadd.f32 0.0, %v1697
  %1699 = vmatprep.mubr.bf16.mxu0 0
  %1700 = vmatmul.mubr.bf16.gmra.mxu0 %v649
  %v1701 = vpop.f32.mrf.mxu0
  %v1702 = vadd.f32 0.0, %v1701
  %v1703 = vpop.f32.mrf.mxu0
  %v1704 = vadd.f32 0.0, %v1703
  %v1705 = vpop.f32.mrf.mxu0
  %v1706 = vadd.f32 0.0, %v1705
  %v1707 = vpop.f32.mrf.mxu0
  %v1708 = vadd.f32 0.0, %v1707
  %1709 = vmatprep.mubr.bf16.mxu0 0
  %1710 = vmatmul.mubr.bf16.gmra.mxu0 %v652
  %v1711 = vpop.f32.mrf.mxu0
  %v1712 = vadd.f32 0.0, %v1711
  %v1713 = vpop.f32.mrf.mxu0
  %v1714 = vadd.f32 0.0, %v1713
  %v1715 = vpop.f32.mrf.mxu0
  %v1716 = vadd.f32 0.0, %v1715
  %v1717 = vpop.f32.mrf.mxu0
  %v1718 = vadd.f32 0.0, %v1717
  %1719 = vmatprep.mubr.bf16.mxu0 0
  %1720 = vmatmul.mubr.bf16.gmra.mxu0 %v655
  %v1721 = vpop.f32.mrf.mxu0
  %v1722 = vadd.f32 0.0, %v1721
  %v1723 = vpop.f32.mrf.mxu0
  %v1724 = vadd.f32 0.0, %v1723
  %v1725 = vpop.f32.mrf.mxu0
  %v1726 = vadd.f32 0.0, %v1725
  %v1727 = vpop.f32.mrf.mxu0
  %v1728 = vadd.f32 0.0, %v1727
  %1729 = vmatprep.mubr.bf16.mxu0 0
  %1730 = vmatmul.mubr.bf16.gmra.mxu0 %v658
  %v1731 = vpop.f32.mrf.mxu0
  %v1732 = vadd.f32 0.0, %v1731
  %v1733 = vpop.f32.mrf.mxu0
  %v1734 = vadd.f32 0.0, %v1733
  %v1735 = vpop.f32.mrf.mxu0
  %v1736 = vadd.f32 0.0, %v1735
  %v1737 = vpop.f32.mrf.mxu0
  %v1738 = vadd.f32 0.0, %v1737
  %1739 = vmatprep.mubr.bf16.mxu0 0
  %1740 = vmatmul.mubr.bf16.gmra.mxu0 %v661
  %v1741 = vpop.f32.mrf.mxu0
  %v1742 = vadd.f32 0.0, %v1741
  %v1743 = vpop.f32.mrf.mxu0
  %v1744 = vadd.f32 0.0, %v1743
  %v1745 = vpop.f32.mrf.mxu0
  %v1746 = vadd.f32 0.0, %v1745
  %v1747 = vpop.f32.mrf.mxu0
  %v1748 = vadd.f32 0.0, %v1747
  %1749 = vmatprep.mubr.bf16.mxu0 0
  %1750 = vmatmul.mubr.bf16.gmra.mxu0 %v664
  %v1751 = vpop.f32.mrf.mxu0
  %v1752 = vadd.f32 0.0, %v1751
  %v1753 = vpop.f32.mrf.mxu0
  %v1754 = vadd.f32 0.0, %v1753
  %v1755 = vpop.f32.mrf.mxu0
  %v1756 = vadd.f32 0.0, %v1755
  %v1757 = vpop.f32.mrf.mxu0
  %v1758 = vadd.f32 0.0, %v1757
  %1759 = vmatprep.mubr.bf16.mxu0 0
  %1760 = vmatmul.mubr.bf16.gmra.mxu0 %v667
  %v1761 = vpop.f32.mrf.mxu0
  %v1762 = vadd.f32 0.0, %v1761
  %v1763 = vpop.f32.mrf.mxu0
  %v1764 = vadd.f32 0.0, %v1763
  %v1765 = vpop.f32.mrf.mxu0
  %v1766 = vadd.f32 0.0, %v1765
  %v1767 = vpop.f32.mrf.mxu0
  %v1768 = vadd.f32 0.0, %v1767
  %1769 = vmatprep.mubr.bf16.mxu0 0
  %1770 = vmatmul.mubr.bf16.gmra.mxu0 %v670
  %v1771 = vpop.f32.mrf.mxu0
  %v1772 = vadd.f32 0.0, %v1771
  %v1773 = vpop.f32.mrf.mxu0
  %v1774 = vadd.f32 0.0, %v1773
  %v1775 = vpop.f32.mrf.mxu0
  %v1776 = vadd.f32 0.0, %v1775
  %v1777 = vpop.f32.mrf.mxu0
  %v1778 = vadd.f32 0.0, %v1777
  %1779 = vmatprep.mubr.bf16.mxu0 0
  %1780 = vmatmul.mubr.bf16.gmra.mxu0 %v673
  %v1781 = vpop.f32.mrf.mxu0
  %v1782 = vadd.f32 0.0, %v1781
  %v1783 = vpop.f32.mrf.mxu0
  %v1784 = vadd.f32 0.0, %v1783
  %v1785 = vpop.f32.mrf.mxu0
  %v1786 = vadd.f32 0.0, %v1785
  %v1787 = vpop.f32.mrf.mxu0
  %v1788 = vadd.f32 0.0, %v1787
  %1789 = vmatprep.mubr.bf16.mxu0 0
  %1790 = vmatmul.mubr.bf16.gmra.mxu0 %v676
  %v1791 = vpop.f32.mrf.mxu0
  %v1792 = vadd.f32 0.0, %v1791
  %v1793 = vpop.f32.mrf.mxu0
  %v1794 = vadd.f32 0.0, %v1793
  %v1795 = vpop.f32.mrf.mxu0
  %v1796 = vadd.f32 0.0, %v1795
  %v1797 = vpop.f32.mrf.mxu0
  %v1798 = vadd.f32 0.0, %v1797
  %1799 = vmatprep.mubr.bf16.mxu0 0
  %1800 = vmatmul.mubr.bf16.gmra.mxu0 %v679
  %v1801 = vpop.f32.mrf.mxu0
  %v1802 = vadd.f32 0.0, %v1801
  %v1803 = vpop.f32.mrf.mxu0
  %v1804 = vadd.f32 0.0, %v1803
  %v1805 = vpop.f32.mrf.mxu0
  %v1806 = vadd.f32 0.0, %v1805
  %v1807 = vpop.f32.mrf.mxu0
  %v1808 = vadd.f32 0.0, %v1807
  %1809 = vmatprep.mubr.bf16.mxu0 0
  %1810 = vmatmul.mubr.bf16.gmra.mxu0 %v682
  %v1811 = vpop.f32.mrf.mxu0
  %v1812 = vadd.f32 0.0, %v1811
  %v1813 = vpop.f32.mrf.mxu0
  %v1814 = vadd.f32 0.0, %v1813
  %v1815 = vpop.f32.mrf.mxu0
  %v1816 = vadd.f32 0.0, %v1815
  %v1817 = vpop.f32.mrf.mxu0
  %v1818 = vadd.f32 0.0, %v1817
  %1819 = vmatprep.mubr.bf16.mxu0 0
  %1820 = vmatmul.mubr.bf16.gmra.mxu0 %v685
  %v1821 = vpop.f32.mrf.mxu0
  %v1822 = vadd.f32 0.0, %v1821
  %v1823 = vpop.f32.mrf.mxu0
  %v1824 = vadd.f32 0.0, %v1823
  %v1825 = vpop.f32.mrf.mxu0
  %v1826 = vadd.f32 0.0, %v1825
  %v1827 = vpop.f32.mrf.mxu0
  %v1828 = vadd.f32 0.0, %v1827
  %1829 = vmatprep.mubr.bf16.mxu0 0
  %1830 = vmatmul.mubr.bf16.gmra.mxu0 %v688
  %v1831 = vpop.f32.mrf.mxu0
  %v1832 = vadd.f32 0.0, %v1831
  %v1833 = vpop.f32.mrf.mxu0
  %v1834 = vadd.f32 0.0, %v1833
  %v1835 = vpop.f32.mrf.mxu0
  %v1836 = vadd.f32 0.0, %v1835
  %v1837 = vpop.f32.mrf.mxu0
  %v1838 = vadd.f32 0.0, %v1837
  %1839 = vmatprep.mubr.bf16.mxu0 0
  %1840 = vmatmul.mubr.bf16.gmra.mxu0 %v691
  %v1841 = vpop.f32.mrf.mxu0
  %v1842 = vadd.f32 0.0, %v1841
  %v1843 = vpop.f32.mrf.mxu0
  %v1844 = vadd.f32 0.0, %v1843
  %v1845 = vpop.f32.mrf.mxu0
  %v1846 = vadd.f32 0.0, %v1845
  %v1847 = vpop.f32.mrf.mxu0
  %v1848 = vadd.f32 0.0, %v1847
  %1849 = vmatprep.mubr.bf16.mxu0 0
  %1850 = vmatmul.mubr.bf16.gmra.mxu0 %v694
  %v1851 = vpop.f32.mrf.mxu0
  %v1852 = vadd.f32 0.0, %v1851
  %v1853 = vpop.f32.mrf.mxu0
  %v1854 = vadd.f32 0.0, %v1853
  %v1855 = vpop.f32.mrf.mxu0
  %v1856 = vadd.f32 0.0, %v1855
  %v1857 = vpop.f32.mrf.mxu0
  %v1858 = vadd.f32 0.0, %v1857
  %1859 = vmatprep.mubr.bf16.mxu0 0
  %1860 = vmatmul.mubr.bf16.gmra.mxu0 %v697
  %v1861 = vpop.f32.mrf.mxu0
  %v1862 = vadd.f32 0.0, %v1861
  %v1863 = vpop.f32.mrf.mxu0
  %v1864 = vadd.f32 0.0, %v1863
  %v1865 = vpop.f32.mrf.mxu0
  %v1866 = vadd.f32 0.0, %v1865
  %v1867 = vpop.f32.mrf.mxu0
  %v1868 = vadd.f32 0.0, %v1867
  %1869 = vmatprep.mubr.bf16.mxu0 0
  %1870 = vmatmul.mubr.bf16.gmra.mxu0 %v700
  %v1871 = vpop.f32.mrf.mxu0
  %v1872 = vadd.f32 0.0, %v1871
  %v1873 = vpop.f32.mrf.mxu0
  %v1874 = vadd.f32 0.0, %v1873
  %v1875 = vpop.f32.mrf.mxu0
  %v1876 = vadd.f32 0.0, %v1875
  %v1877 = vpop.f32.mrf.mxu0
  %v1878 = vadd.f32 0.0, %v1877
  %1879 = vmatprep.mubr.bf16.mxu0 0
  %1880 = vmatmul.mubr.bf16.gmra.mxu0 %v703
  %v1881 = vpop.f32.mrf.mxu0
  %v1882 = vadd.f32 0.0, %v1881
  %v1883 = vpop.f32.mrf.mxu0
  %v1884 = vadd.f32 0.0, %v1883
  %v1885 = vpop.f32.mrf.mxu0
  %v1886 = vadd.f32 0.0, %v1885
  %v1887 = vpop.f32.mrf.mxu0
  %v1888 = vadd.f32 0.0, %v1887
  %1889 = vmatprep.mubr.bf16.mxu0 0
  %1890 = vmatmul.mubr.bf16.gmra.mxu0 %v706
  %v1891 = vpop.f32.mrf.mxu0
  %v1892 = vadd.f32 0.0, %v1891
  %v1893 = vpop.f32.mrf.mxu0
  %v1894 = vadd.f32 0.0, %v1893
  %v1895 = vpop.f32.mrf.mxu0
  %v1896 = vadd.f32 0.0, %v1895
  %v1897 = vpop.f32.mrf.mxu0
  %v1898 = vadd.f32 0.0, %v1897
  %1899 = vmatprep.mubr.bf16.mxu0 0
  %1900 = vmatmul.mubr.bf16.gmra.mxu0 %v709
  %v1901 = vpop.f32.mrf.mxu0
  %v1902 = vadd.f32 0.0, %v1901
  %v1903 = vpop.f32.mrf.mxu0
  %v1904 = vadd.f32 0.0, %v1903
  %v1905 = vpop.f32.mrf.mxu0
  %v1906 = vadd.f32 0.0, %v1905
  %v1907 = vpop.f32.mrf.mxu0
  %v1908 = vadd.f32 0.0, %v1907
  %1909 = vmatprep.mubr.bf16.mxu0 0
  %1910 = vmatmul.mubr.bf16.gmra.mxu0 %v712
  %v1911 = vpop.f32.mrf.mxu0
  %v1912 = vadd.f32 0.0, %v1911
  %v1913 = vpop.f32.mrf.mxu0
  %v1914 = vadd.f32 0.0, %v1913
  %v1915 = vpop.f32.mrf.mxu0
  %v1916 = vadd.f32 0.0, %v1915
  %v1917 = vpop.f32.mrf.mxu0
  %v1918 = vadd.f32 0.0, %v1917
  %1919 = vmatprep.mubr.bf16.mxu0 0
  %1920 = vmatmul.mubr.bf16.gmra.mxu0 %v715
  %v1921 = vpop.f32.mrf.mxu0
  %v1922 = vadd.f32 0.0, %v1921
  %v1923 = vpop.f32.mrf.mxu0
  %v1924 = vadd.f32 0.0, %v1923
  %v1925 = vpop.f32.mrf.mxu0
  %v1926 = vadd.f32 0.0, %v1925
  %v1927 = vpop.f32.mrf.mxu0
  %v1928 = vadd.f32 0.0, %v1927
  %1929 = vmatprep.mubr.bf16.mxu0 0
  %1930 = vmatmul.mubr.bf16.gmra.mxu0 %v718
  %v1931 = vpop.f32.mrf.mxu0
  %v1932 = vadd.f32 0.0, %v1931
  %v1933 = vpop.f32.mrf.mxu0
  %v1934 = vadd.f32 0.0, %v1933
  %v1935 = vpop.f32.mrf.mxu0
  %v1936 = vadd.f32 0.0, %v1935
  %v1937 = vpop.f32.mrf.mxu0
  %v1938 = vadd.f32 0.0, %v1937
  %1939 = vmatprep.mubr.bf16.mxu0 0
  %1940 = vmatmul.mubr.bf16.gmra.mxu0 %v721
  %v1941 = vpop.f32.mrf.mxu0
  %v1942 = vadd.f32 0.0, %v1941
  %v1943 = vpop.f32.mrf.mxu0
  %v1944 = vadd.f32 0.0, %v1943
  %v1945 = vpop.f32.mrf.mxu0
  %v1946 = vadd.f32 0.0, %v1945
  %v1947 = vpop.f32.mrf.mxu0
  %v1948 = vadd.f32 0.0, %v1947
  %1949 = vmatprep.mubr.bf16.mxu0 0
  %1950 = vmatmul.mubr.bf16.gmra.mxu0 %v724
  %v1951 = vpop.f32.mrf.mxu0
  %v1952 = vadd.f32 0.0, %v1951
  %v1953 = vpop.f32.mrf.mxu0
  %v1954 = vadd.f32 0.0, %v1953
  %v1955 = vpop.f32.mrf.mxu0
  %v1956 = vadd.f32 0.0, %v1955
  %v1957 = vpop.f32.mrf.mxu0
  %v1958 = vadd.f32 0.0, %v1957
  %1959 = vmatprep.mubr.bf16.mxu0 0
  %1960 = vmatmul.mubr.bf16.gmra.mxu0 %v727
  %v1961 = vpop.f32.mrf.mxu0
  %v1962 = vadd.f32 0.0, %v1961
  %v1963 = vpop.f32.mrf.mxu0
  %v1964 = vadd.f32 0.0, %v1963
  %v1965 = vpop.f32.mrf.mxu0
  %v1966 = vadd.f32 0.0, %v1965
  %v1967 = vpop.f32.mrf.mxu0
  %v1968 = vadd.f32 0.0, %v1967
  %1969 = vmatprep.mubr.bf16.mxu0 0
  %1970 = vmatmul.mubr.bf16.gmra.mxu0 %v730
  %v1971 = vpop.f32.mrf.mxu0
  %v1972 = vadd.f32 0.0, %v1971
  %v1973 = vpop.f32.mrf.mxu0
  %v1974 = vadd.f32 0.0, %v1973
  %v1975 = vpop.f32.mrf.mxu0
  %v1976 = vadd.f32 0.0, %v1975
  %v1977 = vpop.f32.mrf.mxu0
  %v1978 = vadd.f32 0.0, %v1977
  %1979 = vmatprep.mubr.bf16.mxu0 0
  %1980 = vmatmul.mubr.bf16.gmra.mxu0 %v733
  %v1981 = vpop.f32.mrf.mxu0
  %v1982 = vadd.f32 0.0, %v1981
  %v1983 = vpop.f32.mrf.mxu0
  %v1984 = vadd.f32 0.0, %v1983
  %v1985 = vpop.f32.mrf.mxu0
  %v1986 = vadd.f32 0.0, %v1985
  %v1987 = vpop.f32.mrf.mxu0
  %v1988 = vadd.f32 0.0, %v1987
  %1989 = vmatprep.mubr.bf16.mxu0 0
  %1990 = vmatmul.mubr.bf16.gmra.mxu0 %v736
  %v1991 = vpop.f32.mrf.mxu0
  %v1992 = vadd.f32 0.0, %v1991
  %v1993 = vpop.f32.mrf.mxu0
  %v1994 = vadd.f32 0.0, %v1993
  %v1995 = vpop.f32.mrf.mxu0
  %v1996 = vadd.f32 0.0, %v1995
  %v1997 = vpop.f32.mrf.mxu0
  %v1998 = vadd.f32 0.0, %v1997
  %1999 = vmatprep.mubr.bf16.mxu0 0
  %2000 = vmatmul.mubr.bf16.gmra.mxu0 %v739
  %v2001 = vpop.f32.mrf.mxu0
  %v2002 = vadd.f32 0.0, %v2001
  %v2003 = vpop.f32.mrf.mxu0
  %v2004 = vadd.f32 0.0, %v2003
  %v2005 = vpop.f32.mrf.mxu0
  %v2006 = vadd.f32 0.0, %v2005
  %v2007 = vpop.f32.mrf.mxu0
  %v2008 = vadd.f32 0.0, %v2007
  %2009 = vmatprep.mubr.bf16.mxu0 0
  %2010 = vmatmul.mubr.bf16.gmra.mxu0 %v742
  %v2011 = vpop.f32.mrf.mxu0
  %v2012 = vadd.f32 0.0, %v2011
  %v2013 = vpop.f32.mrf.mxu0
  %v2014 = vadd.f32 0.0, %v2013
  %v2015 = vpop.f32.mrf.mxu0
  %v2016 = vadd.f32 0.0, %v2015
  %v2017 = vpop.f32.mrf.mxu0
  %v2018 = vadd.f32 0.0, %v2017
  %2019 = vmatprep.mubr.bf16.mxu0 0
  %2020 = vmatmul.mubr.bf16.gmra.mxu0 %v745
  %v2021 = vpop.f32.mrf.mxu0
  %v2022 = vadd.f32 0.0, %v2021
  %v2023 = vpop.f32.mrf.mxu0
  %v2024 = vadd.f32 0.0, %v2023
  %v2025 = vpop.f32.mrf.mxu0
  %v2026 = vadd.f32 0.0, %v2025
  %v2027 = vpop.f32.mrf.mxu0
  %v2028 = vadd.f32 0.0, %v2027
  %2029 = vmatprep.mubr.bf16.mxu0 0
  %2030 = vmatmul.mubr.bf16.gmra.mxu0 %v748
  %v2031 = vpop.f32.mrf.mxu0
  %v2032 = vadd.f32 0.0, %v2031
  %v2033 = vpop.f32.mrf.mxu0
  %v2034 = vadd.f32 0.0, %v2033
  %v2035 = vpop.f32.mrf.mxu0
  %v2036 = vadd.f32 0.0, %v2035
  %v2037 = vpop.f32.mrf.mxu0
  %v2038 = vadd.f32 0.0, %v2037
  %2039 = vmatprep.mubr.bf16.mxu0 0
  %2040 = vmatmul.mubr.bf16.gmra.mxu0 %v751
  %v2041 = vpop.f32.mrf.mxu0
  %v2042 = vadd.f32 0.0, %v2041
  %v2043 = vpop.f32.mrf.mxu0
  %v2044 = vadd.f32 0.0, %v2043
  %v2045 = vpop.f32.mrf.mxu0
  %v2046 = vadd.f32 0.0, %v2045
  %v2047 = vpop.f32.mrf.mxu0
  %v2048 = vadd.f32 0.0, %v2047
  %2049 = vmatprep.mubr.bf16.mxu0 0
  %2050 = vmatmul.mubr.bf16.gmra.mxu0 %v754
  %v2051 = vpop.f32.mrf.mxu0
  %v2052 = vadd.f32 0.0, %v2051
  %v2053 = vpop.f32.mrf.mxu0
  %v2054 = vadd.f32 0.0, %v2053
  %v2055 = vpop.f32.mrf.mxu0
  %v2056 = vadd.f32 0.0, %v2055
  %v2057 = vpop.f32.mrf.mxu0
  %v2058 = vadd.f32 0.0, %v2057
  %2059 = vmatprep.mubr.bf16.mxu0 0
  %2060 = vmatmul.mubr.bf16.gmra.mxu0 %v757
  %v2061 = vpop.f32.mrf.mxu0
  %v2062 = vadd.f32 0.0, %v2061
  %v2063 = vpop.f32.mrf.mxu0
  %v2064 = vadd.f32 0.0, %v2063
  %v2065 = vpop.f32.mrf.mxu0
  %v2066 = vadd.f32 0.0, %v2065
  %v2067 = vpop.f32.mrf.mxu0
  %v2068 = vadd.f32 0.0, %v2067
  %2069 = vmatprep.mubr.bf16.mxu0 0
  %2070 = vmatmul.mubr.bf16.gmra.mxu0 %v760
  %v2071 = vpop.f32.mrf.mxu0
  %v2072 = vadd.f32 0.0, %v2071
  %v2073 = vpop.f32.mrf.mxu0
  %v2074 = vadd.f32 0.0, %v2073
  %v2075 = vpop.f32.mrf.mxu0
  %v2076 = vadd.f32 0.0, %v2075
  %v2077 = vpop.f32.mrf.mxu0
  %v2078 = vadd.f32 0.0, %v2077
  %2079 = vmatprep.mubr.bf16.mxu0 0
  %2080 = vmatmul.mubr.bf16.gmra.mxu0 %v763
  %v2081 = vpop.f32.mrf.mxu0
  %v2082 = vadd.f32 0.0, %v2081
  %v2083 = vpop.f32.mrf.mxu0
  %v2084 = vadd.f32 0.0, %v2083
  %v2085 = vpop.f32.mrf.mxu0
  %v2086 = vadd.f32 0.0, %v2085
  %v2087 = vpop.f32.mrf.mxu0
  %v2088 = vadd.f32 0.0, %v2087
  %2089 = vmatprep.mubr.bf16.mxu0 0
  %2090 = vmatmul.mubr.bf16.gmra.mxu0 %v766
  %v2091 = vpop.f32.mrf.mxu0
  %v2092 = vadd.f32 0.0, %v2091
  %v2093 = vpop.f32.mrf.mxu0
  %v2094 = vadd.f32 0.0, %v2093
  %v2095 = vpop.f32.mrf.mxu0
  %v2096 = vadd.f32 0.0, %v2095
  %v2097 = vpop.f32.mrf.mxu0
  %v2098 = vadd.f32 0.0, %v2097
  %2099 = vmatprep.mubr.bf16.mxu0 0
  %2100 = vmatmul.mubr.bf16.gmra.mxu0 %v769
  %v2101 = vpop.f32.mrf.mxu0
  %v2102 = vadd.f32 0.0, %v2101
  %v2103 = vpop.f32.mrf.mxu0
  %v2104 = vadd.f32 0.0, %v2103
  %v2105 = vpop.f32.mrf.mxu0
  %v2106 = vadd.f32 0.0, %v2105
  %v2107 = vpop.f32.mrf.mxu0
  %v2108 = vadd.f32 0.0, %v2107
  %2109 = vmatprep.mubr.bf16.mxu0 0
  %2110 = vmatmul.mubr.bf16.gmra.mxu0 %v772
  %v2111 = vpop.f32.mrf.mxu0
  %v2112 = vadd.f32 0.0, %v2111
  %v2113 = vpop.f32.mrf.mxu0
  %v2114 = vadd.f32 0.0, %v2113
  %v2115 = vpop.f32.mrf.mxu0
  %v2116 = vadd.f32 0.0, %v2115
  %v2117 = vpop.f32.mrf.mxu0
  %v2118 = vadd.f32 0.0, %v2117
  %2119 = vmatprep.mubr.bf16.mxu0 0
  %2120 = vmatmul.mubr.bf16.gmra.mxu0 %v775
  %v2121 = vpop.f32.mrf.mxu0
  %v2122 = vadd.f32 0.0, %v2121
  %v2123 = vpop.f32.mrf.mxu0
  %v2124 = vadd.f32 0.0, %v2123
  %v2125 = vpop.f32.mrf.mxu0
  %v2126 = vadd.f32 0.0, %v2125
  %v2127 = vpop.f32.mrf.mxu0
  %v2128 = vadd.f32 0.0, %v2127
  %2129 = vmatprep.mubr.bf16.mxu0 0
  %2130 = vmatmul.mubr.bf16.gmra.mxu0 %v778
  %v2131 = vpop.f32.mrf.mxu0
  %v2132 = vadd.f32 0.0, %v2131
  %v2133 = vpop.f32.mrf.mxu0
  %v2134 = vadd.f32 0.0, %v2133
  %v2135 = vpop.f32.mrf.mxu0
  %v2136 = vadd.f32 0.0, %v2135
  %v2137 = vpop.f32.mrf.mxu0
  %v2138 = vadd.f32 0.0, %v2137
  %2139 = vmatprep.mubr.bf16.mxu0 0
  %2140 = vmatmul.mubr.bf16.gmra.mxu0 %v781
  %v2141 = vpop.f32.mrf.mxu0
  %v2142 = vadd.f32 0.0, %v2141
  %v2143 = vpop.f32.mrf.mxu0
  %v2144 = vadd.f32 0.0, %v2143
  %v2145 = vpop.f32.mrf.mxu0
  %v2146 = vadd.f32 0.0, %v2145
  %v2147 = vpop.f32.mrf.mxu0
  %v2148 = vadd.f32 0.0, %v2147
  %2149 = vmatprep.mubr.bf16.mxu0 0
  %2150 = vmatmul.mubr.bf16.gmra.mxu0 %v784
  %v2151 = vpop.f32.mrf.mxu0
  %v2152 = vadd.f32 0.0, %v2151
  %v2153 = vpop.f32.mrf.mxu0
  %v2154 = vadd.f32 0.0, %v2153
  %v2155 = vpop.f32.mrf.mxu0
  %v2156 = vadd.f32 0.0, %v2155
  %v2157 = vpop.f32.mrf.mxu0
  %v2158 = vadd.f32 0.0, %v2157
  %2159 = vmatprep.mubr.bf16.mxu0 0
  %2160 = vmatmul.mubr.bf16.gmra.mxu0 %v787
  %v2161 = vpop.f32.mrf.mxu0
  %v2162 = vadd.f32 0.0, %v2161
  %v2163 = vpop.f32.mrf.mxu0
  %v2164 = vadd.f32 0.0, %v2163
  %v2165 = vpop.f32.mrf.mxu0
  %v2166 = vadd.f32 0.0, %v2165
  %v2167 = vpop.f32.mrf.mxu0
  %v2168 = vadd.f32 0.0, %v2167
  %2169 = vmatprep.mubr.bf16.mxu0 0
  %2170 = vmatmul.mubr.bf16.gmra.mxu0 %v790
  %v2171 = vpop.f32.mrf.mxu0
  %v2172 = vadd.f32 0.0, %v2171
  %v2173 = vpop.f32.mrf.mxu0
  %v2174 = vadd.f32 0.0, %v2173
  %v2175 = vpop.f32.mrf.mxu0
  %v2176 = vadd.f32 0.0, %v2175
  %v2177 = vpop.f32.mrf.mxu0
  %v2178 = vadd.f32 0.0, %v2177
  %2179 = vmatprep.mubr.bf16.mxu0 0
  %2180 = vmatmul.mubr.bf16.gmra.mxu0 %v793
  %v2181 = vpop.f32.mrf.mxu0
  %v2182 = vadd.f32 0.0, %v2181
  %v2183 = vpop.f32.mrf.mxu0
  %v2184 = vadd.f32 0.0, %v2183
  %v2185 = vpop.f32.mrf.mxu0
  %v2186 = vadd.f32 0.0, %v2185
  %v2187 = vpop.f32.mrf.mxu0
  %v2188 = vadd.f32 0.0, %v2187
  %2189 = vdwg.mxu0
  %2190 = vmatprep.subr.bf16.mxu0 0
  %2191 = vmatpush1.bf16.msra.mxu0 0
  %2192 = vmatprep.subr.bf16.mxu0 0
  %2193 = vmatpush1.bf16.msra.mxu0 0
  %2194 = vmatprep.subr.bf16.mxu0 0
  %2195 = vmatpush1.bf16.msra.mxu0 0
  %2196 = vmatprep.subr.bf16.mxu0 0
  %2197 = vmatpush1.bf16.msra.mxu0 0
  %2198 = vmatprep.subr.bf16.mxu0 0
  %2199 = vmatpush1.bf16.msra.mxu0 0
  %2200 = vmatprep.subr.bf16.mxu0 0
  %2201 = vmatpush1.bf16.msra.mxu0 0
  %2202 = vmatprep.subr.bf16.mxu0 0
  %2203 = vmatpush1.bf16.msra.mxu0 0
  %2204 = vmatprep.subr.bf16.mxu0 %v812
  %2205 = vmatpush1.bf16.msra.mxu0 %v809
  %2206 = vmatprep.subr.bf16.mxu0 0
  %2207 = vmatpush2.bf16.msra.mxu0 0
  %2208 = vmatprep.subr.bf16.mxu0 0
  %2209 = vmatpush2.bf16.msra.mxu0 0
  %2210 = vmatprep.subr.bf16.mxu0 0
  %2211 = vmatpush2.bf16.msra.mxu0 0
  %2212 = vmatprep.subr.bf16.mxu0 0
  %2213 = vmatpush2.bf16.msra.mxu0 0
  %2214 = vmatprep.subr.bf16.mxu0 0
  %2215 = vmatpush2.bf16.msra.mxu0 0
  %2216 = vmatprep.subr.bf16.mxu0 0
  %2217 = vmatpush2.bf16.msra.mxu0 0
  %2218 = vmatprep.subr.bf16.mxu0 0
  %2219 = vmatpush2.bf16.msra.mxu0 0
  %2220 = vmatprep.subr.bf16.mxu0 0
  %2221 = vmatpush2.bf16.msra.mxu0 0
  %2222 = vmatprep.mubr.bf16.mxu0 0
  %2223 = vmatmul.mubr.bf16.gmra.mxu0 %v604
  %v2224 = vpop.f32.mrf.mxu0
  %v2225 = vadd.f32 0.0, %v2224
  %v2226 = vpop.f32.mrf.mxu0
  %v2227 = vadd.f32 0.0, %v2226
  %v2228 = vpop.f32.mrf.mxu0
  %v2229 = vadd.f32 0.0, %v2228
  %v2230 = vpop.f32.mrf.mxu0
  %v2231 = vadd.f32 0.0, %v2230
  %2232 = vmatprep.mubr.bf16.mxu0 0
  %2233 = vmatmul.mubr.bf16.gmra.mxu0 %v607
  %v2234 = vpop.f32.mrf.mxu0
  %v2235 = vadd.f32 0.0, %v2234
  %v2236 = vpop.f32.mrf.mxu0
  %v2237 = vadd.f32 0.0, %v2236
  %v2238 = vpop.f32.mrf.mxu0
  %v2239 = vadd.f32 0.0, %v2238
  %v2240 = vpop.f32.mrf.mxu0
  %v2241 = vadd.f32 0.0, %v2240
  %2242 = vmatprep.mubr.bf16.mxu0 0
  %2243 = vmatmul.mubr.bf16.gmra.mxu0 %v610
  %v2244 = vpop.f32.mrf.mxu0
  %v2245 = vadd.f32 0.0, %v2244
  %v2246 = vpop.f32.mrf.mxu0
  %v2247 = vadd.f32 0.0, %v2246
  %v2248 = vpop.f32.mrf.mxu0
  %v2249 = vadd.f32 0.0, %v2248
  %v2250 = vpop.f32.mrf.mxu0
  %v2251 = vadd.f32 0.0, %v2250
  %2252 = vmatprep.mubr.bf16.mxu0 0
  %2253 = vmatmul.mubr.bf16.gmra.mxu0 %v613
  %v2254 = vpop.f32.mrf.mxu0
  %v2255 = vadd.f32 0.0, %v2254
  %v2256 = vpop.f32.mrf.mxu0
  %v2257 = vadd.f32 0.0, %v2256
  %v2258 = vpop.f32.mrf.mxu0
  %v2259 = vadd.f32 0.0, %v2258
  %v2260 = vpop.f32.mrf.mxu0
  %v2261 = vadd.f32 0.0, %v2260
  %2262 = vmatprep.mubr.bf16.mxu0 0
  %2263 = vmatmul.mubr.bf16.gmra.mxu0 %v616
  %v2264 = vpop.f32.mrf.mxu0
  %v2265 = vadd.f32 0.0, %v2264
  %v2266 = vpop.f32.mrf.mxu0
  %v2267 = vadd.f32 0.0, %v2266
  %v2268 = vpop.f32.mrf.mxu0
  %v2269 = vadd.f32 0.0, %v2268
  %v2270 = vpop.f32.mrf.mxu0
  %v2271 = vadd.f32 0.0, %v2270
  %2272 = vmatprep.mubr.bf16.mxu0 0
  %2273 = vmatmul.mubr.bf16.gmra.mxu0 %v619
  %v2274 = vpop.f32.mrf.mxu0
  %v2275 = vadd.f32 0.0, %v2274
  %v2276 = vpop.f32.mrf.mxu0
  %v2277 = vadd.f32 0.0, %v2276
  %v2278 = vpop.f32.mrf.mxu0
  %v2279 = vadd.f32 0.0, %v2278
  %v2280 = vpop.f32.mrf.mxu0
  %v2281 = vadd.f32 0.0, %v2280
  %2282 = vmatprep.mubr.bf16.mxu0 0
  %2283 = vmatmul.mubr.bf16.gmra.mxu0 %v622
  %v2284 = vpop.f32.mrf.mxu0
  %v2285 = vadd.f32 0.0, %v2284
  %v2286 = vpop.f32.mrf.mxu0
  %v2287 = vadd.f32 0.0, %v2286
  %v2288 = vpop.f32.mrf.mxu0
  %v2289 = vadd.f32 0.0, %v2288
  %v2290 = vpop.f32.mrf.mxu0
  %v2291 = vadd.f32 0.0, %v2290
  %2292 = vmatprep.mubr.bf16.mxu0 0
  %2293 = vmatmul.mubr.bf16.gmra.mxu0 %v625
  %v2294 = vpop.f32.mrf.mxu0
  %v2295 = vadd.f32 0.0, %v2294
  %v2296 = vpop.f32.mrf.mxu0
  %v2297 = vadd.f32 0.0, %v2296
  %v2298 = vpop.f32.mrf.mxu0
  %v2299 = vadd.f32 0.0, %v2298
  %v2300 = vpop.f32.mrf.mxu0
  %v2301 = vadd.f32 0.0, %v2300
  %2302 = vmatprep.mubr.bf16.mxu0 0
  %2303 = vmatmul.mubr.bf16.gmra.mxu0 %v628
  %v2304 = vpop.f32.mrf.mxu0
  %v2305 = vadd.f32 0.0, %v2304
  %v2306 = vpop.f32.mrf.mxu0
  %v2307 = vadd.f32 0.0, %v2306
  %v2308 = vpop.f32.mrf.mxu0
  %v2309 = vadd.f32 0.0, %v2308
  %v2310 = vpop.f32.mrf.mxu0
  %v2311 = vadd.f32 0.0, %v2310
  %2312 = vmatprep.mubr.bf16.mxu0 0
  %2313 = vmatmul.mubr.bf16.gmra.mxu0 %v631
  %v2314 = vpop.f32.mrf.mxu0
  %v2315 = vadd.f32 0.0, %v2314
  %v2316 = vpop.f32.mrf.mxu0
  %v2317 = vadd.f32 0.0, %v2316
  %v2318 = vpop.f32.mrf.mxu0
  %v2319 = vadd.f32 0.0, %v2318
  %v2320 = vpop.f32.mrf.mxu0
  %v2321 = vadd.f32 0.0, %v2320
  %2322 = vmatprep.mubr.bf16.mxu0 0
  %2323 = vmatmul.mubr.bf16.gmra.mxu0 %v634
  %v2324 = vpop.f32.mrf.mxu0
  %v2325 = vadd.f32 0.0, %v2324
  %v2326 = vpop.f32.mrf.mxu0
  %v2327 = vadd.f32 0.0, %v2326
  %v2328 = vpop.f32.mrf.mxu0
  %v2329 = vadd.f32 0.0, %v2328
  %v2330 = vpop.f32.mrf.mxu0
  %v2331 = vadd.f32 0.0, %v2330
  %2332 = vmatprep.mubr.bf16.mxu0 0
  %2333 = vmatmul.mubr.bf16.gmra.mxu0 %v637
  %v2334 = vpop.f32.mrf.mxu0
  %v2335 = vadd.f32 0.0, %v2334
  %v2336 = vpop.f32.mrf.mxu0
  %v2337 = vadd.f32 0.0, %v2336
  %v2338 = vpop.f32.mrf.mxu0
  %v2339 = vadd.f32 0.0, %v2338
  %v2340 = vpop.f32.mrf.mxu0
  %v2341 = vadd.f32 0.0, %v2340
  %2342 = vmatprep.mubr.bf16.mxu0 0
  %2343 = vmatmul.mubr.bf16.gmra.mxu0 %v640
  %v2344 = vpop.f32.mrf.mxu0
  %v2345 = vadd.f32 0.0, %v2344
  %v2346 = vpop.f32.mrf.mxu0
  %v2347 = vadd.f32 0.0, %v2346
  %v2348 = vpop.f32.mrf.mxu0
  %v2349 = vadd.f32 0.0, %v2348
  %v2350 = vpop.f32.mrf.mxu0
  %v2351 = vadd.f32 0.0, %v2350
  %2352 = vmatprep.mubr.bf16.mxu0 0
  %2353 = vmatmul.mubr.bf16.gmra.mxu0 %v643
  %v2354 = vpop.f32.mrf.mxu0
  %v2355 = vadd.f32 0.0, %v2354
  %v2356 = vpop.f32.mrf.mxu0
  %v2357 = vadd.f32 0.0, %v2356
  %v2358 = vpop.f32.mrf.mxu0
  %v2359 = vadd.f32 0.0, %v2358
  %v2360 = vpop.f32.mrf.mxu0
  %v2361 = vadd.f32 0.0, %v2360
  %2362 = vmatprep.mubr.bf16.mxu0 0
  %2363 = vmatmul.mubr.bf16.gmra.mxu0 %v646
  %v2364 = vpop.f32.mrf.mxu0
  %v2365 = vadd.f32 0.0, %v2364
  %v2366 = vpop.f32.mrf.mxu0
  %v2367 = vadd.f32 0.0, %v2366
  %v2368 = vpop.f32.mrf.mxu0
  %v2369 = vadd.f32 0.0, %v2368
  %v2370 = vpop.f32.mrf.mxu0
  %v2371 = vadd.f32 0.0, %v2370
  %2372 = vmatprep.mubr.bf16.mxu0 0
  %2373 = vmatmul.mubr.bf16.gmra.mxu0 %v649
  %v2374 = vpop.f32.mrf.mxu0
  %v2375 = vadd.f32 0.0, %v2374
  %v2376 = vpop.f32.mrf.mxu0
  %v2377 = vadd.f32 0.0, %v2376
  %v2378 = vpop.f32.mrf.mxu0
  %v2379 = vadd.f32 0.0, %v2378
  %v2380 = vpop.f32.mrf.mxu0
  %v2381 = vadd.f32 0.0, %v2380
  %2382 = vmatprep.mubr.bf16.mxu0 0
  %2383 = vmatmul.mubr.bf16.gmra.mxu0 %v652
  %v2384 = vpop.f32.mrf.mxu0
  %v2385 = vadd.f32 0.0, %v2384
  %v2386 = vpop.f32.mrf.mxu0
  %v2387 = vadd.f32 0.0, %v2386
  %v2388 = vpop.f32.mrf.mxu0
  %v2389 = vadd.f32 0.0, %v2388
  %v2390 = vpop.f32.mrf.mxu0
  %v2391 = vadd.f32 0.0, %v2390
  %2392 = vmatprep.mubr.bf16.mxu0 0
  %2393 = vmatmul.mubr.bf16.gmra.mxu0 %v655
  %v2394 = vpop.f32.mrf.mxu0
  %v2395 = vadd.f32 0.0, %v2394
  %v2396 = vpop.f32.mrf.mxu0
  %v2397 = vadd.f32 0.0, %v2396
  %v2398 = vpop.f32.mrf.mxu0
  %v2399 = vadd.f32 0.0, %v2398
  %v2400 = vpop.f32.mrf.mxu0
  %v2401 = vadd.f32 0.0, %v2400
  %2402 = vmatprep.mubr.bf16.mxu0 0
  %2403 = vmatmul.mubr.bf16.gmra.mxu0 %v658
  %v2404 = vpop.f32.mrf.mxu0
  %v2405 = vadd.f32 0.0, %v2404
  %v2406 = vpop.f32.mrf.mxu0
  %v2407 = vadd.f32 0.0, %v2406
  %v2408 = vpop.f32.mrf.mxu0
  %v2409 = vadd.f32 0.0, %v2408
  %v2410 = vpop.f32.mrf.mxu0
  %v2411 = vadd.f32 0.0, %v2410
  %2412 = vmatprep.mubr.bf16.mxu0 0
  %2413 = vmatmul.mubr.bf16.gmra.mxu0 %v661
  %v2414 = vpop.f32.mrf.mxu0
  %v2415 = vadd.f32 0.0, %v2414
  %v2416 = vpop.f32.mrf.mxu0
  %v2417 = vadd.f32 0.0, %v2416
  %v2418 = vpop.f32.mrf.mxu0
  %v2419 = vadd.f32 0.0, %v2418
  %v2420 = vpop.f32.mrf.mxu0
  %v2421 = vadd.f32 0.0, %v2420
  %2422 = vmatprep.mubr.bf16.mxu0 0
  %2423 = vmatmul.mubr.bf16.gmra.mxu0 %v664
  %v2424 = vpop.f32.mrf.mxu0
  %v2425 = vadd.f32 0.0, %v2424
  %v2426 = vpop.f32.mrf.mxu0
  %v2427 = vadd.f32 0.0, %v2426
  %v2428 = vpop.f32.mrf.mxu0
  %v2429 = vadd.f32 0.0, %v2428
  %v2430 = vpop.f32.mrf.mxu0
  %v2431 = vadd.f32 0.0, %v2430
  %2432 = vmatprep.mubr.bf16.mxu0 0
  %2433 = vmatmul.mubr.bf16.gmra.mxu0 %v667
  %v2434 = vpop.f32.mrf.mxu0
  %v2435 = vadd.f32 0.0, %v2434
  %v2436 = vpop.f32.mrf.mxu0
  %v2437 = vadd.f32 0.0, %v2436
  %v2438 = vpop.f32.mrf.mxu0
  %v2439 = vadd.f32 0.0, %v2438
  %v2440 = vpop.f32.mrf.mxu0
  %v2441 = vadd.f32 0.0, %v2440
  %2442 = vmatprep.mubr.bf16.mxu0 0
  %2443 = vmatmul.mubr.bf16.gmra.mxu0 %v670
  %v2444 = vpop.f32.mrf.mxu0
  %v2445 = vadd.f32 0.0, %v2444
  %v2446 = vpop.f32.mrf.mxu0
  %v2447 = vadd.f32 0.0, %v2446
  %v2448 = vpop.f32.mrf.mxu0
  %v2449 = vadd.f32 0.0, %v2448
  %v2450 = vpop.f32.mrf.mxu0
  %v2451 = vadd.f32 0.0, %v2450
  %2452 = vmatprep.mubr.bf16.mxu0 0
  %2453 = vmatmul.mubr.bf16.gmra.mxu0 %v673
  %v2454 = vpop.f32.mrf.mxu0
  %v2455 = vadd.f32 0.0, %v2454
  %v2456 = vpop.f32.mrf.mxu0
  %v2457 = vadd.f32 0.0, %v2456
  %v2458 = vpop.f32.mrf.mxu0
  %v2459 = vadd.f32 0.0, %v2458
  %v2460 = vpop.f32.mrf.mxu0
  %v2461 = vadd.f32 0.0, %v2460
  %2462 = vmatprep.mubr.bf16.mxu0 0
  %2463 = vmatmul.mubr.bf16.gmra.mxu0 %v676
  %v2464 = vpop.f32.mrf.mxu0
  %v2465 = vadd.f32 0.0, %v2464
  %v2466 = vpop.f32.mrf.mxu0
  %v2467 = vadd.f32 0.0, %v2466
  %v2468 = vpop.f32.mrf.mxu0
  %v2469 = vadd.f32 0.0, %v2468
  %v2470 = vpop.f32.mrf.mxu0
  %v2471 = vadd.f32 0.0, %v2470
  %2472 = vmatprep.mubr.bf16.mxu0 0
  %2473 = vmatmul.mubr.bf16.gmra.mxu0 %v679
  %v2474 = vpop.f32.mrf.mxu0
  %v2475 = vadd.f32 0.0, %v2474
  %v2476 = vpop.f32.mrf.mxu0
  %v2477 = vadd.f32 0.0, %v2476
  %v2478 = vpop.f32.mrf.mxu0
  %v2479 = vadd.f32 0.0, %v2478
  %v2480 = vpop.f32.mrf.mxu0
  %v2481 = vadd.f32 0.0, %v2480
  %2482 = vmatprep.mubr.bf16.mxu0 0
  %2483 = vmatmul.mubr.bf16.gmra.mxu0 %v682
  %v2484 = vpop.f32.mrf.mxu0
  %v2485 = vadd.f32 0.0, %v2484
  %v2486 = vpop.f32.mrf.mxu0
  %v2487 = vadd.f32 0.0, %v2486
  %v2488 = vpop.f32.mrf.mxu0
  %v2489 = vadd.f32 0.0, %v2488
  %v2490 = vpop.f32.mrf.mxu0
  %v2491 = vadd.f32 0.0, %v2490
  %2492 = vmatprep.mubr.bf16.mxu0 0
  %2493 = vmatmul.mubr.bf16.gmra.mxu0 %v685
  %v2494 = vpop.f32.mrf.mxu0
  %v2495 = vadd.f32 0.0, %v2494
  %v2496 = vpop.f32.mrf.mxu0
  %v2497 = vadd.f32 0.0, %v2496
  %v2498 = vpop.f32.mrf.mxu0
  %v2499 = vadd.f32 0.0, %v2498
  %v2500 = vpop.f32.mrf.mxu0
  %v2501 = vadd.f32 0.0, %v2500
  %2502 = vmatprep.mubr.bf16.mxu0 0
  %2503 = vmatmul.mubr.bf16.gmra.mxu0 %v688
  %v2504 = vpop.f32.mrf.mxu0
  %v2505 = vadd.f32 0.0, %v2504
  %v2506 = vpop.f32.mrf.mxu0
  %v2507 = vadd.f32 0.0, %v2506
  %v2508 = vpop.f32.mrf.mxu0
  %v2509 = vadd.f32 0.0, %v2508
  %v2510 = vpop.f32.mrf.mxu0
  %v2511 = vadd.f32 0.0, %v2510
  %2512 = vmatprep.mubr.bf16.mxu0 0
  %2513 = vmatmul.mubr.bf16.gmra.mxu0 %v691
  %v2514 = vpop.f32.mrf.mxu0
  %v2515 = vadd.f32 0.0, %v2514
  %v2516 = vpop.f32.mrf.mxu0
  %v2517 = vadd.f32 0.0, %v2516
  %v2518 = vpop.f32.mrf.mxu0
  %v2519 = vadd.f32 0.0, %v2518
  %v2520 = vpop.f32.mrf.mxu0
  %v2521 = vadd.f32 0.0, %v2520
  %2522 = vmatprep.mubr.bf16.mxu0 0
  %2523 = vmatmul.mubr.bf16.gmra.mxu0 %v694
  %v2524 = vpop.f32.mrf.mxu0
  %v2525 = vadd.f32 0.0, %v2524
  %v2526 = vpop.f32.mrf.mxu0
  %v2527 = vadd.f32 0.0, %v2526
  %v2528 = vpop.f32.mrf.mxu0
  %v2529 = vadd.f32 0.0, %v2528
  %v2530 = vpop.f32.mrf.mxu0
  %v2531 = vadd.f32 0.0, %v2530
  %2532 = vmatprep.mubr.bf16.mxu0 0
  %2533 = vmatmul.mubr.bf16.gmra.mxu0 %v697
  %v2534 = vpop.f32.mrf.mxu0
  %v2535 = vadd.f32 0.0, %v2534
  %v2536 = vpop.f32.mrf.mxu0
  %v2537 = vadd.f32 0.0, %v2536
  %v2538 = vpop.f32.mrf.mxu0
  %v2539 = vadd.f32 0.0, %v2538
  %v2540 = vpop.f32.mrf.mxu0
  %v2541 = vadd.f32 0.0, %v2540
  %2542 = vmatprep.mubr.bf16.mxu0 0
  %2543 = vmatmul.mubr.bf16.gmra.mxu0 %v700
  %v2544 = vpop.f32.mrf.mxu0
  %v2545 = vadd.f32 0.0, %v2544
  %v2546 = vpop.f32.mrf.mxu0
  %v2547 = vadd.f32 0.0, %v2546
  %v2548 = vpop.f32.mrf.mxu0
  %v2549 = vadd.f32 0.0, %v2548
  %v2550 = vpop.f32.mrf.mxu0
  %v2551 = vadd.f32 0.0, %v2550
  %2552 = vmatprep.mubr.bf16.mxu0 0
  %2553 = vmatmul.mubr.bf16.gmra.mxu0 %v703
  %v2554 = vpop.f32.mrf.mxu0
  %v2555 = vadd.f32 0.0, %v2554
  %v2556 = vpop.f32.mrf.mxu0
  %v2557 = vadd.f32 0.0, %v2556
  %v2558 = vpop.f32.mrf.mxu0
  %v2559 = vadd.f32 0.0, %v2558
  %v2560 = vpop.f32.mrf.mxu0
  %v2561 = vadd.f32 0.0, %v2560
  %2562 = vmatprep.mubr.bf16.mxu0 0
  %2563 = vmatmul.mubr.bf16.gmra.mxu0 %v706
  %v2564 = vpop.f32.mrf.mxu0
  %v2565 = vadd.f32 0.0, %v2564
  %v2566 = vpop.f32.mrf.mxu0
  %v2567 = vadd.f32 0.0, %v2566
  %v2568 = vpop.f32.mrf.mxu0
  %v2569 = vadd.f32 0.0, %v2568
  %v2570 = vpop.f32.mrf.mxu0
  %v2571 = vadd.f32 0.0, %v2570
  %2572 = vmatprep.mubr.bf16.mxu0 0
  %2573 = vmatmul.mubr.bf16.gmra.mxu0 %v709
  %v2574 = vpop.f32.mrf.mxu0
  %v2575 = vadd.f32 0.0, %v2574
  %v2576 = vpop.f32.mrf.mxu0
  %v2577 = vadd.f32 0.0, %v2576
  %v2578 = vpop.f32.mrf.mxu0
  %v2579 = vadd.f32 0.0, %v2578
  %v2580 = vpop.f32.mrf.mxu0
  %v2581 = vadd.f32 0.0, %v2580
  %2582 = vmatprep.mubr.bf16.mxu0 0
  %2583 = vmatmul.mubr.bf16.gmra.mxu0 %v712
  %v2584 = vpop.f32.mrf.mxu0
  %v2585 = vadd.f32 0.0, %v2584
  %v2586 = vpop.f32.mrf.mxu0
  %v2587 = vadd.f32 0.0, %v2586
  %v2588 = vpop.f32.mrf.mxu0
  %v2589 = vadd.f32 0.0, %v2588
  %v2590 = vpop.f32.mrf.mxu0
  %v2591 = vadd.f32 0.0, %v2590
  %2592 = vmatprep.mubr.bf16.mxu0 0
  %2593 = vmatmul.mubr.bf16.gmra.mxu0 %v715
  %v2594 = vpop.f32.mrf.mxu0
  %v2595 = vadd.f32 0.0, %v2594
  %v2596 = vpop.f32.mrf.mxu0
  %v2597 = vadd.f32 0.0, %v2596
  %v2598 = vpop.f32.mrf.mxu0
  %v2599 = vadd.f32 0.0, %v2598
  %v2600 = vpop.f32.mrf.mxu0
  %v2601 = vadd.f32 0.0, %v2600
  %2602 = vmatprep.mubr.bf16.mxu0 0
  %2603 = vmatmul.mubr.bf16.gmra.mxu0 %v718
  %v2604 = vpop.f32.mrf.mxu0
  %v2605 = vadd.f32 0.0, %v2604
  %v2606 = vpop.f32.mrf.mxu0
  %v2607 = vadd.f32 0.0, %v2606
  %v2608 = vpop.f32.mrf.mxu0
  %v2609 = vadd.f32 0.0, %v2608
  %v2610 = vpop.f32.mrf.mxu0
  %v2611 = vadd.f32 0.0, %v2610
  %2612 = vmatprep.mubr.bf16.mxu0 0
  %2613 = vmatmul.mubr.bf16.gmra.mxu0 %v721
  %v2614 = vpop.f32.mrf.mxu0
  %v2615 = vadd.f32 0.0, %v2614
  %v2616 = vpop.f32.mrf.mxu0
  %v2617 = vadd.f32 0.0, %v2616
  %v2618 = vpop.f32.mrf.mxu0
  %v2619 = vadd.f32 0.0, %v2618
  %v2620 = vpop.f32.mrf.mxu0
  %v2621 = vadd.f32 0.0, %v2620
  %2622 = vmatprep.mubr.bf16.mxu0 0
  %2623 = vmatmul.mubr.bf16.gmra.mxu0 %v724
  %v2624 = vpop.f32.mrf.mxu0
  %v2625 = vadd.f32 0.0, %v2624
  %v2626 = vpop.f32.mrf.mxu0
  %v2627 = vadd.f32 0.0, %v2626
  %v2628 = vpop.f32.mrf.mxu0
  %v2629 = vadd.f32 0.0, %v2628
  %v2630 = vpop.f32.mrf.mxu0
  %v2631 = vadd.f32 0.0, %v2630
  %2632 = vmatprep.mubr.bf16.mxu0 0
  %2633 = vmatmul.mubr.bf16.gmra.mxu0 %v727
  %v2634 = vpop.f32.mrf.mxu0
  %v2635 = vadd.f32 0.0, %v2634
  %v2636 = vpop.f32.mrf.mxu0
  %v2637 = vadd.f32 0.0, %v2636
  %v2638 = vpop.f32.mrf.mxu0
  %v2639 = vadd.f32 0.0, %v2638
  %v2640 = vpop.f32.mrf.mxu0
  %v2641 = vadd.f32 0.0, %v2640
  %2642 = vmatprep.mubr.bf16.mxu0 0
  %2643 = vmatmul.mubr.bf16.gmra.mxu0 %v730
  %v2644 = vpop.f32.mrf.mxu0
  %v2645 = vadd.f32 0.0, %v2644
  %v2646 = vpop.f32.mrf.mxu0
  %v2647 = vadd.f32 0.0, %v2646
  %v2648 = vpop.f32.mrf.mxu0
  %v2649 = vadd.f32 0.0, %v2648
  %v2650 = vpop.f32.mrf.mxu0
  %v2651 = vadd.f32 0.0, %v2650
  %2652 = vmatprep.mubr.bf16.mxu0 0
  %2653 = vmatmul.mubr.bf16.gmra.mxu0 %v733
  %v2654 = vpop.f32.mrf.mxu0
  %v2655 = vadd.f32 0.0, %v2654
  %v2656 = vpop.f32.mrf.mxu0
  %v2657 = vadd.f32 0.0, %v2656
  %v2658 = vpop.f32.mrf.mxu0
  %v2659 = vadd.f32 0.0, %v2658
  %v2660 = vpop.f32.mrf.mxu0
  %v2661 = vadd.f32 0.0, %v2660
  %2662 = vmatprep.mubr.bf16.mxu0 0
  %2663 = vmatmul.mubr.bf16.gmra.mxu0 %v736
  %v2664 = vpop.f32.mrf.mxu0
  %v2665 = vadd.f32 0.0, %v2664
  %v2666 = vpop.f32.mrf.mxu0
  %v2667 = vadd.f32 0.0, %v2666
  %v2668 = vpop.f32.mrf.mxu0
  %v2669 = vadd.f32 0.0, %v2668
  %v2670 = vpop.f32.mrf.mxu0
  %v2671 = vadd.f32 0.0, %v2670
  %2672 = vmatprep.mubr.bf16.mxu0 0
  %2673 = vmatmul.mubr.bf16.gmra.mxu0 %v739
  %v2674 = vpop.f32.mrf.mxu0
  %v2675 = vadd.f32 0.0, %v2674
  %v2676 = vpop.f32.mrf.mxu0
  %v2677 = vadd.f32 0.0, %v2676
  %v2678 = vpop.f32.mrf.mxu0
  %v2679 = vadd.f32 0.0, %v2678
  %v2680 = vpop.f32.mrf.mxu0
  %v2681 = vadd.f32 0.0, %v2680
  %2682 = vmatprep.mubr.bf16.mxu0 0
  %2683 = vmatmul.mubr.bf16.gmra.mxu0 %v742
  %v2684 = vpop.f32.mrf.mxu0
  %v2685 = vadd.f32 0.0, %v2684
  %v2686 = vpop.f32.mrf.mxu0
  %v2687 = vadd.f32 0.0, %v2686
  %v2688 = vpop.f32.mrf.mxu0
  %v2689 = vadd.f32 0.0, %v2688
  %v2690 = vpop.f32.mrf.mxu0
  %v2691 = vadd.f32 0.0, %v2690
  %2692 = vmatprep.mubr.bf16.mxu0 0
  %2693 = vmatmul.mubr.bf16.gmra.mxu0 %v745
  %v2694 = vpop.f32.mrf.mxu0
  %v2695 = vadd.f32 0.0, %v2694
  %v2696 = vpop.f32.mrf.mxu0
  %v2697 = vadd.f32 0.0, %v2696
  %v2698 = vpop.f32.mrf.mxu0
  %v2699 = vadd.f32 0.0, %v2698
  %v2700 = vpop.f32.mrf.mxu0
  %v2701 = vadd.f32 0.0, %v2700
  %2702 = vmatprep.mubr.bf16.mxu0 0
  %2703 = vmatmul.mubr.bf16.gmra.mxu0 %v748
  %v2704 = vpop.f32.mrf.mxu0
  %v2705 = vadd.f32 0.0, %v2704
  %v2706 = vpop.f32.mrf.mxu0
  %v2707 = vadd.f32 0.0, %v2706
  %v2708 = vpop.f32.mrf.mxu0
  %v2709 = vadd.f32 0.0, %v2708
  %v2710 = vpop.f32.mrf.mxu0
  %v2711 = vadd.f32 0.0, %v2710
  %2712 = vmatprep.mubr.bf16.mxu0 0
  %2713 = vmatmul.mubr.bf16.gmra.mxu0 %v751
  %v2714 = vpop.f32.mrf.mxu0
  %v2715 = vadd.f32 0.0, %v2714
  %v2716 = vpop.f32.mrf.mxu0
  %v2717 = vadd.f32 0.0, %v2716
  %v2718 = vpop.f32.mrf.mxu0
  %v2719 = vadd.f32 0.0, %v2718
  %v2720 = vpop.f32.mrf.mxu0
  %v2721 = vadd.f32 0.0, %v2720
  %2722 = vmatprep.mubr.bf16.mxu0 0
  %2723 = vmatmul.mubr.bf16.gmra.mxu0 %v754
  %v2724 = vpop.f32.mrf.mxu0
  %v2725 = vadd.f32 0.0, %v2724
  %v2726 = vpop.f32.mrf.mxu0
  %v2727 = vadd.f32 0.0, %v2726
  %v2728 = vpop.f32.mrf.mxu0
  %v2729 = vadd.f32 0.0, %v2728
  %v2730 = vpop.f32.mrf.mxu0
  %v2731 = vadd.f32 0.0, %v2730
  %2732 = vmatprep.mubr.bf16.mxu0 0
  %2733 = vmatmul.mubr.bf16.gmra.mxu0 %v757
  %v2734 = vpop.f32.mrf.mxu0
  %v2735 = vadd.f32 0.0, %v2734
  %v2736 = vpop.f32.mrf.mxu0
  %v2737 = vadd.f32 0.0, %v2736
  %v2738 = vpop.f32.mrf.mxu0
  %v2739 = vadd.f32 0.0, %v2738
  %v2740 = vpop.f32.mrf.mxu0
  %v2741 = vadd.f32 0.0, %v2740
  %2742 = vmatprep.mubr.bf16.mxu0 0
  %2743 = vmatmul.mubr.bf16.gmra.mxu0 %v760
  %v2744 = vpop.f32.mrf.mxu0
  %v2745 = vadd.f32 0.0, %v2744
  %v2746 = vpop.f32.mrf.mxu0
  %v2747 = vadd.f32 0.0, %v2746
  %v2748 = vpop.f32.mrf.mxu0
  %v2749 = vadd.f32 0.0, %v2748
  %v2750 = vpop.f32.mrf.mxu0
  %v2751 = vadd.f32 0.0, %v2750
  %2752 = vmatprep.mubr.bf16.mxu0 0
  %2753 = vmatmul.mubr.bf16.gmra.mxu0 %v763
  %v2754 = vpop.f32.mrf.mxu0
  %v2755 = vadd.f32 0.0, %v2754
  %v2756 = vpop.f32.mrf.mxu0
  %v2757 = vadd.f32 0.0, %v2756
  %v2758 = vpop.f32.mrf.mxu0
  %v2759 = vadd.f32 0.0, %v2758
  %v2760 = vpop.f32.mrf.mxu0
  %v2761 = vadd.f32 0.0, %v2760
  %2762 = vmatprep.mubr.bf16.mxu0 0
  %2763 = vmatmul.mubr.bf16.gmra.mxu0 %v766
  %v2764 = vpop.f32.mrf.mxu0
  %v2765 = vadd.f32 0.0, %v2764
  %v2766 = vpop.f32.mrf.mxu0
  %v2767 = vadd.f32 0.0, %v2766
  %v2768 = vpop.f32.mrf.mxu0
  %v2769 = vadd.f32 0.0, %v2768
  %v2770 = vpop.f32.mrf.mxu0
  %v2771 = vadd.f32 0.0, %v2770
  %2772 = vmatprep.mubr.bf16.mxu0 0
  %2773 = vmatmul.mubr.bf16.gmra.mxu0 %v769
  %v2774 = vpop.f32.mrf.mxu0
  %v2775 = vadd.f32 0.0, %v2774
  %v2776 = vpop.f32.mrf.mxu0
  %v2777 = vadd.f32 0.0, %v2776
  %v2778 = vpop.f32.mrf.mxu0
  %v2779 = vadd.f32 0.0, %v2778
  %v2780 = vpop.f32.mrf.mxu0
  %v2781 = vadd.f32 0.0, %v2780
  %2782 = vmatprep.mubr.bf16.mxu0 0
  %2783 = vmatmul.mubr.bf16.gmra.mxu0 %v772
  %v2784 = vpop.f32.mrf.mxu0
  %v2785 = vadd.f32 0.0, %v2784
  %v2786 = vpop.f32.mrf.mxu0
  %v2787 = vadd.f32 0.0, %v2786
  %v2788 = vpop.f32.mrf.mxu0
  %v2789 = vadd.f32 0.0, %v2788
  %v2790 = vpop.f32.mrf.mxu0
  %v2791 = vadd.f32 0.0, %v2790
  %2792 = vmatprep.mubr.bf16.mxu0 0
  %2793 = vmatmul.mubr.bf16.gmra.mxu0 %v775
  %v2794 = vpop.f32.mrf.mxu0
  %v2795 = vadd.f32 0.0, %v2794
  %v2796 = vpop.f32.mrf.mxu0
  %v2797 = vadd.f32 0.0, %v2796
  %v2798 = vpop.f32.mrf.mxu0
  %v2799 = vadd.f32 0.0, %v2798
  %v2800 = vpop.f32.mrf.mxu0
  %v2801 = vadd.f32 0.0, %v2800
  %2802 = vmatprep.mubr.bf16.mxu0 0
  %2803 = vmatmul.mubr.bf16.gmra.mxu0 %v778
  %v2804 = vpop.f32.mrf.mxu0
  %v2805 = vadd.f32 0.0, %v2804
  %v2806 = vpop.f32.mrf.mxu0
  %v2807 = vadd.f32 0.0, %v2806
  %v2808 = vpop.f32.mrf.mxu0
  %v2809 = vadd.f32 0.0, %v2808
  %v2810 = vpop.f32.mrf.mxu0
  %v2811 = vadd.f32 0.0, %v2810
  %2812 = vmatprep.mubr.bf16.mxu0 0
  %2813 = vmatmul.mubr.bf16.gmra.mxu0 %v781
  %v2814 = vpop.f32.mrf.mxu0
  %v2815 = vadd.f32 0.0, %v2814
  %v2816 = vpop.f32.mrf.mxu0
  %v2817 = vadd.f32 0.0, %v2816
  %v2818 = vpop.f32.mrf.mxu0
  %v2819 = vadd.f32 0.0, %v2818
  %v2820 = vpop.f32.mrf.mxu0
  %v2821 = vadd.f32 0.0, %v2820
  %2822 = vmatprep.mubr.bf16.mxu0 0
  %2823 = vmatmul.mubr.bf16.gmra.mxu0 %v784
  %v2824 = vpop.f32.mrf.mxu0
  %v2825 = vadd.f32 0.0, %v2824
  %v2826 = vpop.f32.mrf.mxu0
  %v2827 = vadd.f32 0.0, %v2826
  %v2828 = vpop.f32.mrf.mxu0
  %v2829 = vadd.f32 0.0, %v2828
  %v2830 = vpop.f32.mrf.mxu0
  %v2831 = vadd.f32 0.0, %v2830
  %2832 = vmatprep.mubr.bf16.mxu0 0
  %2833 = vmatmul.mubr.bf16.gmra.mxu0 %v787
  %v2834 = vpop.f32.mrf.mxu0
  %v2835 = vadd.f32 0.0, %v2834
  %v2836 = vpop.f32.mrf.mxu0
  %v2837 = vadd.f32 0.0, %v2836
  %v2838 = vpop.f32.mrf.mxu0
  %v2839 = vadd.f32 0.0, %v2838
  %v2840 = vpop.f32.mrf.mxu0
  %v2841 = vadd.f32 0.0, %v2840
  %2842 = vmatprep.mubr.bf16.mxu0 0
  %2843 = vmatmul.mubr.bf16.gmra.mxu0 %v790
  %v2844 = vpop.f32.mrf.mxu0
  %v2845 = vadd.f32 0.0, %v2844
  %v2846 = vpop.f32.mrf.mxu0
  %v2847 = vadd.f32 0.0, %v2846
  %v2848 = vpop.f32.mrf.mxu0
  %v2849 = vadd.f32 0.0, %v2848
  %v2850 = vpop.f32.mrf.mxu0
  %v2851 = vadd.f32 0.0, %v2850
  %2852 = vmatprep.mubr.bf16.mxu0 0
  %2853 = vmatmul.mubr.bf16.gmra.mxu0 %v793
  %v2854 = vpop.f32.mrf.mxu0
  %v2855 = vadd.f32 0.0, %v2854
  %v2856 = vpop.f32.mrf.mxu0
  %v2857 = vadd.f32 0.0, %v2856
  %v2858 = vpop.f32.mrf.mxu0
  %v2859 = vadd.f32 0.0, %v2858
  %v2860 = vpop.f32.mrf.mxu0
  %v2861 = vadd.f32 0.0, %v2860
  %2862 = vdwg.mxu0
  %2863 = vmatprep.subr.bf16.mxu0 0
  %2864 = vmatpush1.bf16.msra.mxu0 0
  %2865 = vmatprep.subr.bf16.mxu0 0
  %2866 = vmatpush1.bf16.msra.mxu0 0
  %2867 = vmatprep.subr.bf16.mxu0 0
  %2868 = vmatpush1.bf16.msra.mxu0 0
  %2869 = vmatprep.subr.bf16.mxu0 0
  %2870 = vmatpush1.bf16.msra.mxu0 0
  %2871 = vmatprep.subr.bf16.mxu0 0
  %2872 = vmatpush1.bf16.msra.mxu0 0
  %2873 = vmatprep.subr.bf16.mxu0 0
  %2874 = vmatpush1.bf16.msra.mxu0 0
  %2875 = vmatprep.subr.bf16.mxu0 0
  %2876 = vmatpush1.bf16.msra.mxu0 0
  %2877 = vmatprep.subr.bf16.mxu0 %v818
  %2878 = vmatpush1.bf16.msra.mxu0 %v815
  %2879 = vmatprep.subr.bf16.mxu0 0
  %2880 = vmatpush2.bf16.msra.mxu0 0
  %2881 = vmatprep.subr.bf16.mxu0 0
  %2882 = vmatpush2.bf16.msra.mxu0 0
  %2883 = vmatprep.subr.bf16.mxu0 0
  %2884 = vmatpush2.bf16.msra.mxu0 0
  %2885 = vmatprep.subr.bf16.mxu0 0
  %2886 = vmatpush2.bf16.msra.mxu0 0
  %2887 = vmatprep.subr.bf16.mxu0 0
  %2888 = vmatpush2.bf16.msra.mxu0 0
  %2889 = vmatprep.subr.bf16.mxu0 0
  %2890 = vmatpush2.bf16.msra.mxu0 0
  %2891 = vmatprep.subr.bf16.mxu0 0
  %2892 = vmatpush2.bf16.msra.mxu0 0
  %2893 = vmatprep.subr.bf16.mxu0 0
  %2894 = vmatpush2.bf16.msra.mxu0 0
  %2895 = vmatprep.mubr.bf16.mxu0 0
  %2896 = vmatmul.mubr.bf16.gmra.mxu0 %v604
  %v2897 = vpop.f32.mrf.mxu0
  %v2898 = vadd.f32 0.0, %v2897
  %v2899 = vpop.f32.mrf.mxu0
  %v2900 = vadd.f32 0.0, %v2899
  %v2901 = vpop.f32.mrf.mxu0
  %v2902 = vadd.f32 0.0, %v2901
  %v2903 = vpop.f32.mrf.mxu0
  %v2904 = vadd.f32 0.0, %v2903
  %2905 = vmatprep.mubr.bf16.mxu0 0
  %2906 = vmatmul.mubr.bf16.gmra.mxu0 %v607
  %v2907 = vpop.f32.mrf.mxu0
  %v2908 = vadd.f32 0.0, %v2907
  %v2909 = vpop.f32.mrf.mxu0
  %v2910 = vadd.f32 0.0, %v2909
  %v2911 = vpop.f32.mrf.mxu0
  %v2912 = vadd.f32 0.0, %v2911
  %v2913 = vpop.f32.mrf.mxu0
  %v2914 = vadd.f32 0.0, %v2913
  %2915 = vmatprep.mubr.bf16.mxu0 0
  %2916 = vmatmul.mubr.bf16.gmra.mxu0 %v610
  %v2917 = vpop.f32.mrf.mxu0
  %v2918 = vadd.f32 0.0, %v2917
  %v2919 = vpop.f32.mrf.mxu0
  %v2920 = vadd.f32 0.0, %v2919
  %v2921 = vpop.f32.mrf.mxu0
  %v2922 = vadd.f32 0.0, %v2921
  %v2923 = vpop.f32.mrf.mxu0
  %v2924 = vadd.f32 0.0, %v2923
  %2925 = vmatprep.mubr.bf16.mxu0 0
  %2926 = vmatmul.mubr.bf16.gmra.mxu0 %v613
  %v2927 = vpop.f32.mrf.mxu0
  %v2928 = vadd.f32 0.0, %v2927
  %v2929 = vpop.f32.mrf.mxu0
  %v2930 = vadd.f32 0.0, %v2929
  %v2931 = vpop.f32.mrf.mxu0
  %v2932 = vadd.f32 0.0, %v2931
  %v2933 = vpop.f32.mrf.mxu0
  %v2934 = vadd.f32 0.0, %v2933
  %2935 = vmatprep.mubr.bf16.mxu0 0
  %2936 = vmatmul.mubr.bf16.gmra.mxu0 %v616
  %v2937 = vpop.f32.mrf.mxu0
  %v2938 = vadd.f32 0.0, %v2937
  %v2939 = vpop.f32.mrf.mxu0
  %v2940 = vadd.f32 0.0, %v2939
  %v2941 = vpop.f32.mrf.mxu0
  %v2942 = vadd.f32 0.0, %v2941
  %v2943 = vpop.f32.mrf.mxu0
  %v2944 = vadd.f32 0.0, %v2943
  %2945 = vmatprep.mubr.bf16.mxu0 0
  %2946 = vmatmul.mubr.bf16.gmra.mxu0 %v619
  %v2947 = vpop.f32.mrf.mxu0
  %v2948 = vadd.f32 0.0, %v2947
  %v2949 = vpop.f32.mrf.mxu0
  %v2950 = vadd.f32 0.0, %v2949
  %v2951 = vpop.f32.mrf.mxu0
  %v2952 = vadd.f32 0.0, %v2951
  %v2953 = vpop.f32.mrf.mxu0
  %v2954 = vadd.f32 0.0, %v2953
  %2955 = vmatprep.mubr.bf16.mxu0 0
  %2956 = vmatmul.mubr.bf16.gmra.mxu0 %v622
  %v2957 = vpop.f32.mrf.mxu0
  %v2958 = vadd.f32 0.0, %v2957
  %v2959 = vpop.f32.mrf.mxu0
  %v2960 = vadd.f32 0.0, %v2959
  %v2961 = vpop.f32.mrf.mxu0
  %v2962 = vadd.f32 0.0, %v2961
  %v2963 = vpop.f32.mrf.mxu0
  %v2964 = vadd.f32 0.0, %v2963
  %2965 = vmatprep.mubr.bf16.mxu0 0
  %2966 = vmatmul.mubr.bf16.gmra.mxu0 %v625
  %v2967 = vpop.f32.mrf.mxu0
  %v2968 = vadd.f32 0.0, %v2967
  %v2969 = vpop.f32.mrf.mxu0
  %v2970 = vadd.f32 0.0, %v2969
  %v2971 = vpop.f32.mrf.mxu0
  %v2972 = vadd.f32 0.0, %v2971
  %v2973 = vpop.f32.mrf.mxu0
  %v2974 = vadd.f32 0.0, %v2973
  %2975 = vmatprep.mubr.bf16.mxu0 0
  %2976 = vmatmul.mubr.bf16.gmra.mxu0 %v628
  %v2977 = vpop.f32.mrf.mxu0
  %v2978 = vadd.f32 0.0, %v2977
  %v2979 = vpop.f32.mrf.mxu0
  %v2980 = vadd.f32 0.0, %v2979
  %v2981 = vpop.f32.mrf.mxu0
  %v2982 = vadd.f32 0.0, %v2981
  %v2983 = vpop.f32.mrf.mxu0
  %v2984 = vadd.f32 0.0, %v2983
  %2985 = vmatprep.mubr.bf16.mxu0 0
  %2986 = vmatmul.mubr.bf16.gmra.mxu0 %v631
  %v2987 = vpop.f32.mrf.mxu0
  %v2988 = vadd.f32 0.0, %v2987
  %v2989 = vpop.f32.mrf.mxu0
  %v2990 = vadd.f32 0.0, %v2989
  %v2991 = vpop.f32.mrf.mxu0
  %v2992 = vadd.f32 0.0, %v2991
  %v2993 = vpop.f32.mrf.mxu0
  %v2994 = vadd.f32 0.0, %v2993
  %2995 = vmatprep.mubr.bf16.mxu0 0
  %2996 = vmatmul.mubr.bf16.gmra.mxu0 %v634
  %v2997 = vpop.f32.mrf.mxu0
  %v2998 = vadd.f32 0.0, %v2997
  %v2999 = vpop.f32.mrf.mxu0
  %v3000 = vadd.f32 0.0, %v2999
  %v3001 = vpop.f32.mrf.mxu0
  %v3002 = vadd.f32 0.0, %v3001
  %v3003 = vpop.f32.mrf.mxu0
  %v3004 = vadd.f32 0.0, %v3003
  %3005 = vmatprep.mubr.bf16.mxu0 0
  %3006 = vmatmul.mubr.bf16.gmra.mxu0 %v637
  %v3007 = vpop.f32.mrf.mxu0
  %v3008 = vadd.f32 0.0, %v3007
  %v3009 = vpop.f32.mrf.mxu0
  %v3010 = vadd.f32 0.0, %v3009
  %v3011 = vpop.f32.mrf.mxu0
  %v3012 = vadd.f32 0.0, %v3011
  %v3013 = vpop.f32.mrf.mxu0
  %v3014 = vadd.f32 0.0, %v3013
  %3015 = vmatprep.mubr.bf16.mxu0 0
  %3016 = vmatmul.mubr.bf16.gmra.mxu0 %v640
  %v3017 = vpop.f32.mrf.mxu0
  %v3018 = vadd.f32 0.0, %v3017
  %v3019 = vpop.f32.mrf.mxu0
  %v3020 = vadd.f32 0.0, %v3019
  %v3021 = vpop.f32.mrf.mxu0
  %v3022 = vadd.f32 0.0, %v3021
  %v3023 = vpop.f32.mrf.mxu0
  %v3024 = vadd.f32 0.0, %v3023
  %3025 = vmatprep.mubr.bf16.mxu0 0
  %3026 = vmatmul.mubr.bf16.gmra.mxu0 %v643
  %v3027 = vpop.f32.mrf.mxu0
  %v3028 = vadd.f32 0.0, %v3027
  %v3029 = vpop.f32.mrf.mxu0
  %v3030 = vadd.f32 0.0, %v3029
  %v3031 = vpop.f32.mrf.mxu0
  %v3032 = vadd.f32 0.0, %v3031
  %v3033 = vpop.f32.mrf.mxu0
  %v3034 = vadd.f32 0.0, %v3033
  %3035 = vmatprep.mubr.bf16.mxu0 0
  %3036 = vmatmul.mubr.bf16.gmra.mxu0 %v646
  %v3037 = vpop.f32.mrf.mxu0
  %v3038 = vadd.f32 0.0, %v3037
  %v3039 = vpop.f32.mrf.mxu0
  %v3040 = vadd.f32 0.0, %v3039
  %v3041 = vpop.f32.mrf.mxu0
  %v3042 = vadd.f32 0.0, %v3041
  %v3043 = vpop.f32.mrf.mxu0
  %v3044 = vadd.f32 0.0, %v3043
  %3045 = vmatprep.mubr.bf16.mxu0 0
  %3046 = vmatmul.mubr.bf16.gmra.mxu0 %v649
  %v3047 = vpop.f32.mrf.mxu0
  %v3048 = vadd.f32 0.0, %v3047
  %v3049 = vpop.f32.mrf.mxu0
  %v3050 = vadd.f32 0.0, %v3049
  %v3051 = vpop.f32.mrf.mxu0
  %v3052 = vadd.f32 0.0, %v3051
  %v3053 = vpop.f32.mrf.mxu0
  %v3054 = vadd.f32 0.0, %v3053
  %3055 = vmatprep.mubr.bf16.mxu0 0
  %3056 = vmatmul.mubr.bf16.gmra.mxu0 %v652
  %v3057 = vpop.f32.mrf.mxu0
  %v3058 = vadd.f32 0.0, %v3057
  %v3059 = vpop.f32.mrf.mxu0
  %v3060 = vadd.f32 0.0, %v3059
  %v3061 = vpop.f32.mrf.mxu0
  %v3062 = vadd.f32 0.0, %v3061
  %v3063 = vpop.f32.mrf.mxu0
  %v3064 = vadd.f32 0.0, %v3063
  %3065 = vmatprep.mubr.bf16.mxu0 0
  %3066 = vmatmul.mubr.bf16.gmra.mxu0 %v655
  %v3067 = vpop.f32.mrf.mxu0
  %v3068 = vadd.f32 0.0, %v3067
  %v3069 = vpop.f32.mrf.mxu0
  %v3070 = vadd.f32 0.0, %v3069
  %v3071 = vpop.f32.mrf.mxu0
  %v3072 = vadd.f32 0.0, %v3071
  %v3073 = vpop.f32.mrf.mxu0
  %v3074 = vadd.f32 0.0, %v3073
  %3075 = vmatprep.mubr.bf16.mxu0 0
  %3076 = vmatmul.mubr.bf16.gmra.mxu0 %v658
  %v3077 = vpop.f32.mrf.mxu0
  %v3078 = vadd.f32 0.0, %v3077
  %v3079 = vpop.f32.mrf.mxu0
  %v3080 = vadd.f32 0.0, %v3079
  %v3081 = vpop.f32.mrf.mxu0
  %v3082 = vadd.f32 0.0, %v3081
  %v3083 = vpop.f32.mrf.mxu0
  %v3084 = vadd.f32 0.0, %v3083
  %3085 = vmatprep.mubr.bf16.mxu0 0
  %3086 = vmatmul.mubr.bf16.gmra.mxu0 %v661
  %v3087 = vpop.f32.mrf.mxu0
  %v3088 = vadd.f32 0.0, %v3087
  %v3089 = vpop.f32.mrf.mxu0
  %v3090 = vadd.f32 0.0, %v3089
  %v3091 = vpop.f32.mrf.mxu0
  %v3092 = vadd.f32 0.0, %v3091
  %v3093 = vpop.f32.mrf.mxu0
  %v3094 = vadd.f32 0.0, %v3093
  %3095 = vmatprep.mubr.bf16.mxu0 0
  %3096 = vmatmul.mubr.bf16.gmra.mxu0 %v664
  %v3097 = vpop.f32.mrf.mxu0
  %v3098 = vadd.f32 0.0, %v3097
  %v3099 = vpop.f32.mrf.mxu0
  %v3100 = vadd.f32 0.0, %v3099
  %v3101 = vpop.f32.mrf.mxu0
  %v3102 = vadd.f32 0.0, %v3101
  %v3103 = vpop.f32.mrf.mxu0
  %v3104 = vadd.f32 0.0, %v3103
  %3105 = vmatprep.mubr.bf16.mxu0 0
  %3106 = vmatmul.mubr.bf16.gmra.mxu0 %v667
  %v3107 = vpop.f32.mrf.mxu0
  %v3108 = vadd.f32 0.0, %v3107
  %v3109 = vpop.f32.mrf.mxu0
  %v3110 = vadd.f32 0.0, %v3109
  %v3111 = vpop.f32.mrf.mxu0
  %v3112 = vadd.f32 0.0, %v3111
  %v3113 = vpop.f32.mrf.mxu0
  %v3114 = vadd.f32 0.0, %v3113
  %3115 = vmatprep.mubr.bf16.mxu0 0
  %3116 = vmatmul.mubr.bf16.gmra.mxu0 %v670
  %v3117 = vpop.f32.mrf.mxu0
  %v3118 = vadd.f32 0.0, %v3117
  %v3119 = vpop.f32.mrf.mxu0
  %v3120 = vadd.f32 0.0, %v3119
  %v3121 = vpop.f32.mrf.mxu0
  %v3122 = vadd.f32 0.0, %v3121
  %v3123 = vpop.f32.mrf.mxu0
  %v3124 = vadd.f32 0.0, %v3123
  %3125 = vmatprep.mubr.bf16.mxu0 0
  %3126 = vmatmul.mubr.bf16.gmra.mxu0 %v673
  %v3127 = vpop.f32.mrf.mxu0
  %v3128 = vadd.f32 0.0, %v3127
  %v3129 = vpop.f32.mrf.mxu0
  %v3130 = vadd.f32 0.0, %v3129
  %v3131 = vpop.f32.mrf.mxu0
  %v3132 = vadd.f32 0.0, %v3131
  %v3133 = vpop.f32.mrf.mxu0
  %v3134 = vadd.f32 0.0, %v3133
  %3135 = vmatprep.mubr.bf16.mxu0 0
  %3136 = vmatmul.mubr.bf16.gmra.mxu0 %v676
  %v3137 = vpop.f32.mrf.mxu0
  %v3138 = vadd.f32 0.0, %v3137
  %v3139 = vpop.f32.mrf.mxu0
  %v3140 = vadd.f32 0.0, %v3139
  %v3141 = vpop.f32.mrf.mxu0
  %v3142 = vadd.f32 0.0, %v3141
  %v3143 = vpop.f32.mrf.mxu0
  %v3144 = vadd.f32 0.0, %v3143
  %3145 = vmatprep.mubr.bf16.mxu0 0
  %3146 = vmatmul.mubr.bf16.gmra.mxu0 %v679
  %v3147 = vpop.f32.mrf.mxu0
  %v3148 = vadd.f32 0.0, %v3147
  %v3149 = vpop.f32.mrf.mxu0
  %v3150 = vadd.f32 0.0, %v3149
  %v3151 = vpop.f32.mrf.mxu0
  %v3152 = vadd.f32 0.0, %v3151
  %v3153 = vpop.f32.mrf.mxu0
  %v3154 = vadd.f32 0.0, %v3153
  %3155 = vmatprep.mubr.bf16.mxu0 0
  %3156 = vmatmul.mubr.bf16.gmra.mxu0 %v682
  %v3157 = vpop.f32.mrf.mxu0
  %v3158 = vadd.f32 0.0, %v3157
  %v3159 = vpop.f32.mrf.mxu0
  %v3160 = vadd.f32 0.0, %v3159
  %v3161 = vpop.f32.mrf.mxu0
  %v3162 = vadd.f32 0.0, %v3161
  %v3163 = vpop.f32.mrf.mxu0
  %v3164 = vadd.f32 0.0, %v3163
  %3165 = vmatprep.mubr.bf16.mxu0 0
  %3166 = vmatmul.mubr.bf16.gmra.mxu0 %v685
  %v3167 = vpop.f32.mrf.mxu0
  %v3168 = vadd.f32 0.0, %v3167
  %v3169 = vpop.f32.mrf.mxu0
  %v3170 = vadd.f32 0.0, %v3169
  %v3171 = vpop.f32.mrf.mxu0
  %v3172 = vadd.f32 0.0, %v3171
  %v3173 = vpop.f32.mrf.mxu0
  %v3174 = vadd.f32 0.0, %v3173
  %3175 = vmatprep.mubr.bf16.mxu0 0
  %3176 = vmatmul.mubr.bf16.gmra.mxu0 %v688
  %v3177 = vpop.f32.mrf.mxu0
  %v3178 = vadd.f32 0.0, %v3177
  %v3179 = vpop.f32.mrf.mxu0
  %v3180 = vadd.f32 0.0, %v3179
  %v3181 = vpop.f32.mrf.mxu0
  %v3182 = vadd.f32 0.0, %v3181
  %v3183 = vpop.f32.mrf.mxu0
  %v3184 = vadd.f32 0.0, %v3183
  %3185 = vmatprep.mubr.bf16.mxu0 0
  %3186 = vmatmul.mubr.bf16.gmra.mxu0 %v691
  %v3187 = vpop.f32.mrf.mxu0
  %v3188 = vadd.f32 0.0, %v3187
  %v3189 = vpop.f32.mrf.mxu0
  %v3190 = vadd.f32 0.0, %v3189
  %v3191 = vpop.f32.mrf.mxu0
  %v3192 = vadd.f32 0.0, %v3191
  %v3193 = vpop.f32.mrf.mxu0
  %v3194 = vadd.f32 0.0, %v3193
  %3195 = vmatprep.mubr.bf16.mxu0 0
  %3196 = vmatmul.mubr.bf16.gmra.mxu0 %v694
  %v3197 = vpop.f32.mrf.mxu0
  %v3198 = vadd.f32 0.0, %v3197
  %v3199 = vpop.f32.mrf.mxu0
  %v3200 = vadd.f32 0.0, %v3199
  %v3201 = vpop.f32.mrf.mxu0
  %v3202 = vadd.f32 0.0, %v3201
  %v3203 = vpop.f32.mrf.mxu0
  %v3204 = vadd.f32 0.0, %v3203
  %3205 = vmatprep.mubr.bf16.mxu0 0
  %3206 = vmatmul.mubr.bf16.gmra.mxu0 %v697
  %v3207 = vpop.f32.mrf.mxu0
  %v3208 = vadd.f32 0.0, %v3207
  %v3209 = vpop.f32.mrf.mxu0
  %v3210 = vadd.f32 0.0, %v3209
  %v3211 = vpop.f32.mrf.mxu0
  %v3212 = vadd.f32 0.0, %v3211
  %v3213 = vpop.f32.mrf.mxu0
  %v3214 = vadd.f32 0.0, %v3213
  %3215 = vmatprep.mubr.bf16.mxu0 0
  %3216 = vmatmul.mubr.bf16.gmra.mxu0 %v700
  %v3217 = vpop.f32.mrf.mxu0
  %v3218 = vadd.f32 0.0, %v3217
  %v3219 = vpop.f32.mrf.mxu0
  %v3220 = vadd.f32 0.0, %v3219
  %v3221 = vpop.f32.mrf.mxu0
  %v3222 = vadd.f32 0.0, %v3221
  %v3223 = vpop.f32.mrf.mxu0
  %v3224 = vadd.f32 0.0, %v3223
  %3225 = vmatprep.mubr.bf16.mxu0 0
  %3226 = vmatmul.mubr.bf16.gmra.mxu0 %v703
  %v3227 = vpop.f32.mrf.mxu0
  %v3228 = vadd.f32 0.0, %v3227
  %v3229 = vpop.f32.mrf.mxu0
  %v3230 = vadd.f32 0.0, %v3229
  %v3231 = vpop.f32.mrf.mxu0
  %v3232 = vadd.f32 0.0, %v3231
  %v3233 = vpop.f32.mrf.mxu0
  %v3234 = vadd.f32 0.0, %v3233
  %3235 = vmatprep.mubr.bf16.mxu0 0
  %3236 = vmatmul.mubr.bf16.gmra.mxu0 %v706
  %v3237 = vpop.f32.mrf.mxu0
  %v3238 = vadd.f32 0.0, %v3237
  %v3239 = vpop.f32.mrf.mxu0
  %v3240 = vadd.f32 0.0, %v3239
  %v3241 = vpop.f32.mrf.mxu0
  %v3242 = vadd.f32 0.0, %v3241
  %v3243 = vpop.f32.mrf.mxu0
  %v3244 = vadd.f32 0.0, %v3243
  %3245 = vmatprep.mubr.bf16.mxu0 0
  %3246 = vmatmul.mubr.bf16.gmra.mxu0 %v709
  %v3247 = vpop.f32.mrf.mxu0
  %v3248 = vadd.f32 0.0, %v3247
  %v3249 = vpop.f32.mrf.mxu0
  %v3250 = vadd.f32 0.0, %v3249
  %v3251 = vpop.f32.mrf.mxu0
  %v3252 = vadd.f32 0.0, %v3251
  %v3253 = vpop.f32.mrf.mxu0
  %v3254 = vadd.f32 0.0, %v3253
  %3255 = vmatprep.mubr.bf16.mxu0 0
  %3256 = vmatmul.mubr.bf16.gmra.mxu0 %v712
  %v3257 = vpop.f32.mrf.mxu0
  %v3258 = vadd.f32 0.0, %v3257
  %v3259 = vpop.f32.mrf.mxu0
  %v3260 = vadd.f32 0.0, %v3259
  %v3261 = vpop.f32.mrf.mxu0
  %v3262 = vadd.f32 0.0, %v3261
  %v3263 = vpop.f32.mrf.mxu0
  %v3264 = vadd.f32 0.0, %v3263
  %3265 = vmatprep.mubr.bf16.mxu0 0
  %3266 = vmatmul.mubr.bf16.gmra.mxu0 %v715
  %v3267 = vpop.f32.mrf.mxu0
  %v3268 = vadd.f32 0.0, %v3267
  %v3269 = vpop.f32.mrf.mxu0
  %v3270 = vadd.f32 0.0, %v3269
  %v3271 = vpop.f32.mrf.mxu0
  %v3272 = vadd.f32 0.0, %v3271
  %v3273 = vpop.f32.mrf.mxu0
  %v3274 = vadd.f32 0.0, %v3273
  %3275 = vmatprep.mubr.bf16.mxu0 0
  %3276 = vmatmul.mubr.bf16.gmra.mxu0 %v718
  %v3277 = vpop.f32.mrf.mxu0
  %v3278 = vadd.f32 0.0, %v3277
  %v3279 = vpop.f32.mrf.mxu0
  %v3280 = vadd.f32 0.0, %v3279
  %v3281 = vpop.f32.mrf.mxu0
  %v3282 = vadd.f32 0.0, %v3281
  %v3283 = vpop.f32.mrf.mxu0
  %v3284 = vadd.f32 0.0, %v3283
  %3285 = vmatprep.mubr.bf16.mxu0 0
  %3286 = vmatmul.mubr.bf16.gmra.mxu0 %v721
  %v3287 = vpop.f32.mrf.mxu0
  %v3288 = vadd.f32 0.0, %v3287
  %v3289 = vpop.f32.mrf.mxu0
  %v3290 = vadd.f32 0.0, %v3289
  %v3291 = vpop.f32.mrf.mxu0
  %v3292 = vadd.f32 0.0, %v3291
  %v3293 = vpop.f32.mrf.mxu0
  %v3294 = vadd.f32 0.0, %v3293
  %3295 = vmatprep.mubr.bf16.mxu0 0
  %3296 = vmatmul.mubr.bf16.gmra.mxu0 %v724
  %v3297 = vpop.f32.mrf.mxu0
  %v3298 = vadd.f32 0.0, %v3297
  %v3299 = vpop.f32.mrf.mxu0
  %v3300 = vadd.f32 0.0, %v3299
  %v3301 = vpop.f32.mrf.mxu0
  %v3302 = vadd.f32 0.0, %v3301
  %v3303 = vpop.f32.mrf.mxu0
  %v3304 = vadd.f32 0.0, %v3303
  %3305 = vmatprep.mubr.bf16.mxu0 0
  %3306 = vmatmul.mubr.bf16.gmra.mxu0 %v727
  %v3307 = vpop.f32.mrf.mxu0
  %v3308 = vadd.f32 0.0, %v3307
  %v3309 = vpop.f32.mrf.mxu0
  %v3310 = vadd.f32 0.0, %v3309
  %v3311 = vpop.f32.mrf.mxu0
  %v3312 = vadd.f32 0.0, %v3311
  %v3313 = vpop.f32.mrf.mxu0
  %v3314 = vadd.f32 0.0, %v3313
  %3315 = vmatprep.mubr.bf16.mxu0 0
  %3316 = vmatmul.mubr.bf16.gmra.mxu0 %v730
  %v3317 = vpop.f32.mrf.mxu0
  %v3318 = vadd.f32 0.0, %v3317
  %v3319 = vpop.f32.mrf.mxu0
  %v3320 = vadd.f32 0.0, %v3319
  %v3321 = vpop.f32.mrf.mxu0
  %v3322 = vadd.f32 0.0, %v3321
  %v3323 = vpop.f32.mrf.mxu0
  %v3324 = vadd.f32 0.0, %v3323
  %3325 = vmatprep.mubr.bf16.mxu0 0
  %3326 = vmatmul.mubr.bf16.gmra.mxu0 %v733
  %v3327 = vpop.f32.mrf.mxu0
  %v3328 = vadd.f32 0.0, %v3327
  %v3329 = vpop.f32.mrf.mxu0
  %v3330 = vadd.f32 0.0, %v3329
  %v3331 = vpop.f32.mrf.mxu0
  %v3332 = vadd.f32 0.0, %v3331
  %v3333 = vpop.f32.mrf.mxu0
  %v3334 = vadd.f32 0.0, %v3333
  %3335 = vmatprep.mubr.bf16.mxu0 0
  %3336 = vmatmul.mubr.bf16.gmra.mxu0 %v736
  %v3337 = vpop.f32.mrf.mxu0
  %v3338 = vadd.f32 0.0, %v3337
  %v3339 = vpop.f32.mrf.mxu0
  %v3340 = vadd.f32 0.0, %v3339
  %v3341 = vpop.f32.mrf.mxu0
  %v3342 = vadd.f32 0.0, %v3341
  %v3343 = vpop.f32.mrf.mxu0
  %v3344 = vadd.f32 0.0, %v3343
  %3345 = vmatprep.mubr.bf16.mxu0 0
  %3346 = vmatmul.mubr.bf16.gmra.mxu0 %v739
  %v3347 = vpop.f32.mrf.mxu0
  %v3348 = vadd.f32 0.0, %v3347
  %v3349 = vpop.f32.mrf.mxu0
  %v3350 = vadd.f32 0.0, %v3349
  %v3351 = vpop.f32.mrf.mxu0
  %v3352 = vadd.f32 0.0, %v3351
  %v3353 = vpop.f32.mrf.mxu0
  %v3354 = vadd.f32 0.0, %v3353
  %3355 = vmatprep.mubr.bf16.mxu0 0
  %3356 = vmatmul.mubr.bf16.gmra.mxu0 %v742
  %v3357 = vpop.f32.mrf.mxu0
  %v3358 = vadd.f32 0.0, %v3357
  %v3359 = vpop.f32.mrf.mxu0
  %v3360 = vadd.f32 0.0, %v3359
  %v3361 = vpop.f32.mrf.mxu0
  %v3362 = vadd.f32 0.0, %v3361
  %v3363 = vpop.f32.mrf.mxu0
  %v3364 = vadd.f32 0.0, %v3363
  %3365 = vmatprep.mubr.bf16.mxu0 0
  %3366 = vmatmul.mubr.bf16.gmra.mxu0 %v745
  %v3367 = vpop.f32.mrf.mxu0
  %v3368 = vadd.f32 0.0, %v3367
  %v3369 = vpop.f32.mrf.mxu0
  %v3370 = vadd.f32 0.0, %v3369
  %v3371 = vpop.f32.mrf.mxu0
  %v3372 = vadd.f32 0.0, %v3371
  %v3373 = vpop.f32.mrf.mxu0
  %v3374 = vadd.f32 0.0, %v3373
  %3375 = vmatprep.mubr.bf16.mxu0 0
  %3376 = vmatmul.mubr.bf16.gmra.mxu0 %v748
  %v3377 = vpop.f32.mrf.mxu0
  %v3378 = vadd.f32 0.0, %v3377
  %v3379 = vpop.f32.mrf.mxu0
  %v3380 = vadd.f32 0.0, %v3379
  %v3381 = vpop.f32.mrf.mxu0
  %v3382 = vadd.f32 0.0, %v3381
  %v3383 = vpop.f32.mrf.mxu0
  %v3384 = vadd.f32 0.0, %v3383
  %3385 = vmatprep.mubr.bf16.mxu0 0
  %3386 = vmatmul.mubr.bf16.gmra.mxu0 %v751
  %v3387 = vpop.f32.mrf.mxu0
  %v3388 = vadd.f32 0.0, %v3387
  %v3389 = vpop.f32.mrf.mxu0
  %v3390 = vadd.f32 0.0, %v3389
  %v3391 = vpop.f32.mrf.mxu0
  %v3392 = vadd.f32 0.0, %v3391
  %v3393 = vpop.f32.mrf.mxu0
  %v3394 = vadd.f32 0.0, %v3393
  %3395 = vmatprep.mubr.bf16.mxu0 0
  %3396 = vmatmul.mubr.bf16.gmra.mxu0 %v754
  %v3397 = vpop.f32.mrf.mxu0
  %v3398 = vadd.f32 0.0, %v3397
  %v3399 = vpop.f32.mrf.mxu0
  %v3400 = vadd.f32 0.0, %v3399
  %v3401 = vpop.f32.mrf.mxu0
  %v3402 = vadd.f32 0.0, %v3401
  %v3403 = vpop.f32.mrf.mxu0
  %v3404 = vadd.f32 0.0, %v3403
  %3405 = vmatprep.mubr.bf16.mxu0 0
  %3406 = vmatmul.mubr.bf16.gmra.mxu0 %v757
  %v3407 = vpop.f32.mrf.mxu0
  %v3408 = vadd.f32 0.0, %v3407
  %v3409 = vpop.f32.mrf.mxu0
  %v3410 = vadd.f32 0.0, %v3409
  %v3411 = vpop.f32.mrf.mxu0
  %v3412 = vadd.f32 0.0, %v3411
  %v3413 = vpop.f32.mrf.mxu0
  %v3414 = vadd.f32 0.0, %v3413
  %3415 = vmatprep.mubr.bf16.mxu0 0
  %3416 = vmatmul.mubr.bf16.gmra.mxu0 %v760
  %v3417 = vpop.f32.mrf.mxu0
  %v3418 = vadd.f32 0.0, %v3417
  %v3419 = vpop.f32.mrf.mxu0
  %v3420 = vadd.f32 0.0, %v3419
  %v3421 = vpop.f32.mrf.mxu0
  %v3422 = vadd.f32 0.0, %v3421
  %v3423 = vpop.f32.mrf.mxu0
  %v3424 = vadd.f32 0.0, %v3423
  %3425 = vmatprep.mubr.bf16.mxu0 0
  %3426 = vmatmul.mubr.bf16.gmra.mxu0 %v763
  %v3427 = vpop.f32.mrf.mxu0
  %v3428 = vadd.f32 0.0, %v3427
  %v3429 = vpop.f32.mrf.mxu0
  %v3430 = vadd.f32 0.0, %v3429
  %v3431 = vpop.f32.mrf.mxu0
  %v3432 = vadd.f32 0.0, %v3431
  %v3433 = vpop.f32.mrf.mxu0
  %v3434 = vadd.f32 0.0, %v3433
  %3435 = vmatprep.mubr.bf16.mxu0 0
  %3436 = vmatmul.mubr.bf16.gmra.mxu0 %v766
  %v3437 = vpop.f32.mrf.mxu0
  %v3438 = vadd.f32 0.0, %v3437
  %v3439 = vpop.f32.mrf.mxu0
  %v3440 = vadd.f32 0.0, %v3439
  %v3441 = vpop.f32.mrf.mxu0
  %v3442 = vadd.f32 0.0, %v3441
  %v3443 = vpop.f32.mrf.mxu0
  %v3444 = vadd.f32 0.0, %v3443
  %3445 = vmatprep.mubr.bf16.mxu0 0
  %3446 = vmatmul.mubr.bf16.gmra.mxu0 %v769
  %v3447 = vpop.f32.mrf.mxu0
  %v3448 = vadd.f32 0.0, %v3447
  %v3449 = vpop.f32.mrf.mxu0
  %v3450 = vadd.f32 0.0, %v3449
  %v3451 = vpop.f32.mrf.mxu0
  %v3452 = vadd.f32 0.0, %v3451
  %v3453 = vpop.f32.mrf.mxu0
  %v3454 = vadd.f32 0.0, %v3453
  %3455 = vmatprep.mubr.bf16.mxu0 0
  %3456 = vmatmul.mubr.bf16.gmra.mxu0 %v772
  %v3457 = vpop.f32.mrf.mxu0
  %v3458 = vadd.f32 0.0, %v3457
  %v3459 = vpop.f32.mrf.mxu0
  %v3460 = vadd.f32 0.0, %v3459
  %v3461 = vpop.f32.mrf.mxu0
  %v3462 = vadd.f32 0.0, %v3461
  %v3463 = vpop.f32.mrf.mxu0
  %v3464 = vadd.f32 0.0, %v3463
  %3465 = vmatprep.mubr.bf16.mxu0 0
  %3466 = vmatmul.mubr.bf16.gmra.mxu0 %v775
  %v3467 = vpop.f32.mrf.mxu0
  %v3468 = vadd.f32 0.0, %v3467
  %v3469 = vpop.f32.mrf.mxu0
  %v3470 = vadd.f32 0.0, %v3469
  %v3471 = vpop.f32.mrf.mxu0
  %v3472 = vadd.f32 0.0, %v3471
  %v3473 = vpop.f32.mrf.mxu0
  %v3474 = vadd.f32 0.0, %v3473
  %3475 = vmatprep.mubr.bf16.mxu0 0
  %3476 = vmatmul.mubr.bf16.gmra.mxu0 %v778
  %v3477 = vpop.f32.mrf.mxu0
  %v3478 = vadd.f32 0.0, %v3477
  %v3479 = vpop.f32.mrf.mxu0
  %v3480 = vadd.f32 0.0, %v3479
  %v3481 = vpop.f32.mrf.mxu0
  %v3482 = vadd.f32 0.0, %v3481
  %v3483 = vpop.f32.mrf.mxu0
  %v3484 = vadd.f32 0.0, %v3483
  %3485 = vmatprep.mubr.bf16.mxu0 0
  %3486 = vmatmul.mubr.bf16.gmra.mxu0 %v781
  %v3487 = vpop.f32.mrf.mxu0
  %v3488 = vadd.f32 0.0, %v3487
  %v3489 = vpop.f32.mrf.mxu0
  %v3490 = vadd.f32 0.0, %v3489
  %v3491 = vpop.f32.mrf.mxu0
  %v3492 = vadd.f32 0.0, %v3491
  %v3493 = vpop.f32.mrf.mxu0
  %v3494 = vadd.f32 0.0, %v3493
  %3495 = vmatprep.mubr.bf16.mxu0 0
  %3496 = vmatmul.mubr.bf16.gmra.mxu0 %v784
  %v3497 = vpop.f32.mrf.mxu0
  %v3498 = vadd.f32 0.0, %v3497
  %v3499 = vpop.f32.mrf.mxu0
  %v3500 = vadd.f32 0.0, %v3499
  %v3501 = vpop.f32.mrf.mxu0
  %v3502 = vadd.f32 0.0, %v3501
  %v3503 = vpop.f32.mrf.mxu0
  %v3504 = vadd.f32 0.0, %v3503
  %3505 = vmatprep.mubr.bf16.mxu0 0
  %3506 = vmatmul.mubr.bf16.gmra.mxu0 %v787
  %v3507 = vpop.f32.mrf.mxu0
  %v3508 = vadd.f32 0.0, %v3507
  %v3509 = vpop.f32.mrf.mxu0
  %v3510 = vadd.f32 0.0, %v3509
  %v3511 = vpop.f32.mrf.mxu0
  %v3512 = vadd.f32 0.0, %v3511
  %v3513 = vpop.f32.mrf.mxu0
  %v3514 = vadd.f32 0.0, %v3513
  %3515 = vmatprep.mubr.bf16.mxu0 0
  %3516 = vmatmul.mubr.bf16.gmra.mxu0 %v790
  %v3517 = vpop.f32.mrf.mxu0
  %v3518 = vadd.f32 0.0, %v3517
  %v3519 = vpop.f32.mrf.mxu0
  %v3520 = vadd.f32 0.0, %v3519
  %v3521 = vpop.f32.mrf.mxu0
  %v3522 = vadd.f32 0.0, %v3521
  %v3523 = vpop.f32.mrf.mxu0
  %v3524 = vadd.f32 0.0, %v3523
  %3525 = vmatprep.mubr.bf16.mxu0 0
  %3526 = vmatmul.mubr.bf16.gmra.mxu0 %v793
  %v3527 = vpop.f32.mrf.mxu0
  %v3528 = vadd.f32 0.0, %v3527
  %v3529 = vpop.f32.mrf.mxu0
  %v3530 = vadd.f32 0.0, %v3529
  %v3531 = vpop.f32.mrf.mxu0
  %v3532 = vadd.f32 0.0, %v3531
  %v3533 = vpop.f32.mrf.mxu0
  %v3534 = vadd.f32 0.0, %v3533
  %3535 = vdwg.mxu0
  %3536 = vmatprep.subr.bf16.mxu0 0
  %3537 = vmatpush1.bf16.msra.mxu0 0
  %3538 = vmatprep.subr.bf16.mxu0 0
  %3539 = vmatpush1.bf16.msra.mxu0 0
  %3540 = vmatprep.subr.bf16.mxu0 0
  %3541 = vmatpush1.bf16.msra.mxu0 0
  %3542 = vmatprep.subr.bf16.mxu0 0
  %3543 = vmatpush1.bf16.msra.mxu0 0
  %3544 = vmatprep.subr.bf16.mxu0 0
  %3545 = vmatpush1.bf16.msra.mxu0 0
  %3546 = vmatprep.subr.bf16.mxu0 0
  %3547 = vmatpush1.bf16.msra.mxu0 0
  %3548 = vmatprep.subr.bf16.mxu0 0
  %3549 = vmatpush1.bf16.msra.mxu0 0
  %3550 = vmatprep.subr.bf16.mxu0 %v824
  %3551 = vmatpush1.bf16.msra.mxu0 %v821
  %3552 = vmatprep.subr.bf16.mxu0 0
  %3553 = vmatpush2.bf16.msra.mxu0 0
  %3554 = vmatprep.subr.bf16.mxu0 0
  %3555 = vmatpush2.bf16.msra.mxu0 0
  %3556 = vmatprep.subr.bf16.mxu0 0
  %3557 = vmatpush2.bf16.msra.mxu0 0
  %3558 = vmatprep.subr.bf16.mxu0 0
  %3559 = vmatpush2.bf16.msra.mxu0 0
  %3560 = vmatprep.subr.bf16.mxu0 0
  %3561 = vmatpush2.bf16.msra.mxu0 0
  %3562 = vmatprep.subr.bf16.mxu0 0
  %3563 = vmatpush2.bf16.msra.mxu0 0
  %3564 = vmatprep.subr.bf16.mxu0 0
  %3565 = vmatpush2.bf16.msra.mxu0 0
  %3566 = vmatprep.subr.bf16.mxu0 0
  %3567 = vmatpush2.bf16.msra.mxu0 0
  %3568 = vmatprep.mubr.bf16.mxu0 0
  %3569 = vmatmul.mubr.bf16.gmra.mxu0 %v604
  %v3570 = vpop.f32.mrf.mxu0
  %v3571 = vadd.f32 0.0, %v3570
  %v3572 = vpop.f32.mrf.mxu0
  %v3573 = vadd.f32 0.0, %v3572
  %v3574 = vpop.f32.mrf.mxu0
  %v3575 = vadd.f32 0.0, %v3574
  %v3576 = vpop.f32.mrf.mxu0
  %v3577 = vadd.f32 0.0, %v3576
  %3578 = vmatprep.mubr.bf16.mxu0 0
  %3579 = vmatmul.mubr.bf16.gmra.mxu0 %v607
  %v3580 = vpop.f32.mrf.mxu0
  %v3581 = vadd.f32 0.0, %v3580
  %v3582 = vpop.f32.mrf.mxu0
  %v3583 = vadd.f32 0.0, %v3582
  %v3584 = vpop.f32.mrf.mxu0
  %v3585 = vadd.f32 0.0, %v3584
  %v3586 = vpop.f32.mrf.mxu0
  %v3587 = vadd.f32 0.0, %v3586
  %3588 = vmatprep.mubr.bf16.mxu0 0
  %3589 = vmatmul.mubr.bf16.gmra.mxu0 %v610
  %v3590 = vpop.f32.mrf.mxu0
  %v3591 = vadd.f32 0.0, %v3590
  %v3592 = vpop.f32.mrf.mxu0
  %v3593 = vadd.f32 0.0, %v3592
  %v3594 = vpop.f32.mrf.mxu0
  %v3595 = vadd.f32 0.0, %v3594
  %v3596 = vpop.f32.mrf.mxu0
  %v3597 = vadd.f32 0.0, %v3596
  %3598 = vmatprep.mubr.bf16.mxu0 0
  %3599 = vmatmul.mubr.bf16.gmra.mxu0 %v613
  %v3600 = vpop.f32.mrf.mxu0
  %v3601 = vadd.f32 0.0, %v3600
  %v3602 = vpop.f32.mrf.mxu0
  %v3603 = vadd.f32 0.0, %v3602
  %v3604 = vpop.f32.mrf.mxu0
  %v3605 = vadd.f32 0.0, %v3604
  %v3606 = vpop.f32.mrf.mxu0
  %v3607 = vadd.f32 0.0, %v3606
  %3608 = vmatprep.mubr.bf16.mxu0 0
  %3609 = vmatmul.mubr.bf16.gmra.mxu0 %v616
  %v3610 = vpop.f32.mrf.mxu0
  %v3611 = vadd.f32 0.0, %v3610
  %v3612 = vpop.f32.mrf.mxu0
  %v3613 = vadd.f32 0.0, %v3612
  %v3614 = vpop.f32.mrf.mxu0
  %v3615 = vadd.f32 0.0, %v3614
  %v3616 = vpop.f32.mrf.mxu0
  %v3617 = vadd.f32 0.0, %v3616
  %3618 = vmatprep.mubr.bf16.mxu0 0
  %3619 = vmatmul.mubr.bf16.gmra.mxu0 %v619
  %v3620 = vpop.f32.mrf.mxu0
  %v3621 = vadd.f32 0.0, %v3620
  %v3622 = vpop.f32.mrf.mxu0
  %v3623 = vadd.f32 0.0, %v3622
  %v3624 = vpop.f32.mrf.mxu0
  %v3625 = vadd.f32 0.0, %v3624
  %v3626 = vpop.f32.mrf.mxu0
  %v3627 = vadd.f32 0.0, %v3626
  %3628 = vmatprep.mubr.bf16.mxu0 0
  %3629 = vmatmul.mubr.bf16.gmra.mxu0 %v622
  %v3630 = vpop.f32.mrf.mxu0
  %v3631 = vadd.f32 0.0, %v3630
  %v3632 = vpop.f32.mrf.mxu0
  %v3633 = vadd.f32 0.0, %v3632
  %v3634 = vpop.f32.mrf.mxu0
  %v3635 = vadd.f32 0.0, %v3634
  %v3636 = vpop.f32.mrf.mxu0
  %v3637 = vadd.f32 0.0, %v3636
  %3638 = vmatprep.mubr.bf16.mxu0 0
  %3639 = vmatmul.mubr.bf16.gmra.mxu0 %v625
  %v3640 = vpop.f32.mrf.mxu0
  %v3641 = vadd.f32 0.0, %v3640
  %v3642 = vpop.f32.mrf.mxu0
  %v3643 = vadd.f32 0.0, %v3642
  %v3644 = vpop.f32.mrf.mxu0
  %v3645 = vadd.f32 0.0, %v3644
  %v3646 = vpop.f32.mrf.mxu0
  %v3647 = vadd.f32 0.0, %v3646
  %3648 = vmatprep.mubr.bf16.mxu0 0
  %3649 = vmatmul.mubr.bf16.gmra.mxu0 %v628
  %v3650 = vpop.f32.mrf.mxu0
  %v3651 = vadd.f32 0.0, %v3650
  %v3652 = vpop.f32.mrf.mxu0
  %v3653 = vadd.f32 0.0, %v3652
  %v3654 = vpop.f32.mrf.mxu0
  %v3655 = vadd.f32 0.0, %v3654
  %v3656 = vpop.f32.mrf.mxu0
  %v3657 = vadd.f32 0.0, %v3656
  %3658 = vmatprep.mubr.bf16.mxu0 0
  %3659 = vmatmul.mubr.bf16.gmra.mxu0 %v631
  %v3660 = vpop.f32.mrf.mxu0
  %v3661 = vadd.f32 0.0, %v3660
  %v3662 = vpop.f32.mrf.mxu0
  %v3663 = vadd.f32 0.0, %v3662
  %v3664 = vpop.f32.mrf.mxu0
  %v3665 = vadd.f32 0.0, %v3664
  %v3666 = vpop.f32.mrf.mxu0
  %v3667 = vadd.f32 0.0, %v3666
  %3668 = vmatprep.mubr.bf16.mxu0 0
  %3669 = vmatmul.mubr.bf16.gmra.mxu0 %v634
  %v3670 = vpop.f32.mrf.mxu0
  %v3671 = vadd.f32 0.0, %v3670
  %v3672 = vpop.f32.mrf.mxu0
  %v3673 = vadd.f32 0.0, %v3672
  %v3674 = vpop.f32.mrf.mxu0
  %v3675 = vadd.f32 0.0, %v3674
  %v3676 = vpop.f32.mrf.mxu0
  %v3677 = vadd.f32 0.0, %v3676
  %3678 = vmatprep.mubr.bf16.mxu0 0
  %3679 = vmatmul.mubr.bf16.gmra.mxu0 %v637
  %v3680 = vpop.f32.mrf.mxu0
  %v3681 = vadd.f32 0.0, %v3680
  %v3682 = vpop.f32.mrf.mxu0
  %v3683 = vadd.f32 0.0, %v3682
  %v3684 = vpop.f32.mrf.mxu0
  %v3685 = vadd.f32 0.0, %v3684
  %v3686 = vpop.f32.mrf.mxu0
  %v3687 = vadd.f32 0.0, %v3686
  %3688 = vmatprep.mubr.bf16.mxu0 0
  %3689 = vmatmul.mubr.bf16.gmra.mxu0 %v640
  %v3690 = vpop.f32.mrf.mxu0
  %v3691 = vadd.f32 0.0, %v3690
  %v3692 = vpop.f32.mrf.mxu0
  %v3693 = vadd.f32 0.0, %v3692
  %v3694 = vpop.f32.mrf.mxu0
  %v3695 = vadd.f32 0.0, %v3694
  %v3696 = vpop.f32.mrf.mxu0
  %v3697 = vadd.f32 0.0, %v3696
  %3698 = vmatprep.mubr.bf16.mxu0 0
  %3699 = vmatmul.mubr.bf16.gmra.mxu0 %v643
  %v3700 = vpop.f32.mrf.mxu0
  %v3701 = vadd.f32 0.0, %v3700
  %v3702 = vpop.f32.mrf.mxu0
  %v3703 = vadd.f32 0.0, %v3702
  %v3704 = vpop.f32.mrf.mxu0
  %v3705 = vadd.f32 0.0, %v3704
  %v3706 = vpop.f32.mrf.mxu0
  %v3707 = vadd.f32 0.0, %v3706
  %3708 = vmatprep.mubr.bf16.mxu0 0
  %3709 = vmatmul.mubr.bf16.gmra.mxu0 %v646
  %v3710 = vpop.f32.mrf.mxu0
  %v3711 = vadd.f32 0.0, %v3710
  %v3712 = vpop.f32.mrf.mxu0
  %v3713 = vadd.f32 0.0, %v3712
  %v3714 = vpop.f32.mrf.mxu0
  %v3715 = vadd.f32 0.0, %v3714
  %v3716 = vpop.f32.mrf.mxu0
  %v3717 = vadd.f32 0.0, %v3716
  %3718 = vmatprep.mubr.bf16.mxu0 0
  %3719 = vmatmul.mubr.bf16.gmra.mxu0 %v649
  %v3720 = vpop.f32.mrf.mxu0
  %v3721 = vadd.f32 0.0, %v3720
  %v3722 = vpop.f32.mrf.mxu0
  %v3723 = vadd.f32 0.0, %v3722
  %v3724 = vpop.f32.mrf.mxu0
  %v3725 = vadd.f32 0.0, %v3724
  %v3726 = vpop.f32.mrf.mxu0
  %v3727 = vadd.f32 0.0, %v3726
  %3728 = vmatprep.mubr.bf16.mxu0 0
  %3729 = vmatmul.mubr.bf16.gmra.mxu0 %v652
  %v3730 = vpop.f32.mrf.mxu0
  %v3731 = vadd.f32 0.0, %v3730
  %v3732 = vpop.f32.mrf.mxu0
  %v3733 = vadd.f32 0.0, %v3732
  %v3734 = vpop.f32.mrf.mxu0
  %v3735 = vadd.f32 0.0, %v3734
  %v3736 = vpop.f32.mrf.mxu0
  %v3737 = vadd.f32 0.0, %v3736
  %3738 = vmatprep.mubr.bf16.mxu0 0
  %3739 = vmatmul.mubr.bf16.gmra.mxu0 %v655
  %v3740 = vpop.f32.mrf.mxu0
  %v3741 = vadd.f32 0.0, %v3740
  %v3742 = vpop.f32.mrf.mxu0
  %v3743 = vadd.f32 0.0, %v3742
  %v3744 = vpop.f32.mrf.mxu0
  %v3745 = vadd.f32 0.0, %v3744
  %v3746 = vpop.f32.mrf.mxu0
  %v3747 = vadd.f32 0.0, %v3746
  %3748 = vmatprep.mubr.bf16.mxu0 0
  %3749 = vmatmul.mubr.bf16.gmra.mxu0 %v658
  %v3750 = vpop.f32.mrf.mxu0
  %v3751 = vadd.f32 0.0, %v3750
  %v3752 = vpop.f32.mrf.mxu0
  %v3753 = vadd.f32 0.0, %v3752
  %v3754 = vpop.f32.mrf.mxu0
  %v3755 = vadd.f32 0.0, %v3754
  %v3756 = vpop.f32.mrf.mxu0
  %v3757 = vadd.f32 0.0, %v3756
  %3758 = vmatprep.mubr.bf16.mxu0 0
  %3759 = vmatmul.mubr.bf16.gmra.mxu0 %v661
  %v3760 = vpop.f32.mrf.mxu0
  %v3761 = vadd.f32 0.0, %v3760
  %v3762 = vpop.f32.mrf.mxu0
  %v3763 = vadd.f32 0.0, %v3762
  %v3764 = vpop.f32.mrf.mxu0
  %v3765 = vadd.f32 0.0, %v3764
  %v3766 = vpop.f32.mrf.mxu0
  %v3767 = vadd.f32 0.0, %v3766
  %3768 = vmatprep.mubr.bf16.mxu0 0
  %3769 = vmatmul.mubr.bf16.gmra.mxu0 %v664
  %v3770 = vpop.f32.mrf.mxu0
  %v3771 = vadd.f32 0.0, %v3770
  %v3772 = vpop.f32.mrf.mxu0
  %v3773 = vadd.f32 0.0, %v3772
  %v3774 = vpop.f32.mrf.mxu0
  %v3775 = vadd.f32 0.0, %v3774
  %v3776 = vpop.f32.mrf.mxu0
  %v3777 = vadd.f32 0.0, %v3776
  %3778 = vmatprep.mubr.bf16.mxu0 0
  %3779 = vmatmul.mubr.bf16.gmra.mxu0 %v667
  %v3780 = vpop.f32.mrf.mxu0
  %v3781 = vadd.f32 0.0, %v3780
  %v3782 = vpop.f32.mrf.mxu0
  %v3783 = vadd.f32 0.0, %v3782
  %v3784 = vpop.f32.mrf.mxu0
  %v3785 = vadd.f32 0.0, %v3784
  %v3786 = vpop.f32.mrf.mxu0
  %v3787 = vadd.f32 0.0, %v3786
  %3788 = vmatprep.mubr.bf16.mxu0 0
  %3789 = vmatmul.mubr.bf16.gmra.mxu0 %v670
  %v3790 = vpop.f32.mrf.mxu0
  %v3791 = vadd.f32 0.0, %v3790
  %v3792 = vpop.f32.mrf.mxu0
  %v3793 = vadd.f32 0.0, %v3792
  %v3794 = vpop.f32.mrf.mxu0
  %v3795 = vadd.f32 0.0, %v3794
  %v3796 = vpop.f32.mrf.mxu0
  %v3797 = vadd.f32 0.0, %v3796
  %3798 = vmatprep.mubr.bf16.mxu0 0
  %3799 = vmatmul.mubr.bf16.gmra.mxu0 %v673
  %v3800 = vpop.f32.mrf.mxu0
  %v3801 = vadd.f32 0.0, %v3800
  %v3802 = vpop.f32.mrf.mxu0
  %v3803 = vadd.f32 0.0, %v3802
  %v3804 = vpop.f32.mrf.mxu0
  %v3805 = vadd.f32 0.0, %v3804
  %v3806 = vpop.f32.mrf.mxu0
  %v3807 = vadd.f32 0.0, %v3806
  %3808 = vmatprep.mubr.bf16.mxu0 0
  %3809 = vmatmul.mubr.bf16.gmra.mxu0 %v676
  %v3810 = vpop.f32.mrf.mxu0
  %v3811 = vadd.f32 0.0, %v3810
  %v3812 = vpop.f32.mrf.mxu0
  %v3813 = vadd.f32 0.0, %v3812
  %v3814 = vpop.f32.mrf.mxu0
  %v3815 = vadd.f32 0.0, %v3814
  %v3816 = vpop.f32.mrf.mxu0
  %v3817 = vadd.f32 0.0, %v3816
  %3818 = vmatprep.mubr.bf16.mxu0 0
  %3819 = vmatmul.mubr.bf16.gmra.mxu0 %v679
  %v3820 = vpop.f32.mrf.mxu0
  %v3821 = vadd.f32 0.0, %v3820
  %v3822 = vpop.f32.mrf.mxu0
  %v3823 = vadd.f32 0.0, %v3822
  %v3824 = vpop.f32.mrf.mxu0
  %v3825 = vadd.f32 0.0, %v3824
  %v3826 = vpop.f32.mrf.mxu0
  %v3827 = vadd.f32 0.0, %v3826
  %3828 = vmatprep.mubr.bf16.mxu0 0
  %3829 = vmatmul.mubr.bf16.gmra.mxu0 %v682
  %v3830 = vpop.f32.mrf.mxu0
  %v3831 = vadd.f32 0.0, %v3830
  %v3832 = vpop.f32.mrf.mxu0
  %v3833 = vadd.f32 0.0, %v3832
  %v3834 = vpop.f32.mrf.mxu0
  %v3835 = vadd.f32 0.0, %v3834
  %v3836 = vpop.f32.mrf.mxu0
  %v3837 = vadd.f32 0.0, %v3836
  %3838 = vmatprep.mubr.bf16.mxu0 0
  %3839 = vmatmul.mubr.bf16.gmra.mxu0 %v685
  %v3840 = vpop.f32.mrf.mxu0
  %v3841 = vadd.f32 0.0, %v3840
  %v3842 = vpop.f32.mrf.mxu0
  %v3843 = vadd.f32 0.0, %v3842
  %v3844 = vpop.f32.mrf.mxu0
  %v3845 = vadd.f32 0.0, %v3844
  %v3846 = vpop.f32.mrf.mxu0
  %v3847 = vadd.f32 0.0, %v3846
  %3848 = vmatprep.mubr.bf16.mxu0 0
  %3849 = vmatmul.mubr.bf16.gmra.mxu0 %v688
  %v3850 = vpop.f32.mrf.mxu0
  %v3851 = vadd.f32 0.0, %v3850
  %v3852 = vpop.f32.mrf.mxu0
  %v3853 = vadd.f32 0.0, %v3852
  %v3854 = vpop.f32.mrf.mxu0
  %v3855 = vadd.f32 0.0, %v3854
  %v3856 = vpop.f32.mrf.mxu0
  %v3857 = vadd.f32 0.0, %v3856
  %3858 = vmatprep.mubr.bf16.mxu0 0
  %3859 = vmatmul.mubr.bf16.gmra.mxu0 %v691
  %v3860 = vpop.f32.mrf.mxu0
  %v3861 = vadd.f32 0.0, %v3860
  %v3862 = vpop.f32.mrf.mxu0
  %v3863 = vadd.f32 0.0, %v3862
  %v3864 = vpop.f32.mrf.mxu0
  %v3865 = vadd.f32 0.0, %v3864
  %v3866 = vpop.f32.mrf.mxu0
  %v3867 = vadd.f32 0.0, %v3866
  %3868 = vmatprep.mubr.bf16.mxu0 0
  %3869 = vmatmul.mubr.bf16.gmra.mxu0 %v694
  %v3870 = vpop.f32.mrf.mxu0
  %v3871 = vadd.f32 0.0, %v3870
  %v3872 = vpop.f32.mrf.mxu0
  %v3873 = vadd.f32 0.0, %v3872
  %v3874 = vpop.f32.mrf.mxu0
  %v3875 = vadd.f32 0.0, %v3874
  %v3876 = vpop.f32.mrf.mxu0
  %v3877 = vadd.f32 0.0, %v3876
  %3878 = vmatprep.mubr.bf16.mxu0 0
  %3879 = vmatmul.mubr.bf16.gmra.mxu0 %v697
  %v3880 = vpop.f32.mrf.mxu0
  %v3881 = vadd.f32 0.0, %v3880
  %v3882 = vpop.f32.mrf.mxu0
  %v3883 = vadd.f32 0.0, %v3882
  %v3884 = vpop.f32.mrf.mxu0
  %v3885 = vadd.f32 0.0, %v3884
  %v3886 = vpop.f32.mrf.mxu0
  %v3887 = vadd.f32 0.0, %v3886
  %3888 = vmatprep.mubr.bf16.mxu0 0
  %3889 = vmatmul.mubr.bf16.gmra.mxu0 %v700
  %v3890 = vpop.f32.mrf.mxu0
  %v3891 = vadd.f32 0.0, %v3890
  %v3892 = vpop.f32.mrf.mxu0
  %v3893 = vadd.f32 0.0, %v3892
  %v3894 = vpop.f32.mrf.mxu0
  %v3895 = vadd.f32 0.0, %v3894
  %v3896 = vpop.f32.mrf.mxu0
  %v3897 = vadd.f32 0.0, %v3896
  %3898 = vmatprep.mubr.bf16.mxu0 0
  %3899 = vmatmul.mubr.bf16.gmra.mxu0 %v703
  %v3900 = vpop.f32.mrf.mxu0
  %v3901 = vadd.f32 0.0, %v3900
  %v3902 = vpop.f32.mrf.mxu0
  %v3903 = vadd.f32 0.0, %v3902
  %v3904 = vpop.f32.mrf.mxu0
  %v3905 = vadd.f32 0.0, %v3904
  %v3906 = vpop.f32.mrf.mxu0
  %v3907 = vadd.f32 0.0, %v3906
  %3908 = vmatprep.mubr.bf16.mxu0 0
  %3909 = vmatmul.mubr.bf16.gmra.mxu0 %v706
  %v3910 = vpop.f32.mrf.mxu0
  %v3911 = vadd.f32 0.0, %v3910
  %v3912 = vpop.f32.mrf.mxu0
  %v3913 = vadd.f32 0.0, %v3912
  %v3914 = vpop.f32.mrf.mxu0
  %v3915 = vadd.f32 0.0, %v3914
  %v3916 = vpop.f32.mrf.mxu0
  %v3917 = vadd.f32 0.0, %v3916
  %3918 = vmatprep.mubr.bf16.mxu0 0
  %3919 = vmatmul.mubr.bf16.gmra.mxu0 %v709
  %v3920 = vpop.f32.mrf.mxu0
  %v3921 = vadd.f32 0.0, %v3920
  %v3922 = vpop.f32.mrf.mxu0
  %v3923 = vadd.f32 0.0, %v3922
  %v3924 = vpop.f32.mrf.mxu0
  %v3925 = vadd.f32 0.0, %v3924
  %v3926 = vpop.f32.mrf.mxu0
  %v3927 = vadd.f32 0.0, %v3926
  %3928 = vmatprep.mubr.bf16.mxu0 0
  %3929 = vmatmul.mubr.bf16.gmra.mxu0 %v712
  %v3930 = vpop.f32.mrf.mxu0
  %v3931 = vadd.f32 0.0, %v3930
  %v3932 = vpop.f32.mrf.mxu0
  %v3933 = vadd.f32 0.0, %v3932
  %v3934 = vpop.f32.mrf.mxu0
  %v3935 = vadd.f32 0.0, %v3934
  %v3936 = vpop.f32.mrf.mxu0
  %v3937 = vadd.f32 0.0, %v3936
  %3938 = vmatprep.mubr.bf16.mxu0 0
  %3939 = vmatmul.mubr.bf16.gmra.mxu0 %v715
  %v3940 = vpop.f32.mrf.mxu0
  %v3941 = vadd.f32 0.0, %v3940
  %v3942 = vpop.f32.mrf.mxu0
  %v3943 = vadd.f32 0.0, %v3942
  %v3944 = vpop.f32.mrf.mxu0
  %v3945 = vadd.f32 0.0, %v3944
  %v3946 = vpop.f32.mrf.mxu0
  %v3947 = vadd.f32 0.0, %v3946
  %3948 = vmatprep.mubr.bf16.mxu0 0
  %3949 = vmatmul.mubr.bf16.gmra.mxu0 %v718
  %v3950 = vpop.f32.mrf.mxu0
  %v3951 = vadd.f32 0.0, %v3950
  %v3952 = vpop.f32.mrf.mxu0
  %v3953 = vadd.f32 0.0, %v3952
  %v3954 = vpop.f32.mrf.mxu0
  %v3955 = vadd.f32 0.0, %v3954
  %v3956 = vpop.f32.mrf.mxu0
  %v3957 = vadd.f32 0.0, %v3956
  %3958 = vmatprep.mubr.bf16.mxu0 0
  %3959 = vmatmul.mubr.bf16.gmra.mxu0 %v721
  %v3960 = vpop.f32.mrf.mxu0
  %v3961 = vadd.f32 0.0, %v3960
  %v3962 = vpop.f32.mrf.mxu0
  %v3963 = vadd.f32 0.0, %v3962
  %v3964 = vpop.f32.mrf.mxu0
  %v3965 = vadd.f32 0.0, %v3964
  %v3966 = vpop.f32.mrf.mxu0
  %v3967 = vadd.f32 0.0, %v3966
  %3968 = vmatprep.mubr.bf16.mxu0 0
  %3969 = vmatmul.mubr.bf16.gmra.mxu0 %v724
  %v3970 = vpop.f32.mrf.mxu0
  %v3971 = vadd.f32 0.0, %v3970
  %v3972 = vpop.f32.mrf.mxu0
  %v3973 = vadd.f32 0.0, %v3972
  %v3974 = vpop.f32.mrf.mxu0
  %v3975 = vadd.f32 0.0, %v3974
  %v3976 = vpop.f32.mrf.mxu0
  %v3977 = vadd.f32 0.0, %v3976
  %3978 = vmatprep.mubr.bf16.mxu0 0
  %3979 = vmatmul.mubr.bf16.gmra.mxu0 %v727
  %v3980 = vpop.f32.mrf.mxu0
  %v3981 = vadd.f32 0.0, %v3980
  %v3982 = vpop.f32.mrf.mxu0
  %v3983 = vadd.f32 0.0, %v3982
  %v3984 = vpop.f32.mrf.mxu0
  %v3985 = vadd.f32 0.0, %v3984
  %v3986 = vpop.f32.mrf.mxu0
  %v3987 = vadd.f32 0.0, %v3986
  %3988 = vmatprep.mubr.bf16.mxu0 0
  %3989 = vmatmul.mubr.bf16.gmra.mxu0 %v730
  %v3990 = vpop.f32.mrf.mxu0
  %v3991 = vadd.f32 0.0, %v3990
  %v3992 = vpop.f32.mrf.mxu0
  %v3993 = vadd.f32 0.0, %v3992
  %v3994 = vpop.f32.mrf.mxu0
  %v3995 = vadd.f32 0.0, %v3994
  %v3996 = vpop.f32.mrf.mxu0
  %v3997 = vadd.f32 0.0, %v3996
  %3998 = vmatprep.mubr.bf16.mxu0 0
  %3999 = vmatmul.mubr.bf16.gmra.mxu0 %v733
  %v4000 = vpop.f32.mrf.mxu0
  %v4001 = vadd.f32 0.0, %v4000
  %v4002 = vpop.f32.mrf.mxu0
  %v4003 = vadd.f32 0.0, %v4002
  %v4004 = vpop.f32.mrf.mxu0
  %v4005 = vadd.f32 0.0, %v4004
  %v4006 = vpop.f32.mrf.mxu0
  %v4007 = vadd.f32 0.0, %v4006
  %4008 = vmatprep.mubr.bf16.mxu0 0
  %4009 = vmatmul.mubr.bf16.gmra.mxu0 %v736
  %v4010 = vpop.f32.mrf.mxu0
  %v4011 = vadd.f32 0.0, %v4010
  %v4012 = vpop.f32.mrf.mxu0
  %v4013 = vadd.f32 0.0, %v4012
  %v4014 = vpop.f32.mrf.mxu0
  %v4015 = vadd.f32 0.0, %v4014
  %v4016 = vpop.f32.mrf.mxu0
  %v4017 = vadd.f32 0.0, %v4016
  %4018 = vmatprep.mubr.bf16.mxu0 0
  %4019 = vmatmul.mubr.bf16.gmra.mxu0 %v739
  %v4020 = vpop.f32.mrf.mxu0
  %v4021 = vadd.f32 0.0, %v4020
  %v4022 = vpop.f32.mrf.mxu0
  %v4023 = vadd.f32 0.0, %v4022
  %v4024 = vpop.f32.mrf.mxu0
  %v4025 = vadd.f32 0.0, %v4024
  %v4026 = vpop.f32.mrf.mxu0
  %v4027 = vadd.f32 0.0, %v4026
  %4028 = vmatprep.mubr.bf16.mxu0 0
  %4029 = vmatmul.mubr.bf16.gmra.mxu0 %v742
  %v4030 = vpop.f32.mrf.mxu0
  %v4031 = vadd.f32 0.0, %v4030
  %v4032 = vpop.f32.mrf.mxu0
  %v4033 = vadd.f32 0.0, %v4032
  %v4034 = vpop.f32.mrf.mxu0
  %v4035 = vadd.f32 0.0, %v4034
  %v4036 = vpop.f32.mrf.mxu0
  %v4037 = vadd.f32 0.0, %v4036
  %4038 = vmatprep.mubr.bf16.mxu0 0
  %4039 = vmatmul.mubr.bf16.gmra.mxu0 %v745
  %v4040 = vpop.f32.mrf.mxu0
  %v4041 = vadd.f32 0.0, %v4040
  %v4042 = vpop.f32.mrf.mxu0
  %v4043 = vadd.f32 0.0, %v4042
  %v4044 = vpop.f32.mrf.mxu0
  %v4045 = vadd.f32 0.0, %v4044
  %v4046 = vpop.f32.mrf.mxu0
  %v4047 = vadd.f32 0.0, %v4046
  %4048 = vmatprep.mubr.bf16.mxu0 0
  %4049 = vmatmul.mubr.bf16.gmra.mxu0 %v748
  %v4050 = vpop.f32.mrf.mxu0
  %v4051 = vadd.f32 0.0, %v4050
  %v4052 = vpop.f32.mrf.mxu0
  %v4053 = vadd.f32 0.0, %v4052
  %v4054 = vpop.f32.mrf.mxu0
  %v4055 = vadd.f32 0.0, %v4054
  %v4056 = vpop.f32.mrf.mxu0
  %v4057 = vadd.f32 0.0, %v4056
  %4058 = vmatprep.mubr.bf16.mxu0 0
  %4059 = vmatmul.mubr.bf16.gmra.mxu0 %v751
  %v4060 = vpop.f32.mrf.mxu0
  %v4061 = vadd.f32 0.0, %v4060
  %v4062 = vpop.f32.mrf.mxu0
  %v4063 = vadd.f32 0.0, %v4062
  %v4064 = vpop.f32.mrf.mxu0
  %v4065 = vadd.f32 0.0, %v4064
  %v4066 = vpop.f32.mrf.mxu0
  %v4067 = vadd.f32 0.0, %v4066
  %4068 = vmatprep.mubr.bf16.mxu0 0
  %4069 = vmatmul.mubr.bf16.gmra.mxu0 %v754
  %v4070 = vpop.f32.mrf.mxu0
  %v4071 = vadd.f32 0.0, %v4070
  %v4072 = vpop.f32.mrf.mxu0
  %v4073 = vadd.f32 0.0, %v4072
  %v4074 = vpop.f32.mrf.mxu0
  %v4075 = vadd.f32 0.0, %v4074
  %v4076 = vpop.f32.mrf.mxu0
  %v4077 = vadd.f32 0.0, %v4076
  %4078 = vmatprep.mubr.bf16.mxu0 0
  %4079 = vmatmul.mubr.bf16.gmra.mxu0 %v757
  %v4080 = vpop.f32.mrf.mxu0
  %v4081 = vadd.f32 0.0, %v4080
  %v4082 = vpop.f32.mrf.mxu0
  %v4083 = vadd.f32 0.0, %v4082
  %v4084 = vpop.f32.mrf.mxu0
  %v4085 = vadd.f32 0.0, %v4084
  %v4086 = vpop.f32.mrf.mxu0
  %v4087 = vadd.f32 0.0, %v4086
  %4088 = vmatprep.mubr.bf16.mxu0 0
  %4089 = vmatmul.mubr.bf16.gmra.mxu0 %v760
  %v4090 = vpop.f32.mrf.mxu0
  %v4091 = vadd.f32 0.0, %v4090
  %v4092 = vpop.f32.mrf.mxu0
  %v4093 = vadd.f32 0.0, %v4092
  %v4094 = vpop.f32.mrf.mxu0
  %v4095 = vadd.f32 0.0, %v4094
  %v4096 = vpop.f32.mrf.mxu0
  %v4097 = vadd.f32 0.0, %v4096
  %4098 = vmatprep.mubr.bf16.mxu0 0
  %4099 = vmatmul.mubr.bf16.gmra.mxu0 %v763
  %v4100 = vpop.f32.mrf.mxu0
  %v4101 = vadd.f32 0.0, %v4100
  %v4102 = vpop.f32.mrf.mxu0
  %v4103 = vadd.f32 0.0, %v4102
  %v4104 = vpop.f32.mrf.mxu0
  %v4105 = vadd.f32 0.0, %v4104
  %v4106 = vpop.f32.mrf.mxu0
  %v4107 = vadd.f32 0.0, %v4106
  %4108 = vmatprep.mubr.bf16.mxu0 0
  %4109 = vmatmul.mubr.bf16.gmra.mxu0 %v766
  %v4110 = vpop.f32.mrf.mxu0
  %v4111 = vadd.f32 0.0, %v4110
  %v4112 = vpop.f32.mrf.mxu0
  %v4113 = vadd.f32 0.0, %v4112
  %v4114 = vpop.f32.mrf.mxu0
  %v4115 = vadd.f32 0.0, %v4114
  %v4116 = vpop.f32.mrf.mxu0
  %v4117 = vadd.f32 0.0, %v4116
  %4118 = vmatprep.mubr.bf16.mxu0 0
  %4119 = vmatmul.mubr.bf16.gmra.mxu0 %v769
  %v4120 = vpop.f32.mrf.mxu0
  %v4121 = vadd.f32 0.0, %v4120
  %v4122 = vpop.f32.mrf.mxu0
  %v4123 = vadd.f32 0.0, %v4122
  %v4124 = vpop.f32.mrf.mxu0
  %v4125 = vadd.f32 0.0, %v4124
  %v4126 = vpop.f32.mrf.mxu0
  %v4127 = vadd.f32 0.0, %v4126
  %4128 = vmatprep.mubr.bf16.mxu0 0
  %4129 = vmatmul.mubr.bf16.gmra.mxu0 %v772
  %v4130 = vpop.f32.mrf.mxu0
  %v4131 = vadd.f32 0.0, %v4130
  %v4132 = vpop.f32.mrf.mxu0
  %v4133 = vadd.f32 0.0, %v4132
  %v4134 = vpop.f32.mrf.mxu0
  %v4135 = vadd.f32 0.0, %v4134
  %v4136 = vpop.f32.mrf.mxu0
  %v4137 = vadd.f32 0.0, %v4136
  %4138 = vmatprep.mubr.bf16.mxu0 0
  %4139 = vmatmul.mubr.bf16.gmra.mxu0 %v775
  %v4140 = vpop.f32.mrf.mxu0
  %v4141 = vadd.f32 0.0, %v4140
  %v4142 = vpop.f32.mrf.mxu0
  %v4143 = vadd.f32 0.0, %v4142
  %v4144 = vpop.f32.mrf.mxu0
  %v4145 = vadd.f32 0.0, %v4144
  %v4146 = vpop.f32.mrf.mxu0
  %v4147 = vadd.f32 0.0, %v4146
  %4148 = vmatprep.mubr.bf16.mxu0 0
  %4149 = vmatmul.mubr.bf16.gmra.mxu0 %v778
  %v4150 = vpop.f32.mrf.mxu0
  %v4151 = vadd.f32 0.0, %v4150
  %v4152 = vpop.f32.mrf.mxu0
  %v4153 = vadd.f32 0.0, %v4152
  %v4154 = vpop.f32.mrf.mxu0
  %v4155 = vadd.f32 0.0, %v4154
  %v4156 = vpop.f32.mrf.mxu0
  %v4157 = vadd.f32 0.0, %v4156
  %4158 = vmatprep.mubr.bf16.mxu0 0
  %4159 = vmatmul.mubr.bf16.gmra.mxu0 %v781
  %v4160 = vpop.f32.mrf.mxu0
  %v4161 = vadd.f32 0.0, %v4160
  %v4162 = vpop.f32.mrf.mxu0
  %v4163 = vadd.f32 0.0, %v4162
  %v4164 = vpop.f32.mrf.mxu0
  %v4165 = vadd.f32 0.0, %v4164
  %v4166 = vpop.f32.mrf.mxu0
  %v4167 = vadd.f32 0.0, %v4166
  %4168 = vmatprep.mubr.bf16.mxu0 0
  %4169 = vmatmul.mubr.bf16.gmra.mxu0 %v784
  %v4170 = vpop.f32.mrf.mxu0
  %v4171 = vadd.f32 0.0, %v4170
  %v4172 = vpop.f32.mrf.mxu0
  %v4173 = vadd.f32 0.0, %v4172
  %v4174 = vpop.f32.mrf.mxu0
  %v4175 = vadd.f32 0.0, %v4174
  %v4176 = vpop.f32.mrf.mxu0
  %v4177 = vadd.f32 0.0, %v4176
  %4178 = vmatprep.mubr.bf16.mxu0 0
  %4179 = vmatmul.mubr.bf16.gmra.mxu0 %v787
  %v4180 = vpop.f32.mrf.mxu0
  %v4181 = vadd.f32 0.0, %v4180
  %v4182 = vpop.f32.mrf.mxu0
  %v4183 = vadd.f32 0.0, %v4182
  %v4184 = vpop.f32.mrf.mxu0
  %v4185 = vadd.f32 0.0, %v4184
  %v4186 = vpop.f32.mrf.mxu0
  %v4187 = vadd.f32 0.0, %v4186
  %4188 = vmatprep.mubr.bf16.mxu0 0
  %4189 = vmatmul.mubr.bf16.gmra.mxu0 %v790
  %v4190 = vpop.f32.mrf.mxu0
  %v4191 = vadd.f32 0.0, %v4190
  %v4192 = vpop.f32.mrf.mxu0
  %v4193 = vadd.f32 0.0, %v4192
  %v4194 = vpop.f32.mrf.mxu0
  %v4195 = vadd.f32 0.0, %v4194
  %v4196 = vpop.f32.mrf.mxu0
  %v4197 = vadd.f32 0.0, %v4196
  %4198 = vmatprep.mubr.bf16.mxu0 0
  %4199 = vmatmul.mubr.bf16.gmra.mxu0 %v793
  %v4200 = vpop.f32.mrf.mxu0
  %v4201 = vadd.f32 0.0, %v4200
  %v4202 = vpop.f32.mrf.mxu0
  %v4203 = vadd.f32 0.0, %v4202
  %v4204 = vpop.f32.mrf.mxu0
  %v4205 = vadd.f32 0.0, %v4204
  %v4206 = vpop.f32.mrf.mxu0
  %v4207 = vadd.f32 0.0, %v4206
  %4208 = vdwg.mxu0
  %4209 = vmatprep.subr.bf16.mxu0 0
  %4210 = vmatpush1.bf16.msra.mxu0 0
  %4211 = vmatprep.subr.bf16.mxu0 0
  %4212 = vmatpush1.bf16.msra.mxu0 0
  %4213 = vmatprep.subr.bf16.mxu0 0
  %4214 = vmatpush1.bf16.msra.mxu0 0
  %4215 = vmatprep.subr.bf16.mxu0 0
  %4216 = vmatpush1.bf16.msra.mxu0 0
  %4217 = vmatprep.subr.bf16.mxu0 0
  %4218 = vmatpush1.bf16.msra.mxu0 0
  %4219 = vmatprep.subr.bf16.mxu0 0
  %4220 = vmatpush1.bf16.msra.mxu0 0
  %4221 = vmatprep.subr.bf16.mxu0 0
  %4222 = vmatpush1.bf16.msra.mxu0 0
  %4223 = vmatprep.subr.bf16.mxu0 %v830
  %4224 = vmatpush1.bf16.msra.mxu0 %v827
  %4225 = vmatprep.subr.bf16.mxu0 0
  %4226 = vmatpush2.bf16.msra.mxu0 0
  %4227 = vmatprep.subr.bf16.mxu0 0
  %4228 = vmatpush2.bf16.msra.mxu0 0
  %4229 = vmatprep.subr.bf16.mxu0 0
  %4230 = vmatpush2.bf16.msra.mxu0 0
  %4231 = vmatprep.subr.bf16.mxu0 0
  %4232 = vmatpush2.bf16.msra.mxu0 0
  %4233 = vmatprep.subr.bf16.mxu0 0
  %4234 = vmatpush2.bf16.msra.mxu0 0
  %4235 = vmatprep.subr.bf16.mxu0 0
  %4236 = vmatpush2.bf16.msra.mxu0 0
  %4237 = vmatprep.subr.bf16.mxu0 0
  %4238 = vmatpush2.bf16.msra.mxu0 0
  %4239 = vmatprep.subr.bf16.mxu0 0
  %4240 = vmatpush2.bf16.msra.mxu0 0
  %4241 = vmatprep.mubr.bf16.mxu0 0
  %4242 = vmatmul.mubr.bf16.gmra.mxu0 %v604
  %v4243 = vpop.f32.mrf.mxu0
  %v4244 = vadd.f32 0.0, %v4243
  %v4245 = vpop.f32.mrf.mxu0
  %v4246 = vadd.f32 0.0, %v4245
  %v4247 = vpop.f32.mrf.mxu0
  %v4248 = vadd.f32 0.0, %v4247
  %v4249 = vpop.f32.mrf.mxu0
  %v4250 = vadd.f32 0.0, %v4249
  %4251 = vmatprep.mubr.bf16.mxu0 0
  %4252 = vmatmul.mubr.bf16.gmra.mxu0 %v607
  %v4253 = vpop.f32.mrf.mxu0
  %v4254 = vadd.f32 0.0, %v4253
  %v4255 = vpop.f32.mrf.mxu0
  %v4256 = vadd.f32 0.0, %v4255
  %v4257 = vpop.f32.mrf.mxu0
  %v4258 = vadd.f32 0.0, %v4257
  %v4259 = vpop.f32.mrf.mxu0
  %v4260 = vadd.f32 0.0, %v4259
  %4261 = vmatprep.mubr.bf16.mxu0 0
  %4262 = vmatmul.mubr.bf16.gmra.mxu0 %v610
  %v4263 = vpop.f32.mrf.mxu0
  %v4264 = vadd.f32 0.0, %v4263
  %v4265 = vpop.f32.mrf.mxu0
  %v4266 = vadd.f32 0.0, %v4265
  %v4267 = vpop.f32.mrf.mxu0
  %v4268 = vadd.f32 0.0, %v4267
  %v4269 = vpop.f32.mrf.mxu0
  %v4270 = vadd.f32 0.0, %v4269
  %4271 = vmatprep.mubr.bf16.mxu0 0
  %4272 = vmatmul.mubr.bf16.gmra.mxu0 %v613
  %v4273 = vpop.f32.mrf.mxu0
  %v4274 = vadd.f32 0.0, %v4273
  %v4275 = vpop.f32.mrf.mxu0
  %v4276 = vadd.f32 0.0, %v4275
  %v4277 = vpop.f32.mrf.mxu0
  %v4278 = vadd.f32 0.0, %v4277
  %v4279 = vpop.f32.mrf.mxu0
  %v4280 = vadd.f32 0.0, %v4279
  %4281 = vmatprep.mubr.bf16.mxu0 0
  %4282 = vmatmul.mubr.bf16.gmra.mxu0 %v616
  %v4283 = vpop.f32.mrf.mxu0
  %v4284 = vadd.f32 0.0, %v4283
  %v4285 = vpop.f32.mrf.mxu0
  %v4286 = vadd.f32 0.0, %v4285
  %v4287 = vpop.f32.mrf.mxu0
  %v4288 = vadd.f32 0.0, %v4287
  %v4289 = vpop.f32.mrf.mxu0
  %v4290 = vadd.f32 0.0, %v4289
  %4291 = vmatprep.mubr.bf16.mxu0 0
  %4292 = vmatmul.mubr.bf16.gmra.mxu0 %v619
  %v4293 = vpop.f32.mrf.mxu0
  %v4294 = vadd.f32 0.0, %v4293
  %v4295 = vpop.f32.mrf.mxu0
  %v4296 = vadd.f32 0.0, %v4295
  %v4297 = vpop.f32.mrf.mxu0
  %v4298 = vadd.f32 0.0, %v4297
  %v4299 = vpop.f32.mrf.mxu0
  %v4300 = vadd.f32 0.0, %v4299
  %4301 = vmatprep.mubr.bf16.mxu0 0
  %4302 = vmatmul.mubr.bf16.gmra.mxu0 %v622
  %v4303 = vpop.f32.mrf.mxu0
  %v4304 = vadd.f32 0.0, %v4303
  %v4305 = vpop.f32.mrf.mxu0
  %v4306 = vadd.f32 0.0, %v4305
  %v4307 = vpop.f32.mrf.mxu0
  %v4308 = vadd.f32 0.0, %v4307
  %v4309 = vpop.f32.mrf.mxu0
  %v4310 = vadd.f32 0.0, %v4309
  %4311 = vmatprep.mubr.bf16.mxu0 0
  %4312 = vmatmul.mubr.bf16.gmra.mxu0 %v625
  %v4313 = vpop.f32.mrf.mxu0
  %v4314 = vadd.f32 0.0, %v4313
  %v4315 = vpop.f32.mrf.mxu0
  %v4316 = vadd.f32 0.0, %v4315
  %v4317 = vpop.f32.mrf.mxu0
  %v4318 = vadd.f32 0.0, %v4317
  %v4319 = vpop.f32.mrf.mxu0
  %v4320 = vadd.f32 0.0, %v4319
  %4321 = vmatprep.mubr.bf16.mxu0 0
  %4322 = vmatmul.mubr.bf16.gmra.mxu0 %v628
  %v4323 = vpop.f32.mrf.mxu0
  %v4324 = vadd.f32 0.0, %v4323
  %v4325 = vpop.f32.mrf.mxu0
  %v4326 = vadd.f32 0.0, %v4325
  %v4327 = vpop.f32.mrf.mxu0
  %v4328 = vadd.f32 0.0, %v4327
  %v4329 = vpop.f32.mrf.mxu0
  %v4330 = vadd.f32 0.0, %v4329
  %4331 = vmatprep.mubr.bf16.mxu0 0
  %4332 = vmatmul.mubr.bf16.gmra.mxu0 %v631
  %v4333 = vpop.f32.mrf.mxu0
  %v4334 = vadd.f32 0.0, %v4333
  %v4335 = vpop.f32.mrf.mxu0
  %v4336 = vadd.f32 0.0, %v4335
  %v4337 = vpop.f32.mrf.mxu0
  %v4338 = vadd.f32 0.0, %v4337
  %v4339 = vpop.f32.mrf.mxu0
  %v4340 = vadd.f32 0.0, %v4339
  %4341 = vmatprep.mubr.bf16.mxu0 0
  %4342 = vmatmul.mubr.bf16.gmra.mxu0 %v634
  %v4343 = vpop.f32.mrf.mxu0
  %v4344 = vadd.f32 0.0, %v4343
  %v4345 = vpop.f32.mrf.mxu0
  %v4346 = vadd.f32 0.0, %v4345
  %v4347 = vpop.f32.mrf.mxu0
  %v4348 = vadd.f32 0.0, %v4347
  %v4349 = vpop.f32.mrf.mxu0
  %v4350 = vadd.f32 0.0, %v4349
  %4351 = vmatprep.mubr.bf16.mxu0 0
  %4352 = vmatmul.mubr.bf16.gmra.mxu0 %v637
  %v4353 = vpop.f32.mrf.mxu0
  %v4354 = vadd.f32 0.0, %v4353
  %v4355 = vpop.f32.mrf.mxu0
  %v4356 = vadd.f32 0.0, %v4355
  %v4357 = vpop.f32.mrf.mxu0
  %v4358 = vadd.f32 0.0, %v4357
  %v4359 = vpop.f32.mrf.mxu0
  %v4360 = vadd.f32 0.0, %v4359
  %4361 = vmatprep.mubr.bf16.mxu0 0
  %4362 = vmatmul.mubr.bf16.gmra.mxu0 %v640
  %v4363 = vpop.f32.mrf.mxu0
  %v4364 = vadd.f32 0.0, %v4363
  %v4365 = vpop.f32.mrf.mxu0
  %v4366 = vadd.f32 0.0, %v4365
  %v4367 = vpop.f32.mrf.mxu0
  %v4368 = vadd.f32 0.0, %v4367
  %v4369 = vpop.f32.mrf.mxu0
  %v4370 = vadd.f32 0.0, %v4369
  %4371 = vmatprep.mubr.bf16.mxu0 0
  %4372 = vmatmul.mubr.bf16.gmra.mxu0 %v643
  %v4373 = vpop.f32.mrf.mxu0
  %v4374 = vadd.f32 0.0, %v4373
  %v4375 = vpop.f32.mrf.mxu0
  %v4376 = vadd.f32 0.0, %v4375
  %v4377 = vpop.f32.mrf.mxu0
  %v4378 = vadd.f32 0.0, %v4377
  %v4379 = vpop.f32.mrf.mxu0
  %v4380 = vadd.f32 0.0, %v4379
  %4381 = vmatprep.mubr.bf16.mxu0 0
  %4382 = vmatmul.mubr.bf16.gmra.mxu0 %v646
  %v4383 = vpop.f32.mrf.mxu0
  %v4384 = vadd.f32 0.0, %v4383
  %v4385 = vpop.f32.mrf.mxu0
  %v4386 = vadd.f32 0.0, %v4385
  %v4387 = vpop.f32.mrf.mxu0
  %v4388 = vadd.f32 0.0, %v4387
  %v4389 = vpop.f32.mrf.mxu0
  %v4390 = vadd.f32 0.0, %v4389
  %4391 = vmatprep.mubr.bf16.mxu0 0
  %4392 = vmatmul.mubr.bf16.gmra.mxu0 %v649
  %v4393 = vpop.f32.mrf.mxu0
  %v4394 = vadd.f32 0.0, %v4393
  %v4395 = vpop.f32.mrf.mxu0
  %v4396 = vadd.f32 0.0, %v4395
  %v4397 = vpop.f32.mrf.mxu0
  %v4398 = vadd.f32 0.0, %v4397
  %v4399 = vpop.f32.mrf.mxu0
  %v4400 = vadd.f32 0.0, %v4399
  %4401 = vmatprep.mubr.bf16.mxu0 0
  %4402 = vmatmul.mubr.bf16.gmra.mxu0 %v652
  %v4403 = vpop.f32.mrf.mxu0
  %v4404 = vadd.f32 0.0, %v4403
  %v4405 = vpop.f32.mrf.mxu0
  %v4406 = vadd.f32 0.0, %v4405
  %v4407 = vpop.f32.mrf.mxu0
  %v4408 = vadd.f32 0.0, %v4407
  %v4409 = vpop.f32.mrf.mxu0
  %v4410 = vadd.f32 0.0, %v4409
  %4411 = vmatprep.mubr.bf16.mxu0 0
  %4412 = vmatmul.mubr.bf16.gmra.mxu0 %v655
  %v4413 = vpop.f32.mrf.mxu0
  %v4414 = vadd.f32 0.0, %v4413
  %v4415 = vpop.f32.mrf.mxu0
  %v4416 = vadd.f32 0.0, %v4415
  %v4417 = vpop.f32.mrf.mxu0
  %v4418 = vadd.f32 0.0, %v4417
  %v4419 = vpop.f32.mrf.mxu0
  %v4420 = vadd.f32 0.0, %v4419
  %4421 = vmatprep.mubr.bf16.mxu0 0
  %4422 = vmatmul.mubr.bf16.gmra.mxu0 %v658
  %v4423 = vpop.f32.mrf.mxu0
  %v4424 = vadd.f32 0.0, %v4423
  %v4425 = vpop.f32.mrf.mxu0
  %v4426 = vadd.f32 0.0, %v4425
  %v4427 = vpop.f32.mrf.mxu0
  %v4428 = vadd.f32 0.0, %v4427
  %v4429 = vpop.f32.mrf.mxu0
  %v4430 = vadd.f32 0.0, %v4429
  %4431 = vmatprep.mubr.bf16.mxu0 0
  %4432 = vmatmul.mubr.bf16.gmra.mxu0 %v661
  %v4433 = vpop.f32.mrf.mxu0
  %v4434 = vadd.f32 0.0, %v4433
  %v4435 = vpop.f32.mrf.mxu0
  %v4436 = vadd.f32 0.0, %v4435
  %v4437 = vpop.f32.mrf.mxu0
  %v4438 = vadd.f32 0.0, %v4437
  %v4439 = vpop.f32.mrf.mxu0
  %v4440 = vadd.f32 0.0, %v4439
  %4441 = vmatprep.mubr.bf16.mxu0 0
  %4442 = vmatmul.mubr.bf16.gmra.mxu0 %v664
  %v4443 = vpop.f32.mrf.mxu0
  %v4444 = vadd.f32 0.0, %v4443
  %v4445 = vpop.f32.mrf.mxu0
  %v4446 = vadd.f32 0.0, %v4445
  %v4447 = vpop.f32.mrf.mxu0
  %v4448 = vadd.f32 0.0, %v4447
  %v4449 = vpop.f32.mrf.mxu0
  %v4450 = vadd.f32 0.0, %v4449
  %4451 = vmatprep.mubr.bf16.mxu0 0
  %4452 = vmatmul.mubr.bf16.gmra.mxu0 %v667
  %v4453 = vpop.f32.mrf.mxu0
  %v4454 = vadd.f32 0.0, %v4453
  %v4455 = vpop.f32.mrf.mxu0
  %v4456 = vadd.f32 0.0, %v4455
  %v4457 = vpop.f32.mrf.mxu0
  %v4458 = vadd.f32 0.0, %v4457
  %v4459 = vpop.f32.mrf.mxu0
  %v4460 = vadd.f32 0.0, %v4459
  %4461 = vmatprep.mubr.bf16.mxu0 0
  %4462 = vmatmul.mubr.bf16.gmra.mxu0 %v670
  %v4463 = vpop.f32.mrf.mxu0
  %v4464 = vadd.f32 0.0, %v4463
  %v4465 = vpop.f32.mrf.mxu0
  %v4466 = vadd.f32 0.0, %v4465
  %v4467 = vpop.f32.mrf.mxu0
  %v4468 = vadd.f32 0.0, %v4467
  %v4469 = vpop.f32.mrf.mxu0
  %v4470 = vadd.f32 0.0, %v4469
  %4471 = vmatprep.mubr.bf16.mxu0 0
  %4472 = vmatmul.mubr.bf16.gmra.mxu0 %v673
  %v4473 = vpop.f32.mrf.mxu0
  %v4474 = vadd.f32 0.0, %v4473
  %v4475 = vpop.f32.mrf.mxu0
  %v4476 = vadd.f32 0.0, %v4475
  %v4477 = vpop.f32.mrf.mxu0
  %v4478 = vadd.f32 0.0, %v4477
  %v4479 = vpop.f32.mrf.mxu0
  %v4480 = vadd.f32 0.0, %v4479
  %4481 = vmatprep.mubr.bf16.mxu0 0
  %4482 = vmatmul.mubr.bf16.gmra.mxu0 %v676
  %v4483 = vpop.f32.mrf.mxu0
  %v4484 = vadd.f32 0.0, %v4483
  %v4485 = vpop.f32.mrf.mxu0
  %v4486 = vadd.f32 0.0, %v4485
  %v4487 = vpop.f32.mrf.mxu0
  %v4488 = vadd.f32 0.0, %v4487
  %v4489 = vpop.f32.mrf.mxu0
  %v4490 = vadd.f32 0.0, %v4489
  %4491 = vmatprep.mubr.bf16.mxu0 0
  %4492 = vmatmul.mubr.bf16.gmra.mxu0 %v679
  %v4493 = vpop.f32.mrf.mxu0
  %v4494 = vadd.f32 0.0, %v4493
  %v4495 = vpop.f32.mrf.mxu0
  %v4496 = vadd.f32 0.0, %v4495
  %v4497 = vpop.f32.mrf.mxu0
  %v4498 = vadd.f32 0.0, %v4497
  %v4499 = vpop.f32.mrf.mxu0
  %v4500 = vadd.f32 0.0, %v4499
  %4501 = vmatprep.mubr.bf16.mxu0 0
  %4502 = vmatmul.mubr.bf16.gmra.mxu0 %v682
  %v4503 = vpop.f32.mrf.mxu0
  %v4504 = vadd.f32 0.0, %v4503
  %v4505 = vpop.f32.mrf.mxu0
  %v4506 = vadd.f32 0.0, %v4505
  %v4507 = vpop.f32.mrf.mxu0
  %v4508 = vadd.f32 0.0, %v4507
  %v4509 = vpop.f32.mrf.mxu0
  %v4510 = vadd.f32 0.0, %v4509
  %4511 = vmatprep.mubr.bf16.mxu0 0
  %4512 = vmatmul.mubr.bf16.gmra.mxu0 %v685
  %v4513 = vpop.f32.mrf.mxu0
  %v4514 = vadd.f32 0.0, %v4513
  %v4515 = vpop.f32.mrf.mxu0
  %v4516 = vadd.f32 0.0, %v4515
  %v4517 = vpop.f32.mrf.mxu0
  %v4518 = vadd.f32 0.0, %v4517
  %v4519 = vpop.f32.mrf.mxu0
  %v4520 = vadd.f32 0.0, %v4519
  %4521 = vmatprep.mubr.bf16.mxu0 0
  %4522 = vmatmul.mubr.bf16.gmra.mxu0 %v688
  %v4523 = vpop.f32.mrf.mxu0
  %v4524 = vadd.f32 0.0, %v4523
  %v4525 = vpop.f32.mrf.mxu0
  %v4526 = vadd.f32 0.0, %v4525
  %v4527 = vpop.f32.mrf.mxu0
  %v4528 = vadd.f32 0.0, %v4527
  %v4529 = vpop.f32.mrf.mxu0
  %v4530 = vadd.f32 0.0, %v4529
  %4531 = vmatprep.mubr.bf16.mxu0 0
  %4532 = vmatmul.mubr.bf16.gmra.mxu0 %v691
  %v4533 = vpop.f32.mrf.mxu0
  %v4534 = vadd.f32 0.0, %v4533
  %v4535 = vpop.f32.mrf.mxu0
  %v4536 = vadd.f32 0.0, %v4535
  %v4537 = vpop.f32.mrf.mxu0
  %v4538 = vadd.f32 0.0, %v4537
  %v4539 = vpop.f32.mrf.mxu0
  %v4540 = vadd.f32 0.0, %v4539
  %4541 = vmatprep.mubr.bf16.mxu0 0
  %4542 = vmatmul.mubr.bf16.gmra.mxu0 %v694
  %v4543 = vpop.f32.mrf.mxu0
  %v4544 = vadd.f32 0.0, %v4543
  %v4545 = vpop.f32.mrf.mxu0
  %v4546 = vadd.f32 0.0, %v4545
  %v4547 = vpop.f32.mrf.mxu0
  %v4548 = vadd.f32 0.0, %v4547
  %v4549 = vpop.f32.mrf.mxu0
  %v4550 = vadd.f32 0.0, %v4549
  %4551 = vmatprep.mubr.bf16.mxu0 0
  %4552 = vmatmul.mubr.bf16.gmra.mxu0 %v697
  %v4553 = vpop.f32.mrf.mxu0
  %v4554 = vadd.f32 0.0, %v4553
  %v4555 = vpop.f32.mrf.mxu0
  %v4556 = vadd.f32 0.0, %v4555
  %v4557 = vpop.f32.mrf.mxu0
  %v4558 = vadd.f32 0.0, %v4557
  %v4559 = vpop.f32.mrf.mxu0
  %v4560 = vadd.f32 0.0, %v4559
  %4561 = vmatprep.mubr.bf16.mxu0 0
  %4562 = vmatmul.mubr.bf16.gmra.mxu0 %v700
  %v4563 = vpop.f32.mrf.mxu0
  %v4564 = vadd.f32 0.0, %v4563
  %v4565 = vpop.f32.mrf.mxu0
  %v4566 = vadd.f32 0.0, %v4565
  %v4567 = vpop.f32.mrf.mxu0
  %v4568 = vadd.f32 0.0, %v4567
  %v4569 = vpop.f32.mrf.mxu0
  %v4570 = vadd.f32 0.0, %v4569
  %4571 = vmatprep.mubr.bf16.mxu0 0
  %4572 = vmatmul.mubr.bf16.gmra.mxu0 %v703
  %v4573 = vpop.f32.mrf.mxu0
  %v4574 = vadd.f32 0.0, %v4573
  %v4575 = vpop.f32.mrf.mxu0
  %v4576 = vadd.f32 0.0, %v4575
  %v4577 = vpop.f32.mrf.mxu0
  %v4578 = vadd.f32 0.0, %v4577
  %v4579 = vpop.f32.mrf.mxu0
  %v4580 = vadd.f32 0.0, %v4579
  %4581 = vmatprep.mubr.bf16.mxu0 0
  %4582 = vmatmul.mubr.bf16.gmra.mxu0 %v706
  %v4583 = vpop.f32.mrf.mxu0
  %v4584 = vadd.f32 0.0, %v4583
  %v4585 = vpop.f32.mrf.mxu0
  %v4586 = vadd.f32 0.0, %v4585
  %v4587 = vpop.f32.mrf.mxu0
  %v4588 = vadd.f32 0.0, %v4587
  %v4589 = vpop.f32.mrf.mxu0
  %v4590 = vadd.f32 0.0, %v4589
  %4591 = vmatprep.mubr.bf16.mxu0 0
  %4592 = vmatmul.mubr.bf16.gmra.mxu0 %v709
  %v4593 = vpop.f32.mrf.mxu0
  %v4594 = vadd.f32 0.0, %v4593
  %v4595 = vpop.f32.mrf.mxu0
  %v4596 = vadd.f32 0.0, %v4595
  %v4597 = vpop.f32.mrf.mxu0
  %v4598 = vadd.f32 0.0, %v4597
  %v4599 = vpop.f32.mrf.mxu0
  %v4600 = vadd.f32 0.0, %v4599
  %4601 = vmatprep.mubr.bf16.mxu0 0
  %4602 = vmatmul.mubr.bf16.gmra.mxu0 %v712
  %v4603 = vpop.f32.mrf.mxu0
  %v4604 = vadd.f32 0.0, %v4603
  %v4605 = vpop.f32.mrf.mxu0
  %v4606 = vadd.f32 0.0, %v4605
  %v4607 = vpop.f32.mrf.mxu0
  %v4608 = vadd.f32 0.0, %v4607
  %v4609 = vpop.f32.mrf.mxu0
  %v4610 = vadd.f32 0.0, %v4609
  %4611 = vmatprep.mubr.bf16.mxu0 0
  %4612 = vmatmul.mubr.bf16.gmra.mxu0 %v715
  %v4613 = vpop.f32.mrf.mxu0
  %v4614 = vadd.f32 0.0, %v4613
  %v4615 = vpop.f32.mrf.mxu0
  %v4616 = vadd.f32 0.0, %v4615
  %v4617 = vpop.f32.mrf.mxu0
  %v4618 = vadd.f32 0.0, %v4617
  %v4619 = vpop.f32.mrf.mxu0
  %v4620 = vadd.f32 0.0, %v4619
  %4621 = vmatprep.mubr.bf16.mxu0 0
  %4622 = vmatmul.mubr.bf16.gmra.mxu0 %v718
  %v4623 = vpop.f32.mrf.mxu0
  %v4624 = vadd.f32 0.0, %v4623
  %v4625 = vpop.f32.mrf.mxu0
  %v4626 = vadd.f32 0.0, %v4625
  %v4627 = vpop.f32.mrf.mxu0
  %v4628 = vadd.f32 0.0, %v4627
  %v4629 = vpop.f32.mrf.mxu0
  %v4630 = vadd.f32 0.0, %v4629
  %4631 = vmatprep.mubr.bf16.mxu0 0
  %4632 = vmatmul.mubr.bf16.gmra.mxu0 %v721
  %v4633 = vpop.f32.mrf.mxu0
  %v4634 = vadd.f32 0.0, %v4633
  %v4635 = vpop.f32.mrf.mxu0
  %v4636 = vadd.f32 0.0, %v4635
  %v4637 = vpop.f32.mrf.mxu0
  %v4638 = vadd.f32 0.0, %v4637
  %v4639 = vpop.f32.mrf.mxu0
  %v4640 = vadd.f32 0.0, %v4639
  %4641 = vmatprep.mubr.bf16.mxu0 0
  %4642 = vmatmul.mubr.bf16.gmra.mxu0 %v724
  %v4643 = vpop.f32.mrf.mxu0
  %v4644 = vadd.f32 0.0, %v4643
  %v4645 = vpop.f32.mrf.mxu0
  %v4646 = vadd.f32 0.0, %v4645
  %v4647 = vpop.f32.mrf.mxu0
  %v4648 = vadd.f32 0.0, %v4647
  %v4649 = vpop.f32.mrf.mxu0
  %v4650 = vadd.f32 0.0, %v4649
  %4651 = vmatprep.mubr.bf16.mxu0 0
  %4652 = vmatmul.mubr.bf16.gmra.mxu0 %v727
  %v4653 = vpop.f32.mrf.mxu0
  %v4654 = vadd.f32 0.0, %v4653
  %v4655 = vpop.f32.mrf.mxu0
  %v4656 = vadd.f32 0.0, %v4655
  %v4657 = vpop.f32.mrf.mxu0
  %v4658 = vadd.f32 0.0, %v4657
  %v4659 = vpop.f32.mrf.mxu0
  %v4660 = vadd.f32 0.0, %v4659
  %4661 = vmatprep.mubr.bf16.mxu0 0
  %4662 = vmatmul.mubr.bf16.gmra.mxu0 %v730
  %v4663 = vpop.f32.mrf.mxu0
  %v4664 = vadd.f32 0.0, %v4663
  %v4665 = vpop.f32.mrf.mxu0
  %v4666 = vadd.f32 0.0, %v4665
  %v4667 = vpop.f32.mrf.mxu0
  %v4668 = vadd.f32 0.0, %v4667
  %v4669 = vpop.f32.mrf.mxu0
  %v4670 = vadd.f32 0.0, %v4669
  %4671 = vmatprep.mubr.bf16.mxu0 0
  %4672 = vmatmul.mubr.bf16.gmra.mxu0 %v733
  %v4673 = vpop.f32.mrf.mxu0
  %v4674 = vadd.f32 0.0, %v4673
  %v4675 = vpop.f32.mrf.mxu0
  %v4676 = vadd.f32 0.0, %v4675
  %v4677 = vpop.f32.mrf.mxu0
  %v4678 = vadd.f32 0.0, %v4677
  %v4679 = vpop.f32.mrf.mxu0
  %v4680 = vadd.f32 0.0, %v4679
  %4681 = vmatprep.mubr.bf16.mxu0 0
  %4682 = vmatmul.mubr.bf16.gmra.mxu0 %v736
  %v4683 = vpop.f32.mrf.mxu0
  %v4684 = vadd.f32 0.0, %v4683
  %v4685 = vpop.f32.mrf.mxu0
  %v4686 = vadd.f32 0.0, %v4685
  %v4687 = vpop.f32.mrf.mxu0
  %v4688 = vadd.f32 0.0, %v4687
  %v4689 = vpop.f32.mrf.mxu0
  %v4690 = vadd.f32 0.0, %v4689
  %4691 = vmatprep.mubr.bf16.mxu0 0
  %4692 = vmatmul.mubr.bf16.gmra.mxu0 %v739
  %v4693 = vpop.f32.mrf.mxu0
  %v4694 = vadd.f32 0.0, %v4693
  %v4695 = vpop.f32.mrf.mxu0
  %v4696 = vadd.f32 0.0, %v4695
  %v4697 = vpop.f32.mrf.mxu0
  %v4698 = vadd.f32 0.0, %v4697
  %v4699 = vpop.f32.mrf.mxu0
  %v4700 = vadd.f32 0.0, %v4699
  %4701 = vmatprep.mubr.bf16.mxu0 0
  %4702 = vmatmul.mubr.bf16.gmra.mxu0 %v742
  %v4703 = vpop.f32.mrf.mxu0
  %v4704 = vadd.f32 0.0, %v4703
  %v4705 = vpop.f32.mrf.mxu0
  %v4706 = vadd.f32 0.0, %v4705
  %v4707 = vpop.f32.mrf.mxu0
  %v4708 = vadd.f32 0.0, %v4707
  %v4709 = vpop.f32.mrf.mxu0
  %v4710 = vadd.f32 0.0, %v4709
  %4711 = vmatprep.mubr.bf16.mxu0 0
  %4712 = vmatmul.mubr.bf16.gmra.mxu0 %v745
  %v4713 = vpop.f32.mrf.mxu0
  %v4714 = vadd.f32 0.0, %v4713
  %v4715 = vpop.f32.mrf.mxu0
  %v4716 = vadd.f32 0.0, %v4715
  %v4717 = vpop.f32.mrf.mxu0
  %v4718 = vadd.f32 0.0, %v4717
  %v4719 = vpop.f32.mrf.mxu0
  %v4720 = vadd.f32 0.0, %v4719
  %4721 = vmatprep.mubr.bf16.mxu0 0
  %4722 = vmatmul.mubr.bf16.gmra.mxu0 %v748
  %v4723 = vpop.f32.mrf.mxu0
  %v4724 = vadd.f32 0.0, %v4723
  %v4725 = vpop.f32.mrf.mxu0
  %v4726 = vadd.f32 0.0, %v4725
  %v4727 = vpop.f32.mrf.mxu0
  %v4728 = vadd.f32 0.0, %v4727
  %v4729 = vpop.f32.mrf.mxu0
  %v4730 = vadd.f32 0.0, %v4729
  %4731 = vmatprep.mubr.bf16.mxu0 0
  %4732 = vmatmul.mubr.bf16.gmra.mxu0 %v751
  %v4733 = vpop.f32.mrf.mxu0
  %v4734 = vadd.f32 0.0, %v4733
  %v4735 = vpop.f32.mrf.mxu0
  %v4736 = vadd.f32 0.0, %v4735
  %v4737 = vpop.f32.mrf.mxu0
  %v4738 = vadd.f32 0.0, %v4737
  %v4739 = vpop.f32.mrf.mxu0
  %v4740 = vadd.f32 0.0, %v4739
  %4741 = vmatprep.mubr.bf16.mxu0 0
  %4742 = vmatmul.mubr.bf16.gmra.mxu0 %v754
  %v4743 = vpop.f32.mrf.mxu0
  %v4744 = vadd.f32 0.0, %v4743
  %v4745 = vpop.f32.mrf.mxu0
  %v4746 = vadd.f32 0.0, %v4745
  %v4747 = vpop.f32.mrf.mxu0
  %v4748 = vadd.f32 0.0, %v4747
  %v4749 = vpop.f32.mrf.mxu0
  %v4750 = vadd.f32 0.0, %v4749
  %4751 = vmatprep.mubr.bf16.mxu0 0
  %4752 = vmatmul.mubr.bf16.gmra.mxu0 %v757
  %v4753 = vpop.f32.mrf.mxu0
  %v4754 = vadd.f32 0.0, %v4753
  %v4755 = vpop.f32.mrf.mxu0
  %v4756 = vadd.f32 0.0, %v4755
  %v4757 = vpop.f32.mrf.mxu0
  %v4758 = vadd.f32 0.0, %v4757
  %v4759 = vpop.f32.mrf.mxu0
  %v4760 = vadd.f32 0.0, %v4759
  %4761 = vmatprep.mubr.bf16.mxu0 0
  %4762 = vmatmul.mubr.bf16.gmra.mxu0 %v760
  %v4763 = vpop.f32.mrf.mxu0
  %v4764 = vadd.f32 0.0, %v4763
  %v4765 = vpop.f32.mrf.mxu0
  %v4766 = vadd.f32 0.0, %v4765
  %v4767 = vpop.f32.mrf.mxu0
  %v4768 = vadd.f32 0.0, %v4767
  %v4769 = vpop.f32.mrf.mxu0
  %v4770 = vadd.f32 0.0, %v4769
  %4771 = vmatprep.mubr.bf16.mxu0 0
  %4772 = vmatmul.mubr.bf16.gmra.mxu0 %v763
  %v4773 = vpop.f32.mrf.mxu0
  %v4774 = vadd.f32 0.0, %v4773
  %v4775 = vpop.f32.mrf.mxu0
  %v4776 = vadd.f32 0.0, %v4775
  %v4777 = vpop.f32.mrf.mxu0
  %v4778 = vadd.f32 0.0, %v4777
  %v4779 = vpop.f32.mrf.mxu0
  %v4780 = vadd.f32 0.0, %v4779
  %4781 = vmatprep.mubr.bf16.mxu0 0
  %4782 = vmatmul.mubr.bf16.gmra.mxu0 %v766
  %v4783 = vpop.f32.mrf.mxu0
  %v4784 = vadd.f32 0.0, %v4783
  %v4785 = vpop.f32.mrf.mxu0
  %v4786 = vadd.f32 0.0, %v4785
  %v4787 = vpop.f32.mrf.mxu0
  %v4788 = vadd.f32 0.0, %v4787
  %v4789 = vpop.f32.mrf.mxu0
  %v4790 = vadd.f32 0.0, %v4789
  %4791 = vmatprep.mubr.bf16.mxu0 0
  %4792 = vmatmul.mubr.bf16.gmra.mxu0 %v769
  %v4793 = vpop.f32.mrf.mxu0
  %v4794 = vadd.f32 0.0, %v4793
  %v4795 = vpop.f32.mrf.mxu0
  %v4796 = vadd.f32 0.0, %v4795
  %v4797 = vpop.f32.mrf.mxu0
  %v4798 = vadd.f32 0.0, %v4797
  %v4799 = vpop.f32.mrf.mxu0
  %v4800 = vadd.f32 0.0, %v4799
  %4801 = vmatprep.mubr.bf16.mxu0 0
  %4802 = vmatmul.mubr.bf16.gmra.mxu0 %v772
  %v4803 = vpop.f32.mrf.mxu0
  %v4804 = vadd.f32 0.0, %v4803
  %v4805 = vpop.f32.mrf.mxu0
  %v4806 = vadd.f32 0.0, %v4805
  %v4807 = vpop.f32.mrf.mxu0
  %v4808 = vadd.f32 0.0, %v4807
  %v4809 = vpop.f32.mrf.mxu0
  %v4810 = vadd.f32 0.0, %v4809
  %4811 = vmatprep.mubr.bf16.mxu0 0
  %4812 = vmatmul.mubr.bf16.gmra.mxu0 %v775
  %v4813 = vpop.f32.mrf.mxu0
  %v4814 = vadd.f32 0.0, %v4813
  %v4815 = vpop.f32.mrf.mxu0
  %v4816 = vadd.f32 0.0, %v4815
  %v4817 = vpop.f32.mrf.mxu0
  %v4818 = vadd.f32 0.0, %v4817
  %v4819 = vpop.f32.mrf.mxu0
  %v4820 = vadd.f32 0.0, %v4819
  %4821 = vmatprep.mubr.bf16.mxu0 0
  %4822 = vmatmul.mubr.bf16.gmra.mxu0 %v778
  %v4823 = vpop.f32.mrf.mxu0
  %v4824 = vadd.f32 0.0, %v4823
  %v4825 = vpop.f32.mrf.mxu0
  %v4826 = vadd.f32 0.0, %v4825
  %v4827 = vpop.f32.mrf.mxu0
  %v4828 = vadd.f32 0.0, %v4827
  %v4829 = vpop.f32.mrf.mxu0
  %v4830 = vadd.f32 0.0, %v4829
  %4831 = vmatprep.mubr.bf16.mxu0 0
  %4832 = vmatmul.mubr.bf16.gmra.mxu0 %v781
  %v4833 = vpop.f32.mrf.mxu0
  %v4834 = vadd.f32 0.0, %v4833
  %v4835 = vpop.f32.mrf.mxu0
  %v4836 = vadd.f32 0.0, %v4835
  %v4837 = vpop.f32.mrf.mxu0
  %v4838 = vadd.f32 0.0, %v4837
  %v4839 = vpop.f32.mrf.mxu0
  %v4840 = vadd.f32 0.0, %v4839
  %4841 = vmatprep.mubr.bf16.mxu0 0
  %4842 = vmatmul.mubr.bf16.gmra.mxu0 %v784
  %v4843 = vpop.f32.mrf.mxu0
  %v4844 = vadd.f32 0.0, %v4843
  %v4845 = vpop.f32.mrf.mxu0
  %v4846 = vadd.f32 0.0, %v4845
  %v4847 = vpop.f32.mrf.mxu0
  %v4848 = vadd.f32 0.0, %v4847
  %v4849 = vpop.f32.mrf.mxu0
  %v4850 = vadd.f32 0.0, %v4849
  %4851 = vmatprep.mubr.bf16.mxu0 0
  %4852 = vmatmul.mubr.bf16.gmra.mxu0 %v787
  %v4853 = vpop.f32.mrf.mxu0
  %v4854 = vadd.f32 0.0, %v4853
  %v4855 = vpop.f32.mrf.mxu0
  %v4856 = vadd.f32 0.0, %v4855
  %v4857 = vpop.f32.mrf.mxu0
  %v4858 = vadd.f32 0.0, %v4857
  %v4859 = vpop.f32.mrf.mxu0
  %v4860 = vadd.f32 0.0, %v4859
  %4861 = vmatprep.mubr.bf16.mxu0 0
  %4862 = vmatmul.mubr.bf16.gmra.mxu0 %v790
  %v4863 = vpop.f32.mrf.mxu0
  %v4864 = vadd.f32 0.0, %v4863
  %v4865 = vpop.f32.mrf.mxu0
  %v4866 = vadd.f32 0.0, %v4865
  %v4867 = vpop.f32.mrf.mxu0
  %v4868 = vadd.f32 0.0, %v4867
  %v4869 = vpop.f32.mrf.mxu0
  %v4870 = vadd.f32 0.0, %v4869
  %4871 = vmatprep.mubr.bf16.mxu0 0
  %4872 = vmatmul.mubr.bf16.gmra.mxu0 %v793
  %v4873 = vpop.f32.mrf.mxu0
  %v4874 = vadd.f32 0.0, %v4873
  %v4875 = vpop.f32.mrf.mxu0
  %v4876 = vadd.f32 0.0, %v4875
  %v4877 = vpop.f32.mrf.mxu0
  %v4878 = vadd.f32 0.0, %v4877
  %v4879 = vpop.f32.mrf.mxu0
  %v4880 = vadd.f32 0.0, %v4879
  %4881 = vdwg.mxu0
  %4882 = vmatprep.subr.bf16.mxu0 0
  %4883 = vmatpush1.bf16.msra.mxu0 0
  %4884 = vmatprep.subr.bf16.mxu0 0
  %4885 = vmatpush1.bf16.msra.mxu0 0
  %4886 = vmatprep.subr.bf16.mxu0 0
  %4887 = vmatpush1.bf16.msra.mxu0 0
  %4888 = vmatprep.subr.bf16.mxu0 0
  %4889 = vmatpush1.bf16.msra.mxu0 0
  %4890 = vmatprep.subr.bf16.mxu0 0
  %4891 = vmatpush1.bf16.msra.mxu0 0
  %4892 = vmatprep.subr.bf16.mxu0 0
  %4893 = vmatpush1.bf16.msra.mxu0 0
  %4894 = vmatprep.subr.bf16.mxu0 0
  %4895 = vmatpush1.bf16.msra.mxu0 0
  %4896 = vmatprep.subr.bf16.mxu0 %v836
  %4897 = vmatpush1.bf16.msra.mxu0 %v833
  %4898 = vmatprep.subr.bf16.mxu0 0
  %4899 = vmatpush2.bf16.msra.mxu0 0
  %4900 = vmatprep.subr.bf16.mxu0 0
  %4901 = vmatpush2.bf16.msra.mxu0 0
  %4902 = vmatprep.subr.bf16.mxu0 0
  %4903 = vmatpush2.bf16.msra.mxu0 0
  %4904 = vmatprep.subr.bf16.mxu0 0
  %4905 = vmatpush2.bf16.msra.mxu0 0
  %4906 = vmatprep.subr.bf16.mxu0 0
  %4907 = vmatpush2.bf16.msra.mxu0 0
  %4908 = vmatprep.subr.bf16.mxu0 0
  %4909 = vmatpush2.bf16.msra.mxu0 0
  %4910 = vmatprep.subr.bf16.mxu0 0
  %4911 = vmatpush2.bf16.msra.mxu0 0
  %4912 = vmatprep.subr.bf16.mxu0 0
  %4913 = vmatpush2.bf16.msra.mxu0 0
  %4914 = vmatprep.mubr.bf16.mxu0 0
  %4915 = vmatmul.mubr.bf16.gmra.mxu0 %v604
  %v4916 = vpop.f32.mrf.mxu0
  %v4917 = vadd.f32 0.0, %v4916
  %v4918 = vpop.f32.mrf.mxu0
  %v4919 = vadd.f32 0.0, %v4918
  %v4920 = vpop.f32.mrf.mxu0
  %v4921 = vadd.f32 0.0, %v4920
  %v4922 = vpop.f32.mrf.mxu0
  %v4923 = vadd.f32 0.0, %v4922
  %4924 = vmatprep.mubr.bf16.mxu0 0
  %4925 = vmatmul.mubr.bf16.gmra.mxu0 %v607
  %v4926 = vpop.f32.mrf.mxu0
  %v4927 = vadd.f32 0.0, %v4926
  %v4928 = vpop.f32.mrf.mxu0
  %v4929 = vadd.f32 0.0, %v4928
  %v4930 = vpop.f32.mrf.mxu0
  %v4931 = vadd.f32 0.0, %v4930
  %v4932 = vpop.f32.mrf.mxu0
  %v4933 = vadd.f32 0.0, %v4932
  %4934 = vmatprep.mubr.bf16.mxu0 0
  %4935 = vmatmul.mubr.bf16.gmra.mxu0 %v610
  %v4936 = vpop.f32.mrf.mxu0
  %v4937 = vadd.f32 0.0, %v4936
  %v4938 = vpop.f32.mrf.mxu0
  %v4939 = vadd.f32 0.0, %v4938
  %v4940 = vpop.f32.mrf.mxu0
  %v4941 = vadd.f32 0.0, %v4940
  %v4942 = vpop.f32.mrf.mxu0
  %v4943 = vadd.f32 0.0, %v4942
  %4944 = vmatprep.mubr.bf16.mxu0 0
  %4945 = vmatmul.mubr.bf16.gmra.mxu0 %v613
  %v4946 = vpop.f32.mrf.mxu0
  %v4947 = vadd.f32 0.0, %v4946
  %v4948 = vpop.f32.mrf.mxu0
  %v4949 = vadd.f32 0.0, %v4948
  %v4950 = vpop.f32.mrf.mxu0
  %v4951 = vadd.f32 0.0, %v4950
  %v4952 = vpop.f32.mrf.mxu0
  %v4953 = vadd.f32 0.0, %v4952
  %4954 = vmatprep.mubr.bf16.mxu0 0
  %4955 = vmatmul.mubr.bf16.gmra.mxu0 %v616
  %v4956 = vpop.f32.mrf.mxu0
  %v4957 = vadd.f32 0.0, %v4956
  %v4958 = vpop.f32.mrf.mxu0
  %v4959 = vadd.f32 0.0, %v4958
  %v4960 = vpop.f32.mrf.mxu0
  %v4961 = vadd.f32 0.0, %v4960
  %v4962 = vpop.f32.mrf.mxu0
  %v4963 = vadd.f32 0.0, %v4962
  %4964 = vmatprep.mubr.bf16.mxu0 0
  %4965 = vmatmul.mubr.bf16.gmra.mxu0 %v619
  %v4966 = vpop.f32.mrf.mxu0
  %v4967 = vadd.f32 0.0, %v4966
  %v4968 = vpop.f32.mrf.mxu0
  %v4969 = vadd.f32 0.0, %v4968
  %v4970 = vpop.f32.mrf.mxu0
  %v4971 = vadd.f32 0.0, %v4970
  %v4972 = vpop.f32.mrf.mxu0
  %v4973 = vadd.f32 0.0, %v4972
  %4974 = vmatprep.mubr.bf16.mxu0 0
  %4975 = vmatmul.mubr.bf16.gmra.mxu0 %v622
  %v4976 = vpop.f32.mrf.mxu0
  %v4977 = vadd.f32 0.0, %v4976
  %v4978 = vpop.f32.mrf.mxu0
  %v4979 = vadd.f32 0.0, %v4978
  %v4980 = vpop.f32.mrf.mxu0
  %v4981 = vadd.f32 0.0, %v4980
  %v4982 = vpop.f32.mrf.mxu0
  %v4983 = vadd.f32 0.0, %v4982
  %4984 = vmatprep.mubr.bf16.mxu0 0
  %4985 = vmatmul.mubr.bf16.gmra.mxu0 %v625
  %v4986 = vpop.f32.mrf.mxu0
  %v4987 = vadd.f32 0.0, %v4986
  %v4988 = vpop.f32.mrf.mxu0
  %v4989 = vadd.f32 0.0, %v4988
  %v4990 = vpop.f32.mrf.mxu0
  %v4991 = vadd.f32 0.0, %v4990
  %v4992 = vpop.f32.mrf.mxu0
  %v4993 = vadd.f32 0.0, %v4992
  %4994 = vmatprep.mubr.bf16.mxu0 0
  %4995 = vmatmul.mubr.bf16.gmra.mxu0 %v628
  %v4996 = vpop.f32.mrf.mxu0
  %v4997 = vadd.f32 0.0, %v4996
  %v4998 = vpop.f32.mrf.mxu0
  %v4999 = vadd.f32 0.0, %v4998
  %v5000 = vpop.f32.mrf.mxu0
  %v5001 = vadd.f32 0.0, %v5000
  %v5002 = vpop.f32.mrf.mxu0
  %v5003 = vadd.f32 0.0, %v5002
  %5004 = vmatprep.mubr.bf16.mxu0 0
  %5005 = vmatmul.mubr.bf16.gmra.mxu0 %v631
  %v5006 = vpop.f32.mrf.mxu0
  %v5007 = vadd.f32 0.0, %v5006
  %v5008 = vpop.f32.mrf.mxu0
  %v5009 = vadd.f32 0.0, %v5008
  %v5010 = vpop.f32.mrf.mxu0
  %v5011 = vadd.f32 0.0, %v5010
  %v5012 = vpop.f32.mrf.mxu0
  %v5013 = vadd.f32 0.0, %v5012
  %5014 = vmatprep.mubr.bf16.mxu0 0
  %5015 = vmatmul.mubr.bf16.gmra.mxu0 %v634
  %v5016 = vpop.f32.mrf.mxu0
  %v5017 = vadd.f32 0.0, %v5016
  %v5018 = vpop.f32.mrf.mxu0
  %v5019 = vadd.f32 0.0, %v5018
  %v5020 = vpop.f32.mrf.mxu0
  %v5021 = vadd.f32 0.0, %v5020
  %v5022 = vpop.f32.mrf.mxu0
  %v5023 = vadd.f32 0.0, %v5022
  %5024 = vmatprep.mubr.bf16.mxu0 0
  %5025 = vmatmul.mubr.bf16.gmra.mxu0 %v637
  %v5026 = vpop.f32.mrf.mxu0
  %v5027 = vadd.f32 0.0, %v5026
  %v5028 = vpop.f32.mrf.mxu0
  %v5029 = vadd.f32 0.0, %v5028
  %v5030 = vpop.f32.mrf.mxu0
  %v5031 = vadd.f32 0.0, %v5030
  %v5032 = vpop.f32.mrf.mxu0
  %v5033 = vadd.f32 0.0, %v5032
  %5034 = vmatprep.mubr.bf16.mxu0 0
  %5035 = vmatmul.mubr.bf16.gmra.mxu0 %v640
  %v5036 = vpop.f32.mrf.mxu0
  %v5037 = vadd.f32 0.0, %v5036
  %v5038 = vpop.f32.mrf.mxu0
  %v5039 = vadd.f32 0.0, %v5038
  %v5040 = vpop.f32.mrf.mxu0
  %v5041 = vadd.f32 0.0, %v5040
  %v5042 = vpop.f32.mrf.mxu0
  %v5043 = vadd.f32 0.0, %v5042
  %5044 = vmatprep.mubr.bf16.mxu0 0
  %5045 = vmatmul.mubr.bf16.gmra.mxu0 %v643
  %v5046 = vpop.f32.mrf.mxu0
  %v5047 = vadd.f32 0.0, %v5046
  %v5048 = vpop.f32.mrf.mxu0
  %v5049 = vadd.f32 0.0, %v5048
  %v5050 = vpop.f32.mrf.mxu0
  %v5051 = vadd.f32 0.0, %v5050
  %v5052 = vpop.f32.mrf.mxu0
  %v5053 = vadd.f32 0.0, %v5052
  %5054 = vmatprep.mubr.bf16.mxu0 0
  %5055 = vmatmul.mubr.bf16.gmra.mxu0 %v646
  %v5056 = vpop.f32.mrf.mxu0
  %v5057 = vadd.f32 0.0, %v5056
  %v5058 = vpop.f32.mrf.mxu0
  %v5059 = vadd.f32 0.0, %v5058
  %v5060 = vpop.f32.mrf.mxu0
  %v5061 = vadd.f32 0.0, %v5060
  %v5062 = vpop.f32.mrf.mxu0
  %v5063 = vadd.f32 0.0, %v5062
  %5064 = vmatprep.mubr.bf16.mxu0 0
  %5065 = vmatmul.mubr.bf16.gmra.mxu0 %v649
  %v5066 = vpop.f32.mrf.mxu0
  %v5067 = vadd.f32 0.0, %v5066
  %v5068 = vpop.f32.mrf.mxu0
  %v5069 = vadd.f32 0.0, %v5068
  %v5070 = vpop.f32.mrf.mxu0
  %v5071 = vadd.f32 0.0, %v5070
  %v5072 = vpop.f32.mrf.mxu0
  %v5073 = vadd.f32 0.0, %v5072
  %5074 = vmatprep.mubr.bf16.mxu0 0
  %5075 = vmatmul.mubr.bf16.gmra.mxu0 %v652
  %v5076 = vpop.f32.mrf.mxu0
  %v5077 = vadd.f32 0.0, %v5076
  %v5078 = vpop.f32.mrf.mxu0
  %v5079 = vadd.f32 0.0, %v5078
  %v5080 = vpop.f32.mrf.mxu0
  %v5081 = vadd.f32 0.0, %v5080
  %v5082 = vpop.f32.mrf.mxu0
  %v5083 = vadd.f32 0.0, %v5082
  %5084 = vmatprep.mubr.bf16.mxu0 0
  %5085 = vmatmul.mubr.bf16.gmra.mxu0 %v655
  %v5086 = vpop.f32.mrf.mxu0
  %v5087 = vadd.f32 0.0, %v5086
  %v5088 = vpop.f32.mrf.mxu0
  %v5089 = vadd.f32 0.0, %v5088
  %v5090 = vpop.f32.mrf.mxu0
  %v5091 = vadd.f32 0.0, %v5090
  %v5092 = vpop.f32.mrf.mxu0
  %v5093 = vadd.f32 0.0, %v5092
  %5094 = vmatprep.mubr.bf16.mxu0 0
  %5095 = vmatmul.mubr.bf16.gmra.mxu0 %v658
  %v5096 = vpop.f32.mrf.mxu0
  %v5097 = vadd.f32 0.0, %v5096
  %v5098 = vpop.f32.mrf.mxu0
  %v5099 = vadd.f32 0.0, %v5098
  %v5100 = vpop.f32.mrf.mxu0
  %v5101 = vadd.f32 0.0, %v5100
  %v5102 = vpop.f32.mrf.mxu0
  %v5103 = vadd.f32 0.0, %v5102
  %5104 = vmatprep.mubr.bf16.mxu0 0
  %5105 = vmatmul.mubr.bf16.gmra.mxu0 %v661
  %v5106 = vpop.f32.mrf.mxu0
  %v5107 = vadd.f32 0.0, %v5106
  %v5108 = vpop.f32.mrf.mxu0
  %v5109 = vadd.f32 0.0, %v5108
  %v5110 = vpop.f32.mrf.mxu0
  %v5111 = vadd.f32 0.0, %v5110
  %v5112 = vpop.f32.mrf.mxu0
  %v5113 = vadd.f32 0.0, %v5112
  %5114 = vmatprep.mubr.bf16.mxu0 0
  %5115 = vmatmul.mubr.bf16.gmra.mxu0 %v664
  %v5116 = vpop.f32.mrf.mxu0
  %v5117 = vadd.f32 0.0, %v5116
  %v5118 = vpop.f32.mrf.mxu0
  %v5119 = vadd.f32 0.0, %v5118
  %v5120 = vpop.f32.mrf.mxu0
  %v5121 = vadd.f32 0.0, %v5120
  %v5122 = vpop.f32.mrf.mxu0
  %v5123 = vadd.f32 0.0, %v5122
  %5124 = vmatprep.mubr.bf16.mxu0 0
  %5125 = vmatmul.mubr.bf16.gmra.mxu0 %v667
  %v5126 = vpop.f32.mrf.mxu0
  %v5127 = vadd.f32 0.0, %v5126
  %v5128 = vpop.f32.mrf.mxu0
  %v5129 = vadd.f32 0.0, %v5128
  %v5130 = vpop.f32.mrf.mxu0
  %v5131 = vadd.f32 0.0, %v5130
  %v5132 = vpop.f32.mrf.mxu0
  %v5133 = vadd.f32 0.0, %v5132
  %5134 = vmatprep.mubr.bf16.mxu0 0
  %5135 = vmatmul.mubr.bf16.gmra.mxu0 %v670
  %v5136 = vpop.f32.mrf.mxu0
  %v5137 = vadd.f32 0.0, %v5136
  %v5138 = vpop.f32.mrf.mxu0
  %v5139 = vadd.f32 0.0, %v5138
  %v5140 = vpop.f32.mrf.mxu0
  %v5141 = vadd.f32 0.0, %v5140
  %v5142 = vpop.f32.mrf.mxu0
  %v5143 = vadd.f32 0.0, %v5142
  %5144 = vmatprep.mubr.bf16.mxu0 0
  %5145 = vmatmul.mubr.bf16.gmra.mxu0 %v673
  %v5146 = vpop.f32.mrf.mxu0
  %v5147 = vadd.f32 0.0, %v5146
  %v5148 = vpop.f32.mrf.mxu0
  %v5149 = vadd.f32 0.0, %v5148
  %v5150 = vpop.f32.mrf.mxu0
  %v5151 = vadd.f32 0.0, %v5150
  %v5152 = vpop.f32.mrf.mxu0
  %v5153 = vadd.f32 0.0, %v5152
  %5154 = vmatprep.mubr.bf16.mxu0 0
  %5155 = vmatmul.mubr.bf16.gmra.mxu0 %v676
  %v5156 = vpop.f32.mrf.mxu0
  %v5157 = vadd.f32 0.0, %v5156
  %v5158 = vpop.f32.mrf.mxu0
  %v5159 = vadd.f32 0.0, %v5158
  %v5160 = vpop.f32.mrf.mxu0
  %v5161 = vadd.f32 0.0, %v5160
  %v5162 = vpop.f32.mrf.mxu0
  %v5163 = vadd.f32 0.0, %v5162
  %5164 = vmatprep.mubr.bf16.mxu0 0
  %5165 = vmatmul.mubr.bf16.gmra.mxu0 %v679
  %v5166 = vpop.f32.mrf.mxu0
  %v5167 = vadd.f32 0.0, %v5166
  %v5168 = vpop.f32.mrf.mxu0
  %v5169 = vadd.f32 0.0, %v5168
  %v5170 = vpop.f32.mrf.mxu0
  %v5171 = vadd.f32 0.0, %v5170
  %v5172 = vpop.f32.mrf.mxu0
  %v5173 = vadd.f32 0.0, %v5172
  %5174 = vmatprep.mubr.bf16.mxu0 0
  %5175 = vmatmul.mubr.bf16.gmra.mxu0 %v682
  %v5176 = vpop.f32.mrf.mxu0
  %v5177 = vadd.f32 0.0, %v5176
  %v5178 = vpop.f32.mrf.mxu0
  %v5179 = vadd.f32 0.0, %v5178
  %v5180 = vpop.f32.mrf.mxu0
  %v5181 = vadd.f32 0.0, %v5180
  %v5182 = vpop.f32.mrf.mxu0
  %v5183 = vadd.f32 0.0, %v5182
  %5184 = vmatprep.mubr.bf16.mxu0 0
  %5185 = vmatmul.mubr.bf16.gmra.mxu0 %v685
  %v5186 = vpop.f32.mrf.mxu0
  %v5187 = vadd.f32 0.0, %v5186
  %v5188 = vpop.f32.mrf.mxu0
  %v5189 = vadd.f32 0.0, %v5188
  %v5190 = vpop.f32.mrf.mxu0
  %v5191 = vadd.f32 0.0, %v5190
  %v5192 = vpop.f32.mrf.mxu0
  %v5193 = vadd.f32 0.0, %v5192
  %5194 = vmatprep.mubr.bf16.mxu0 0
  %5195 = vmatmul.mubr.bf16.gmra.mxu0 %v688
  %v5196 = vpop.f32.mrf.mxu0
  %v5197 = vadd.f32 0.0, %v5196
  %v5198 = vpop.f32.mrf.mxu0
  %v5199 = vadd.f32 0.0, %v5198
  %v5200 = vpop.f32.mrf.mxu0
  %v5201 = vadd.f32 0.0, %v5200
  %v5202 = vpop.f32.mrf.mxu0
  %v5203 = vadd.f32 0.0, %v5202
  %5204 = vmatprep.mubr.bf16.mxu0 0
  %5205 = vmatmul.mubr.bf16.gmra.mxu0 %v691
  %v5206 = vpop.f32.mrf.mxu0
  %v5207 = vadd.f32 0.0, %v5206
  %v5208 = vpop.f32.mrf.mxu0
  %v5209 = vadd.f32 0.0, %v5208
  %v5210 = vpop.f32.mrf.mxu0
  %v5211 = vadd.f32 0.0, %v5210
  %v5212 = vpop.f32.mrf.mxu0
  %v5213 = vadd.f32 0.0, %v5212
  %5214 = vmatprep.mubr.bf16.mxu0 0
  %5215 = vmatmul.mubr.bf16.gmra.mxu0 %v694
  %v5216 = vpop.f32.mrf.mxu0
  %v5217 = vadd.f32 0.0, %v5216
  %v5218 = vpop.f32.mrf.mxu0
  %v5219 = vadd.f32 0.0, %v5218
  %v5220 = vpop.f32.mrf.mxu0
  %v5221 = vadd.f32 0.0, %v5220
  %v5222 = vpop.f32.mrf.mxu0
  %v5223 = vadd.f32 0.0, %v5222
  %5224 = vmatprep.mubr.bf16.mxu0 0
  %5225 = vmatmul.mubr.bf16.gmra.mxu0 %v697
  %v5226 = vpop.f32.mrf.mxu0
  %v5227 = vadd.f32 0.0, %v5226
  %v5228 = vpop.f32.mrf.mxu0
  %v5229 = vadd.f32 0.0, %v5228
  %v5230 = vpop.f32.mrf.mxu0
  %v5231 = vadd.f32 0.0, %v5230
  %v5232 = vpop.f32.mrf.mxu0
  %v5233 = vadd.f32 0.0, %v5232
  %5234 = vmatprep.mubr.bf16.mxu0 0
  %5235 = vmatmul.mubr.bf16.gmra.mxu0 %v700
  %v5236 = vpop.f32.mrf.mxu0
  %v5237 = vadd.f32 0.0, %v5236
  %v5238 = vpop.f32.mrf.mxu0
  %v5239 = vadd.f32 0.0, %v5238
  %v5240 = vpop.f32.mrf.mxu0
  %v5241 = vadd.f32 0.0, %v5240
  %v5242 = vpop.f32.mrf.mxu0
  %v5243 = vadd.f32 0.0, %v5242
  %5244 = vmatprep.mubr.bf16.mxu0 0
  %5245 = vmatmul.mubr.bf16.gmra.mxu0 %v703
  %v5246 = vpop.f32.mrf.mxu0
  %v5247 = vadd.f32 0.0, %v5246
  %v5248 = vpop.f32.mrf.mxu0
  %v5249 = vadd.f32 0.0, %v5248
  %v5250 = vpop.f32.mrf.mxu0
  %v5251 = vadd.f32 0.0, %v5250
  %v5252 = vpop.f32.mrf.mxu0
  %v5253 = vadd.f32 0.0, %v5252
  %5254 = vmatprep.mubr.bf16.mxu0 0
  %5255 = vmatmul.mubr.bf16.gmra.mxu0 %v706
  %v5256 = vpop.f32.mrf.mxu0
  %v5257 = vadd.f32 0.0, %v5256
  %v5258 = vpop.f32.mrf.mxu0
  %v5259 = vadd.f32 0.0, %v5258
  %v5260 = vpop.f32.mrf.mxu0
  %v5261 = vadd.f32 0.0, %v5260
  %v5262 = vpop.f32.mrf.mxu0
  %v5263 = vadd.f32 0.0, %v5262
  %5264 = vmatprep.mubr.bf16.mxu0 0
  %5265 = vmatmul.mubr.bf16.gmra.mxu0 %v709
  %v5266 = vpop.f32.mrf.mxu0
  %v5267 = vadd.f32 0.0, %v5266
  %v5268 = vpop.f32.mrf.mxu0
  %v5269 = vadd.f32 0.0, %v5268
  %v5270 = vpop.f32.mrf.mxu0
  %v5271 = vadd.f32 0.0, %v5270
  %v5272 = vpop.f32.mrf.mxu0
  %v5273 = vadd.f32 0.0, %v5272
  %5274 = vmatprep.mubr.bf16.mxu0 0
  %5275 = vmatmul.mubr.bf16.gmra.mxu0 %v712
  %v5276 = vpop.f32.mrf.mxu0
  %v5277 = vadd.f32 0.0, %v5276
  %v5278 = vpop.f32.mrf.mxu0
  %v5279 = vadd.f32 0.0, %v5278
  %v5280 = vpop.f32.mrf.mxu0
  %v5281 = vadd.f32 0.0, %v5280
  %v5282 = vpop.f32.mrf.mxu0
  %v5283 = vadd.f32 0.0, %v5282
  %5284 = vmatprep.mubr.bf16.mxu0 0
  %5285 = vmatmul.mubr.bf16.gmra.mxu0 %v715
  %v5286 = vpop.f32.mrf.mxu0
  %v5287 = vadd.f32 0.0, %v5286
  %v5288 = vpop.f32.mrf.mxu0
  %v5289 = vadd.f32 0.0, %v5288
  %v5290 = vpop.f32.mrf.mxu0
  %v5291 = vadd.f32 0.0, %v5290
  %v5292 = vpop.f32.mrf.mxu0
  %v5293 = vadd.f32 0.0, %v5292
  %5294 = vmatprep.mubr.bf16.mxu0 0
  %5295 = vmatmul.mubr.bf16.gmra.mxu0 %v718
  %v5296 = vpop.f32.mrf.mxu0
  %v5297 = vadd.f32 0.0, %v5296
  %v5298 = vpop.f32.mrf.mxu0
  %v5299 = vadd.f32 0.0, %v5298
  %v5300 = vpop.f32.mrf.mxu0
  %v5301 = vadd.f32 0.0, %v5300
  %v5302 = vpop.f32.mrf.mxu0
  %v5303 = vadd.f32 0.0, %v5302
  %5304 = vmatprep.mubr.bf16.mxu0 0
  %5305 = vmatmul.mubr.bf16.gmra.mxu0 %v721
  %v5306 = vpop.f32.mrf.mxu0
  %v5307 = vadd.f32 0.0, %v5306
  %v5308 = vpop.f32.mrf.mxu0
  %v5309 = vadd.f32 0.0, %v5308
  %v5310 = vpop.f32.mrf.mxu0
  %v5311 = vadd.f32 0.0, %v5310
  %v5312 = vpop.f32.mrf.mxu0
  %v5313 = vadd.f32 0.0, %v5312
  %5314 = vmatprep.mubr.bf16.mxu0 0
  %5315 = vmatmul.mubr.bf16.gmra.mxu0 %v724
  %v5316 = vpop.f32.mrf.mxu0
  %v5317 = vadd.f32 0.0, %v5316
  %v5318 = vpop.f32.mrf.mxu0
  %v5319 = vadd.f32 0.0, %v5318
  %v5320 = vpop.f32.mrf.mxu0
  %v5321 = vadd.f32 0.0, %v5320
  %v5322 = vpop.f32.mrf.mxu0
  %v5323 = vadd.f32 0.0, %v5322
  %5324 = vmatprep.mubr.bf16.mxu0 0
  %5325 = vmatmul.mubr.bf16.gmra.mxu0 %v727
  %v5326 = vpop.f32.mrf.mxu0
  %v5327 = vadd.f32 0.0, %v5326
  %v5328 = vpop.f32.mrf.mxu0
  %v5329 = vadd.f32 0.0, %v5328
  %v5330 = vpop.f32.mrf.mxu0
  %v5331 = vadd.f32 0.0, %v5330
  %v5332 = vpop.f32.mrf.mxu0
  %v5333 = vadd.f32 0.0, %v5332
  %5334 = vmatprep.mubr.bf16.mxu0 0
  %5335 = vmatmul.mubr.bf16.gmra.mxu0 %v730
  %v5336 = vpop.f32.mrf.mxu0
  %v5337 = vadd.f32 0.0, %v5336
  %v5338 = vpop.f32.mrf.mxu0
  %v5339 = vadd.f32 0.0, %v5338
  %v5340 = vpop.f32.mrf.mxu0
  %v5341 = vadd.f32 0.0, %v5340
  %v5342 = vpop.f32.mrf.mxu0
  %v5343 = vadd.f32 0.0, %v5342
  %5344 = vmatprep.mubr.bf16.mxu0 0
  %5345 = vmatmul.mubr.bf16.gmra.mxu0 %v733
  %v5346 = vpop.f32.mrf.mxu0
  %v5347 = vadd.f32 0.0, %v5346
  %v5348 = vpop.f32.mrf.mxu0
  %v5349 = vadd.f32 0.0, %v5348
  %v5350 = vpop.f32.mrf.mxu0
  %v5351 = vadd.f32 0.0, %v5350
  %v5352 = vpop.f32.mrf.mxu0
  %v5353 = vadd.f32 0.0, %v5352
  %5354 = vmatprep.mubr.bf16.mxu0 0
  %5355 = vmatmul.mubr.bf16.gmra.mxu0 %v736
  %v5356 = vpop.f32.mrf.mxu0
  %v5357 = vadd.f32 0.0, %v5356
  %v5358 = vpop.f32.mrf.mxu0
  %v5359 = vadd.f32 0.0, %v5358
  %v5360 = vpop.f32.mrf.mxu0
  %v5361 = vadd.f32 0.0, %v5360
  %v5362 = vpop.f32.mrf.mxu0
  %v5363 = vadd.f32 0.0, %v5362
  %5364 = vmatprep.mubr.bf16.mxu0 0
  %5365 = vmatmul.mubr.bf16.gmra.mxu0 %v739
  %v5366 = vpop.f32.mrf.mxu0
  %v5367 = vadd.f32 0.0, %v5366
  %v5368 = vpop.f32.mrf.mxu0
  %v5369 = vadd.f32 0.0, %v5368
  %v5370 = vpop.f32.mrf.mxu0
  %v5371 = vadd.f32 0.0, %v5370
  %v5372 = vpop.f32.mrf.mxu0
  %v5373 = vadd.f32 0.0, %v5372
  %5374 = vmatprep.mubr.bf16.mxu0 0
  %5375 = vmatmul.mubr.bf16.gmra.mxu0 %v742
  %v5376 = vpop.f32.mrf.mxu0
  %v5377 = vadd.f32 0.0, %v5376
  %v5378 = vpop.f32.mrf.mxu0
  %v5379 = vadd.f32 0.0, %v5378
  %v5380 = vpop.f32.mrf.mxu0
  %v5381 = vadd.f32 0.0, %v5380
  %v5382 = vpop.f32.mrf.mxu0
  %v5383 = vadd.f32 0.0, %v5382
  %5384 = vmatprep.mubr.bf16.mxu0 0
  %5385 = vmatmul.mubr.bf16.gmra.mxu0 %v745
  %v5386 = vpop.f32.mrf.mxu0
  %v5387 = vadd.f32 0.0, %v5386
  %v5388 = vpop.f32.mrf.mxu0
  %v5389 = vadd.f32 0.0, %v5388
  %v5390 = vpop.f32.mrf.mxu0
  %v5391 = vadd.f32 0.0, %v5390
  %v5392 = vpop.f32.mrf.mxu0
  %v5393 = vadd.f32 0.0, %v5392
  %5394 = vmatprep.mubr.bf16.mxu0 0
  %5395 = vmatmul.mubr.bf16.gmra.mxu0 %v748
  %v5396 = vpop.f32.mrf.mxu0
  %v5397 = vadd.f32 0.0, %v5396
  %v5398 = vpop.f32.mrf.mxu0
  %v5399 = vadd.f32 0.0, %v5398
  %v5400 = vpop.f32.mrf.mxu0
  %v5401 = vadd.f32 0.0, %v5400
  %v5402 = vpop.f32.mrf.mxu0
  %v5403 = vadd.f32 0.0, %v5402
  %5404 = vmatprep.mubr.bf16.mxu0 0
  %5405 = vmatmul.mubr.bf16.gmra.mxu0 %v751
  %v5406 = vpop.f32.mrf.mxu0
  %v5407 = vadd.f32 0.0, %v5406
  %v5408 = vpop.f32.mrf.mxu0
  %v5409 = vadd.f32 0.0, %v5408
  %v5410 = vpop.f32.mrf.mxu0
  %v5411 = vadd.f32 0.0, %v5410
  %v5412 = vpop.f32.mrf.mxu0
  %v5413 = vadd.f32 0.0, %v5412
  %5414 = vmatprep.mubr.bf16.mxu0 0
  %5415 = vmatmul.mubr.bf16.gmra.mxu0 %v754
  %v5416 = vpop.f32.mrf.mxu0
  %v5417 = vadd.f32 0.0, %v5416
  %v5418 = vpop.f32.mrf.mxu0
  %v5419 = vadd.f32 0.0, %v5418
  %v5420 = vpop.f32.mrf.mxu0
  %v5421 = vadd.f32 0.0, %v5420
  %v5422 = vpop.f32.mrf.mxu0
  %v5423 = vadd.f32 0.0, %v5422
  %5424 = vmatprep.mubr.bf16.mxu0 0
  %5425 = vmatmul.mubr.bf16.gmra.mxu0 %v757
  %v5426 = vpop.f32.mrf.mxu0
  %v5427 = vadd.f32 0.0, %v5426
  %v5428 = vpop.f32.mrf.mxu0
  %v5429 = vadd.f32 0.0, %v5428
  %v5430 = vpop.f32.mrf.mxu0
  %v5431 = vadd.f32 0.0, %v5430
  %v5432 = vpop.f32.mrf.mxu0
  %v5433 = vadd.f32 0.0, %v5432
  %5434 = vmatprep.mubr.bf16.mxu0 0
  %5435 = vmatmul.mubr.bf16.gmra.mxu0 %v760
  %v5436 = vpop.f32.mrf.mxu0
  %v5437 = vadd.f32 0.0, %v5436
  %v5438 = vpop.f32.mrf.mxu0
  %v5439 = vadd.f32 0.0, %v5438
  %v5440 = vpop.f32.mrf.mxu0
  %v5441 = vadd.f32 0.0, %v5440
  %v5442 = vpop.f32.mrf.mxu0
  %v5443 = vadd.f32 0.0, %v5442
  %5444 = vmatprep.mubr.bf16.mxu0 0
  %5445 = vmatmul.mubr.bf16.gmra.mxu0 %v763
  %v5446 = vpop.f32.mrf.mxu0
  %v5447 = vadd.f32 0.0, %v5446
  %v5448 = vpop.f32.mrf.mxu0
  %v5449 = vadd.f32 0.0, %v5448
  %v5450 = vpop.f32.mrf.mxu0
  %v5451 = vadd.f32 0.0, %v5450
  %v5452 = vpop.f32.mrf.mxu0
  %v5453 = vadd.f32 0.0, %v5452
  %5454 = vmatprep.mubr.bf16.mxu0 0
  %5455 = vmatmul.mubr.bf16.gmra.mxu0 %v766
  %v5456 = vpop.f32.mrf.mxu0
  %v5457 = vadd.f32 0.0, %v5456
  %v5458 = vpop.f32.mrf.mxu0
  %v5459 = vadd.f32 0.0, %v5458
  %v5460 = vpop.f32.mrf.mxu0
  %v5461 = vadd.f32 0.0, %v5460
  %v5462 = vpop.f32.mrf.mxu0
  %v5463 = vadd.f32 0.0, %v5462
  %5464 = vmatprep.mubr.bf16.mxu0 0
  %5465 = vmatmul.mubr.bf16.gmra.mxu0 %v769
  %v5466 = vpop.f32.mrf.mxu0
  %v5467 = vadd.f32 0.0, %v5466
  %v5468 = vpop.f32.mrf.mxu0
  %v5469 = vadd.f32 0.0, %v5468
  %v5470 = vpop.f32.mrf.mxu0
  %v5471 = vadd.f32 0.0, %v5470
  %v5472 = vpop.f32.mrf.mxu0
  %v5473 = vadd.f32 0.0, %v5472
  %5474 = vmatprep.mubr.bf16.mxu0 0
  %5475 = vmatmul.mubr.bf16.gmra.mxu0 %v772
  %v5476 = vpop.f32.mrf.mxu0
  %v5477 = vadd.f32 0.0, %v5476
  %v5478 = vpop.f32.mrf.mxu0
  %v5479 = vadd.f32 0.0, %v5478
  %v5480 = vpop.f32.mrf.mxu0
  %v5481 = vadd.f32 0.0, %v5480
  %v5482 = vpop.f32.mrf.mxu0
  %v5483 = vadd.f32 0.0, %v5482
  %5484 = vmatprep.mubr.bf16.mxu0 0
  %5485 = vmatmul.mubr.bf16.gmra.mxu0 %v775
  %v5486 = vpop.f32.mrf.mxu0
  %v5487 = vadd.f32 0.0, %v5486
  %v5488 = vpop.f32.mrf.mxu0
  %v5489 = vadd.f32 0.0, %v5488
  %v5490 = vpop.f32.mrf.mxu0
  %v5491 = vadd.f32 0.0, %v5490
  %v5492 = vpop.f32.mrf.mxu0
  %v5493 = vadd.f32 0.0, %v5492
  %5494 = vmatprep.mubr.bf16.mxu0 0
  %5495 = vmatmul.mubr.bf16.gmra.mxu0 %v778
  %v5496 = vpop.f32.mrf.mxu0
  %v5497 = vadd.f32 0.0, %v5496
  %v5498 = vpop.f32.mrf.mxu0
  %v5499 = vadd.f32 0.0, %v5498
  %v5500 = vpop.f32.mrf.mxu0
  %v5501 = vadd.f32 0.0, %v5500
  %v5502 = vpop.f32.mrf.mxu0
  %v5503 = vadd.f32 0.0, %v5502
  %5504 = vmatprep.mubr.bf16.mxu0 0
  %5505 = vmatmul.mubr.bf16.gmra.mxu0 %v781
  %v5506 = vpop.f32.mrf.mxu0
  %v5507 = vadd.f32 0.0, %v5506
  %v5508 = vpop.f32.mrf.mxu0
  %v5509 = vadd.f32 0.0, %v5508
  %v5510 = vpop.f32.mrf.mxu0
  %v5511 = vadd.f32 0.0, %v5510
  %v5512 = vpop.f32.mrf.mxu0
  %v5513 = vadd.f32 0.0, %v5512
  %5514 = vmatprep.mubr.bf16.mxu0 0
  %5515 = vmatmul.mubr.bf16.gmra.mxu0 %v784
  %v5516 = vpop.f32.mrf.mxu0
  %v5517 = vadd.f32 0.0, %v5516
  %v5518 = vpop.f32.mrf.mxu0
  %v5519 = vadd.f32 0.0, %v5518
  %v5520 = vpop.f32.mrf.mxu0
  %v5521 = vadd.f32 0.0, %v5520
  %v5522 = vpop.f32.mrf.mxu0
  %v5523 = vadd.f32 0.0, %v5522
  %5524 = vmatprep.mubr.bf16.mxu0 0
  %5525 = vmatmul.mubr.bf16.gmra.mxu0 %v787
  %v5526 = vpop.f32.mrf.mxu0
  %v5527 = vadd.f32 0.0, %v5526
  %v5528 = vpop.f32.mrf.mxu0
  %v5529 = vadd.f32 0.0, %v5528
  %v5530 = vpop.f32.mrf.mxu0
  %v5531 = vadd.f32 0.0, %v5530
  %v5532 = vpop.f32.mrf.mxu0
  %v5533 = vadd.f32 0.0, %v5532
  %5534 = vmatprep.mubr.bf16.mxu0 0
  %5535 = vmatmul.mubr.bf16.gmra.mxu0 %v790
  %v5536 = vpop.f32.mrf.mxu0
  %v5537 = vadd.f32 0.0, %v5536
  %v5538 = vpop.f32.mrf.mxu0
  %v5539 = vadd.f32 0.0, %v5538
  %v5540 = vpop.f32.mrf.mxu0
  %v5541 = vadd.f32 0.0, %v5540
  %v5542 = vpop.f32.mrf.mxu0
  %v5543 = vadd.f32 0.0, %v5542
  %5544 = vmatprep.mubr.bf16.mxu0 0
  %5545 = vmatmul.mubr.bf16.gmra.mxu0 %v793
  %v5546 = vpop.f32.mrf.mxu0
  %v5547 = vadd.f32 0.0, %v5546
  %v5548 = vpop.f32.mrf.mxu0
  %v5549 = vadd.f32 0.0, %v5548
  %v5550 = vpop.f32.mrf.mxu0
  %v5551 = vadd.f32 0.0, %v5550
  %v5552 = vpop.f32.mrf.mxu0
  %v5553 = vadd.f32 0.0, %v5552
  %5554 = vdwg.mxu0
  %5555 = vmatprep.subr.bf16.mxu0 0
  %5556 = vmatpush1.bf16.msra.mxu0 0
  %5557 = vmatprep.subr.bf16.mxu0 0
  %5558 = vmatpush1.bf16.msra.mxu0 0
  %5559 = vmatprep.subr.bf16.mxu0 0
  %5560 = vmatpush1.bf16.msra.mxu0 0
  %5561 = vmatprep.subr.bf16.mxu0 0
  %5562 = vmatpush1.bf16.msra.mxu0 0
  %5563 = vmatprep.subr.bf16.mxu0 0
  %5564 = vmatpush1.bf16.msra.mxu0 0
  %5565 = vmatprep.subr.bf16.mxu0 0
  %5566 = vmatpush1.bf16.msra.mxu0 0
  %5567 = vmatprep.subr.bf16.mxu0 0
  %5568 = vmatpush1.bf16.msra.mxu0 0
  %5569 = vmatprep.subr.bf16.mxu0 %v842
  %5570 = vmatpush1.bf16.msra.mxu0 %v839
  %5571 = vmatprep.subr.bf16.mxu0 0
  %5572 = vmatpush2.bf16.msra.mxu0 0
  %5573 = vmatprep.subr.bf16.mxu0 0
  %5574 = vmatpush2.bf16.msra.mxu0 0
  %5575 = vmatprep.subr.bf16.mxu0 0
  %5576 = vmatpush2.bf16.msra.mxu0 0
  %5577 = vmatprep.subr.bf16.mxu0 0
  %5578 = vmatpush2.bf16.msra.mxu0 0
  %5579 = vmatprep.subr.bf16.mxu0 0
  %5580 = vmatpush2.bf16.msra.mxu0 0
  %5581 = vmatprep.subr.bf16.mxu0 0
  %5582 = vmatpush2.bf16.msra.mxu0 0
  %5583 = vmatprep.subr.bf16.mxu0 0
  %5584 = vmatpush2.bf16.msra.mxu0 0
  %5585 = vmatprep.subr.bf16.mxu0 0
  %5586 = vmatpush2.bf16.msra.mxu0 0
  %5587 = vmatprep.mubr.bf16.mxu0 0
  %5588 = vmatmul.mubr.bf16.gmra.mxu0 %v604
  %v5589 = vpop.f32.mrf.mxu0
  %v5590 = vadd.f32 0.0, %v5589
  %v5591 = vpop.f32.mrf.mxu0
  %v5592 = vadd.f32 0.0, %v5591
  %v5593 = vpop.f32.mrf.mxu0
  %v5594 = vadd.f32 0.0, %v5593
  %v5595 = vpop.f32.mrf.mxu0
  %v5596 = vadd.f32 0.0, %v5595
  %5597 = vmatprep.mubr.bf16.mxu0 0
  %5598 = vmatmul.mubr.bf16.gmra.mxu0 %v607
  %v5599 = vpop.f32.mrf.mxu0
  %v5600 = vadd.f32 0.0, %v5599
  %v5601 = vpop.f32.mrf.mxu0
  %v5602 = vadd.f32 0.0, %v5601
  %v5603 = vpop.f32.mrf.mxu0
  %v5604 = vadd.f32 0.0, %v5603
  %v5605 = vpop.f32.mrf.mxu0
  %v5606 = vadd.f32 0.0, %v5605
  %5607 = vmatprep.mubr.bf16.mxu0 0
  %5608 = vmatmul.mubr.bf16.gmra.mxu0 %v610
  %v5609 = vpop.f32.mrf.mxu0
  %v5610 = vadd.f32 0.0, %v5609
  %v5611 = vpop.f32.mrf.mxu0
  %v5612 = vadd.f32 0.0, %v5611
  %v5613 = vpop.f32.mrf.mxu0
  %v5614 = vadd.f32 0.0, %v5613
  %v5615 = vpop.f32.mrf.mxu0
  %v5616 = vadd.f32 0.0, %v5615
  %5617 = vmatprep.mubr.bf16.mxu0 0
  %5618 = vmatmul.mubr.bf16.gmra.mxu0 %v613
  %v5619 = vpop.f32.mrf.mxu0
  %v5620 = vadd.f32 0.0, %v5619
  %v5621 = vpop.f32.mrf.mxu0
  %v5622 = vadd.f32 0.0, %v5621
  %v5623 = vpop.f32.mrf.mxu0
  %v5624 = vadd.f32 0.0, %v5623
  %v5625 = vpop.f32.mrf.mxu0
  %v5626 = vadd.f32 0.0, %v5625
  %5627 = vmatprep.mubr.bf16.mxu0 0
  %5628 = vmatmul.mubr.bf16.gmra.mxu0 %v616
  %v5629 = vpop.f32.mrf.mxu0
  %v5630 = vadd.f32 0.0, %v5629
  %v5631 = vpop.f32.mrf.mxu0
  %v5632 = vadd.f32 0.0, %v5631
  %v5633 = vpop.f32.mrf.mxu0
  %v5634 = vadd.f32 0.0, %v5633
  %v5635 = vpop.f32.mrf.mxu0
  %v5636 = vadd.f32 0.0, %v5635
  %5637 = vmatprep.mubr.bf16.mxu0 0
  %5638 = vmatmul.mubr.bf16.gmra.mxu0 %v619
  %v5639 = vpop.f32.mrf.mxu0
  %v5640 = vadd.f32 0.0, %v5639
  %v5641 = vpop.f32.mrf.mxu0
  %v5642 = vadd.f32 0.0, %v5641
  %v5643 = vpop.f32.mrf.mxu0
  %v5644 = vadd.f32 0.0, %v5643
  %v5645 = vpop.f32.mrf.mxu0
  %v5646 = vadd.f32 0.0, %v5645
  %5647 = vmatprep.mubr.bf16.mxu0 0
  %5648 = vmatmul.mubr.bf16.gmra.mxu0 %v622
  %v5649 = vpop.f32.mrf.mxu0
  %v5650 = vadd.f32 0.0, %v5649
  %v5651 = vpop.f32.mrf.mxu0
  %v5652 = vadd.f32 0.0, %v5651
  %v5653 = vpop.f32.mrf.mxu0
  %v5654 = vadd.f32 0.0, %v5653
  %v5655 = vpop.f32.mrf.mxu0
  %v5656 = vadd.f32 0.0, %v5655
  %5657 = vmatprep.mubr.bf16.mxu0 0
  %5658 = vmatmul.mubr.bf16.gmra.mxu0 %v625
  %v5659 = vpop.f32.mrf.mxu0
  %v5660 = vadd.f32 0.0, %v5659
  %v5661 = vpop.f32.mrf.mxu0
  %v5662 = vadd.f32 0.0, %v5661
  %v5663 = vpop.f32.mrf.mxu0
  %v5664 = vadd.f32 0.0, %v5663
  %v5665 = vpop.f32.mrf.mxu0
  %v5666 = vadd.f32 0.0, %v5665
  %5667 = vmatprep.mubr.bf16.mxu0 0
  %5668 = vmatmul.mubr.bf16.gmra.mxu0 %v628
  %v5669 = vpop.f32.mrf.mxu0
  %v5670 = vadd.f32 0.0, %v5669
  %v5671 = vpop.f32.mrf.mxu0
  %v5672 = vadd.f32 0.0, %v5671
  %v5673 = vpop.f32.mrf.mxu0
  %v5674 = vadd.f32 0.0, %v5673
  %v5675 = vpop.f32.mrf.mxu0
  %v5676 = vadd.f32 0.0, %v5675
  %5677 = vmatprep.mubr.bf16.mxu0 0
  %5678 = vmatmul.mubr.bf16.gmra.mxu0 %v631
  %v5679 = vpop.f32.mrf.mxu0
  %v5680 = vadd.f32 0.0, %v5679
  %v5681 = vpop.f32.mrf.mxu0
  %v5682 = vadd.f32 0.0, %v5681
  %v5683 = vpop.f32.mrf.mxu0
  %v5684 = vadd.f32 0.0, %v5683
  %v5685 = vpop.f32.mrf.mxu0
  %v5686 = vadd.f32 0.0, %v5685
  %5687 = vmatprep.mubr.bf16.mxu0 0
  %5688 = vmatmul.mubr.bf16.gmra.mxu0 %v634
  %v5689 = vpop.f32.mrf.mxu0
  %v5690 = vadd.f32 0.0, %v5689
  %v5691 = vpop.f32.mrf.mxu0
  %v5692 = vadd.f32 0.0, %v5691
  %v5693 = vpop.f32.mrf.mxu0
  %v5694 = vadd.f32 0.0, %v5693
  %v5695 = vpop.f32.mrf.mxu0
  %v5696 = vadd.f32 0.0, %v5695
  %5697 = vmatprep.mubr.bf16.mxu0 0
  %5698 = vmatmul.mubr.bf16.gmra.mxu0 %v637
  %v5699 = vpop.f32.mrf.mxu0
  %v5700 = vadd.f32 0.0, %v5699
  %v5701 = vpop.f32.mrf.mxu0
  %v5702 = vadd.f32 0.0, %v5701
  %v5703 = vpop.f32.mrf.mxu0
  %v5704 = vadd.f32 0.0, %v5703
  %v5705 = vpop.f32.mrf.mxu0
  %v5706 = vadd.f32 0.0, %v5705
  %5707 = vmatprep.mubr.bf16.mxu0 0
  %5708 = vmatmul.mubr.bf16.gmra.mxu0 %v640
  %v5709 = vpop.f32.mrf.mxu0
  %v5710 = vadd.f32 0.0, %v5709
  %v5711 = vpop.f32.mrf.mxu0
  %v5712 = vadd.f32 0.0, %v5711
  %v5713 = vpop.f32.mrf.mxu0
  %v5714 = vadd.f32 0.0, %v5713
  %v5715 = vpop.f32.mrf.mxu0
  %v5716 = vadd.f32 0.0, %v5715
  %5717 = vmatprep.mubr.bf16.mxu0 0
  %5718 = vmatmul.mubr.bf16.gmra.mxu0 %v643
  %v5719 = vpop.f32.mrf.mxu0
  %v5720 = vadd.f32 0.0, %v5719
  %v5721 = vpop.f32.mrf.mxu0
  %v5722 = vadd.f32 0.0, %v5721
  %v5723 = vpop.f32.mrf.mxu0
  %v5724 = vadd.f32 0.0, %v5723
  %v5725 = vpop.f32.mrf.mxu0
  %v5726 = vadd.f32 0.0, %v5725
  %5727 = vmatprep.mubr.bf16.mxu0 0
  %5728 = vmatmul.mubr.bf16.gmra.mxu0 %v646
  %v5729 = vpop.f32.mrf.mxu0
  %v5730 = vadd.f32 0.0, %v5729
  %v5731 = vpop.f32.mrf.mxu0
  %v5732 = vadd.f32 0.0, %v5731
  %v5733 = vpop.f32.mrf.mxu0
  %v5734 = vadd.f32 0.0, %v5733
  %v5735 = vpop.f32.mrf.mxu0
  %v5736 = vadd.f32 0.0, %v5735
  %5737 = vmatprep.mubr.bf16.mxu0 0
  %5738 = vmatmul.mubr.bf16.gmra.mxu0 %v649
  %v5739 = vpop.f32.mrf.mxu0
  %v5740 = vadd.f32 0.0, %v5739
  %v5741 = vpop.f32.mrf.mxu0
  %v5742 = vadd.f32 0.0, %v5741
  %v5743 = vpop.f32.mrf.mxu0
  %v5744 = vadd.f32 0.0, %v5743
  %v5745 = vpop.f32.mrf.mxu0
  %v5746 = vadd.f32 0.0, %v5745
  %5747 = vmatprep.mubr.bf16.mxu0 0
  %5748 = vmatmul.mubr.bf16.gmra.mxu0 %v652
  %v5749 = vpop.f32.mrf.mxu0
  %v5750 = vadd.f32 0.0, %v5749
  %v5751 = vpop.f32.mrf.mxu0
  %v5752 = vadd.f32 0.0, %v5751
  %v5753 = vpop.f32.mrf.mxu0
  %v5754 = vadd.f32 0.0, %v5753
  %v5755 = vpop.f32.mrf.mxu0
  %v5756 = vadd.f32 0.0, %v5755
  %5757 = vmatprep.mubr.bf16.mxu0 0
  %5758 = vmatmul.mubr.bf16.gmra.mxu0 %v655
  %v5759 = vpop.f32.mrf.mxu0
  %v5760 = vadd.f32 0.0, %v5759
  %v5761 = vpop.f32.mrf.mxu0
  %v5762 = vadd.f32 0.0, %v5761
  %v5763 = vpop.f32.mrf.mxu0
  %v5764 = vadd.f32 0.0, %v5763
  %v5765 = vpop.f32.mrf.mxu0
  %v5766 = vadd.f32 0.0, %v5765
  %5767 = vmatprep.mubr.bf16.mxu0 0
  %5768 = vmatmul.mubr.bf16.gmra.mxu0 %v658
  %v5769 = vpop.f32.mrf.mxu0
  %v5770 = vadd.f32 0.0, %v5769
  %v5771 = vpop.f32.mrf.mxu0
  %v5772 = vadd.f32 0.0, %v5771
  %v5773 = vpop.f32.mrf.mxu0
  %v5774 = vadd.f32 0.0, %v5773
  %v5775 = vpop.f32.mrf.mxu0
  %v5776 = vadd.f32 0.0, %v5775
  %5777 = vmatprep.mubr.bf16.mxu0 0
  %5778 = vmatmul.mubr.bf16.gmra.mxu0 %v661
  %v5779 = vpop.f32.mrf.mxu0
  %v5780 = vadd.f32 0.0, %v5779
  %v5781 = vpop.f32.mrf.mxu0
  %v5782 = vadd.f32 0.0, %v5781
  %v5783 = vpop.f32.mrf.mxu0
  %v5784 = vadd.f32 0.0, %v5783
  %v5785 = vpop.f32.mrf.mxu0
  %v5786 = vadd.f32 0.0, %v5785
  %5787 = vmatprep.mubr.bf16.mxu0 0
  %5788 = vmatmul.mubr.bf16.gmra.mxu0 %v664
  %v5789 = vpop.f32.mrf.mxu0
  %v5790 = vadd.f32 0.0, %v5789
  %v5791 = vpop.f32.mrf.mxu0
  %v5792 = vadd.f32 0.0, %v5791
  %v5793 = vpop.f32.mrf.mxu0
  %v5794 = vadd.f32 0.0, %v5793
  %v5795 = vpop.f32.mrf.mxu0
  %v5796 = vadd.f32 0.0, %v5795
  %5797 = vmatprep.mubr.bf16.mxu0 0
  %5798 = vmatmul.mubr.bf16.gmra.mxu0 %v667
  %v5799 = vpop.f32.mrf.mxu0
  %v5800 = vadd.f32 0.0, %v5799
  %v5801 = vpop.f32.mrf.mxu0
  %v5802 = vadd.f32 0.0, %v5801
  %v5803 = vpop.f32.mrf.mxu0
  %v5804 = vadd.f32 0.0, %v5803
  %v5805 = vpop.f32.mrf.mxu0
  %v5806 = vadd.f32 0.0, %v5805
  %5807 = vmatprep.mubr.bf16.mxu0 0
  %5808 = vmatmul.mubr.bf16.gmra.mxu0 %v670
  %v5809 = vpop.f32.mrf.mxu0
  %v5810 = vadd.f32 0.0, %v5809
  %v5811 = vpop.f32.mrf.mxu0
  %v5812 = vadd.f32 0.0, %v5811
  %v5813 = vpop.f32.mrf.mxu0
  %v5814 = vadd.f32 0.0, %v5813
  %v5815 = vpop.f32.mrf.mxu0
  %v5816 = vadd.f32 0.0, %v5815
  %5817 = vmatprep.mubr.bf16.mxu0 0
  %5818 = vmatmul.mubr.bf16.gmra.mxu0 %v673
  %v5819 = vpop.f32.mrf.mxu0
  %v5820 = vadd.f32 0.0, %v5819
  %v5821 = vpop.f32.mrf.mxu0
  %v5822 = vadd.f32 0.0, %v5821
  %v5823 = vpop.f32.mrf.mxu0
  %v5824 = vadd.f32 0.0, %v5823
  %v5825 = vpop.f32.mrf.mxu0
  %v5826 = vadd.f32 0.0, %v5825
  %5827 = vmatprep.mubr.bf16.mxu0 0
  %5828 = vmatmul.mubr.bf16.gmra.mxu0 %v676
  %v5829 = vpop.f32.mrf.mxu0
  %v5830 = vadd.f32 0.0, %v5829
  %v5831 = vpop.f32.mrf.mxu0
  %v5832 = vadd.f32 0.0, %v5831
  %v5833 = vpop.f32.mrf.mxu0
  %v5834 = vadd.f32 0.0, %v5833
  %v5835 = vpop.f32.mrf.mxu0
  %v5836 = vadd.f32 0.0, %v5835
  %5837 = vmatprep.mubr.bf16.mxu0 0
  %5838 = vmatmul.mubr.bf16.gmra.mxu0 %v679
  %v5839 = vpop.f32.mrf.mxu0
  %v5840 = vadd.f32 0.0, %v5839
  %v5841 = vpop.f32.mrf.mxu0
  %v5842 = vadd.f32 0.0, %v5841
  %v5843 = vpop.f32.mrf.mxu0
  %v5844 = vadd.f32 0.0, %v5843
  %v5845 = vpop.f32.mrf.mxu0
  %v5846 = vadd.f32 0.0, %v5845
  %5847 = vmatprep.mubr.bf16.mxu0 0
  %5848 = vmatmul.mubr.bf16.gmra.mxu0 %v682
  %v5849 = vpop.f32.mrf.mxu0
  %v5850 = vadd.f32 0.0, %v5849
  %v5851 = vpop.f32.mrf.mxu0
  %v5852 = vadd.f32 0.0, %v5851
  %v5853 = vpop.f32.mrf.mxu0
  %v5854 = vadd.f32 0.0, %v5853
  %v5855 = vpop.f32.mrf.mxu0
  %v5856 = vadd.f32 0.0, %v5855
  %5857 = vmatprep.mubr.bf16.mxu0 0
  %5858 = vmatmul.mubr.bf16.gmra.mxu0 %v685
  %v5859 = vpop.f32.mrf.mxu0
  %v5860 = vadd.f32 0.0, %v5859
  %v5861 = vpop.f32.mrf.mxu0
  %v5862 = vadd.f32 0.0, %v5861
  %v5863 = vpop.f32.mrf.mxu0
  %v5864 = vadd.f32 0.0, %v5863
  %v5865 = vpop.f32.mrf.mxu0
  %v5866 = vadd.f32 0.0, %v5865
  %5867 = vmatprep.mubr.bf16.mxu0 0
  %5868 = vmatmul.mubr.bf16.gmra.mxu0 %v688
  %v5869 = vpop.f32.mrf.mxu0
  %v5870 = vadd.f32 0.0, %v5869
  %v5871 = vpop.f32.mrf.mxu0
  %v5872 = vadd.f32 0.0, %v5871
  %v5873 = vpop.f32.mrf.mxu0
  %v5874 = vadd.f32 0.0, %v5873
  %v5875 = vpop.f32.mrf.mxu0
  %v5876 = vadd.f32 0.0, %v5875
  %5877 = vmatprep.mubr.bf16.mxu0 0
  %5878 = vmatmul.mubr.bf16.gmra.mxu0 %v691
  %v5879 = vpop.f32.mrf.mxu0
  %v5880 = vadd.f32 0.0, %v5879
  %v5881 = vpop.f32.mrf.mxu0
  %v5882 = vadd.f32 0.0, %v5881
  %v5883 = vpop.f32.mrf.mxu0
  %v5884 = vadd.f32 0.0, %v5883
  %v5885 = vpop.f32.mrf.mxu0
  %v5886 = vadd.f32 0.0, %v5885
  %5887 = vmatprep.mubr.bf16.mxu0 0
  %5888 = vmatmul.mubr.bf16.gmra.mxu0 %v694
  %v5889 = vpop.f32.mrf.mxu0
  %v5890 = vadd.f32 0.0, %v5889
  %v5891 = vpop.f32.mrf.mxu0
  %v5892 = vadd.f32 0.0, %v5891
  %v5893 = vpop.f32.mrf.mxu0
  %v5894 = vadd.f32 0.0, %v5893
  %v5895 = vpop.f32.mrf.mxu0
  %v5896 = vadd.f32 0.0, %v5895
  %5897 = vmatprep.mubr.bf16.mxu0 0
  %5898 = vmatmul.mubr.bf16.gmra.mxu0 %v697
  %v5899 = vpop.f32.mrf.mxu0
  %v5900 = vadd.f32 0.0, %v5899
  %v5901 = vpop.f32.mrf.mxu0
  %v5902 = vadd.f32 0.0, %v5901
  %v5903 = vpop.f32.mrf.mxu0
  %v5904 = vadd.f32 0.0, %v5903
  %v5905 = vpop.f32.mrf.mxu0
  %v5906 = vadd.f32 0.0, %v5905
  %5907 = vmatprep.mubr.bf16.mxu0 0
  %5908 = vmatmul.mubr.bf16.gmra.mxu0 %v700
  %v5909 = vpop.f32.mrf.mxu0
  %v5910 = vadd.f32 0.0, %v5909
  %v5911 = vpop.f32.mrf.mxu0
  %v5912 = vadd.f32 0.0, %v5911
  %v5913 = vpop.f32.mrf.mxu0
  %v5914 = vadd.f32 0.0, %v5913
  %v5915 = vpop.f32.mrf.mxu0
  %v5916 = vadd.f32 0.0, %v5915
  %5917 = vmatprep.mubr.bf16.mxu0 0
  %5918 = vmatmul.mubr.bf16.gmra.mxu0 %v703
  %v5919 = vpop.f32.mrf.mxu0
  %v5920 = vadd.f32 0.0, %v5919
  %v5921 = vpop.f32.mrf.mxu0
  %v5922 = vadd.f32 0.0, %v5921
  %v5923 = vpop.f32.mrf.mxu0
  %v5924 = vadd.f32 0.0, %v5923
  %v5925 = vpop.f32.mrf.mxu0
  %v5926 = vadd.f32 0.0, %v5925
  %5927 = vmatprep.mubr.bf16.mxu0 0
  %5928 = vmatmul.mubr.bf16.gmra.mxu0 %v706
  %v5929 = vpop.f32.mrf.mxu0
  %v5930 = vadd.f32 0.0, %v5929
  %v5931 = vpop.f32.mrf.mxu0
  %v5932 = vadd.f32 0.0, %v5931
  %v5933 = vpop.f32.mrf.mxu0
  %v5934 = vadd.f32 0.0, %v5933
  %v5935 = vpop.f32.mrf.mxu0
  %v5936 = vadd.f32 0.0, %v5935
  %5937 = vmatprep.mubr.bf16.mxu0 0
  %5938 = vmatmul.mubr.bf16.gmra.mxu0 %v709
  %v5939 = vpop.f32.mrf.mxu0
  %v5940 = vadd.f32 0.0, %v5939
  %v5941 = vpop.f32.mrf.mxu0
  %v5942 = vadd.f32 0.0, %v5941
  %v5943 = vpop.f32.mrf.mxu0
  %v5944 = vadd.f32 0.0, %v5943
  %v5945 = vpop.f32.mrf.mxu0
  %v5946 = vadd.f32 0.0, %v5945
  %5947 = vmatprep.mubr.bf16.mxu0 0
  %5948 = vmatmul.mubr.bf16.gmra.mxu0 %v712
  %v5949 = vpop.f32.mrf.mxu0
  %v5950 = vadd.f32 0.0, %v5949
  %v5951 = vpop.f32.mrf.mxu0
  %v5952 = vadd.f32 0.0, %v5951
  %v5953 = vpop.f32.mrf.mxu0
  %v5954 = vadd.f32 0.0, %v5953
  %v5955 = vpop.f32.mrf.mxu0
  %v5956 = vadd.f32 0.0, %v5955
  %5957 = vmatprep.mubr.bf16.mxu0 0
  %5958 = vmatmul.mubr.bf16.gmra.mxu0 %v715
  %v5959 = vpop.f32.mrf.mxu0
  %v5960 = vadd.f32 0.0, %v5959
  %v5961 = vpop.f32.mrf.mxu0
  %v5962 = vadd.f32 0.0, %v5961
  %v5963 = vpop.f32.mrf.mxu0
  %v5964 = vadd.f32 0.0, %v5963
  %v5965 = vpop.f32.mrf.mxu0
  %v5966 = vadd.f32 0.0, %v5965
  %5967 = vmatprep.mubr.bf16.mxu0 0
  %5968 = vmatmul.mubr.bf16.gmra.mxu0 %v718
  %v5969 = vpop.f32.mrf.mxu0
  %v5970 = vadd.f32 0.0, %v5969
  %v5971 = vpop.f32.mrf.mxu0
  %v5972 = vadd.f32 0.0, %v5971
  %v5973 = vpop.f32.mrf.mxu0
  %v5974 = vadd.f32 0.0, %v5973
  %v5975 = vpop.f32.mrf.mxu0
  %v5976 = vadd.f32 0.0, %v5975
  %5977 = vmatprep.mubr.bf16.mxu0 0
  %5978 = vmatmul.mubr.bf16.gmra.mxu0 %v721
  %v5979 = vpop.f32.mrf.mxu0
  %v5980 = vadd.f32 0.0, %v5979
  %v5981 = vpop.f32.mrf.mxu0
  %v5982 = vadd.f32 0.0, %v5981
  %v5983 = vpop.f32.mrf.mxu0
  %v5984 = vadd.f32 0.0, %v5983
  %v5985 = vpop.f32.mrf.mxu0
  %v5986 = vadd.f32 0.0, %v5985
  %5987 = vmatprep.mubr.bf16.mxu0 0
  %5988 = vmatmul.mubr.bf16.gmra.mxu0 %v724
  %v5989 = vpop.f32.mrf.mxu0
  %v5990 = vadd.f32 0.0, %v5989
  %v5991 = vpop.f32.mrf.mxu0
  %v5992 = vadd.f32 0.0, %v5991
  %v5993 = vpop.f32.mrf.mxu0
  %v5994 = vadd.f32 0.0, %v5993
  %v5995 = vpop.f32.mrf.mxu0
  %v5996 = vadd.f32 0.0, %v5995
  %5997 = vmatprep.mubr.bf16.mxu0 0
  %5998 = vmatmul.mubr.bf16.gmra.mxu0 %v727
  %v5999 = vpop.f32.mrf.mxu0
  %v6000 = vadd.f32 0.0, %v5999
  %v6001 = vpop.f32.mrf.mxu0
  %v6002 = vadd.f32 0.0, %v6001
  %v6003 = vpop.f32.mrf.mxu0
  %v6004 = vadd.f32 0.0, %v6003
  %v6005 = vpop.f32.mrf.mxu0
  %v6006 = vadd.f32 0.0, %v6005
  %6007 = vmatprep.mubr.bf16.mxu0 0
  %6008 = vmatmul.mubr.bf16.gmra.mxu0 %v730
  %v6009 = vpop.f32.mrf.mxu0
  %v6010 = vadd.f32 0.0, %v6009
  %v6011 = vpop.f32.mrf.mxu0
  %v6012 = vadd.f32 0.0, %v6011
  %v6013 = vpop.f32.mrf.mxu0
  %v6014 = vadd.f32 0.0, %v6013
  %v6015 = vpop.f32.mrf.mxu0
  %v6016 = vadd.f32 0.0, %v6015
  %6017 = vmatprep.mubr.bf16.mxu0 0
  %6018 = vmatmul.mubr.bf16.gmra.mxu0 %v733
  %v6019 = vpop.f32.mrf.mxu0
  %v6020 = vadd.f32 0.0, %v6019
  %v6021 = vpop.f32.mrf.mxu0
  %v6022 = vadd.f32 0.0, %v6021
  %v6023 = vpop.f32.mrf.mxu0
  %v6024 = vadd.f32 0.0, %v6023
  %v6025 = vpop.f32.mrf.mxu0
  %v6026 = vadd.f32 0.0, %v6025
  %6027 = vmatprep.mubr.bf16.mxu0 0
  %6028 = vmatmul.mubr.bf16.gmra.mxu0 %v736
  %v6029 = vpop.f32.mrf.mxu0
  %v6030 = vadd.f32 0.0, %v6029
  %v6031 = vpop.f32.mrf.mxu0
  %v6032 = vadd.f32 0.0, %v6031
  %v6033 = vpop.f32.mrf.mxu0
  %v6034 = vadd.f32 0.0, %v6033
  %v6035 = vpop.f32.mrf.mxu0
  %v6036 = vadd.f32 0.0, %v6035
  %6037 = vmatprep.mubr.bf16.mxu0 0
  %6038 = vmatmul.mubr.bf16.gmra.mxu0 %v739
  %v6039 = vpop.f32.mrf.mxu0
  %v6040 = vadd.f32 0.0, %v6039
  %v6041 = vpop.f32.mrf.mxu0
  %v6042 = vadd.f32 0.0, %v6041
  %v6043 = vpop.f32.mrf.mxu0
  %v6044 = vadd.f32 0.0, %v6043
  %v6045 = vpop.f32.mrf.mxu0
  %v6046 = vadd.f32 0.0, %v6045
  %6047 = vmatprep.mubr.bf16.mxu0 0
  %6048 = vmatmul.mubr.bf16.gmra.mxu0 %v742
  %v6049 = vpop.f32.mrf.mxu0
  %v6050 = vadd.f32 0.0, %v6049
  %v6051 = vpop.f32.mrf.mxu0
  %v6052 = vadd.f32 0.0, %v6051
  %v6053 = vpop.f32.mrf.mxu0
  %v6054 = vadd.f32 0.0, %v6053
  %v6055 = vpop.f32.mrf.mxu0
  %v6056 = vadd.f32 0.0, %v6055
  %6057 = vmatprep.mubr.bf16.mxu0 0
  %6058 = vmatmul.mubr.bf16.gmra.mxu0 %v745
  %v6059 = vpop.f32.mrf.mxu0
  %v6060 = vadd.f32 0.0, %v6059
  %v6061 = vpop.f32.mrf.mxu0
  %v6062 = vadd.f32 0.0, %v6061
  %v6063 = vpop.f32.mrf.mxu0
  %v6064 = vadd.f32 0.0, %v6063
  %v6065 = vpop.f32.mrf.mxu0
  %v6066 = vadd.f32 0.0, %v6065
  %6067 = vmatprep.mubr.bf16.mxu0 0
  %6068 = vmatmul.mubr.bf16.gmra.mxu0 %v748
  %v6069 = vpop.f32.mrf.mxu0
  %v6070 = vadd.f32 0.0, %v6069
  %v6071 = vpop.f32.mrf.mxu0
  %v6072 = vadd.f32 0.0, %v6071
  %v6073 = vpop.f32.mrf.mxu0
  %v6074 = vadd.f32 0.0, %v6073
  %v6075 = vpop.f32.mrf.mxu0
  %v6076 = vadd.f32 0.0, %v6075
  %6077 = vmatprep.mubr.bf16.mxu0 0
  %6078 = vmatmul.mubr.bf16.gmra.mxu0 %v751
  %v6079 = vpop.f32.mrf.mxu0
  %v6080 = vadd.f32 0.0, %v6079
  %v6081 = vpop.f32.mrf.mxu0
  %v6082 = vadd.f32 0.0, %v6081
  %v6083 = vpop.f32.mrf.mxu0
  %v6084 = vadd.f32 0.0, %v6083
  %v6085 = vpop.f32.mrf.mxu0
  %v6086 = vadd.f32 0.0, %v6085
  %6087 = vmatprep.mubr.bf16.mxu0 0
  %6088 = vmatmul.mubr.bf16.gmra.mxu0 %v754
  %v6089 = vpop.f32.mrf.mxu0
  %v6090 = vadd.f32 0.0, %v6089
  %v6091 = vpop.f32.mrf.mxu0
  %v6092 = vadd.f32 0.0, %v6091
  %v6093 = vpop.f32.mrf.mxu0
  %v6094 = vadd.f32 0.0, %v6093
  %v6095 = vpop.f32.mrf.mxu0
  %v6096 = vadd.f32 0.0, %v6095
  %6097 = vmatprep.mubr.bf16.mxu0 0
  %6098 = vmatmul.mubr.bf16.gmra.mxu0 %v757
  %v6099 = vpop.f32.mrf.mxu0
  %v6100 = vadd.f32 0.0, %v6099
  %v6101 = vpop.f32.mrf.mxu0
  %v6102 = vadd.f32 0.0, %v6101
  %v6103 = vpop.f32.mrf.mxu0
  %v6104 = vadd.f32 0.0, %v6103
  %v6105 = vpop.f32.mrf.mxu0
  %v6106 = vadd.f32 0.0, %v6105
  %6107 = vmatprep.mubr.bf16.mxu0 0
  %6108 = vmatmul.mubr.bf16.gmra.mxu0 %v760
  %v6109 = vpop.f32.mrf.mxu0
  %v6110 = vadd.f32 0.0, %v6109
  %v6111 = vpop.f32.mrf.mxu0
  %v6112 = vadd.f32 0.0, %v6111
  %v6113 = vpop.f32.mrf.mxu0
  %v6114 = vadd.f32 0.0, %v6113
  %v6115 = vpop.f32.mrf.mxu0
  %v6116 = vadd.f32 0.0, %v6115
  %6117 = vmatprep.mubr.bf16.mxu0 0
  %6118 = vmatmul.mubr.bf16.gmra.mxu0 %v763
  %v6119 = vpop.f32.mrf.mxu0
  %v6120 = vadd.f32 0.0, %v6119
  %v6121 = vpop.f32.mrf.mxu0
  %v6122 = vadd.f32 0.0, %v6121
  %v6123 = vpop.f32.mrf.mxu0
  %v6124 = vadd.f32 0.0, %v6123
  %v6125 = vpop.f32.mrf.mxu0
  %v6126 = vadd.f32 0.0, %v6125
  %6127 = vmatprep.mubr.bf16.mxu0 0
  %6128 = vmatmul.mubr.bf16.gmra.mxu0 %v766
  %v6129 = vpop.f32.mrf.mxu0
  %v6130 = vadd.f32 0.0, %v6129
  %v6131 = vpop.f32.mrf.mxu0
  %v6132 = vadd.f32 0.0, %v6131
  %v6133 = vpop.f32.mrf.mxu0
  %v6134 = vadd.f32 0.0, %v6133
  %v6135 = vpop.f32.mrf.mxu0
  %v6136 = vadd.f32 0.0, %v6135
  %6137 = vmatprep.mubr.bf16.mxu0 0
  %6138 = vmatmul.mubr.bf16.gmra.mxu0 %v769
  %v6139 = vpop.f32.mrf.mxu0
  %v6140 = vadd.f32 0.0, %v6139
  %v6141 = vpop.f32.mrf.mxu0
  %v6142 = vadd.f32 0.0, %v6141
  %v6143 = vpop.f32.mrf.mxu0
  %v6144 = vadd.f32 0.0, %v6143
  %v6145 = vpop.f32.mrf.mxu0
  %v6146 = vadd.f32 0.0, %v6145
  %6147 = vmatprep.mubr.bf16.mxu0 0
  %6148 = vmatmul.mubr.bf16.gmra.mxu0 %v772
  %v6149 = vpop.f32.mrf.mxu0
  %v6150 = vadd.f32 0.0, %v6149
  %v6151 = vpop.f32.mrf.mxu0
  %v6152 = vadd.f32 0.0, %v6151
  %v6153 = vpop.f32.mrf.mxu0
  %v6154 = vadd.f32 0.0, %v6153
  %v6155 = vpop.f32.mrf.mxu0
  %v6156 = vadd.f32 0.0, %v6155
  %6157 = vmatprep.mubr.bf16.mxu0 0
  %6158 = vmatmul.mubr.bf16.gmra.mxu0 %v775
  %v6159 = vpop.f32.mrf.mxu0
  %v6160 = vadd.f32 0.0, %v6159
  %v6161 = vpop.f32.mrf.mxu0
  %v6162 = vadd.f32 0.0, %v6161
  %v6163 = vpop.f32.mrf.mxu0
  %v6164 = vadd.f32 0.0, %v6163
  %v6165 = vpop.f32.mrf.mxu0
  %v6166 = vadd.f32 0.0, %v6165
  %6167 = vmatprep.mubr.bf16.mxu0 0
  %6168 = vmatmul.mubr.bf16.gmra.mxu0 %v778
  %v6169 = vpop.f32.mrf.mxu0
  %v6170 = vadd.f32 0.0, %v6169
  %v6171 = vpop.f32.mrf.mxu0
  %v6172 = vadd.f32 0.0, %v6171
  %v6173 = vpop.f32.mrf.mxu0
  %v6174 = vadd.f32 0.0, %v6173
  %v6175 = vpop.f32.mrf.mxu0
  %v6176 = vadd.f32 0.0, %v6175
  %6177 = vmatprep.mubr.bf16.mxu0 0
  %6178 = vmatmul.mubr.bf16.gmra.mxu0 %v781
  %v6179 = vpop.f32.mrf.mxu0
  %v6180 = vadd.f32 0.0, %v6179
  %v6181 = vpop.f32.mrf.mxu0
  %v6182 = vadd.f32 0.0, %v6181
  %v6183 = vpop.f32.mrf.mxu0
  %v6184 = vadd.f32 0.0, %v6183
  %v6185 = vpop.f32.mrf.mxu0
  %v6186 = vadd.f32 0.0, %v6185
  %6187 = vmatprep.mubr.bf16.mxu0 0
  %6188 = vmatmul.mubr.bf16.gmra.mxu0 %v784
  %v6189 = vpop.f32.mrf.mxu0
  %v6190 = vadd.f32 0.0, %v6189
  %v6191 = vpop.f32.mrf.mxu0
  %v6192 = vadd.f32 0.0, %v6191
  %v6193 = vpop.f32.mrf.mxu0
  %v6194 = vadd.f32 0.0, %v6193
  %v6195 = vpop.f32.mrf.mxu0
  %v6196 = vadd.f32 0.0, %v6195
  %6197 = vmatprep.mubr.bf16.mxu0 0
  %6198 = vmatmul.mubr.bf16.gmra.mxu0 %v787
  %v6199 = vpop.f32.mrf.mxu0
  %v6200 = vadd.f32 0.0, %v6199
  %v6201 = vpop.f32.mrf.mxu0
  %v6202 = vadd.f32 0.0, %v6201
  %v6203 = vpop.f32.mrf.mxu0
  %v6204 = vadd.f32 0.0, %v6203
  %v6205 = vpop.f32.mrf.mxu0
  %v6206 = vadd.f32 0.0, %v6205
  %6207 = vmatprep.mubr.bf16.mxu0 0
  %6208 = vmatmul.mubr.bf16.gmra.mxu0 %v790
  %v6209 = vpop.f32.mrf.mxu0
  %v6210 = vadd.f32 0.0, %v6209
  %v6211 = vpop.f32.mrf.mxu0
  %v6212 = vadd.f32 0.0, %v6211
  %v6213 = vpop.f32.mrf.mxu0
  %v6214 = vadd.f32 0.0, %v6213
  %v6215 = vpop.f32.mrf.mxu0
  %v6216 = vadd.f32 0.0, %v6215
  %6217 = vmatprep.mubr.bf16.mxu0 0
  %6218 = vmatmul.mubr.bf16.gmra.mxu0 %v793
  %v6219 = vpop.f32.mrf.mxu0
  %v6220 = vadd.f32 0.0, %v6219
  %v6221 = vpop.f32.mrf.mxu0
  %v6222 = vadd.f32 0.0, %v6221
  %v6223 = vpop.f32.mrf.mxu0
  %v6224 = vadd.f32 0.0, %v6223
  %v6225 = vpop.f32.mrf.mxu0
  %v6226 = vadd.f32 0.0, %v6225
  %6227 = vdwg.mxu0
  %v6228 = vmin.f32 %v879, %v883
  %v6229 = vmin.f32 %v6228, %v889
  %v6230 = vmin.f32 %v6229, %v893
  %v6231 = vmin.f32 %v6230, %v899
  %v6232 = vmin.f32 %v6231, %v903
  %v6233 = vmin.f32 %v6232, %v909
  %v6234 = vmin.f32 %v6233, %v913
  %v6235 = vmin.f32 %v6234, %v919
  %v6236 = vmin.f32 %v6235, %v923
  %v6237 = vmin.f32 %v6236, %v929
  %v6238 = vmin.f32 %v6237, %v933
  %v6239 = vmin.f32 %v6238, %v939
  %v6240 = vmin.f32 %v6239, %v943
  %v6241 = vmin.f32 %v6240, %v949
  %v6242 = vmin.f32 %v6241, %v953
  %v6243 = vmin.f32 %v6242, %v959
  %v6244 = vmin.f32 %v6243, %v963
  %v6245 = vmin.f32 %v6244, %v969
  %v6246 = vmin.f32 %v6245, %v973
  %v6247 = vmin.f32 %v6246, %v979
  %v6248 = vmin.f32 %v6247, %v983
  %v6249 = vmin.f32 %v6248, %v989
  %v6250 = vmin.f32 %v6249, %v993
  %v6251 = vmin.f32 %v6250, %v999
  %v6252 = vmin.f32 %v6251, %v1003
  %v6253 = vmin.f32 %v6252, %v1009
  %v6254 = vmin.f32 %v6253, %v1013
  %v6255 = vmin.f32 %v6254, %v1019
  %v6256 = vmin.f32 %v6255, %v1023
  %v6257 = vmin.f32 %v6256, %v1029
  %v6258 = vmin.f32 %v6257, %v1033
  %v6259 = vmin.f32 %v6258, %v1039
  %v6260 = vmin.f32 %v6259, %v1043
  %v6261 = vmin.f32 %v6260, %v1049
  %v6262 = vmin.f32 %v6261, %v1053
  %v6263 = vmin.f32 %v6262, %v1059
  %v6264 = vmin.f32 %v6263, %v1063
  %v6265 = vmin.f32 %v6264, %v1069
  %v6266 = vmin.f32 %v6265, %v1073
  %v6267 = vmin.f32 %v6266, %v1079
  %v6268 = vmin.f32 %v6267, %v1083
  %v6269 = vmin.f32 %v6268, %v1089
  %v6270 = vmin.f32 %v6269, %v1093
  %v6271 = vmin.f32 %v6270, %v1099
  %v6272 = vmin.f32 %v6271, %v1103
  %v6273 = vmin.f32 %v6272, %v1109
  %v6274 = vmin.f32 %v6273, %v1113
  %v6275 = vmin.f32 %v6274, %v1119
  %v6276 = vmin.f32 %v6275, %v1123
  %v6277 = vmin.f32 %v6276, %v1129
  %v6278 = vmin.f32 %v6277, %v1133
  %v6279 = vmin.f32 %v6278, %v1139
  %v6280 = vmin.f32 %v6279, %v1143
  %v6281 = vmin.f32 %v6280, %v1149
  %v6282 = vmin.f32 %v6281, %v1153
  %v6283 = vmin.f32 %v6282, %v1159
  %v6284 = vmin.f32 %v6283, %v1163
  %v6285 = vmin.f32 %v6284, %v1169
  %v6286 = vmin.f32 %v6285, %v1173
  %v6287 = vmin.f32 %v6286, %v1179
  %v6288 = vmin.f32 %v6287, %v1183
  %v6289 = vmin.f32 %v6288, %v1189
  %v6290 = vmin.f32 %v6289, %v1193
  %v6291 = vmin.f32 %v6290, %v1199
  %v6292 = vmin.f32 %v6291, %v1203
  %v6293 = vmin.f32 %v6292, %v1209
  %v6294 = vmin.f32 %v6293, %v1213
  %v6295 = vmin.f32 %v6294, %v1219
  %v6296 = vmin.f32 %v6295, %v1223
  %v6297 = vmin.f32 %v6296, %v1229
  %v6298 = vmin.f32 %v6297, %v1233
  %v6299 = vmin.f32 %v6298, %v1239
  %v6300 = vmin.f32 %v6299, %v1243
  %v6301 = vmin.f32 %v6300, %v1249
  %v6302 = vmin.f32 %v6301, %v1253
  %v6303 = vmin.f32 %v6302, %v1259
  %v6304 = vmin.f32 %v6303, %v1263
  %v6305 = vmin.f32 %v6304, %v1269
  %v6306 = vmin.f32 %v6305, %v1273
  %v6307 = vmin.f32 %v6306, %v1279
  %v6308 = vmin.f32 %v6307, %v1283
  %v6309 = vmin.f32 %v6308, %v1289
  %v6310 = vmin.f32 %v6309, %v1293
  %v6311 = vmin.f32 %v6310, %v1299
  %v6312 = vmin.f32 %v6311, %v1303
  %v6313 = vmin.f32 %v6312, %v1309
  %v6314 = vmin.f32 %v6313, %v1313
  %v6315 = vmin.f32 %v6314, %v1319
  %v6316 = vmin.f32 %v6315, %v1323
  %v6317 = vmin.f32 %v6316, %v1329
  %v6318 = vmin.f32 %v6317, %v1333
  %v6319 = vmin.f32 %v6318, %v1339
  %v6320 = vmin.f32 %v6319, %v1343
  %v6321 = vmin.f32 %v6320, %v1349
  %v6322 = vmin.f32 %v6321, %v1353
  %v6323 = vmin.f32 %v6322, %v1359
  %v6324 = vmin.f32 %v6323, %v1363
  %v6325 = vmin.f32 %v6324, %v1369
  %v6326 = vmin.f32 %v6325, %v1373
  %v6327 = vmin.f32 %v6326, %v1379
  %v6328 = vmin.f32 %v6327, %v1383
  %v6329 = vmin.f32 %v6328, %v1389
  %v6330 = vmin.f32 %v6329, %v1393
  %v6331 = vmin.f32 %v6330, %v1399
  %v6332 = vmin.f32 %v6331, %v1403
  %v6333 = vmin.f32 %v6332, %v1409
  %v6334 = vmin.f32 %v6333, %v1413
  %v6335 = vmin.f32 %v6334, %v1419
  %v6336 = vmin.f32 %v6335, %v1423
  %v6337 = vmin.f32 %v6336, %v1429
  %v6338 = vmin.f32 %v6337, %v1433
  %v6339 = vmin.f32 %v6338, %v1439
  %v6340 = vmin.f32 %v6339, %v1443
  %v6341 = vmin.f32 %v6340, %v1449
  %v6342 = vmin.f32 %v6341, %v1453
  %v6343 = vmin.f32 %v6342, %v1459
  %v6344 = vmin.f32 %v6343, %v1463
  %v6345 = vmin.f32 %v6344, %v1469
  %v6346 = vmin.f32 %v6345, %v1473
  %v6347 = vmin.f32 %v6346, %v1479
  %v6348 = vmin.f32 %v6347, %v1483
  %v6349 = vmin.f32 %v6348, %v1489
  %v6350 = vmin.f32 %v6349, %v1493
  %v6351 = vmin.f32 %v6350, %v1499
  %v6352 = vmin.f32 %v6351, %v1503
  %v6353 = vmin.f32 %v6352, %v1509
  %v6354 = vmin.f32 %v6353, %v1513
  %v6355 = vrot.slane %v6354, 4
  %v6356 = vmin.f32 %v6354, %v6355
  %v6357 = vrot.slane %v6356, 2
  %v6358 = vmin.f32 %v6356, %v6357
  %v6359 = vrot.slane %v6358, 1
  %v6360 = vmin.f32 %v6358, %v6359
  %v6361 = vmin.f32 %v881, %v885
  %v6362 = vmin.f32 %v6361, %v891
  %v6363 = vmin.f32 %v6362, %v895
  %v6364 = vmin.f32 %v6363, %v901
  %v6365 = vmin.f32 %v6364, %v905
  %v6366 = vmin.f32 %v6365, %v911
  %v6367 = vmin.f32 %v6366, %v915
  %v6368 = vmin.f32 %v6367, %v921
  %v6369 = vmin.f32 %v6368, %v925
  %v6370 = vmin.f32 %v6369, %v931
  %v6371 = vmin.f32 %v6370, %v935
  %v6372 = vmin.f32 %v6371, %v941
  %v6373 = vmin.f32 %v6372, %v945
  %v6374 = vmin.f32 %v6373, %v951
  %v6375 = vmin.f32 %v6374, %v955
  %v6376 = vmin.f32 %v6375, %v961
  %v6377 = vmin.f32 %v6376, %v965
  %v6378 = vmin.f32 %v6377, %v971
  %v6379 = vmin.f32 %v6378, %v975
  %v6380 = vmin.f32 %v6379, %v981
  %v6381 = vmin.f32 %v6380, %v985
  %v6382 = vmin.f32 %v6381, %v991
  %v6383 = vmin.f32 %v6382, %v995
  %v6384 = vmin.f32 %v6383, %v1001
  %v6385 = vmin.f32 %v6384, %v1005
  %v6386 = vmin.f32 %v6385, %v1011
  %v6387 = vmin.f32 %v6386, %v1015
  %v6388 = vmin.f32 %v6387, %v1021
  %v6389 = vmin.f32 %v6388, %v1025
  %v6390 = vmin.f32 %v6389, %v1031
  %v6391 = vmin.f32 %v6390, %v1035
  %v6392 = vmin.f32 %v6391, %v1041
  %v6393 = vmin.f32 %v6392, %v1045
  %v6394 = vmin.f32 %v6393, %v1051
  %v6395 = vmin.f32 %v6394, %v1055
  %v6396 = vmin.f32 %v6395, %v1061
  %v6397 = vmin.f32 %v6396, %v1065
  %v6398 = vmin.f32 %v6397, %v1071
  %v6399 = vmin.f32 %v6398, %v1075
  %v6400 = vmin.f32 %v6399, %v1081
  %v6401 = vmin.f32 %v6400, %v1085
  %v6402 = vmin.f32 %v6401, %v1091
  %v6403 = vmin.f32 %v6402, %v1095
  %v6404 = vmin.f32 %v6403, %v1101
  %v6405 = vmin.f32 %v6404, %v1105
  %v6406 = vmin.f32 %v6405, %v1111
  %v6407 = vmin.f32 %v6406, %v1115
  %v6408 = vmin.f32 %v6407, %v1121
  %v6409 = vmin.f32 %v6408, %v1125
  %v6410 = vmin.f32 %v6409, %v1131
  %v6411 = vmin.f32 %v6410, %v1135
  %v6412 = vmin.f32 %v6411, %v1141
  %v6413 = vmin.f32 %v6412, %v1145
  %v6414 = vmin.f32 %v6413, %v1151
  %v6415 = vmin.f32 %v6414, %v1155
  %v6416 = vmin.f32 %v6415, %v1161
  %v6417 = vmin.f32 %v6416, %v1165
  %v6418 = vmin.f32 %v6417, %v1171
  %v6419 = vmin.f32 %v6418, %v1175
  %v6420 = vmin.f32 %v6419, %v1181
  %v6421 = vmin.f32 %v6420, %v1185
  %v6422 = vmin.f32 %v6421, %v1191
  %v6423 = vmin.f32 %v6422, %v1195
  %v6424 = vmin.f32 %v6423, %v1201
  %v6425 = vmin.f32 %v6424, %v1205
  %v6426 = vmin.f32 %v6425, %v1211
  %v6427 = vmin.f32 %v6426, %v1215
  %v6428 = vmin.f32 %v6427, %v1221
  %v6429 = vmin.f32 %v6428, %v1225
  %v6430 = vmin.f32 %v6429, %v1231
  %v6431 = vmin.f32 %v6430, %v1235
  %v6432 = vmin.f32 %v6431, %v1241
  %v6433 = vmin.f32 %v6432, %v1245
  %v6434 = vmin.f32 %v6433, %v1251
  %v6435 = vmin.f32 %v6434, %v1255
  %v6436 = vmin.f32 %v6435, %v1261
  %v6437 = vmin.f32 %v6436, %v1265
  %v6438 = vmin.f32 %v6437, %v1271
  %v6439 = vmin.f32 %v6438, %v1275
  %v6440 = vmin.f32 %v6439, %v1281
  %v6441 = vmin.f32 %v6440, %v1285
  %v6442 = vmin.f32 %v6441, %v1291
  %v6443 = vmin.f32 %v6442, %v1295
  %v6444 = vmin.f32 %v6443, %v1301
  %v6445 = vmin.f32 %v6444, %v1305
  %v6446 = vmin.f32 %v6445, %v1311
  %v6447 = vmin.f32 %v6446, %v1315
  %v6448 = vmin.f32 %v6447, %v1321
  %v6449 = vmin.f32 %v6448, %v1325
  %v6450 = vmin.f32 %v6449, %v1331
  %v6451 = vmin.f32 %v6450, %v1335
  %v6452 = vmin.f32 %v6451, %v1341
  %v6453 = vmin.f32 %v6452, %v1345
  %v6454 = vmin.f32 %v6453, %v1351
  %v6455 = vmin.f32 %v6454, %v1355
  %v6456 = vmin.f32 %v6455, %v1361
  %v6457 = vmin.f32 %v6456, %v1365
  %v6458 = vmin.f32 %v6457, %v1371
  %v6459 = vmin.f32 %v6458, %v1375
  %v6460 = vmin.f32 %v6459, %v1381
  %v6461 = vmin.f32 %v6460, %v1385
  %v6462 = vmin.f32 %v6461, %v1391
  %v6463 = vmin.f32 %v6462, %v1395
  %v6464 = vmin.f32 %v6463, %v1401
  %v6465 = vmin.f32 %v6464, %v1405
  %v6466 = vmin.f32 %v6465, %v1411
  %v6467 = vmin.f32 %v6466, %v1415
  %v6468 = vmin.f32 %v6467, %v1421
  %v6469 = vmin.f32 %v6468, %v1425
  %v6470 = vmin.f32 %v6469, %v1431
  %v6471 = vmin.f32 %v6470, %v1435
  %v6472 = vmin.f32 %v6471, %v1441
  %v6473 = vmin.f32 %v6472, %v1445
  %v6474 = vmin.f32 %v6473, %v1451
  %v6475 = vmin.f32 %v6474, %v1455
  %v6476 = vmin.f32 %v6475, %v1461
  %v6477 = vmin.f32 %v6476, %v1465
  %v6478 = vmin.f32 %v6477, %v1471
  %v6479 = vmin.f32 %v6478, %v1475
  %v6480 = vmin.f32 %v6479, %v1481
  %v6481 = vmin.f32 %v6480, %v1485
  %v6482 = vmin.f32 %v6481, %v1491
  %v6483 = vmin.f32 %v6482, %v1495
  %v6484 = vmin.f32 %v6483, %v1501
  %v6485 = vmin.f32 %v6484, %v1505
  %v6486 = vmin.f32 %v6485, %v1511
  %v6487 = vmin.f32 %v6486, %v1515
  %v6488 = vrot.slane %v6487, 4
  %v6489 = vmin.f32 %v6487, %v6488
  %v6490 = vrot.slane %v6489, 2
  %v6491 = vmin.f32 %v6489, %v6490
  %v6492 = vrot.slane %v6491, 1
  %v6493 = vmin.f32 %v6491, %v6492
  %v6494 = vmin.f32 %v1552, %v1556
  %v6495 = vmin.f32 %v6494, %v1562
  %v6496 = vmin.f32 %v6495, %v1566
  %v6497 = vmin.f32 %v6496, %v1572
  %v6498 = vmin.f32 %v6497, %v1576
  %v6499 = vmin.f32 %v6498, %v1582
  %v6500 = vmin.f32 %v6499, %v1586
  %v6501 = vmin.f32 %v6500, %v1592
  %v6502 = vmin.f32 %v6501, %v1596
  %v6503 = vmin.f32 %v6502, %v1602
  %v6504 = vmin.f32 %v6503, %v1606
  %v6505 = vmin.f32 %v6504, %v1612
  %v6506 = vmin.f32 %v6505, %v1616
  %v6507 = vmin.f32 %v6506, %v1622
  %v6508 = vmin.f32 %v6507, %v1626
  %v6509 = vmin.f32 %v6508, %v1632
  %v6510 = vmin.f32 %v6509, %v1636
  %v6511 = vmin.f32 %v6510, %v1642
  %v6512 = vmin.f32 %v6511, %v1646
  %v6513 = vmin.f32 %v6512, %v1652
  %v6514 = vmin.f32 %v6513, %v1656
  %v6515 = vmin.f32 %v6514, %v1662
  %v6516 = vmin.f32 %v6515, %v1666
  %v6517 = vmin.f32 %v6516, %v1672
  %v6518 = vmin.f32 %v6517, %v1676
  %v6519 = vmin.f32 %v6518, %v1682
  %v6520 = vmin.f32 %v6519, %v1686
  %v6521 = vmin.f32 %v6520, %v1692
  %v6522 = vmin.f32 %v6521, %v1696
  %v6523 = vmin.f32 %v6522, %v1702
  %v6524 = vmin.f32 %v6523, %v1706
  %v6525 = vmin.f32 %v6524, %v1712
  %v6526 = vmin.f32 %v6525, %v1716
  %v6527 = vmin.f32 %v6526, %v1722
  %v6528 = vmin.f32 %v6527, %v1726
  %v6529 = vmin.f32 %v6528, %v1732
  %v6530 = vmin.f32 %v6529, %v1736
  %v6531 = vmin.f32 %v6530, %v1742
  %v6532 = vmin.f32 %v6531, %v1746
  %v6533 = vmin.f32 %v6532, %v1752
  %v6534 = vmin.f32 %v6533, %v1756
  %v6535 = vmin.f32 %v6534, %v1762
  %v6536 = vmin.f32 %v6535, %v1766
  %v6537 = vmin.f32 %v6536, %v1772
  %v6538 = vmin.f32 %v6537, %v1776
  %v6539 = vmin.f32 %v6538, %v1782
  %v6540 = vmin.f32 %v6539, %v1786
  %v6541 = vmin.f32 %v6540, %v1792
  %v6542 = vmin.f32 %v6541, %v1796
  %v6543 = vmin.f32 %v6542, %v1802
  %v6544 = vmin.f32 %v6543, %v1806
  %v6545 = vmin.f32 %v6544, %v1812
  %v6546 = vmin.f32 %v6545, %v1816
  %v6547 = vmin.f32 %v6546, %v1822
  %v6548 = vmin.f32 %v6547, %v1826
  %v6549 = vmin.f32 %v6548, %v1832
  %v6550 = vmin.f32 %v6549, %v1836
  %v6551 = vmin.f32 %v6550, %v1842
  %v6552 = vmin.f32 %v6551, %v1846
  %v6553 = vmin.f32 %v6552, %v1852
  %v6554 = vmin.f32 %v6553, %v1856
  %v6555 = vmin.f32 %v6554, %v1862
  %v6556 = vmin.f32 %v6555, %v1866
  %v6557 = vmin.f32 %v6556, %v1872
  %v6558 = vmin.f32 %v6557, %v1876
  %v6559 = vmin.f32 %v6558, %v1882
  %v6560 = vmin.f32 %v6559, %v1886
  %v6561 = vmin.f32 %v6560, %v1892
  %v6562 = vmin.f32 %v6561, %v1896
  %v6563 = vmin.f32 %v6562, %v1902
  %v6564 = vmin.f32 %v6563, %v1906
  %v6565 = vmin.f32 %v6564, %v1912
  %v6566 = vmin.f32 %v6565, %v1916
  %v6567 = vmin.f32 %v6566, %v1922
  %v6568 = vmin.f32 %v6567, %v1926
  %v6569 = vmin.f32 %v6568, %v1932
  %v6570 = vmin.f32 %v6569, %v1936
  %v6571 = vmin.f32 %v6570, %v1942
  %v6572 = vmin.f32 %v6571, %v1946
  %v6573 = vmin.f32 %v6572, %v1952
  %v6574 = vmin.f32 %v6573, %v1956
  %v6575 = vmin.f32 %v6574, %v1962
  %v6576 = vmin.f32 %v6575, %v1966
  %v6577 = vmin.f32 %v6576, %v1972
  %v6578 = vmin.f32 %v6577, %v1976
  %v6579 = vmin.f32 %v6578, %v1982
  %v6580 = vmin.f32 %v6579, %v1986
  %v6581 = vmin.f32 %v6580, %v1992
  %v6582 = vmin.f32 %v6581, %v1996
  %v6583 = vmin.f32 %v6582, %v2002
  %v6584 = vmin.f32 %v6583, %v2006
  %v6585 = vmin.f32 %v6584, %v2012
  %v6586 = vmin.f32 %v6585, %v2016
  %v6587 = vmin.f32 %v6586, %v2022
  %v6588 = vmin.f32 %v6587, %v2026
  %v6589 = vmin.f32 %v6588, %v2032
  %v6590 = vmin.f32 %v6589, %v2036
  %v6591 = vmin.f32 %v6590, %v2042
  %v6592 = vmin.f32 %v6591, %v2046
  %v6593 = vmin.f32 %v6592, %v2052
  %v6594 = vmin.f32 %v6593, %v2056
  %v6595 = vmin.f32 %v6594, %v2062
  %v6596 = vmin.f32 %v6595, %v2066
  %v6597 = vmin.f32 %v6596, %v2072
  %v6598 = vmin.f32 %v6597, %v2076
  %v6599 = vmin.f32 %v6598, %v2082
  %v6600 = vmin.f32 %v6599, %v2086
  %v6601 = vmin.f32 %v6600, %v2092
  %v6602 = vmin.f32 %v6601, %v2096
  %v6603 = vmin.f32 %v6602, %v2102
  %v6604 = vmin.f32 %v6603, %v2106
  %v6605 = vmin.f32 %v6604, %v2112
  %v6606 = vmin.f32 %v6605, %v2116
  %v6607 = vmin.f32 %v6606, %v2122
  %v6608 = vmin.f32 %v6607, %v2126
  %v6609 = vmin.f32 %v6608, %v2132
  %v6610 = vmin.f32 %v6609, %v2136
  %v6611 = vmin.f32 %v6610, %v2142
  %v6612 = vmin.f32 %v6611, %v2146
  %v6613 = vmin.f32 %v6612, %v2152
  %v6614 = vmin.f32 %v6613, %v2156
  %v6615 = vmin.f32 %v6614, %v2162
  %v6616 = vmin.f32 %v6615, %v2166
  %v6617 = vmin.f32 %v6616, %v2172
  %v6618 = vmin.f32 %v6617, %v2176
  %v6619 = vmin.f32 %v6618, %v2182
  %v6620 = vmin.f32 %v6619, %v2186
  %v6621 = vrot.slane %v6620, 4
  %v6622 = vmin.f32 %v6620, %v6621
  %v6623 = vrot.slane %v6622, 2
  %v6624 = vmin.f32 %v6622, %v6623
  %v6625 = vrot.slane %v6624, 1
  %v6626 = vmin.f32 %v6624, %v6625
  %v6627 = vmin.f32 %v1554, %v1558
  %v6628 = vmin.f32 %v6627, %v1564
  %v6629 = vmin.f32 %v6628, %v1568
  %v6630 = vmin.f32 %v6629, %v1574
  %v6631 = vmin.f32 %v6630, %v1578
  %v6632 = vmin.f32 %v6631, %v1584
  %v6633 = vmin.f32 %v6632, %v1588
  %v6634 = vmin.f32 %v6633, %v1594
  %v6635 = vmin.f32 %v6634, %v1598
  %v6636 = vmin.f32 %v6635, %v1604
  %v6637 = vmin.f32 %v6636, %v1608
  %v6638 = vmin.f32 %v6637, %v1614
  %v6639 = vmin.f32 %v6638, %v1618
  %v6640 = vmin.f32 %v6639, %v1624
  %v6641 = vmin.f32 %v6640, %v1628
  %v6642 = vmin.f32 %v6641, %v1634
  %v6643 = vmin.f32 %v6642, %v1638
  %v6644 = vmin.f32 %v6643, %v1644
  %v6645 = vmin.f32 %v6644, %v1648
  %v6646 = vmin.f32 %v6645, %v1654
  %v6647 = vmin.f32 %v6646, %v1658
  %v6648 = vmin.f32 %v6647, %v1664
  %v6649 = vmin.f32 %v6648, %v1668
  %v6650 = vmin.f32 %v6649, %v1674
  %v6651 = vmin.f32 %v6650, %v1678
  %v6652 = vmin.f32 %v6651, %v1684
  %v6653 = vmin.f32 %v6652, %v1688
  %v6654 = vmin.f32 %v6653, %v1694
  %v6655 = vmin.f32 %v6654, %v1698
  %v6656 = vmin.f32 %v6655, %v1704
  %v6657 = vmin.f32 %v6656, %v1708
  %v6658 = vmin.f32 %v6657, %v1714
  %v6659 = vmin.f32 %v6658, %v1718
  %v6660 = vmin.f32 %v6659, %v1724
  %v6661 = vmin.f32 %v6660, %v1728
  %v6662 = vmin.f32 %v6661, %v1734
  %v6663 = vmin.f32 %v6662, %v1738
  %v6664 = vmin.f32 %v6663, %v1744
  %v6665 = vmin.f32 %v6664, %v1748
  %v6666 = vmin.f32 %v6665, %v1754
  %v6667 = vmin.f32 %v6666, %v1758
  %v6668 = vmin.f32 %v6667, %v1764
  %v6669 = vmin.f32 %v6668, %v1768
  %v6670 = vmin.f32 %v6669, %v1774
  %v6671 = vmin.f32 %v6670, %v1778
  %v6672 = vmin.f32 %v6671, %v1784
  %v6673 = vmin.f32 %v6672, %v1788
  %v6674 = vmin.f32 %v6673, %v1794
  %v6675 = vmin.f32 %v6674, %v1798
  %v6676 = vmin.f32 %v6675, %v1804
  %v6677 = vmin.f32 %v6676, %v1808
  %v6678 = vmin.f32 %v6677, %v1814
  %v6679 = vmin.f32 %v6678, %v1818
  %v6680 = vmin.f32 %v6679, %v1824
  %v6681 = vmin.f32 %v6680, %v1828
  %v6682 = vmin.f32 %v6681, %v1834
  %v6683 = vmin.f32 %v6682, %v1838
  %v6684 = vmin.f32 %v6683, %v1844
  %v6685 = vmin.f32 %v6684, %v1848
  %v6686 = vmin.f32 %v6685, %v1854
  %v6687 = vmin.f32 %v6686, %v1858
  %v6688 = vmin.f32 %v6687, %v1864
  %v6689 = vmin.f32 %v6688, %v1868
  %v6690 = vmin.f32 %v6689, %v1874
  %v6691 = vmin.f32 %v6690, %v1878
  %v6692 = vmin.f32 %v6691, %v1884
  %v6693 = vmin.f32 %v6692, %v1888
  %v6694 = vmin.f32 %v6693, %v1894
  %v6695 = vmin.f32 %v6694, %v1898
  %v6696 = vmin.f32 %v6695, %v1904
  %v6697 = vmin.f32 %v6696, %v1908
  %v6698 = vmin.f32 %v6697, %v1914
  %v6699 = vmin.f32 %v6698, %v1918
  %v6700 = vmin.f32 %v6699, %v1924
  %v6701 = vmin.f32 %v6700, %v1928
  %v6702 = vmin.f32 %v6701, %v1934
  %v6703 = vmin.f32 %v6702, %v1938
  %v6704 = vmin.f32 %v6703, %v1944
  %v6705 = vmin.f32 %v6704, %v1948
  %v6706 = vmin.f32 %v6705, %v1954
  %v6707 = vmin.f32 %v6706, %v1958
  %v6708 = vmin.f32 %v6707, %v1964
  %v6709 = vmin.f32 %v6708, %v1968
  %v6710 = vmin.f32 %v6709, %v1974
  %v6711 = vmin.f32 %v6710, %v1978
  %v6712 = vmin.f32 %v6711, %v1984
  %v6713 = vmin.f32 %v6712, %v1988
  %v6714 = vmin.f32 %v6713, %v1994
  %v6715 = vmin.f32 %v6714, %v1998
  %v6716 = vmin.f32 %v6715, %v2004
  %v6717 = vmin.f32 %v6716, %v2008
  %v6718 = vmin.f32 %v6717, %v2014
  %v6719 = vmin.f32 %v6718, %v2018
  %v6720 = vmin.f32 %v6719, %v2024
  %v6721 = vmin.f32 %v6720, %v2028
  %v6722 = vmin.f32 %v6721, %v2034
  %v6723 = vmin.f32 %v6722, %v2038
  %v6724 = vmin.f32 %v6723, %v2044
  %v6725 = vmin.f32 %v6724, %v2048
  %v6726 = vmin.f32 %v6725, %v2054
  %v6727 = vmin.f32 %v6726, %v2058
  %v6728 = vmin.f32 %v6727, %v2064
  %v6729 = vmin.f32 %v6728, %v2068
  %v6730 = vmin.f32 %v6729, %v2074
  %v6731 = vmin.f32 %v6730, %v2078
  %v6732 = vmin.f32 %v6731, %v2084
  %v6733 = vmin.f32 %v6732, %v2088
  %v6734 = vmin.f32 %v6733, %v2094
  %v6735 = vmin.f32 %v6734, %v2098
  %v6736 = vmin.f32 %v6735, %v2104
  %v6737 = vmin.f32 %v6736, %v2108
  %v6738 = vmin.f32 %v6737, %v2114
  %v6739 = vmin.f32 %v6738, %v2118
  %v6740 = vmin.f32 %v6739, %v2124
  %v6741 = vmin.f32 %v6740, %v2128
  %v6742 = vmin.f32 %v6741, %v2134
  %v6743 = vmin.f32 %v6742, %v2138
  %v6744 = vmin.f32 %v6743, %v2144
  %v6745 = vmin.f32 %v6744, %v2148
  %v6746 = vmin.f32 %v6745, %v2154
  %v6747 = vmin.f32 %v6746, %v2158
  %v6748 = vmin.f32 %v6747, %v2164
  %v6749 = vmin.f32 %v6748, %v2168
  %v6750 = vmin.f32 %v6749, %v2174
  %v6751 = vmin.f32 %v6750, %v2178
  %v6752 = vmin.f32 %v6751, %v2184
  %v6753 = vmin.f32 %v6752, %v2188
  %v6754 = vrot.slane %v6753, 4
  %v6755 = vmin.f32 %v6753, %v6754
  %v6756 = vrot.slane %v6755, 2
  %v6757 = vmin.f32 %v6755, %v6756
  %v6758 = vrot.slane %v6757, 1
  %v6759 = vmin.f32 %v6757, %v6758
  %v6760 = vmin.f32 %v2225, %v2229
  %v6761 = vmin.f32 %v6760, %v2235
  %v6762 = vmin.f32 %v6761, %v2239
  %v6763 = vmin.f32 %v6762, %v2245
  %v6764 = vmin.f32 %v6763, %v2249
  %v6765 = vmin.f32 %v6764, %v2255
  %v6766 = vmin.f32 %v6765, %v2259
  %v6767 = vmin.f32 %v6766, %v2265
  %v6768 = vmin.f32 %v6767, %v2269
  %v6769 = vmin.f32 %v6768, %v2275
  %v6770 = vmin.f32 %v6769, %v2279
  %v6771 = vmin.f32 %v6770, %v2285
  %v6772 = vmin.f32 %v6771, %v2289
  %v6773 = vmin.f32 %v6772, %v2295
  %v6774 = vmin.f32 %v6773, %v2299
  %v6775 = vmin.f32 %v6774, %v2305
  %v6776 = vmin.f32 %v6775, %v2309
  %v6777 = vmin.f32 %v6776, %v2315
  %v6778 = vmin.f32 %v6777, %v2319
  %v6779 = vmin.f32 %v6778, %v2325
  %v6780 = vmin.f32 %v6779, %v2329
  %v6781 = vmin.f32 %v6780, %v2335
  %v6782 = vmin.f32 %v6781, %v2339
  %v6783 = vmin.f32 %v6782, %v2345
  %v6784 = vmin.f32 %v6783, %v2349
  %v6785 = vmin.f32 %v6784, %v2355
  %v6786 = vmin.f32 %v6785, %v2359
  %v6787 = vmin.f32 %v6786, %v2365
  %v6788 = vmin.f32 %v6787, %v2369
  %v6789 = vmin.f32 %v6788, %v2375
  %v6790 = vmin.f32 %v6789, %v2379
  %v6791 = vmin.f32 %v6790, %v2385
  %v6792 = vmin.f32 %v6791, %v2389
  %v6793 = vmin.f32 %v6792, %v2395
  %v6794 = vmin.f32 %v6793, %v2399
  %v6795 = vmin.f32 %v6794, %v2405
  %v6796 = vmin.f32 %v6795, %v2409
  %v6797 = vmin.f32 %v6796, %v2415
  %v6798 = vmin.f32 %v6797, %v2419
  %v6799 = vmin.f32 %v6798, %v2425
  %v6800 = vmin.f32 %v6799, %v2429
  %v6801 = vmin.f32 %v6800, %v2435
  %v6802 = vmin.f32 %v6801, %v2439
  %v6803 = vmin.f32 %v6802, %v2445
  %v6804 = vmin.f32 %v6803, %v2449
  %v6805 = vmin.f32 %v6804, %v2455
  %v6806 = vmin.f32 %v6805, %v2459
  %v6807 = vmin.f32 %v6806, %v2465
  %v6808 = vmin.f32 %v6807, %v2469
  %v6809 = vmin.f32 %v6808, %v2475
  %v6810 = vmin.f32 %v6809, %v2479
  %v6811 = vmin.f32 %v6810, %v2485
  %v6812 = vmin.f32 %v6811, %v2489
  %v6813 = vmin.f32 %v6812, %v2495
  %v6814 = vmin.f32 %v6813, %v2499
  %v6815 = vmin.f32 %v6814, %v2505
  %v6816 = vmin.f32 %v6815, %v2509
  %v6817 = vmin.f32 %v6816, %v2515
  %v6818 = vmin.f32 %v6817, %v2519
  %v6819 = vmin.f32 %v6818, %v2525
  %v6820 = vmin.f32 %v6819, %v2529
  %v6821 = vmin.f32 %v6820, %v2535
  %v6822 = vmin.f32 %v6821, %v2539
  %v6823 = vmin.f32 %v6822, %v2545
  %v6824 = vmin.f32 %v6823, %v2549
  %v6825 = vmin.f32 %v6824, %v2555
  %v6826 = vmin.f32 %v6825, %v2559
  %v6827 = vmin.f32 %v6826, %v2565
  %v6828 = vmin.f32 %v6827, %v2569
  %v6829 = vmin.f32 %v6828, %v2575
  %v6830 = vmin.f32 %v6829, %v2579
  %v6831 = vmin.f32 %v6830, %v2585
  %v6832 = vmin.f32 %v6831, %v2589
  %v6833 = vmin.f32 %v6832, %v2595
  %v6834 = vmin.f32 %v6833, %v2599
  %v6835 = vmin.f32 %v6834, %v2605
  %v6836 = vmin.f32 %v6835, %v2609
  %v6837 = vmin.f32 %v6836, %v2615
  %v6838 = vmin.f32 %v6837, %v2619
  %v6839 = vmin.f32 %v6838, %v2625
  %v6840 = vmin.f32 %v6839, %v2629
  %v6841 = vmin.f32 %v6840, %v2635
  %v6842 = vmin.f32 %v6841, %v2639
  %v6843 = vmin.f32 %v6842, %v2645
  %v6844 = vmin.f32 %v6843, %v2649
  %v6845 = vmin.f32 %v6844, %v2655
  %v6846 = vmin.f32 %v6845, %v2659
  %v6847 = vmin.f32 %v6846, %v2665
  %v6848 = vmin.f32 %v6847, %v2669
  %v6849 = vmin.f32 %v6848, %v2675
  %v6850 = vmin.f32 %v6849, %v2679
  %v6851 = vmin.f32 %v6850, %v2685
  %v6852 = vmin.f32 %v6851, %v2689
  %v6853 = vmin.f32 %v6852, %v2695
  %v6854 = vmin.f32 %v6853, %v2699
  %v6855 = vmin.f32 %v6854, %v2705
  %v6856 = vmin.f32 %v6855, %v2709
  %v6857 = vmin.f32 %v6856, %v2715
  %v6858 = vmin.f32 %v6857, %v2719
  %v6859 = vmin.f32 %v6858, %v2725
  %v6860 = vmin.f32 %v6859, %v2729
  %v6861 = vmin.f32 %v6860, %v2735
  %v6862 = vmin.f32 %v6861, %v2739
  %v6863 = vmin.f32 %v6862, %v2745
  %v6864 = vmin.f32 %v6863, %v2749
  %v6865 = vmin.f32 %v6864, %v2755
  %v6866 = vmin.f32 %v6865, %v2759
  %v6867 = vmin.f32 %v6866, %v2765
  %v6868 = vmin.f32 %v6867, %v2769
  %v6869 = vmin.f32 %v6868, %v2775
  %v6870 = vmin.f32 %v6869, %v2779
  %v6871 = vmin.f32 %v6870, %v2785
  %v6872 = vmin.f32 %v6871, %v2789
  %v6873 = vmin.f32 %v6872, %v2795
  %v6874 = vmin.f32 %v6873, %v2799
  %v6875 = vmin.f32 %v6874, %v2805
  %v6876 = vmin.f32 %v6875, %v2809
  %v6877 = vmin.f32 %v6876, %v2815
  %v6878 = vmin.f32 %v6877, %v2819
  %v6879 = vmin.f32 %v6878, %v2825
  %v6880 = vmin.f32 %v6879, %v2829
  %v6881 = vmin.f32 %v6880, %v2835
  %v6882 = vmin.f32 %v6881, %v2839
  %v6883 = vmin.f32 %v6882, %v2845
  %v6884 = vmin.f32 %v6883, %v2849
  %v6885 = vmin.f32 %v6884, %v2855
  %v6886 = vmin.f32 %v6885, %v2859
  %v6887 = vrot.slane %v6886, 4
  %v6888 = vmin.f32 %v6886, %v6887
  %v6889 = vrot.slane %v6888, 2
  %v6890 = vmin.f32 %v6888, %v6889
  %v6891 = vrot.slane %v6890, 1
  %v6892 = vmin.f32 %v6890, %v6891
  %v6893 = vmin.f32 %v2227, %v2231
  %v6894 = vmin.f32 %v6893, %v2237
  %v6895 = vmin.f32 %v6894, %v2241
  %v6896 = vmin.f32 %v6895, %v2247
  %v6897 = vmin.f32 %v6896, %v2251
  %v6898 = vmin.f32 %v6897, %v2257
  %v6899 = vmin.f32 %v6898, %v2261
  %v6900 = vmin.f32 %v6899, %v2267
  %v6901 = vmin.f32 %v6900, %v2271
  %v6902 = vmin.f32 %v6901, %v2277
  %v6903 = vmin.f32 %v6902, %v2281
  %v6904 = vmin.f32 %v6903, %v2287
  %v6905 = vmin.f32 %v6904, %v2291
  %v6906 = vmin.f32 %v6905, %v2297
  %v6907 = vmin.f32 %v6906, %v2301
  %v6908 = vmin.f32 %v6907, %v2307
  %v6909 = vmin.f32 %v6908, %v2311
  %v6910 = vmin.f32 %v6909, %v2317
  %v6911 = vmin.f32 %v6910, %v2321
  %v6912 = vmin.f32 %v6911, %v2327
  %v6913 = vmin.f32 %v6912, %v2331
  %v6914 = vmin.f32 %v6913, %v2337
  %v6915 = vmin.f32 %v6914, %v2341
  %v6916 = vmin.f32 %v6915, %v2347
  %v6917 = vmin.f32 %v6916, %v2351
  %v6918 = vmin.f32 %v6917, %v2357
  %v6919 = vmin.f32 %v6918, %v2361
  %v6920 = vmin.f32 %v6919, %v2367
  %v6921 = vmin.f32 %v6920, %v2371
  %v6922 = vmin.f32 %v6921, %v2377
  %v6923 = vmin.f32 %v6922, %v2381
  %v6924 = vmin.f32 %v6923, %v2387
  %v6925 = vmin.f32 %v6924, %v2391
  %v6926 = vmin.f32 %v6925, %v2397
  %v6927 = vmin.f32 %v6926, %v2401
  %v6928 = vmin.f32 %v6927, %v2407
  %v6929 = vmin.f32 %v6928, %v2411
  %v6930 = vmin.f32 %v6929, %v2417
  %v6931 = vmin.f32 %v6930, %v2421
  %v6932 = vmin.f32 %v6931, %v2427
  %v6933 = vmin.f32 %v6932, %v2431
  %v6934 = vmin.f32 %v6933, %v2437
  %v6935 = vmin.f32 %v6934, %v2441
  %v6936 = vmin.f32 %v6935, %v2447
  %v6937 = vmin.f32 %v6936, %v2451
  %v6938 = vmin.f32 %v6937, %v2457
  %v6939 = vmin.f32 %v6938, %v2461
  %v6940 = vmin.f32 %v6939, %v2467
  %v6941 = vmin.f32 %v6940, %v2471
  %v6942 = vmin.f32 %v6941, %v2477
  %v6943 = vmin.f32 %v6942, %v2481
  %v6944 = vmin.f32 %v6943, %v2487
  %v6945 = vmin.f32 %v6944, %v2491
  %v6946 = vmin.f32 %v6945, %v2497
  %v6947 = vmin.f32 %v6946, %v2501
  %v6948 = vmin.f32 %v6947, %v2507
  %v6949 = vmin.f32 %v6948, %v2511
  %v6950 = vmin.f32 %v6949, %v2517
  %v6951 = vmin.f32 %v6950, %v2521
  %v6952 = vmin.f32 %v6951, %v2527
  %v6953 = vmin.f32 %v6952, %v2531
  %v6954 = vmin.f32 %v6953, %v2537
  %v6955 = vmin.f32 %v6954, %v2541
  %v6956 = vmin.f32 %v6955, %v2547
  %v6957 = vmin.f32 %v6956, %v2551
  %v6958 = vmin.f32 %v6957, %v2557
  %v6959 = vmin.f32 %v6958, %v2561
  %v6960 = vmin.f32 %v6959, %v2567
  %v6961 = vmin.f32 %v6960, %v2571
  %v6962 = vmin.f32 %v6961, %v2577
  %v6963 = vmin.f32 %v6962, %v2581
  %v6964 = vmin.f32 %v6963, %v2587
  %v6965 = vmin.f32 %v6964, %v2591
  %v6966 = vmin.f32 %v6965, %v2597
  %v6967 = vmin.f32 %v6966, %v2601
  %v6968 = vmin.f32 %v6967, %v2607
  %v6969 = vmin.f32 %v6968, %v2611
  %v6970 = vmin.f32 %v6969, %v2617
  %v6971 = vmin.f32 %v6970, %v2621
  %v6972 = vmin.f32 %v6971, %v2627
  %v6973 = vmin.f32 %v6972, %v2631
  %v6974 = vmin.f32 %v6973, %v2637
  %v6975 = vmin.f32 %v6974, %v2641
  %v6976 = vmin.f32 %v6975, %v2647
  %v6977 = vmin.f32 %v6976, %v2651
  %v6978 = vmin.f32 %v6977, %v2657
  %v6979 = vmin.f32 %v6978, %v2661
  %v6980 = vmin.f32 %v6979, %v2667
  %v6981 = vmin.f32 %v6980, %v2671
  %v6982 = vmin.f32 %v6981, %v2677
  %v6983 = vmin.f32 %v6982, %v2681
  %v6984 = vmin.f32 %v6983, %v2687
  %v6985 = vmin.f32 %v6984, %v2691
  %v6986 = vmin.f32 %v6985, %v2697
  %v6987 = vmin.f32 %v6986, %v2701
  %v6988 = vmin.f32 %v6987, %v2707
  %v6989 = vmin.f32 %v6988, %v2711
  %v6990 = vmin.f32 %v6989, %v2717
  %v6991 = vmin.f32 %v6990, %v2721
  %v6992 = vmin.f32 %v6991, %v2727
  %v6993 = vmin.f32 %v6992, %v2731
  %v6994 = vmin.f32 %v6993, %v2737
  %v6995 = vmin.f32 %v6994, %v2741
  %v6996 = vmin.f32 %v6995, %v2747
  %v6997 = vmin.f32 %v6996, %v2751
  %v6998 = vmin.f32 %v6997, %v2757
  %v6999 = vmin.f32 %v6998, %v2761
  %v7000 = vmin.f32 %v6999, %v2767
  %v7001 = vmin.f32 %v7000, %v2771
  %v7002 = vmin.f32 %v7001, %v2777
  %v7003 = vmin.f32 %v7002, %v2781
  %v7004 = vmin.f32 %v7003, %v2787
  %v7005 = vmin.f32 %v7004, %v2791
  %v7006 = vmin.f32 %v7005, %v2797
  %v7007 = vmin.f32 %v7006, %v2801
  %v7008 = vmin.f32 %v7007, %v2807
  %v7009 = vmin.f32 %v7008, %v2811
  %v7010 = vmin.f32 %v7009, %v2817
  %v7011 = vmin.f32 %v7010, %v2821
  %v7012 = vmin.f32 %v7011, %v2827
  %v7013 = vmin.f32 %v7012, %v2831
  %v7014 = vmin.f32 %v7013, %v2837
  %v7015 = vmin.f32 %v7014, %v2841
  %v7016 = vmin.f32 %v7015, %v2847
  %v7017 = vmin.f32 %v7016, %v2851
  %v7018 = vmin.f32 %v7017, %v2857
  %v7019 = vmin.f32 %v7018, %v2861
  %v7020 = vrot.slane %v7019, 4
  %v7021 = vmin.f32 %v7019, %v7020
  %v7022 = vrot.slane %v7021, 2
  %v7023 = vmin.f32 %v7021, %v7022
  %v7024 = vrot.slane %v7023, 1
  %v7025 = vmin.f32 %v7023, %v7024
  %v7026 = vmin.f32 %v2898, %v2902
  %v7027 = vmin.f32 %v7026, %v2908
  %v7028 = vmin.f32 %v7027, %v2912
  %v7029 = vmin.f32 %v7028, %v2918
  %v7030 = vmin.f32 %v7029, %v2922
  %v7031 = vmin.f32 %v7030, %v2928
  %v7032 = vmin.f32 %v7031, %v2932
  %v7033 = vmin.f32 %v7032, %v2938
  %v7034 = vmin.f32 %v7033, %v2942
  %v7035 = vmin.f32 %v7034, %v2948
  %v7036 = vmin.f32 %v7035, %v2952
  %v7037 = vmin.f32 %v7036, %v2958
  %v7038 = vmin.f32 %v7037, %v2962
  %v7039 = vmin.f32 %v7038, %v2968
  %v7040 = vmin.f32 %v7039, %v2972
  %v7041 = vmin.f32 %v7040, %v2978
  %v7042 = vmin.f32 %v7041, %v2982
  %v7043 = vmin.f32 %v7042, %v2988
  %v7044 = vmin.f32 %v7043, %v2992
  %v7045 = vmin.f32 %v7044, %v2998
  %v7046 = vmin.f32 %v7045, %v3002
  %v7047 = vmin.f32 %v7046, %v3008
  %v7048 = vmin.f32 %v7047, %v3012
  %v7049 = vmin.f32 %v7048, %v3018
  %v7050 = vmin.f32 %v7049, %v3022
  %v7051 = vmin.f32 %v7050, %v3028
  %v7052 = vmin.f32 %v7051, %v3032
  %v7053 = vmin.f32 %v7052, %v3038
  %v7054 = vmin.f32 %v7053, %v3042
  %v7055 = vmin.f32 %v7054, %v3048
  %v7056 = vmin.f32 %v7055, %v3052
  %v7057 = vmin.f32 %v7056, %v3058
  %v7058 = vmin.f32 %v7057, %v3062
  %v7059 = vmin.f32 %v7058, %v3068
  %v7060 = vmin.f32 %v7059, %v3072
  %v7061 = vmin.f32 %v7060, %v3078
  %v7062 = vmin.f32 %v7061, %v3082
  %v7063 = vmin.f32 %v7062, %v3088
  %v7064 = vmin.f32 %v7063, %v3092
  %v7065 = vmin.f32 %v7064, %v3098
  %v7066 = vmin.f32 %v7065, %v3102
  %v7067 = vmin.f32 %v7066, %v3108
  %v7068 = vmin.f32 %v7067, %v3112
  %v7069 = vmin.f32 %v7068, %v3118
  %v7070 = vmin.f32 %v7069, %v3122
  %v7071 = vmin.f32 %v7070, %v3128
  %v7072 = vmin.f32 %v7071, %v3132
  %v7073 = vmin.f32 %v7072, %v3138
  %v7074 = vmin.f32 %v7073, %v3142
  %v7075 = vmin.f32 %v7074, %v3148
  %v7076 = vmin.f32 %v7075, %v3152
  %v7077 = vmin.f32 %v7076, %v3158
  %v7078 = vmin.f32 %v7077, %v3162
  %v7079 = vmin.f32 %v7078, %v3168
  %v7080 = vmin.f32 %v7079, %v3172
  %v7081 = vmin.f32 %v7080, %v3178
  %v7082 = vmin.f32 %v7081, %v3182
  %v7083 = vmin.f32 %v7082, %v3188
  %v7084 = vmin.f32 %v7083, %v3192
  %v7085 = vmin.f32 %v7084, %v3198
  %v7086 = vmin.f32 %v7085, %v3202
  %v7087 = vmin.f32 %v7086, %v3208
  %v7088 = vmin.f32 %v7087, %v3212
  %v7089 = vmin.f32 %v7088, %v3218
  %v7090 = vmin.f32 %v7089, %v3222
  %v7091 = vmin.f32 %v7090, %v3228
  %v7092 = vmin.f32 %v7091, %v3232
  %v7093 = vmin.f32 %v7092, %v3238
  %v7094 = vmin.f32 %v7093, %v3242
  %v7095 = vmin.f32 %v7094, %v3248
  %v7096 = vmin.f32 %v7095, %v3252
  %v7097 = vmin.f32 %v7096, %v3258
  %v7098 = vmin.f32 %v7097, %v3262
  %v7099 = vmin.f32 %v7098, %v3268
  %v7100 = vmin.f32 %v7099, %v3272
  %v7101 = vmin.f32 %v7100, %v3278
  %v7102 = vmin.f32 %v7101, %v3282
  %v7103 = vmin.f32 %v7102, %v3288
  %v7104 = vmin.f32 %v7103, %v3292
  %v7105 = vmin.f32 %v7104, %v3298
  %v7106 = vmin.f32 %v7105, %v3302
  %v7107 = vmin.f32 %v7106, %v3308
  %v7108 = vmin.f32 %v7107, %v3312
  %v7109 = vmin.f32 %v7108, %v3318
  %v7110 = vmin.f32 %v7109, %v3322
  %v7111 = vmin.f32 %v7110, %v3328
  %v7112 = vmin.f32 %v7111, %v3332
  %v7113 = vmin.f32 %v7112, %v3338
  %v7114 = vmin.f32 %v7113, %v3342
  %v7115 = vmin.f32 %v7114, %v3348
  %v7116 = vmin.f32 %v7115, %v3352
  %v7117 = vmin.f32 %v7116, %v3358
  %v7118 = vmin.f32 %v7117, %v3362
  %v7119 = vmin.f32 %v7118, %v3368
  %v7120 = vmin.f32 %v7119, %v3372
  %v7121 = vmin.f32 %v7120, %v3378
  %v7122 = vmin.f32 %v7121, %v3382
  %v7123 = vmin.f32 %v7122, %v3388
  %v7124 = vmin.f32 %v7123, %v3392
  %v7125 = vmin.f32 %v7124, %v3398
  %v7126 = vmin.f32 %v7125, %v3402
  %v7127 = vmin.f32 %v7126, %v3408
  %v7128 = vmin.f32 %v7127, %v3412
  %v7129 = vmin.f32 %v7128, %v3418
  %v7130 = vmin.f32 %v7129, %v3422
  %v7131 = vmin.f32 %v7130, %v3428
  %v7132 = vmin.f32 %v7131, %v3432
  %v7133 = vmin.f32 %v7132, %v3438
  %v7134 = vmin.f32 %v7133, %v3442
  %v7135 = vmin.f32 %v7134, %v3448
  %v7136 = vmin.f32 %v7135, %v3452
  %v7137 = vmin.f32 %v7136, %v3458
  %v7138 = vmin.f32 %v7137, %v3462
  %v7139 = vmin.f32 %v7138, %v3468
  %v7140 = vmin.f32 %v7139, %v3472
  %v7141 = vmin.f32 %v7140, %v3478
  %v7142 = vmin.f32 %v7141, %v3482
  %v7143 = vmin.f32 %v7142, %v3488
  %v7144 = vmin.f32 %v7143, %v3492
  %v7145 = vmin.f32 %v7144, %v3498
  %v7146 = vmin.f32 %v7145, %v3502
  %v7147 = vmin.f32 %v7146, %v3508
  %v7148 = vmin.f32 %v7147, %v3512
  %v7149 = vmin.f32 %v7148, %v3518
  %v7150 = vmin.f32 %v7149, %v3522
  %v7151 = vmin.f32 %v7150, %v3528
  %v7152 = vmin.f32 %v7151, %v3532
  %v7153 = vrot.slane %v7152, 4
  %v7154 = vmin.f32 %v7152, %v7153
  %v7155 = vrot.slane %v7154, 2
  %v7156 = vmin.f32 %v7154, %v7155
  %v7157 = vrot.slane %v7156, 1
  %v7158 = vmin.f32 %v7156, %v7157
  %v7159 = vmin.f32 %v2900, %v2904
  %v7160 = vmin.f32 %v7159, %v2910
  %v7161 = vmin.f32 %v7160, %v2914
  %v7162 = vmin.f32 %v7161, %v2920
  %v7163 = vmin.f32 %v7162, %v2924
  %v7164 = vmin.f32 %v7163, %v2930
  %v7165 = vmin.f32 %v7164, %v2934
  %v7166 = vmin.f32 %v7165, %v2940
  %v7167 = vmin.f32 %v7166, %v2944
  %v7168 = vmin.f32 %v7167, %v2950
  %v7169 = vmin.f32 %v7168, %v2954
  %v7170 = vmin.f32 %v7169, %v2960
  %v7171 = vmin.f32 %v7170, %v2964
  %v7172 = vmin.f32 %v7171, %v2970
  %v7173 = vmin.f32 %v7172, %v2974
  %v7174 = vmin.f32 %v7173, %v2980
  %v7175 = vmin.f32 %v7174, %v2984
  %v7176 = vmin.f32 %v7175, %v2990
  %v7177 = vmin.f32 %v7176, %v2994
  %v7178 = vmin.f32 %v7177, %v3000
  %v7179 = vmin.f32 %v7178, %v3004
  %v7180 = vmin.f32 %v7179, %v3010
  %v7181 = vmin.f32 %v7180, %v3014
  %v7182 = vmin.f32 %v7181, %v3020
  %v7183 = vmin.f32 %v7182, %v3024
  %v7184 = vmin.f32 %v7183, %v3030
  %v7185 = vmin.f32 %v7184, %v3034
  %v7186 = vmin.f32 %v7185, %v3040
  %v7187 = vmin.f32 %v7186, %v3044
  %v7188 = vmin.f32 %v7187, %v3050
  %v7189 = vmin.f32 %v7188, %v3054
  %v7190 = vmin.f32 %v7189, %v3060
  %v7191 = vmin.f32 %v7190, %v3064
  %v7192 = vmin.f32 %v7191, %v3070
  %v7193 = vmin.f32 %v7192, %v3074
  %v7194 = vmin.f32 %v7193, %v3080
  %v7195 = vmin.f32 %v7194, %v3084
  %v7196 = vmin.f32 %v7195, %v3090
  %v7197 = vmin.f32 %v7196, %v3094
  %v7198 = vmin.f32 %v7197, %v3100
  %v7199 = vmin.f32 %v7198, %v3104
  %v7200 = vmin.f32 %v7199, %v3110
  %v7201 = vmin.f32 %v7200, %v3114
  %v7202 = vmin.f32 %v7201, %v3120
  %v7203 = vmin.f32 %v7202, %v3124
  %v7204 = vmin.f32 %v7203, %v3130
  %v7205 = vmin.f32 %v7204, %v3134
  %v7206 = vmin.f32 %v7205, %v3140
  %v7207 = vmin.f32 %v7206, %v3144
  %v7208 = vmin.f32 %v7207, %v3150
  %v7209 = vmin.f32 %v7208, %v3154
  %v7210 = vmin.f32 %v7209, %v3160
  %v7211 = vmin.f32 %v7210, %v3164
  %v7212 = vmin.f32 %v7211, %v3170
  %v7213 = vmin.f32 %v7212, %v3174
  %v7214 = vmin.f32 %v7213, %v3180
  %v7215 = vmin.f32 %v7214, %v3184
  %v7216 = vmin.f32 %v7215, %v3190
  %v7217 = vmin.f32 %v7216, %v3194
  %v7218 = vmin.f32 %v7217, %v3200
  %v7219 = vmin.f32 %v7218, %v3204
  %v7220 = vmin.f32 %v7219, %v3210
  %v7221 = vmin.f32 %v7220, %v3214
  %v7222 = vmin.f32 %v7221, %v3220
  %v7223 = vmin.f32 %v7222, %v3224
  %v7224 = vmin.f32 %v7223, %v3230
  %v7225 = vmin.f32 %v7224, %v3234
  %v7226 = vmin.f32 %v7225, %v3240
  %v7227 = vmin.f32 %v7226, %v3244
  %v7228 = vmin.f32 %v7227, %v3250
  %v7229 = vmin.f32 %v7228, %v3254
  %v7230 = vmin.f32 %v7229, %v3260
  %v7231 = vmin.f32 %v7230, %v3264
  %v7232 = vmin.f32 %v7231, %v3270
  %v7233 = vmin.f32 %v7232, %v3274
  %v7234 = vmin.f32 %v7233, %v3280
  %v7235 = vmin.f32 %v7234, %v3284
  %v7236 = vmin.f32 %v7235, %v3290
  %v7237 = vmin.f32 %v7236, %v3294
  %v7238 = vmin.f32 %v7237, %v3300
  %v7239 = vmin.f32 %v7238, %v3304
  %v7240 = vmin.f32 %v7239, %v3310
  %v7241 = vmin.f32 %v7240, %v3314
  %v7242 = vmin.f32 %v7241, %v3320
  %v7243 = vmin.f32 %v7242, %v3324
  %v7244 = vmin.f32 %v7243, %v3330
  %v7245 = vmin.f32 %v7244, %v3334
  %v7246 = vmin.f32 %v7245, %v3340
  %v7247 = vmin.f32 %v7246, %v3344
  %v7248 = vmin.f32 %v7247, %v3350
  %v7249 = vmin.f32 %v7248, %v3354
  %v7250 = vmin.f32 %v7249, %v3360
  %v7251 = vmin.f32 %v7250, %v3364
  %v7252 = vmin.f32 %v7251, %v3370
  %v7253 = vmin.f32 %v7252, %v3374
  %v7254 = vmin.f32 %v7253, %v3380
  %v7255 = vmin.f32 %v7254, %v3384
  %v7256 = vmin.f32 %v7255, %v3390
  %v7257 = vmin.f32 %v7256, %v3394
  %v7258 = vmin.f32 %v7257, %v3400
  %v7259 = vmin.f32 %v7258, %v3404
  %v7260 = vmin.f32 %v7259, %v3410
  %v7261 = vmin.f32 %v7260, %v3414
  %v7262 = vmin.f32 %v7261, %v3420
  %v7263 = vmin.f32 %v7262, %v3424
  %v7264 = vmin.f32 %v7263, %v3430
  %v7265 = vmin.f32 %v7264, %v3434
  %v7266 = vmin.f32 %v7265, %v3440
  %v7267 = vmin.f32 %v7266, %v3444
  %v7268 = vmin.f32 %v7267, %v3450
  %v7269 = vmin.f32 %v7268, %v3454
  %v7270 = vmin.f32 %v7269, %v3460
  %v7271 = vmin.f32 %v7270, %v3464
  %v7272 = vmin.f32 %v7271, %v3470
  %v7273 = vmin.f32 %v7272, %v3474
  %v7274 = vmin.f32 %v7273, %v3480
  %v7275 = vmin.f32 %v7274, %v3484
  %v7276 = vmin.f32 %v7275, %v3490
  %v7277 = vmin.f32 %v7276, %v3494
  %v7278 = vmin.f32 %v7277, %v3500
  %v7279 = vmin.f32 %v7278, %v3504
  %v7280 = vmin.f32 %v7279, %v3510
  %v7281 = vmin.f32 %v7280, %v3514
  %v7282 = vmin.f32 %v7281, %v3520
  %v7283 = vmin.f32 %v7282, %v3524
  %v7284 = vmin.f32 %v7283, %v3530
  %v7285 = vmin.f32 %v7284, %v3534
  %v7286 = vrot.slane %v7285, 4
  %v7287 = vmin.f32 %v7285, %v7286
  %v7288 = vrot.slane %v7287, 2
  %v7289 = vmin.f32 %v7287, %v7288
  %v7290 = vrot.slane %v7289, 1
  %v7291 = vmin.f32 %v7289, %v7290
  %v7292 = vmin.f32 %v3571, %v3575
  %v7293 = vmin.f32 %v7292, %v3581
  %v7294 = vmin.f32 %v7293, %v3585
  %v7295 = vmin.f32 %v7294, %v3591
  %v7296 = vmin.f32 %v7295, %v3595
  %v7297 = vmin.f32 %v7296, %v3601
  %v7298 = vmin.f32 %v7297, %v3605
  %v7299 = vmin.f32 %v7298, %v3611
  %v7300 = vmin.f32 %v7299, %v3615
  %v7301 = vmin.f32 %v7300, %v3621
  %v7302 = vmin.f32 %v7301, %v3625
  %v7303 = vmin.f32 %v7302, %v3631
  %v7304 = vmin.f32 %v7303, %v3635
  %v7305 = vmin.f32 %v7304, %v3641
  %v7306 = vmin.f32 %v7305, %v3645
  %v7307 = vmin.f32 %v7306, %v3651
  %v7308 = vmin.f32 %v7307, %v3655
  %v7309 = vmin.f32 %v7308, %v3661
  %v7310 = vmin.f32 %v7309, %v3665
  %v7311 = vmin.f32 %v7310, %v3671
  %v7312 = vmin.f32 %v7311, %v3675
  %v7313 = vmin.f32 %v7312, %v3681
  %v7314 = vmin.f32 %v7313, %v3685
  %v7315 = vmin.f32 %v7314, %v3691
  %v7316 = vmin.f32 %v7315, %v3695
  %v7317 = vmin.f32 %v7316, %v3701
  %v7318 = vmin.f32 %v7317, %v3705
  %v7319 = vmin.f32 %v7318, %v3711
  %v7320 = vmin.f32 %v7319, %v3715
  %v7321 = vmin.f32 %v7320, %v3721
  %v7322 = vmin.f32 %v7321, %v3725
  %v7323 = vmin.f32 %v7322, %v3731
  %v7324 = vmin.f32 %v7323, %v3735
  %v7325 = vmin.f32 %v7324, %v3741
  %v7326 = vmin.f32 %v7325, %v3745
  %v7327 = vmin.f32 %v7326, %v3751
  %v7328 = vmin.f32 %v7327, %v3755
  %v7329 = vmin.f32 %v7328, %v3761
  %v7330 = vmin.f32 %v7329, %v3765
  %v7331 = vmin.f32 %v7330, %v3771
  %v7332 = vmin.f32 %v7331, %v3775
  %v7333 = vmin.f32 %v7332, %v3781
  %v7334 = vmin.f32 %v7333, %v3785
  %v7335 = vmin.f32 %v7334, %v3791
  %v7336 = vmin.f32 %v7335, %v3795
  %v7337 = vmin.f32 %v7336, %v3801
  %v7338 = vmin.f32 %v7337, %v3805
  %v7339 = vmin.f32 %v7338, %v3811
  %v7340 = vmin.f32 %v7339, %v3815
  %v7341 = vmin.f32 %v7340, %v3821
  %v7342 = vmin.f32 %v7341, %v3825
  %v7343 = vmin.f32 %v7342, %v3831
  %v7344 = vmin.f32 %v7343, %v3835
  %v7345 = vmin.f32 %v7344, %v3841
  %v7346 = vmin.f32 %v7345, %v3845
  %v7347 = vmin.f32 %v7346, %v3851
  %v7348 = vmin.f32 %v7347, %v3855
  %v7349 = vmin.f32 %v7348, %v3861
  %v7350 = vmin.f32 %v7349, %v3865
  %v7351 = vmin.f32 %v7350, %v3871
  %v7352 = vmin.f32 %v7351, %v3875
  %v7353 = vmin.f32 %v7352, %v3881
  %v7354 = vmin.f32 %v7353, %v3885
  %v7355 = vmin.f32 %v7354, %v3891
  %v7356 = vmin.f32 %v7355, %v3895
  %v7357 = vmin.f32 %v7356, %v3901
  %v7358 = vmin.f32 %v7357, %v3905
  %v7359 = vmin.f32 %v7358, %v3911
  %v7360 = vmin.f32 %v7359, %v3915
  %v7361 = vmin.f32 %v7360, %v3921
  %v7362 = vmin.f32 %v7361, %v3925
  %v7363 = vmin.f32 %v7362, %v3931
  %v7364 = vmin.f32 %v7363, %v3935
  %v7365 = vmin.f32 %v7364, %v3941
  %v7366 = vmin.f32 %v7365, %v3945
  %v7367 = vmin.f32 %v7366, %v3951
  %v7368 = vmin.f32 %v7367, %v3955
  %v7369 = vmin.f32 %v7368, %v3961
  %v7370 = vmin.f32 %v7369, %v3965
  %v7371 = vmin.f32 %v7370, %v3971
  %v7372 = vmin.f32 %v7371, %v3975
  %v7373 = vmin.f32 %v7372, %v3981
  %v7374 = vmin.f32 %v7373, %v3985
  %v7375 = vmin.f32 %v7374, %v3991
  %v7376 = vmin.f32 %v7375, %v3995
  %v7377 = vmin.f32 %v7376, %v4001
  %v7378 = vmin.f32 %v7377, %v4005
  %v7379 = vmin.f32 %v7378, %v4011
  %v7380 = vmin.f32 %v7379, %v4015
  %v7381 = vmin.f32 %v7380, %v4021
  %v7382 = vmin.f32 %v7381, %v4025
  %v7383 = vmin.f32 %v7382, %v4031
  %v7384 = vmin.f32 %v7383, %v4035
  %v7385 = vmin.f32 %v7384, %v4041
  %v7386 = vmin.f32 %v7385, %v4045
  %v7387 = vmin.f32 %v7386, %v4051
  %v7388 = vmin.f32 %v7387, %v4055
  %v7389 = vmin.f32 %v7388, %v4061
  %v7390 = vmin.f32 %v7389, %v4065
  %v7391 = vmin.f32 %v7390, %v4071
  %v7392 = vmin.f32 %v7391, %v4075
  %v7393 = vmin.f32 %v7392, %v4081
  %v7394 = vmin.f32 %v7393, %v4085
  %v7395 = vmin.f32 %v7394, %v4091
  %v7396 = vmin.f32 %v7395, %v4095
  %v7397 = vmin.f32 %v7396, %v4101
  %v7398 = vmin.f32 %v7397, %v4105
  %v7399 = vmin.f32 %v7398, %v4111
  %v7400 = vmin.f32 %v7399, %v4115
  %v7401 = vmin.f32 %v7400, %v4121
  %v7402 = vmin.f32 %v7401, %v4125
  %v7403 = vmin.f32 %v7402, %v4131
  %v7404 = vmin.f32 %v7403, %v4135
  %v7405 = vmin.f32 %v7404, %v4141
  %v7406 = vmin.f32 %v7405, %v4145
  %v7407 = vmin.f32 %v7406, %v4151
  %v7408 = vmin.f32 %v7407, %v4155
  %v7409 = vmin.f32 %v7408, %v4161
  %v7410 = vmin.f32 %v7409, %v4165
  %v7411 = vmin.f32 %v7410, %v4171
  %v7412 = vmin.f32 %v7411, %v4175
  %v7413 = vmin.f32 %v7412, %v4181
  %v7414 = vmin.f32 %v7413, %v4185
  %v7415 = vmin.f32 %v7414, %v4191
  %v7416 = vmin.f32 %v7415, %v4195
  %v7417 = vmin.f32 %v7416, %v4201
  %v7418 = vmin.f32 %v7417, %v4205
  %v7419 = vrot.slane %v7418, 4
  %v7420 = vmin.f32 %v7418, %v7419
  %v7421 = vrot.slane %v7420, 2
  %v7422 = vmin.f32 %v7420, %v7421
  %v7423 = vrot.slane %v7422, 1
  %v7424 = vmin.f32 %v7422, %v7423
  %v7425 = vmin.f32 %v3573, %v3577
  %v7426 = vmin.f32 %v7425, %v3583
  %v7427 = vmin.f32 %v7426, %v3587
  %v7428 = vmin.f32 %v7427, %v3593
  %v7429 = vmin.f32 %v7428, %v3597
  %v7430 = vmin.f32 %v7429, %v3603
  %v7431 = vmin.f32 %v7430, %v3607
  %v7432 = vmin.f32 %v7431, %v3613
  %v7433 = vmin.f32 %v7432, %v3617
  %v7434 = vmin.f32 %v7433, %v3623
  %v7435 = vmin.f32 %v7434, %v3627
  %v7436 = vmin.f32 %v7435, %v3633
  %v7437 = vmin.f32 %v7436, %v3637
  %v7438 = vmin.f32 %v7437, %v3643
  %v7439 = vmin.f32 %v7438, %v3647
  %v7440 = vmin.f32 %v7439, %v3653
  %v7441 = vmin.f32 %v7440, %v3657
  %v7442 = vmin.f32 %v7441, %v3663
  %v7443 = vmin.f32 %v7442, %v3667
  %v7444 = vmin.f32 %v7443, %v3673
  %v7445 = vmin.f32 %v7444, %v3677
  %v7446 = vmin.f32 %v7445, %v3683
  %v7447 = vmin.f32 %v7446, %v3687
  %v7448 = vmin.f32 %v7447, %v3693
  %v7449 = vmin.f32 %v7448, %v3697
  %v7450 = vmin.f32 %v7449, %v3703
  %v7451 = vmin.f32 %v7450, %v3707
  %v7452 = vmin.f32 %v7451, %v3713
  %v7453 = vmin.f32 %v7452, %v3717
  %v7454 = vmin.f32 %v7453, %v3723
  %v7455 = vmin.f32 %v7454, %v3727
  %v7456 = vmin.f32 %v7455, %v3733
  %v7457 = vmin.f32 %v7456, %v3737
  %v7458 = vmin.f32 %v7457, %v3743
  %v7459 = vmin.f32 %v7458, %v3747
  %v7460 = vmin.f32 %v7459, %v3753
  %v7461 = vmin.f32 %v7460, %v3757
  %v7462 = vmin.f32 %v7461, %v3763
  %v7463 = vmin.f32 %v7462, %v3767
  %v7464 = vmin.f32 %v7463, %v3773
  %v7465 = vmin.f32 %v7464, %v3777
  %v7466 = vmin.f32 %v7465, %v3783
  %v7467 = vmin.f32 %v7466, %v3787
  %v7468 = vmin.f32 %v7467, %v3793
  %v7469 = vmin.f32 %v7468, %v3797
  %v7470 = vmin.f32 %v7469, %v3803
  %v7471 = vmin.f32 %v7470, %v3807
  %v7472 = vmin.f32 %v7471, %v3813
  %v7473 = vmin.f32 %v7472, %v3817
  %v7474 = vmin.f32 %v7473, %v3823
  %v7475 = vmin.f32 %v7474, %v3827
  %v7476 = vmin.f32 %v7475, %v3833
  %v7477 = vmin.f32 %v7476, %v3837
  %v7478 = vmin.f32 %v7477, %v3843
  %v7479 = vmin.f32 %v7478, %v3847
  %v7480 = vmin.f32 %v7479, %v3853
  %v7481 = vmin.f32 %v7480, %v3857
  %v7482 = vmin.f32 %v7481, %v3863
  %v7483 = vmin.f32 %v7482, %v3867
  %v7484 = vmin.f32 %v7483, %v3873
  %v7485 = vmin.f32 %v7484, %v3877
  %v7486 = vmin.f32 %v7485, %v3883
  %v7487 = vmin.f32 %v7486, %v3887
  %v7488 = vmin.f32 %v7487, %v3893
  %v7489 = vmin.f32 %v7488, %v3897
  %v7490 = vmin.f32 %v7489, %v3903
  %v7491 = vmin.f32 %v7490, %v3907
  %v7492 = vmin.f32 %v7491, %v3913
  %v7493 = vmin.f32 %v7492, %v3917
  %v7494 = vmin.f32 %v7493, %v3923
  %v7495 = vmin.f32 %v7494, %v3927
  %v7496 = vmin.f32 %v7495, %v3933
  %v7497 = vmin.f32 %v7496, %v3937
  %v7498 = vmin.f32 %v7497, %v3943
  %v7499 = vmin.f32 %v7498, %v3947
  %v7500 = vmin.f32 %v7499, %v3953
  %v7501 = vmin.f32 %v7500, %v3957
  %v7502 = vmin.f32 %v7501, %v3963
  %v7503 = vmin.f32 %v7502, %v3967
  %v7504 = vmin.f32 %v7503, %v3973
  %v7505 = vmin.f32 %v7504, %v3977
  %v7506 = vmin.f32 %v7505, %v3983
  %v7507 = vmin.f32 %v7506, %v3987
  %v7508 = vmin.f32 %v7507, %v3993
  %v7509 = vmin.f32 %v7508, %v3997
  %v7510 = vmin.f32 %v7509, %v4003
  %v7511 = vmin.f32 %v7510, %v4007
  %v7512 = vmin.f32 %v7511, %v4013
  %v7513 = vmin.f32 %v7512, %v4017
  %v7514 = vmin.f32 %v7513, %v4023
  %v7515 = vmin.f32 %v7514, %v4027
  %v7516 = vmin.f32 %v7515, %v4033
  %v7517 = vmin.f32 %v7516, %v4037
  %v7518 = vmin.f32 %v7517, %v4043
  %v7519 = vmin.f32 %v7518, %v4047
  %v7520 = vmin.f32 %v7519, %v4053
  %v7521 = vmin.f32 %v7520, %v4057
  %v7522 = vmin.f32 %v7521, %v4063
  %v7523 = vmin.f32 %v7522, %v4067
  %v7524 = vmin.f32 %v7523, %v4073
  %v7525 = vmin.f32 %v7524, %v4077
  %v7526 = vmin.f32 %v7525, %v4083
  %v7527 = vmin.f32 %v7526, %v4087
  %v7528 = vmin.f32 %v7527, %v4093
  %v7529 = vmin.f32 %v7528, %v4097
  %v7530 = vmin.f32 %v7529, %v4103
  %v7531 = vmin.f32 %v7530, %v4107
  %v7532 = vmin.f32 %v7531, %v4113
  %v7533 = vmin.f32 %v7532, %v4117
  %v7534 = vmin.f32 %v7533, %v4123
  %v7535 = vmin.f32 %v7534, %v4127
  %v7536 = vmin.f32 %v7535, %v4133
  %v7537 = vmin.f32 %v7536, %v4137
  %v7538 = vmin.f32 %v7537, %v4143
  %v7539 = vmin.f32 %v7538, %v4147
  %v7540 = vmin.f32 %v7539, %v4153
  %v7541 = vmin.f32 %v7540, %v4157
  %v7542 = vmin.f32 %v7541, %v4163
  %v7543 = vmin.f32 %v7542, %v4167
  %v7544 = vmin.f32 %v7543, %v4173
  %v7545 = vmin.f32 %v7544, %v4177
  %v7546 = vmin.f32 %v7545, %v4183
  %v7547 = vmin.f32 %v7546, %v4187
  %v7548 = vmin.f32 %v7547, %v4193
  %v7549 = vmin.f32 %v7548, %v4197
  %v7550 = vmin.f32 %v7549, %v4203
  %v7551 = vmin.f32 %v7550, %v4207
  %v7552 = vrot.slane %v7551, 4
  %v7553 = vmin.f32 %v7551, %v7552
  %v7554 = vrot.slane %v7553, 2
  %v7555 = vmin.f32 %v7553, %v7554
  %v7556 = vrot.slane %v7555, 1
  %v7557 = vmin.f32 %v7555, %v7556
  %v7558 = vmin.f32 %v4244, %v4248
  %v7559 = vmin.f32 %v7558, %v4254
  %v7560 = vmin.f32 %v7559, %v4258
  %v7561 = vmin.f32 %v7560, %v4264
  %v7562 = vmin.f32 %v7561, %v4268
  %v7563 = vmin.f32 %v7562, %v4274
  %v7564 = vmin.f32 %v7563, %v4278
  %v7565 = vmin.f32 %v7564, %v4284
  %v7566 = vmin.f32 %v7565, %v4288
  %v7567 = vmin.f32 %v7566, %v4294
  %v7568 = vmin.f32 %v7567, %v4298
  %v7569 = vmin.f32 %v7568, %v4304
  %v7570 = vmin.f32 %v7569, %v4308
  %v7571 = vmin.f32 %v7570, %v4314
  %v7572 = vmin.f32 %v7571, %v4318
  %v7573 = vmin.f32 %v7572, %v4324
  %v7574 = vmin.f32 %v7573, %v4328
  %v7575 = vmin.f32 %v7574, %v4334
  %v7576 = vmin.f32 %v7575, %v4338
  %v7577 = vmin.f32 %v7576, %v4344
  %v7578 = vmin.f32 %v7577, %v4348
  %v7579 = vmin.f32 %v7578, %v4354
  %v7580 = vmin.f32 %v7579, %v4358
  %v7581 = vmin.f32 %v7580, %v4364
  %v7582 = vmin.f32 %v7581, %v4368
  %v7583 = vmin.f32 %v7582, %v4374
  %v7584 = vmin.f32 %v7583, %v4378
  %v7585 = vmin.f32 %v7584, %v4384
  %v7586 = vmin.f32 %v7585, %v4388
  %v7587 = vmin.f32 %v7586, %v4394
  %v7588 = vmin.f32 %v7587, %v4398
  %v7589 = vmin.f32 %v7588, %v4404
  %v7590 = vmin.f32 %v7589, %v4408
  %v7591 = vmin.f32 %v7590, %v4414
  %v7592 = vmin.f32 %v7591, %v4418
  %v7593 = vmin.f32 %v7592, %v4424
  %v7594 = vmin.f32 %v7593, %v4428
  %v7595 = vmin.f32 %v7594, %v4434
  %v7596 = vmin.f32 %v7595, %v4438
  %v7597 = vmin.f32 %v7596, %v4444
  %v7598 = vmin.f32 %v7597, %v4448
  %v7599 = vmin.f32 %v7598, %v4454
  %v7600 = vmin.f32 %v7599, %v4458
  %v7601 = vmin.f32 %v7600, %v4464
  %v7602 = vmin.f32 %v7601, %v4468
  %v7603 = vmin.f32 %v7602, %v4474
  %v7604 = vmin.f32 %v7603, %v4478
  %v7605 = vmin.f32 %v7604, %v4484
  %v7606 = vmin.f32 %v7605, %v4488
  %v7607 = vmin.f32 %v7606, %v4494
  %v7608 = vmin.f32 %v7607, %v4498
  %v7609 = vmin.f32 %v7608, %v4504
  %v7610 = vmin.f32 %v7609, %v4508
  %v7611 = vmin.f32 %v7610, %v4514
  %v7612 = vmin.f32 %v7611, %v4518
  %v7613 = vmin.f32 %v7612, %v4524
  %v7614 = vmin.f32 %v7613, %v4528
  %v7615 = vmin.f32 %v7614, %v4534
  %v7616 = vmin.f32 %v7615, %v4538
  %v7617 = vmin.f32 %v7616, %v4544
  %v7618 = vmin.f32 %v7617, %v4548
  %v7619 = vmin.f32 %v7618, %v4554
  %v7620 = vmin.f32 %v7619, %v4558
  %v7621 = vmin.f32 %v7620, %v4564
  %v7622 = vmin.f32 %v7621, %v4568
  %v7623 = vmin.f32 %v7622, %v4574
  %v7624 = vmin.f32 %v7623, %v4578
  %v7625 = vmin.f32 %v7624, %v4584
  %v7626 = vmin.f32 %v7625, %v4588
  %v7627 = vmin.f32 %v7626, %v4594
  %v7628 = vmin.f32 %v7627, %v4598
  %v7629 = vmin.f32 %v7628, %v4604
  %v7630 = vmin.f32 %v7629, %v4608
  %v7631 = vmin.f32 %v7630, %v4614
  %v7632 = vmin.f32 %v7631, %v4618
  %v7633 = vmin.f32 %v7632, %v4624
  %v7634 = vmin.f32 %v7633, %v4628
  %v7635 = vmin.f32 %v7634, %v4634
  %v7636 = vmin.f32 %v7635, %v4638
  %v7637 = vmin.f32 %v7636, %v4644
  %v7638 = vmin.f32 %v7637, %v4648
  %v7639 = vmin.f32 %v7638, %v4654
  %v7640 = vmin.f32 %v7639, %v4658
  %v7641 = vmin.f32 %v7640, %v4664
  %v7642 = vmin.f32 %v7641, %v4668
  %v7643 = vmin.f32 %v7642, %v4674
  %v7644 = vmin.f32 %v7643, %v4678
  %v7645 = vmin.f32 %v7644, %v4684
  %v7646 = vmin.f32 %v7645, %v4688
  %v7647 = vmin.f32 %v7646, %v4694
  %v7648 = vmin.f32 %v7647, %v4698
  %v7649 = vmin.f32 %v7648, %v4704
  %v7650 = vmin.f32 %v7649, %v4708
  %v7651 = vmin.f32 %v7650, %v4714
  %v7652 = vmin.f32 %v7651, %v4718
  %v7653 = vmin.f32 %v7652, %v4724
  %v7654 = vmin.f32 %v7653, %v4728
  %v7655 = vmin.f32 %v7654, %v4734
  %v7656 = vmin.f32 %v7655, %v4738
  %v7657 = vmin.f32 %v7656, %v4744
  %v7658 = vmin.f32 %v7657, %v4748
  %v7659 = vmin.f32 %v7658, %v4754
  %v7660 = vmin.f32 %v7659, %v4758
  %v7661 = vmin.f32 %v7660, %v4764
  %v7662 = vmin.f32 %v7661, %v4768
  %v7663 = vmin.f32 %v7662, %v4774
  %v7664 = vmin.f32 %v7663, %v4778
  %v7665 = vmin.f32 %v7664, %v4784
  %v7666 = vmin.f32 %v7665, %v4788
  %v7667 = vmin.f32 %v7666, %v4794
  %v7668 = vmin.f32 %v7667, %v4798
  %v7669 = vmin.f32 %v7668, %v4804
  %v7670 = vmin.f32 %v7669, %v4808
  %v7671 = vmin.f32 %v7670, %v4814
  %v7672 = vmin.f32 %v7671, %v4818
  %v7673 = vmin.f32 %v7672, %v4824
  %v7674 = vmin.f32 %v7673, %v4828
  %v7675 = vmin.f32 %v7674, %v4834
  %v7676 = vmin.f32 %v7675, %v4838
  %v7677 = vmin.f32 %v7676, %v4844
  %v7678 = vmin.f32 %v7677, %v4848
  %v7679 = vmin.f32 %v7678, %v4854
  %v7680 = vmin.f32 %v7679, %v4858
  %v7681 = vmin.f32 %v7680, %v4864
  %v7682 = vmin.f32 %v7681, %v4868
  %v7683 = vmin.f32 %v7682, %v4874
  %v7684 = vmin.f32 %v7683, %v4878
  %v7685 = vrot.slane %v7684, 4
  %v7686 = vmin.f32 %v7684, %v7685
  %v7687 = vrot.slane %v7686, 2
  %v7688 = vmin.f32 %v7686, %v7687
  %v7689 = vrot.slane %v7688, 1
  %v7690 = vmin.f32 %v7688, %v7689
  %v7691 = vmin.f32 %v4246, %v4250
  %v7692 = vmin.f32 %v7691, %v4256
  %v7693 = vmin.f32 %v7692, %v4260
  %v7694 = vmin.f32 %v7693, %v4266
  %v7695 = vmin.f32 %v7694, %v4270
  %v7696 = vmin.f32 %v7695, %v4276
  %v7697 = vmin.f32 %v7696, %v4280
  %v7698 = vmin.f32 %v7697, %v4286
  %v7699 = vmin.f32 %v7698, %v4290
  %v7700 = vmin.f32 %v7699, %v4296
  %v7701 = vmin.f32 %v7700, %v4300
  %v7702 = vmin.f32 %v7701, %v4306
  %v7703 = vmin.f32 %v7702, %v4310
  %v7704 = vmin.f32 %v7703, %v4316
  %v7705 = vmin.f32 %v7704, %v4320
  %v7706 = vmin.f32 %v7705, %v4326
  %v7707 = vmin.f32 %v7706, %v4330
  %v7708 = vmin.f32 %v7707, %v4336
  %v7709 = vmin.f32 %v7708, %v4340
  %v7710 = vmin.f32 %v7709, %v4346
  %v7711 = vmin.f32 %v7710, %v4350
  %v7712 = vmin.f32 %v7711, %v4356
  %v7713 = vmin.f32 %v7712, %v4360
  %v7714 = vmin.f32 %v7713, %v4366
  %v7715 = vmin.f32 %v7714, %v4370
  %v7716 = vmin.f32 %v7715, %v4376
  %v7717 = vmin.f32 %v7716, %v4380
  %v7718 = vmin.f32 %v7717, %v4386
  %v7719 = vmin.f32 %v7718, %v4390
  %v7720 = vmin.f32 %v7719, %v4396
  %v7721 = vmin.f32 %v7720, %v4400
  %v7722 = vmin.f32 %v7721, %v4406
  %v7723 = vmin.f32 %v7722, %v4410
  %v7724 = vmin.f32 %v7723, %v4416
  %v7725 = vmin.f32 %v7724, %v4420
  %v7726 = vmin.f32 %v7725, %v4426
  %v7727 = vmin.f32 %v7726, %v4430
  %v7728 = vmin.f32 %v7727, %v4436
  %v7729 = vmin.f32 %v7728, %v4440
  %v7730 = vmin.f32 %v7729, %v4446
  %v7731 = vmin.f32 %v7730, %v4450
  %v7732 = vmin.f32 %v7731, %v4456
  %v7733 = vmin.f32 %v7732, %v4460
  %v7734 = vmin.f32 %v7733, %v4466
  %v7735 = vmin.f32 %v7734, %v4470
  %v7736 = vmin.f32 %v7735, %v4476
  %v7737 = vmin.f32 %v7736, %v4480
  %v7738 = vmin.f32 %v7737, %v4486
  %v7739 = vmin.f32 %v7738, %v4490
  %v7740 = vmin.f32 %v7739, %v4496
  %v7741 = vmin.f32 %v7740, %v4500
  %v7742 = vmin.f32 %v7741, %v4506
  %v7743 = vmin.f32 %v7742, %v4510
  %v7744 = vmin.f32 %v7743, %v4516
  %v7745 = vmin.f32 %v7744, %v4520
  %v7746 = vmin.f32 %v7745, %v4526
  %v7747 = vmin.f32 %v7746, %v4530
  %v7748 = vmin.f32 %v7747, %v4536
  %v7749 = vmin.f32 %v7748, %v4540
  %v7750 = vmin.f32 %v7749, %v4546
  %v7751 = vmin.f32 %v7750, %v4550
  %v7752 = vmin.f32 %v7751, %v4556
  %v7753 = vmin.f32 %v7752, %v4560
  %v7754 = vmin.f32 %v7753, %v4566
  %v7755 = vmin.f32 %v7754, %v4570
  %v7756 = vmin.f32 %v7755, %v4576
  %v7757 = vmin.f32 %v7756, %v4580
  %v7758 = vmin.f32 %v7757, %v4586
  %v7759 = vmin.f32 %v7758, %v4590
  %v7760 = vmin.f32 %v7759, %v4596
  %v7761 = vmin.f32 %v7760, %v4600
  %v7762 = vmin.f32 %v7761, %v4606
  %v7763 = vmin.f32 %v7762, %v4610
  %v7764 = vmin.f32 %v7763, %v4616
  %v7765 = vmin.f32 %v7764, %v4620
  %v7766 = vmin.f32 %v7765, %v4626
  %v7767 = vmin.f32 %v7766, %v4630
  %v7768 = vmin.f32 %v7767, %v4636
  %v7769 = vmin.f32 %v7768, %v4640
  %v7770 = vmin.f32 %v7769, %v4646
  %v7771 = vmin.f32 %v7770, %v4650
  %v7772 = vmin.f32 %v7771, %v4656
  %v7773 = vmin.f32 %v7772, %v4660
  %v7774 = vmin.f32 %v7773, %v4666
  %v7775 = vmin.f32 %v7774, %v4670
  %v7776 = vmin.f32 %v7775, %v4676
  %v7777 = vmin.f32 %v7776, %v4680
  %v7778 = vmin.f32 %v7777, %v4686
  %v7779 = vmin.f32 %v7778, %v4690
  %v7780 = vmin.f32 %v7779, %v4696
  %v7781 = vmin.f32 %v7780, %v4700
  %v7782 = vmin.f32 %v7781, %v4706
  %v7783 = vmin.f32 %v7782, %v4710
  %v7784 = vmin.f32 %v7783, %v4716
  %v7785 = vmin.f32 %v7784, %v4720
  %v7786 = vmin.f32 %v7785, %v4726
  %v7787 = vmin.f32 %v7786, %v4730
  %v7788 = vmin.f32 %v7787, %v4736
  %v7789 = vmin.f32 %v7788, %v4740
  %v7790 = vmin.f32 %v7789, %v4746
  %v7791 = vmin.f32 %v7790, %v4750
  %v7792 = vmin.f32 %v7791, %v4756
  %v7793 = vmin.f32 %v7792, %v4760
  %v7794 = vmin.f32 %v7793, %v4766
  %v7795 = vmin.f32 %v7794, %v4770
  %v7796 = vmin.f32 %v7795, %v4776
  %v7797 = vmin.f32 %v7796, %v4780
  %v7798 = vmin.f32 %v7797, %v4786
  %v7799 = vmin.f32 %v7798, %v4790
  %v7800 = vmin.f32 %v7799, %v4796
  %v7801 = vmin.f32 %v7800, %v4800
  %v7802 = vmin.f32 %v7801, %v4806
  %v7803 = vmin.f32 %v7802, %v4810
  %v7804 = vmin.f32 %v7803, %v4816
  %v7805 = vmin.f32 %v7804, %v4820
  %v7806 = vmin.f32 %v7805, %v4826
  %v7807 = vmin.f32 %v7806, %v4830
  %v7808 = vmin.f32 %v7807, %v4836
  %v7809 = vmin.f32 %v7808, %v4840
  %v7810 = vmin.f32 %v7809, %v4846
  %v7811 = vmin.f32 %v7810, %v4850
  %v7812 = vmin.f32 %v7811, %v4856
  %v7813 = vmin.f32 %v7812, %v4860
  %v7814 = vmin.f32 %v7813, %v4866
  %v7815 = vmin.f32 %v7814, %v4870
  %v7816 = vmin.f32 %v7815, %v4876
  %v7817 = vmin.f32 %v7816, %v4880
  %v7818 = vrot.slane %v7817, 4
  %v7819 = vmin.f32 %v7817, %v7818
  %v7820 = vrot.slane %v7819, 2
  %v7821 = vmin.f32 %v7819, %v7820
  %v7822 = vrot.slane %v7821, 1
  %v7823 = vmin.f32 %v7821, %v7822
  %v7824 = vmin.f32 %v4917, %v4921
  %v7825 = vmin.f32 %v7824, %v4927
  %v7826 = vmin.f32 %v7825, %v4931
  %v7827 = vmin.f32 %v7826, %v4937
  %v7828 = vmin.f32 %v7827, %v4941
  %v7829 = vmin.f32 %v7828, %v4947
  %v7830 = vmin.f32 %v7829, %v4951
  %v7831 = vmin.f32 %v7830, %v4957
  %v7832 = vmin.f32 %v7831, %v4961
  %v7833 = vmin.f32 %v7832, %v4967
  %v7834 = vmin.f32 %v7833, %v4971
  %v7835 = vmin.f32 %v7834, %v4977
  %v7836 = vmin.f32 %v7835, %v4981
  %v7837 = vmin.f32 %v7836, %v4987
  %v7838 = vmin.f32 %v7837, %v4991
  %v7839 = vmin.f32 %v7838, %v4997
  %v7840 = vmin.f32 %v7839, %v5001
  %v7841 = vmin.f32 %v7840, %v5007
  %v7842 = vmin.f32 %v7841, %v5011
  %v7843 = vmin.f32 %v7842, %v5017
  %v7844 = vmin.f32 %v7843, %v5021
  %v7845 = vmin.f32 %v7844, %v5027
  %v7846 = vmin.f32 %v7845, %v5031
  %v7847 = vmin.f32 %v7846, %v5037
  %v7848 = vmin.f32 %v7847, %v5041
  %v7849 = vmin.f32 %v7848, %v5047
  %v7850 = vmin.f32 %v7849, %v5051
  %v7851 = vmin.f32 %v7850, %v5057
  %v7852 = vmin.f32 %v7851, %v5061
  %v7853 = vmin.f32 %v7852, %v5067
  %v7854 = vmin.f32 %v7853, %v5071
  %v7855 = vmin.f32 %v7854, %v5077
  %v7856 = vmin.f32 %v7855, %v5081
  %v7857 = vmin.f32 %v7856, %v5087
  %v7858 = vmin.f32 %v7857, %v5091
  %v7859 = vmin.f32 %v7858, %v5097
  %v7860 = vmin.f32 %v7859, %v5101
  %v7861 = vmin.f32 %v7860, %v5107
  %v7862 = vmin.f32 %v7861, %v5111
  %v7863 = vmin.f32 %v7862, %v5117
  %v7864 = vmin.f32 %v7863, %v5121
  %v7865 = vmin.f32 %v7864, %v5127
  %v7866 = vmin.f32 %v7865, %v5131
  %v7867 = vmin.f32 %v7866, %v5137
  %v7868 = vmin.f32 %v7867, %v5141
  %v7869 = vmin.f32 %v7868, %v5147
  %v7870 = vmin.f32 %v7869, %v5151
  %v7871 = vmin.f32 %v7870, %v5157
  %v7872 = vmin.f32 %v7871, %v5161
  %v7873 = vmin.f32 %v7872, %v5167
  %v7874 = vmin.f32 %v7873, %v5171
  %v7875 = vmin.f32 %v7874, %v5177
  %v7876 = vmin.f32 %v7875, %v5181
  %v7877 = vmin.f32 %v7876, %v5187
  %v7878 = vmin.f32 %v7877, %v5191
  %v7879 = vmin.f32 %v7878, %v5197
  %v7880 = vmin.f32 %v7879, %v5201
  %v7881 = vmin.f32 %v7880, %v5207
  %v7882 = vmin.f32 %v7881, %v5211
  %v7883 = vmin.f32 %v7882, %v5217
  %v7884 = vmin.f32 %v7883, %v5221
  %v7885 = vmin.f32 %v7884, %v5227
  %v7886 = vmin.f32 %v7885, %v5231
  %v7887 = vmin.f32 %v7886, %v5237
  %v7888 = vmin.f32 %v7887, %v5241
  %v7889 = vmin.f32 %v7888, %v5247
  %v7890 = vmin.f32 %v7889, %v5251
  %v7891 = vmin.f32 %v7890, %v5257
  %v7892 = vmin.f32 %v7891, %v5261
  %v7893 = vmin.f32 %v7892, %v5267
  %v7894 = vmin.f32 %v7893, %v5271
  %v7895 = vmin.f32 %v7894, %v5277
  %v7896 = vmin.f32 %v7895, %v5281
  %v7897 = vmin.f32 %v7896, %v5287
  %v7898 = vmin.f32 %v7897, %v5291
  %v7899 = vmin.f32 %v7898, %v5297
  %v7900 = vmin.f32 %v7899, %v5301
  %v7901 = vmin.f32 %v7900, %v5307
  %v7902 = vmin.f32 %v7901, %v5311
  %v7903 = vmin.f32 %v7902, %v5317
  %v7904 = vmin.f32 %v7903, %v5321
  %v7905 = vmin.f32 %v7904, %v5327
  %v7906 = vmin.f32 %v7905, %v5331
  %v7907 = vmin.f32 %v7906, %v5337
  %v7908 = vmin.f32 %v7907, %v5341
  %v7909 = vmin.f32 %v7908, %v5347
  %v7910 = vmin.f32 %v7909, %v5351
  %v7911 = vmin.f32 %v7910, %v5357
  %v7912 = vmin.f32 %v7911, %v5361
  %v7913 = vmin.f32 %v7912, %v5367
  %v7914 = vmin.f32 %v7913, %v5371
  %v7915 = vmin.f32 %v7914, %v5377
  %v7916 = vmin.f32 %v7915, %v5381
  %v7917 = vmin.f32 %v7916, %v5387
  %v7918 = vmin.f32 %v7917, %v5391
  %v7919 = vmin.f32 %v7918, %v5397
  %v7920 = vmin.f32 %v7919, %v5401
  %v7921 = vmin.f32 %v7920, %v5407
  %v7922 = vmin.f32 %v7921, %v5411
  %v7923 = vmin.f32 %v7922, %v5417
  %v7924 = vmin.f32 %v7923, %v5421
  %v7925 = vmin.f32 %v7924, %v5427
  %v7926 = vmin.f32 %v7925, %v5431
  %v7927 = vmin.f32 %v7926, %v5437
  %v7928 = vmin.f32 %v7927, %v5441
  %v7929 = vmin.f32 %v7928, %v5447
  %v7930 = vmin.f32 %v7929, %v5451
  %v7931 = vmin.f32 %v7930, %v5457
  %v7932 = vmin.f32 %v7931, %v5461
  %v7933 = vmin.f32 %v7932, %v5467
  %v7934 = vmin.f32 %v7933, %v5471
  %v7935 = vmin.f32 %v7934, %v5477
  %v7936 = vmin.f32 %v7935, %v5481
  %v7937 = vmin.f32 %v7936, %v5487
  %v7938 = vmin.f32 %v7937, %v5491
  %v7939 = vmin.f32 %v7938, %v5497
  %v7940 = vmin.f32 %v7939, %v5501
  %v7941 = vmin.f32 %v7940, %v5507
  %v7942 = vmin.f32 %v7941, %v5511
  %v7943 = vmin.f32 %v7942, %v5517
  %v7944 = vmin.f32 %v7943, %v5521
  %v7945 = vmin.f32 %v7944, %v5527
  %v7946 = vmin.f32 %v7945, %v5531
  %v7947 = vmin.f32 %v7946, %v5537
  %v7948 = vmin.f32 %v7947, %v5541
  %v7949 = vmin.f32 %v7948, %v5547
  %v7950 = vmin.f32 %v7949, %v5551
  %v7951 = vrot.slane %v7950, 4
  %v7952 = vmin.f32 %v7950, %v7951
  %v7953 = vrot.slane %v7952, 2
  %v7954 = vmin.f32 %v7952, %v7953
  %v7955 = vrot.slane %v7954, 1
  %v7956 = vmin.f32 %v7954, %v7955
  %v7957 = vmin.f32 %v4919, %v4923
  %v7958 = vmin.f32 %v7957, %v4929
  %v7959 = vmin.f32 %v7958, %v4933
  %v7960 = vmin.f32 %v7959, %v4939
  %v7961 = vmin.f32 %v7960, %v4943
  %v7962 = vmin.f32 %v7961, %v4949
  %v7963 = vmin.f32 %v7962, %v4953
  %v7964 = vmin.f32 %v7963, %v4959
  %v7965 = vmin.f32 %v7964, %v4963
  %v7966 = vmin.f32 %v7965, %v4969
  %v7967 = vmin.f32 %v7966, %v4973
  %v7968 = vmin.f32 %v7967, %v4979
  %v7969 = vmin.f32 %v7968, %v4983
  %v7970 = vmin.f32 %v7969, %v4989
  %v7971 = vmin.f32 %v7970, %v4993
  %v7972 = vmin.f32 %v7971, %v4999
  %v7973 = vmin.f32 %v7972, %v5003
  %v7974 = vmin.f32 %v7973, %v5009
  %v7975 = vmin.f32 %v7974, %v5013
  %v7976 = vmin.f32 %v7975, %v5019
  %v7977 = vmin.f32 %v7976, %v5023
  %v7978 = vmin.f32 %v7977, %v5029
  %v7979 = vmin.f32 %v7978, %v5033
  %v7980 = vmin.f32 %v7979, %v5039
  %v7981 = vmin.f32 %v7980, %v5043
  %v7982 = vmin.f32 %v7981, %v5049
  %v7983 = vmin.f32 %v7982, %v5053
  %v7984 = vmin.f32 %v7983, %v5059
  %v7985 = vmin.f32 %v7984, %v5063
  %v7986 = vmin.f32 %v7985, %v5069
  %v7987 = vmin.f32 %v7986, %v5073
  %v7988 = vmin.f32 %v7987, %v5079
  %v7989 = vmin.f32 %v7988, %v5083
  %v7990 = vmin.f32 %v7989, %v5089
  %v7991 = vmin.f32 %v7990, %v5093
  %v7992 = vmin.f32 %v7991, %v5099
  %v7993 = vmin.f32 %v7992, %v5103
  %v7994 = vmin.f32 %v7993, %v5109
  %v7995 = vmin.f32 %v7994, %v5113
  %v7996 = vmin.f32 %v7995, %v5119
  %v7997 = vmin.f32 %v7996, %v5123
  %v7998 = vmin.f32 %v7997, %v5129
  %v7999 = vmin.f32 %v7998, %v5133
  %v8000 = vmin.f32 %v7999, %v5139
  %v8001 = vmin.f32 %v8000, %v5143
  %v8002 = vmin.f32 %v8001, %v5149
  %v8003 = vmin.f32 %v8002, %v5153
  %v8004 = vmin.f32 %v8003, %v5159
  %v8005 = vmin.f32 %v8004, %v5163
  %v8006 = vmin.f32 %v8005, %v5169
  %v8007 = vmin.f32 %v8006, %v5173
  %v8008 = vmin.f32 %v8007, %v5179
  %v8009 = vmin.f32 %v8008, %v5183
  %v8010 = vmin.f32 %v8009, %v5189
  %v8011 = vmin.f32 %v8010, %v5193
  %v8012 = vmin.f32 %v8011, %v5199
  %v8013 = vmin.f32 %v8012, %v5203
  %v8014 = vmin.f32 %v8013, %v5209
  %v8015 = vmin.f32 %v8014, %v5213
  %v8016 = vmin.f32 %v8015, %v5219
  %v8017 = vmin.f32 %v8016, %v5223
  %v8018 = vmin.f32 %v8017, %v5229
  %v8019 = vmin.f32 %v8018, %v5233
  %v8020 = vmin.f32 %v8019, %v5239
  %v8021 = vmin.f32 %v8020, %v5243
  %v8022 = vmin.f32 %v8021, %v5249
  %v8023 = vmin.f32 %v8022, %v5253
  %v8024 = vmin.f32 %v8023, %v5259
  %v8025 = vmin.f32 %v8024, %v5263
  %v8026 = vmin.f32 %v8025, %v5269
  %v8027 = vmin.f32 %v8026, %v5273
  %v8028 = vmin.f32 %v8027, %v5279
  %v8029 = vmin.f32 %v8028, %v5283
  %v8030 = vmin.f32 %v8029, %v5289
  %v8031 = vmin.f32 %v8030, %v5293
  %v8032 = vmin.f32 %v8031, %v5299
  %v8033 = vmin.f32 %v8032, %v5303
  %v8034 = vmin.f32 %v8033, %v5309
  %v8035 = vmin.f32 %v8034, %v5313
  %v8036 = vmin.f32 %v8035, %v5319
  %v8037 = vmin.f32 %v8036, %v5323
  %v8038 = vmin.f32 %v8037, %v5329
  %v8039 = vmin.f32 %v8038, %v5333
  %v8040 = vmin.f32 %v8039, %v5339
  %v8041 = vmin.f32 %v8040, %v5343
  %v8042 = vmin.f32 %v8041, %v5349
  %v8043 = vmin.f32 %v8042, %v5353
  %v8044 = vmin.f32 %v8043, %v5359
  %v8045 = vmin.f32 %v8044, %v5363
  %v8046 = vmin.f32 %v8045, %v5369
  %v8047 = vmin.f32 %v8046, %v5373
  %v8048 = vmin.f32 %v8047, %v5379
  %v8049 = vmin.f32 %v8048, %v5383
  %v8050 = vmin.f32 %v8049, %v5389
  %v8051 = vmin.f32 %v8050, %v5393
  %v8052 = vmin.f32 %v8051, %v5399
  %v8053 = vmin.f32 %v8052, %v5403
  %v8054 = vmin.f32 %v8053, %v5409
  %v8055 = vmin.f32 %v8054, %v5413
  %v8056 = vmin.f32 %v8055, %v5419
  %v8057 = vmin.f32 %v8056, %v5423
  %v8058 = vmin.f32 %v8057, %v5429
  %v8059 = vmin.f32 %v8058, %v5433
  %v8060 = vmin.f32 %v8059, %v5439
  %v8061 = vmin.f32 %v8060, %v5443
  %v8062 = vmin.f32 %v8061, %v5449
  %v8063 = vmin.f32 %v8062, %v5453
  %v8064 = vmin.f32 %v8063, %v5459
  %v8065 = vmin.f32 %v8064, %v5463
  %v8066 = vmin.f32 %v8065, %v5469
  %v8067 = vmin.f32 %v8066, %v5473
  %v8068 = vmin.f32 %v8067, %v5479
  %v8069 = vmin.f32 %v8068, %v5483
  %v8070 = vmin.f32 %v8069, %v5489
  %v8071 = vmin.f32 %v8070, %v5493
  %v8072 = vmin.f32 %v8071, %v5499
  %v8073 = vmin.f32 %v8072, %v5503
  %v8074 = vmin.f32 %v8073, %v5509
  %v8075 = vmin.f32 %v8074, %v5513
  %v8076 = vmin.f32 %v8075, %v5519
  %v8077 = vmin.f32 %v8076, %v5523
  %v8078 = vmin.f32 %v8077, %v5529
  %v8079 = vmin.f32 %v8078, %v5533
  %v8080 = vmin.f32 %v8079, %v5539
  %v8081 = vmin.f32 %v8080, %v5543
  %v8082 = vmin.f32 %v8081, %v5549
  %v8083 = vmin.f32 %v8082, %v5553
  %v8084 = vrot.slane %v8083, 4
  %v8085 = vmin.f32 %v8083, %v8084
  %v8086 = vrot.slane %v8085, 2
  %v8087 = vmin.f32 %v8085, %v8086
  %v8088 = vrot.slane %v8087, 1
  %v8089 = vmin.f32 %v8087, %v8088
  %v8090 = vmin.f32 %v5590, %v5594
  %v8091 = vmin.f32 %v8090, %v5600
  %v8092 = vmin.f32 %v8091, %v5604
  %v8093 = vmin.f32 %v8092, %v5610
  %v8094 = vmin.f32 %v8093, %v5614
  %v8095 = vmin.f32 %v8094, %v5620
  %v8096 = vmin.f32 %v8095, %v5624
  %v8097 = vmin.f32 %v8096, %v5630
  %v8098 = vmin.f32 %v8097, %v5634
  %v8099 = vmin.f32 %v8098, %v5640
  %v8100 = vmin.f32 %v8099, %v5644
  %v8101 = vmin.f32 %v8100, %v5650
  %v8102 = vmin.f32 %v8101, %v5654
  %v8103 = vmin.f32 %v8102, %v5660
  %v8104 = vmin.f32 %v8103, %v5664
  %v8105 = vmin.f32 %v8104, %v5670
  %v8106 = vmin.f32 %v8105, %v5674
  %v8107 = vmin.f32 %v8106, %v5680
  %v8108 = vmin.f32 %v8107, %v5684
  %v8109 = vmin.f32 %v8108, %v5690
  %v8110 = vmin.f32 %v8109, %v5694
  %v8111 = vmin.f32 %v8110, %v5700
  %v8112 = vmin.f32 %v8111, %v5704
  %v8113 = vmin.f32 %v8112, %v5710
  %v8114 = vmin.f32 %v8113, %v5714
  %v8115 = vmin.f32 %v8114, %v5720
  %v8116 = vmin.f32 %v8115, %v5724
  %v8117 = vmin.f32 %v8116, %v5730
  %v8118 = vmin.f32 %v8117, %v5734
  %v8119 = vmin.f32 %v8118, %v5740
  %v8120 = vmin.f32 %v8119, %v5744
  %v8121 = vmin.f32 %v8120, %v5750
  %v8122 = vmin.f32 %v8121, %v5754
  %v8123 = vmin.f32 %v8122, %v5760
  %v8124 = vmin.f32 %v8123, %v5764
  %v8125 = vmin.f32 %v8124, %v5770
  %v8126 = vmin.f32 %v8125, %v5774
  %v8127 = vmin.f32 %v8126, %v5780
  %v8128 = vmin.f32 %v8127, %v5784
  %v8129 = vmin.f32 %v8128, %v5790
  %v8130 = vmin.f32 %v8129, %v5794
  %v8131 = vmin.f32 %v8130, %v5800
  %v8132 = vmin.f32 %v8131, %v5804
  %v8133 = vmin.f32 %v8132, %v5810
  %v8134 = vmin.f32 %v8133, %v5814
  %v8135 = vmin.f32 %v8134, %v5820
  %v8136 = vmin.f32 %v8135, %v5824
  %v8137 = vmin.f32 %v8136, %v5830
  %v8138 = vmin.f32 %v8137, %v5834
  %v8139 = vmin.f32 %v8138, %v5840
  %v8140 = vmin.f32 %v8139, %v5844
  %v8141 = vmin.f32 %v8140, %v5850
  %v8142 = vmin.f32 %v8141, %v5854
  %v8143 = vmin.f32 %v8142, %v5860
  %v8144 = vmin.f32 %v8143, %v5864
  %v8145 = vmin.f32 %v8144, %v5870
  %v8146 = vmin.f32 %v8145, %v5874
  %v8147 = vmin.f32 %v8146, %v5880
  %v8148 = vmin.f32 %v8147, %v5884
  %v8149 = vmin.f32 %v8148, %v5890
  %v8150 = vmin.f32 %v8149, %v5894
  %v8151 = vmin.f32 %v8150, %v5900
  %v8152 = vmin.f32 %v8151, %v5904
  %v8153 = vmin.f32 %v8152, %v5910
  %v8154 = vmin.f32 %v8153, %v5914
  %v8155 = vmin.f32 %v8154, %v5920
  %v8156 = vmin.f32 %v8155, %v5924
  %v8157 = vmin.f32 %v8156, %v5930
  %v8158 = vmin.f32 %v8157, %v5934
  %v8159 = vmin.f32 %v8158, %v5940
  %v8160 = vmin.f32 %v8159, %v5944
  %v8161 = vmin.f32 %v8160, %v5950
  %v8162 = vmin.f32 %v8161, %v5954
  %v8163 = vmin.f32 %v8162, %v5960
  %v8164 = vmin.f32 %v8163, %v5964
  %v8165 = vmin.f32 %v8164, %v5970
  %v8166 = vmin.f32 %v8165, %v5974
  %v8167 = vmin.f32 %v8166, %v5980
  %v8168 = vmin.f32 %v8167, %v5984
  %v8169 = vmin.f32 %v8168, %v5990
  %v8170 = vmin.f32 %v8169, %v5994
  %v8171 = vmin.f32 %v8170, %v6000
  %v8172 = vmin.f32 %v8171, %v6004
  %v8173 = vmin.f32 %v8172, %v6010
  %v8174 = vmin.f32 %v8173, %v6014
  %v8175 = vmin.f32 %v8174, %v6020
  %v8176 = vmin.f32 %v8175, %v6024
  %v8177 = vmin.f32 %v8176, %v6030
  %v8178 = vmin.f32 %v8177, %v6034
  %v8179 = vmin.f32 %v8178, %v6040
  %v8180 = vmin.f32 %v8179, %v6044
  %v8181 = vmin.f32 %v8180, %v6050
  %v8182 = vmin.f32 %v8181, %v6054
  %v8183 = vmin.f32 %v8182, %v6060
  %v8184 = vmin.f32 %v8183, %v6064
  %v8185 = vmin.f32 %v8184, %v6070
  %v8186 = vmin.f32 %v8185, %v6074
  %v8187 = vmin.f32 %v8186, %v6080
  %v8188 = vmin.f32 %v8187, %v6084
  %v8189 = vmin.f32 %v8188, %v6090
  %v8190 = vmin.f32 %v8189, %v6094
  %v8191 = vmin.f32 %v8190, %v6100
  %v8192 = vmin.f32 %v8191, %v6104
  %v8193 = vmin.f32 %v8192, %v6110
  %v8194 = vmin.f32 %v8193, %v6114
  %v8195 = vmin.f32 %v8194, %v6120
  %v8196 = vmin.f32 %v8195, %v6124
  %v8197 = vmin.f32 %v8196, %v6130
  %v8198 = vmin.f32 %v8197, %v6134
  %v8199 = vmin.f32 %v8198, %v6140
  %v8200 = vmin.f32 %v8199, %v6144
  %v8201 = vmin.f32 %v8200, %v6150
  %v8202 = vmin.f32 %v8201, %v6154
  %v8203 = vmin.f32 %v8202, %v6160
  %v8204 = vmin.f32 %v8203, %v6164
  %v8205 = vmin.f32 %v8204, %v6170
  %v8206 = vmin.f32 %v8205, %v6174
  %v8207 = vmin.f32 %v8206, %v6180
  %v8208 = vmin.f32 %v8207, %v6184
  %v8209 = vmin.f32 %v8208, %v6190
  %v8210 = vmin.f32 %v8209, %v6194
  %v8211 = vmin.f32 %v8210, %v6200
  %v8212 = vmin.f32 %v8211, %v6204
  %v8213 = vmin.f32 %v8212, %v6210
  %v8214 = vmin.f32 %v8213, %v6214
  %v8215 = vmin.f32 %v8214, %v6220
  %v8216 = vmin.f32 %v8215, %v6224
  %v8217 = vrot.slane %v8216, 4
  %v8218 = vmin.f32 %v8216, %v8217
  %v8219 = vrot.slane %v8218, 2
  %v8220 = vmin.f32 %v8218, %v8219
  %v8221 = vrot.slane %v8220, 1
  %v8222 = vmin.f32 %v8220, %v8221
  %v8223 = vmin.f32 %v5592, %v5596
  %v8224 = vmin.f32 %v8223, %v5602
  %v8225 = vmin.f32 %v8224, %v5606
  %v8226 = vmin.f32 %v8225, %v5612
  %v8227 = vmin.f32 %v8226, %v5616
  %v8228 = vmin.f32 %v8227, %v5622
  %v8229 = vmin.f32 %v8228, %v5626
  %v8230 = vmin.f32 %v8229, %v5632
  %v8231 = vmin.f32 %v8230, %v5636
  %v8232 = vmin.f32 %v8231, %v5642
  %v8233 = vmin.f32 %v8232, %v5646
  %v8234 = vmin.f32 %v8233, %v5652
  %v8235 = vmin.f32 %v8234, %v5656
  %v8236 = vmin.f32 %v8235, %v5662
  %v8237 = vmin.f32 %v8236, %v5666
  %v8238 = vmin.f32 %v8237, %v5672
  %v8239 = vmin.f32 %v8238, %v5676
  %v8240 = vmin.f32 %v8239, %v5682
  %v8241 = vmin.f32 %v8240, %v5686
  %v8242 = vmin.f32 %v8241, %v5692
  %v8243 = vmin.f32 %v8242, %v5696
  %v8244 = vmin.f32 %v8243, %v5702
  %v8245 = vmin.f32 %v8244, %v5706
  %v8246 = vmin.f32 %v8245, %v5712
  %v8247 = vmin.f32 %v8246, %v5716
  %v8248 = vmin.f32 %v8247, %v5722
  %v8249 = vmin.f32 %v8248, %v5726
  %v8250 = vmin.f32 %v8249, %v5732
  %v8251 = vmin.f32 %v8250, %v5736
  %v8252 = vmin.f32 %v8251, %v5742
  %v8253 = vmin.f32 %v8252, %v5746
  %v8254 = vmin.f32 %v8253, %v5752
  %v8255 = vmin.f32 %v8254, %v5756
  %v8256 = vmin.f32 %v8255, %v5762
  %v8257 = vmin.f32 %v8256, %v5766
  %v8258 = vmin.f32 %v8257, %v5772
  %v8259 = vmin.f32 %v8258, %v5776
  %v8260 = vmin.f32 %v8259, %v5782
  %v8261 = vmin.f32 %v8260, %v5786
  %v8262 = vmin.f32 %v8261, %v5792
  %v8263 = vmin.f32 %v8262, %v5796
  %v8264 = vmin.f32 %v8263, %v5802
  %v8265 = vmin.f32 %v8264, %v5806
  %v8266 = vmin.f32 %v8265, %v5812
  %v8267 = vmin.f32 %v8266, %v5816
  %v8268 = vmin.f32 %v8267, %v5822
  %v8269 = vmin.f32 %v8268, %v5826
  %v8270 = vmin.f32 %v8269, %v5832
  %v8271 = vmin.f32 %v8270, %v5836
  %v8272 = vmin.f32 %v8271, %v5842
  %v8273 = vmin.f32 %v8272, %v5846
  %v8274 = vmin.f32 %v8273, %v5852
  %v8275 = vmin.f32 %v8274, %v5856
  %v8276 = vmin.f32 %v8275, %v5862
  %v8277 = vmin.f32 %v8276, %v5866
  %v8278 = vmin.f32 %v8277, %v5872
  %v8279 = vmin.f32 %v8278, %v5876
  %v8280 = vmin.f32 %v8279, %v5882
  %v8281 = vmin.f32 %v8280, %v5886
  %v8282 = vmin.f32 %v8281, %v5892
  %v8283 = vmin.f32 %v8282, %v5896
  %v8284 = vmin.f32 %v8283, %v5902
  %v8285 = vmin.f32 %v8284, %v5906
  %v8286 = vmin.f32 %v8285, %v5912
  %v8287 = vmin.f32 %v8286, %v5916
  %v8288 = vmin.f32 %v8287, %v5922
  %v8289 = vmin.f32 %v8288, %v5926
  %v8290 = vmin.f32 %v8289, %v5932
  %v8291 = vmin.f32 %v8290, %v5936
  %v8292 = vmin.f32 %v8291, %v5942
  %v8293 = vmin.f32 %v8292, %v5946
  %v8294 = vmin.f32 %v8293, %v5952
  %v8295 = vmin.f32 %v8294, %v5956
  %v8296 = vmin.f32 %v8295, %v5962
  %v8297 = vmin.f32 %v8296, %v5966
  %v8298 = vmin.f32 %v8297, %v5972
  %v8299 = vmin.f32 %v8298, %v5976
  %v8300 = vmin.f32 %v8299, %v5982
  %v8301 = vmin.f32 %v8300, %v5986
  %v8302 = vmin.f32 %v8301, %v5992
  %v8303 = vmin.f32 %v8302, %v5996
  %v8304 = vmin.f32 %v8303, %v6002
  %v8305 = vmin.f32 %v8304, %v6006
  %v8306 = vmin.f32 %v8305, %v6012
  %v8307 = vmin.f32 %v8306, %v6016
  %v8308 = vmin.f32 %v8307, %v6022
  %v8309 = vmin.f32 %v8308, %v6026
  %v8310 = vmin.f32 %v8309, %v6032
  %v8311 = vmin.f32 %v8310, %v6036
  %v8312 = vmin.f32 %v8311, %v6042
  %v8313 = vmin.f32 %v8312, %v6046
  %v8314 = vmin.f32 %v8313, %v6052
  %v8315 = vmin.f32 %v8314, %v6056
  %v8316 = vmin.f32 %v8315, %v6062
  %v8317 = vmin.f32 %v8316, %v6066
  %v8318 = vmin.f32 %v8317, %v6072
  %v8319 = vmin.f32 %v8318, %v6076
  %v8320 = vmin.f32 %v8319, %v6082
  %v8321 = vmin.f32 %v8320, %v6086
  %v8322 = vmin.f32 %v8321, %v6092
  %v8323 = vmin.f32 %v8322, %v6096
  %v8324 = vmin.f32 %v8323, %v6102
  %v8325 = vmin.f32 %v8324, %v6106
  %v8326 = vmin.f32 %v8325, %v6112
  %v8327 = vmin.f32 %v8326, %v6116
  %v8328 = vmin.f32 %v8327, %v6122
  %v8329 = vmin.f32 %v8328, %v6126
  %v8330 = vmin.f32 %v8329, %v6132
  %v8331 = vmin.f32 %v8330, %v6136
  %v8332 = vmin.f32 %v8331, %v6142
  %v8333 = vmin.f32 %v8332, %v6146
  %v8334 = vmin.f32 %v8333, %v6152
  %v8335 = vmin.f32 %v8334, %v6156
  %v8336 = vmin.f32 %v8335, %v6162
  %v8337 = vmin.f32 %v8336, %v6166
  %v8338 = vmin.f32 %v8337, %v6172
  %v8339 = vmin.f32 %v8338, %v6176
  %v8340 = vmin.f32 %v8339, %v6182
  %v8341 = vmin.f32 %v8340, %v6186
  %v8342 = vmin.f32 %v8341, %v6192
  %v8343 = vmin.f32 %v8342, %v6196
  %v8344 = vmin.f32 %v8343, %v6202
  %v8345 = vmin.f32 %v8344, %v6206
  %v8346 = vmin.f32 %v8345, %v6212
  %v8347 = vmin.f32 %v8346, %v6216
  %v8348 = vmin.f32 %v8347, %v6222
  %v8349 = vmin.f32 %v8348, %v6226
  %v8350 = vrot.slane %v8349, 4
  %v8351 = vmin.f32 %v8349, %v8350
  %v8352 = vrot.slane %v8351, 2
  %v8353 = vmin.f32 %v8351, %v8352
  %v8354 = vrot.slane %v8353, 1
  %v8355 = vmin.f32 %v8353, %v8354
  %v8356 = vmul.f32 %v74, %v74
  %v8357 = vmul.f32 %v75, %v75
  %v8358 = vmul.f32 %v76, %v76
  %v8359 = vmul.f32 %v77, %v77
  %v8360 = vmul.f32 %v78, %v78
  %v8361 = vmul.f32 %v79, %v79
  %v8362 = vmul.f32 %v80, %v80
  %v8363 = vmul.f32 %v81, %v81
  %v8372 = vcombine.high %v8356, %v8356
  %v8373 = vcombine.high %v8357, %v8357
  %v8374 = vcombine.high %v8358, %v8358
  %v8375 = vcombine.high %v8359, %v8359
  %v8376 = vcombine.high %v8360, %v8360
  %v8377 = vcombine.high %v8361, %v8361
  %v8378 = vcombine.high %v8362, %v8362
  %v8379 = vcombine.high %v8363, %v8363
  %v8388 = vsel %vm795, %v8356, 0.0
  %v8389 = vrot.slane %v8388, 4
  %v8390 = vadd.f32 %v8388, %v8389
  %v8391 = vrot.slane %v8390, 2
  %v8392 = vadd.f32 %v8390, %v8391
  %v8393 = vrot.slane %v8392, 1
  %v8394 = vadd.f32 %v8392, %v8393
  %v8395 = vsel %vm795, %v8372, 0.0
  %v8396 = vrot.slane %v8395, 4
  %v8397 = vadd.f32 %v8395, %v8396
  %v8398 = vrot.slane %v8397, 2
  %v8399 = vadd.f32 %v8397, %v8398
  %v8400 = vrot.slane %v8399, 1
  %v8401 = vadd.f32 %v8399, %v8400
  %v8402 = vsel %vm795, %v8357, 0.0
  %v8403 = vrot.slane %v8402, 4
  %v8404 = vadd.f32 %v8402, %v8403
  %v8405 = vrot.slane %v8404, 2
  %v8406 = vadd.f32 %v8404, %v8405
  %v8407 = vrot.slane %v8406, 1
  %v8408 = vadd.f32 %v8406, %v8407
  %v8409 = vsel %vm795, %v8373, 0.0
  %v8410 = vrot.slane %v8409, 4
  %v8411 = vadd.f32 %v8409, %v8410
  %v8412 = vrot.slane %v8411, 2
  %v8413 = vadd.f32 %v8411, %v8412
  %v8414 = vrot.slane %v8413, 1
  %v8415 = vadd.f32 %v8413, %v8414
  %v8416 = vsel %vm795, %v8358, 0.0
  %v8417 = vrot.slane %v8416, 4
  %v8418 = vadd.f32 %v8416, %v8417
  %v8419 = vrot.slane %v8418, 2
  %v8420 = vadd.f32 %v8418, %v8419
  %v8421 = vrot.slane %v8420, 1
  %v8422 = vadd.f32 %v8420, %v8421
  %v8423 = vsel %vm795, %v8374, 0.0
  %v8424 = vrot.slane %v8423, 4
  %v8425 = vadd.f32 %v8423, %v8424
  %v8426 = vrot.slane %v8425, 2
  %v8427 = vadd.f32 %v8425, %v8426
  %v8428 = vrot.slane %v8427, 1
  %v8429 = vadd.f32 %v8427, %v8428
  %v8430 = vsel %vm795, %v8359, 0.0
  %v8431 = vrot.slane %v8430, 4
  %v8432 = vadd.f32 %v8430, %v8431
  %v8433 = vrot.slane %v8432, 2
  %v8434 = vadd.f32 %v8432, %v8433
  %v8435 = vrot.slane %v8434, 1
  %v8436 = vadd.f32 %v8434, %v8435
  %v8437 = vsel %vm795, %v8375, 0.0
  %v8438 = vrot.slane %v8437, 4
  %v8439 = vadd.f32 %v8437, %v8438
  %v8440 = vrot.slane %v8439, 2
  %v8441 = vadd.f32 %v8439, %v8440
  %v8442 = vrot.slane %v8441, 1
  %v8443 = vadd.f32 %v8441, %v8442
  %v8444 = vsel %vm795, %v8360, 0.0
  %v8445 = vrot.slane %v8444, 4
  %v8446 = vadd.f32 %v8444, %v8445
  %v8447 = vrot.slane %v8446, 2
  %v8448 = vadd.f32 %v8446, %v8447
  %v8449 = vrot.slane %v8448, 1
  %v8450 = vadd.f32 %v8448, %v8449
  %v8451 = vsel %vm795, %v8376, 0.0
  %v8452 = vrot.slane %v8451, 4
  %v8453 = vadd.f32 %v8451, %v8452
  %v8454 = vrot.slane %v8453, 2
  %v8455 = vadd.f32 %v8453, %v8454
  %v8456 = vrot.slane %v8455, 1
  %v8457 = vadd.f32 %v8455, %v8456
  %v8458 = vsel %vm795, %v8361, 0.0
  %v8459 = vrot.slane %v8458, 4
  %v8460 = vadd.f32 %v8458, %v8459
  %v8461 = vrot.slane %v8460, 2
  %v8462 = vadd.f32 %v8460, %v8461
  %v8463 = vrot.slane %v8462, 1
  %v8464 = vadd.f32 %v8462, %v8463
  %v8465 = vsel %vm795, %v8377, 0.0
  %v8466 = vrot.slane %v8465, 4
  %v8467 = vadd.f32 %v8465, %v8466
  %v8468 = vrot.slane %v8467, 2
  %v8469 = vadd.f32 %v8467, %v8468
  %v8470 = vrot.slane %v8469, 1
  %v8471 = vadd.f32 %v8469, %v8470
  %v8472 = vsel %vm795, %v8362, 0.0
  %v8473 = vrot.slane %v8472, 4
  %v8474 = vadd.f32 %v8472, %v8473
  %v8475 = vrot.slane %v8474, 2
  %v8476 = vadd.f32 %v8474, %v8475
  %v8477 = vrot.slane %v8476, 1
  %v8478 = vadd.f32 %v8476, %v8477
  %v8479 = vsel %vm795, %v8378, 0.0
  %v8480 = vrot.slane %v8479, 4
  %v8481 = vadd.f32 %v8479, %v8480
  %v8482 = vrot.slane %v8481, 2
  %v8483 = vadd.f32 %v8481, %v8482
  %v8484 = vrot.slane %v8483, 1
  %v8485 = vadd.f32 %v8483, %v8484
  %v8486 = vsel %vm795, %v8363, 0.0
  %v8487 = vrot.slane %v8486, 4
  %v8488 = vadd.f32 %v8486, %v8487
  %v8489 = vrot.slane %v8488, 2
  %v8490 = vadd.f32 %v8488, %v8489
  %v8491 = vrot.slane %v8490, 1
  %v8492 = vadd.f32 %v8490, %v8491
  %v8493 = vsel %vm795, %v8379, 0.0
  %v8494 = vrot.slane %v8493, 4
  %v8495 = vadd.f32 %v8493, %v8494
  %v8496 = vrot.slane %v8495, 2
  %v8497 = vadd.f32 %v8495, %v8496
  %v8498 = vrot.slane %v8497, 1
  %v8499 = vadd.f32 %v8497, %v8498
  %v8500 = vadd.f32 %v8394, %v6360
  %v8501 = vadd.f32 %v8401, %v6493
  %v8502 = vadd.f32 %v8408, %v6626
  %v8503 = vadd.f32 %v8415, %v6759
  %v8504 = vadd.f32 %v8422, %v6892
  %v8505 = vadd.f32 %v8429, %v7025
  %v8506 = vadd.f32 %v8436, %v7158
  %v8507 = vadd.f32 %v8443, %v7291
  %v8508 = vadd.f32 %v8450, %v7424
  %v8509 = vadd.f32 %v8457, %v7557
  %v8510 = vadd.f32 %v8464, %v7690
  %v8511 = vadd.f32 %v8471, %v7823
  %v8512 = vadd.f32 %v8478, %v7956
  %v8513 = vadd.f32 %v8485, %v8089
  %v8514 = vadd.f32 %v8492, %v8222
  %v8515 = vadd.f32 %v8499, %v8355
  %v8516 = vmax.f32 %v8500, 0.0
  %v8517 = vmax.f32 %v8501, 0.0
  %v8518 = vmax.f32 %v8502, 0.0
  %v8519 = vmax.f32 %v8503, 0.0
  %v8520 = vmax.f32 %v8504, 0.0
  %v8521 = vmax.f32 %v8505, 0.0
  %v8522 = vmax.f32 %v8506, 0.0
  %v8523 = vmax.f32 %v8507, 0.0
  %v8524 = vmax.f32 %v8508, 0.0
  %v8525 = vmax.f32 %v8509, 0.0
  %v8526 = vmax.f32 %v8510, 0.0
  %v8527 = vmax.f32 %v8511, 0.0
  %v8528 = vmax.f32 %v8512, 0.0
  %v8529 = vmax.f32 %v8513, 0.0
  %v8530 = vmax.f32 %v8514, 0.0
  %v8531 = vmax.f32 %v8515, 0.0
  %v8532 = vld [vmem:[%s2] ss:$8 sm:$0xf]
  %v8533 = vld [vmem:[%s2] ss:$8 sm:$0xf0]
  %v8534 = vor.u32 %v8532, %v8533
  %s8535 = scalar_lea.vmem %s2, 64
  %v8536 = vld [vmem:[%s8535] ss:$8 sm:$0xf]
  %v8537 = vld [vmem:[%s8535] ss:$8 sm:$0xf0]
  %v8538 = vor.u32 %v8536, %v8537
  %v8555 = vcombine.low %v8516, %v8517
  %v8556 = vcombine.low %v8518, %v8519
  %v8557 = vcombine.low %v8520, %v8521
  %v8558 = vcombine.low %v8522, %v8523
  %v8560 = vunpack.c.l.s4 1966171168
  %v8561 = vunpack.c.0.s8 %v8560
  %v8562 = vlaneseq
  %v8563 = vshrl.u32 %v8562, 7
  %v8564 = vsub.s32 %v8561, %v8563
  %v8565 = vrot.slane %v8555, %v8564
  %v8567 = vunpack.c.l.s4 1966171168
  %v8568 = vunpack.c.0.s8 %v8567
  %v8569 = vlaneseq
  %v8570 = vshrl.u32 %v8569, 7
  %v8571 = vsub.s32 %v8568, %v8570
  %v8572 = vrot.slane %v8556, %v8571
  %v8574 = vunpack.c.l.s4 1966171168
  %v8575 = vunpack.c.0.s8 %v8574
  %v8576 = vlaneseq
  %v8577 = vshrl.u32 %v8576, 7
  %v8578 = vsub.s32 %v8575, %v8577
  %v8579 = vrot.slane %v8557, %v8578
  %v8581 = vunpack.c.l.s4 1966171168
  %v8582 = vunpack.c.0.s8 %v8581
  %v8583 = vlaneseq
  %v8584 = vshrl.u32 %v8583, 7
  %v8585 = vsub.s32 %v8582, %v8584
  %v8586 = vrot.slane %v8558, %v8585
  %v8587 = vcombine.low %v8565, %v8572
  %v8588 = vcombine.low %v8579, %v8586
  %v8590 = vunpack.c.l.s4 1966171168
  %v8591 = vunpack.c.0.s8 %v8590
  %v8592 = vlaneseq
  %v8593 = vshrl.u32 %v8592, 7
  %v8594 = vsub.s32 %v8591, %v8593
  %v8595 = vrot.slane %v8587, %v8594
  %v8597 = vunpack.c.l.s4 1966171168
  %v8598 = vunpack.c.0.s8 %v8597
  %v8599 = vlaneseq
  %v8600 = vshrl.u32 %v8599, 7
  %v8601 = vsub.s32 %v8598, %v8600
  %v8602 = vrot.slane %v8588, %v8601
  %v8603 = vcombine.low %v8595, %v8602
  %v8604 = vcombine.low %v8524, %v8525
  %v8605 = vcombine.low %v8526, %v8527
  %v8606 = vcombine.low %v8528, %v8529
  %v8607 = vcombine.low %v8530, %v8531
  %v8609 = vunpack.c.l.s4 1966171168
  %v8610 = vunpack.c.0.s8 %v8609
  %v8611 = vlaneseq
  %v8612 = vshrl.u32 %v8611, 7
  %v8613 = vsub.s32 %v8610, %v8612
  %v8614 = vrot.slane %v8604, %v8613
  %v8616 = vunpack.c.l.s4 1966171168
  %v8617 = vunpack.c.0.s8 %v8616
  %v8618 = vlaneseq
  %v8619 = vshrl.u32 %v8618, 7
  %v8620 = vsub.s32 %v8617, %v8619
  %v8621 = vrot.slane %v8605, %v8620
  %v8623 = vunpack.c.l.s4 1966171168
  %v8624 = vunpack.c.0.s8 %v8623
  %v8625 = vlaneseq
  %v8626 = vshrl.u32 %v8625, 7
  %v8627 = vsub.s32 %v8624, %v8626
  %v8628 = vrot.slane %v8606, %v8627
  %v8630 = vunpack.c.l.s4 1966171168
  %v8631 = vunpack.c.0.s8 %v8630
  %v8632 = vlaneseq
  %v8633 = vshrl.u32 %v8632, 7
  %v8634 = vsub.s32 %v8631, %v8633
  %v8635 = vrot.slane %v8607, %v8634
  %v8636 = vcombine.low %v8614, %v8621
  %v8637 = vcombine.low %v8628, %v8635
  %v8639 = vunpack.c.l.s4 1966171168
  %v8640 = vunpack.c.0.s8 %v8639
  %v8641 = vlaneseq
  %v8642 = vshrl.u32 %v8641, 7
  %v8643 = vsub.s32 %v8640, %v8642
  %v8644 = vrot.slane %v8636, %v8643
  %v8646 = vunpack.c.l.s4 1966171168
  %v8647 = vunpack.c.0.s8 %v8646
  %v8648 = vlaneseq
  %v8649 = vshrl.u32 %v8648, 7
  %v8650 = vsub.s32 %v8647, %v8649
  %v8651 = vrot.slane %v8637, %v8650
  %v8652 = vcombine.low %v8644, %v8651
  %v8655 = vadd.f32 %v8534, %v8603
  %v8656 = vadd.f32 %v8538, %v8652
  %8657 = vst [vmem:[%s2] ss:$8 sm:$0xf] %v8655
  %8658 = vst [vmem:[%s2] ss:$8 sm:$0xf0] %v8655
  %8659 = vst [vmem:[%s8535] ss:$8 sm:$0xf] %v8656
  %8660 = vst [vmem:[%s8535] ss:$8 sm:$0xf0] %v8656
  // Predicated region
  $region14: #{_lambda_.1} parent=0 // pred_check
    _
  $region15: #{_lambda_.1} parent=0 // pred_check_branch
    %8662 = sbr.rel (0) target = $region17
  $region16: #{_lambda_.1} parent=0 // pred_region
    _
  $region17: #{_lambda_.1} parent=0 // pred_fallthru
    _
  // Predicated region
  $region18: #{_lambda_.1} parent=0 // pred_check
    _
  $region19: #{_lambda_.1} parent=0 // pred_check_branch
    %8664 = sbr.rel (0) target = $region21
  $region20: #{_lambda_.1} parent=0 // pred_region
    _
  $region21: #{_lambda_.1} parent=0 // pred_fallthru
    _

</llo_original>
